<compile_context>
chip_gen: v7x
topology: tpu7x:2x2x1
jax: 0.10.0
libtpu: 0.0.40
codegen_flags: <defaults>
</compile_context>

<pallas_src>
import jax
import jax.numpy as jnp
from jax import lax
from jax.experimental import pallas as pl
from jax.experimental.pallas import tpu as pltpu

# ---- config (stand-in for the original `config` module) ----
MAX_LENGTH = 6

# ---- synthetic model dims ----
VOCAB = 32
EMB = 32
SPK_EMB = 32
HIDDEN = 32
NUM_SPEAKERS = 4
SEQ_LEN = 8
SOS = 1
EOS = 2
GATE_PAD = 128          # 3 * HIDDEN = 96, padded to a full 128-lane tile
OUT_PAD = 128           # lane-dense output width; results live in [:MAX_LENGTH]


def _vmem_specs(n):
    return [pl.BlockSpec(memory_space=pltpu.MemorySpace.VMEM) for _ in range(n)]


def _sigmoid(x):
    return 1.0 / (1.0 + jnp.exp(-x))


# --------------- single fused kernel: encoder + cvt_hidden + greedy decode ---------------
def seq2seq_greedy_kernel(
        x_ref, spk_ref, sos_ref,
        ewi_ref, ewh_ref, ebi_ref, ebh_ref,
        cvtw_ref, cvtb_ref,
        demb_ref, dwiw_ref, dwis_ref, dwh_ref, dbi_ref, dbh_ref,
        wch_ref, wcc_ref, bc_ref, wo_ref, bo_ref,
        tok_ref, score_ref,
        enc_scratch, gx_scratch):
    H = HIDDEN
    T = x_ref.shape[0]

    def gru_combine(gx, gh, h):
        # gates packed [r | z | n] along the lane dim (first 3H of 128 lanes)
        r = _sigmoid(gx[:, 0:H] + gh[:, 0:H])
        z = _sigmoid(gx[:, H:2 * H] + gh[:, H:2 * H])
        n = jnp.tanh(gx[:, 2 * H:3 * H] + r * gh[:, 2 * H:3 * H])
        return (1.0 - z) * n + z * h

    # ---------------- encoder GRU ----------------
    # All input-gate activations for every time step in ONE MXU push.
    gx_scratch[...] = (jnp.dot(x_ref[...], ewi_ref[...],
                               preferred_element_type=jnp.float32) + ebi_ref[...])

    def enc_step(t, h):
        gx = gx_scratch[pl.ds(t, 1), :]                                      # (1, 3H pad)
        gh = jnp.dot(h, ewh_ref[...], preferred_element_type=jnp.float32) + ebh_ref[...]
        h_new = gru_combine(gx, gh, h)
        enc_scratch[pl.ds(t, 1), :] = h_new
        return h_new

    h_enc = lax.fori_loop(0, T, enc_step, jnp.zeros((1, H), jnp.float32),
                          unroll=True)

    # ---------------- cvt_hidden fused into the same kernel ----------------
    h = jnp.tanh(jnp.dot(h_enc, cvtw_ref[...], preferred_element_type=jnp.float32)
                 + cvtb_ref[...])

    enc_out = enc_scratch[...]                                               # (T, H) resident

    # speaker-embedding contribution to the decoder input gates is constant
    spk_gx = (jnp.dot(spk_ref[...], dwis_ref[...], preferred_element_type=jnp.float32)
              + dbi_ref[...])

    vocab_iota = lax.broadcasted_iota(jnp.int32, (1, VOCAB), 1)
    step_iota = lax.broadcasted_iota(jnp.int32, (1, OUT_PAD), 1)

    tok_init = jnp.zeros((1, OUT_PAD), jnp.int32)
    score_init = jnp.zeros((1, OUT_PAD), jnp.float32)
    onehot0 = sos_ref[...]                                                   # (1, V) one-hot SOS

    def dec_step(step, carry):
        h, onehot, toks, scores = carry
        # embedding lookup of the fed-back token via one-hot matmul (stays on MXU)
        word = jnp.dot(onehot, demb_ref[...], preferred_element_type=jnp.float32)   # (1, E)

        # GRU cell with fused gates (2 MXU pushes)
        gx = jnp.dot(word, dwiw_ref[...], preferred_element_type=jnp.float32) + spk_gx
        gh = jnp.dot(h, dwh_ref[...], preferred_element_type=jnp.float32) + dbh_ref[...]
        h_new = gru_combine(gx, gh, h)

        # Luong "dot" attention over encoder outputs (contract feature dims, no transpose)
        att_logits = lax.dot_general(h_new, enc_out, (((1,), (1,)), ((), ())),
                                     preferred_element_type=jnp.float32)     # (1, T)
        am = jnp.max(att_logits, axis=-1, keepdims=True)
        ae = jnp.exp(att_logits - am)
        attn = ae * pl.reciprocal(jnp.sum(ae, axis=-1, keepdims=True), approx=True)
        ctx = jnp.dot(attn, enc_out, preferred_element_type=jnp.float32)     # (1, H)

        # concat(h, ctx) @ Wc  ==  h @ Wc_h + ctx @ Wc_c  (split to avoid in-kernel concat)
        concat_out = jnp.tanh(
            jnp.dot(h_new, wch_ref[...], preferred_element_type=jnp.float32)
            + jnp.dot(ctx, wcc_ref[...], preferred_element_type=jnp.float32)
            + bc_ref[...])
        logits = (jnp.dot(concat_out, wo_ref[...], preferred_element_type=jnp.float32)
                  + bo_ref[...])                                             # (1, V)

        # greedy selection, numerically stable:
        #   max softmax prob = 1 / sum(exp(logits - max_logit)); argmax(probs) = argmax(logits)
        lmax = jnp.max(logits, axis=-1, keepdims=True)
        denom = jnp.sum(jnp.exp(logits - lmax), axis=-1, keepdims=True)
        best_prob = 1.0 / denom                                              # (1, 1)
        idx_f = jnp.min(jnp.where(logits >= lmax,
                                  vocab_iota.astype(jnp.float32),
                                  jnp.float32(VOCAB)),
                        axis=-1, keepdims=True)                              # first argmax
        idx = idx_f.astype(jnp.int32)                                        # (1, 1) int32
        onehot_next = (vocab_iota == idx).astype(jnp.float32)                # (1, V)

        sel = step_iota == step
        toks = jnp.where(sel, idx, toks)
        scores = jnp.where(sel, best_prob, scores)
        return h_new, onehot_next, toks, scores

    _, _, toks, scores = lax.fori_loop(0, MAX_LENGTH, dec_step,
                                       (h, onehot0, tok_init, score_init),
                                       unroll=True)
    tok_ref[...] = toks          # single lane-dense store after the loop
    score_ref[...] = scores


@jax.jit
def _greedy_forward(input_seq, speaker_id, sos, p):
    tokens = input_seq[:, 0]                                    # (T,)
    x_emb = p["enc_emb"][tokens]                                # one-time gather (T, EMB)
    spk_row = p["spk_emb"][speaker_id][None, :]                 # (1, SPK_EMB)
    sos_onehot = jax.nn.one_hot(sos, VOCAB, dtype=jnp.float32)[None, :]      # (1, V)
    T = x_emb.shape[0]
    toks, scores = pl.pallas_call(
        seq2seq_greedy_kernel,
        out_shape=(jax.ShapeDtypeStruct((1, OUT_PAD), jnp.int32),
                   jax.ShapeDtypeStruct((1, OUT_PAD), jnp.float32)),
        in_specs=_vmem_specs(20),
        out_specs=tuple(_vmem_specs(2)),
        scratch_shapes=[pltpu.VMEM((T, HIDDEN), jnp.float32),
                        pltpu.VMEM((T, GATE_PAD), jnp.float32)],
    )(x_emb, spk_row, sos_onehot,
      p["enc_wi"], p["enc_wh"], p["enc_bi"], p["enc_bh"],
      p["cvt_w"], p["cvt_b"],
      p["dec_emb"], p["dec_wi_word"], p["dec_wi_spk"], p["dec_wh"],
      p["dec_bi"], p["dec_bh"],
      p["wch"], p["wcc"], p["bc"], p["wo"], p["bo"])
    return toks[0, :MAX_LENGTH], scores[0, :MAX_LENGTH]


# ---------------- deterministic synthetic parameters ----------------
def init_params(key):
    keys = iter(jax.random.split(key, 40))

    def nrm(shape, scale=0.3):
        return (scale * jax.random.normal(next(keys), shape)).astype(jnp.float32)

    def pack_w(ws):                       # [r|z|n] along lanes, padded to 128
        w = jnp.concatenate(ws, axis=1)
        return jnp.pad(w, ((0, 0), (0, GATE_PAD - w.shape[1])))

    p = {}
    p["enc_emb"] = nrm((VOCAB, EMB))
    p["dec_emb"] = nrm((VOCAB, EMB))
    p["spk_emb"] = nrm((NUM_SPEAKERS, SPK_EMB))

    # encoder GRU (fused-gate layout)
    p["enc_wi"] = pack_w([nrm((EMB, HIDDEN)) for _ in range(3)])
    p["enc_wh"] = pack_w([nrm((HIDDEN, HIDDEN)) for _ in range(3)])
    p["enc_bi"] = pack_w([nrm((1, HIDDEN)) for _ in range(3)])
    p["enc_bh"] = pack_w([nrm((1, HIDDEN)) for _ in range(3)])

    # decoder GRU cell: input = word_emb || spk_emb, split into two packed weights
    p["dec_wi_word"] = pack_w([nrm((EMB, HIDDEN)) for _ in range(3)])
    p["dec_wi_spk"] = pack_w([nrm((SPK_EMB, HIDDEN)) for _ in range(3)])
    p["dec_wh"] = pack_w([nrm((HIDDEN, HIDDEN)) for _ in range(3)])
    p["dec_bi"] = pack_w([nrm((1, HIDDEN)) for _ in range(3)])
    p["dec_bh"] = pack_w([nrm((1, HIDDEN)) for _ in range(3)])

    p["cvt_w"] = nrm((HIDDEN, HIDDEN))
    p["cvt_b"] = nrm((1, HIDDEN))
    p["wch"] = nrm((HIDDEN, HIDDEN))
    p["wcc"] = nrm((HIDDEN, HIDDEN))
    p["bc"] = nrm((1, HIDDEN))
    p["wo"] = nrm((HIDDEN, VOCAB))
    p["bo"] = nrm((1, VOCAB))
    return p


# ---------------- module wrapper mirroring GreedySearchDecoder.forward ----------------
class PallasGreedySearchDecoder:
    def __init__(self, params):
        self.params = params

    def forward(self, input_seq, input_length, speaker_id, sos, eos):
        # TODO(synk): variable-length packed sequences (pack_padded_sequence) not modeled;
        # the full input_seq is encoded. `input_length`/`eos` are unused, matching the
        # greedy decoder which always emits MAX_LENGTH distributions.
        tokens, scores = _greedy_forward(input_seq, jnp.int32(speaker_id),
                                         jnp.int32(sos), self.params)
        return tokens, scores           # (MAX_LENGTH,), (MAX_LENGTH,)


if __name__ == "__main__":
    key = jax.random.PRNGKey(0)
    pkey, ikey = jax.random.split(key)
    params = init_params(pkey)

    # input sequence of token ids, shape (T, 1), plus its length (== T)
    input_seq = jax.random.randint(ikey, (SEQ_LEN, 1), 3, VOCAB, dtype=jnp.int32)
    input_length = jnp.array([SEQ_LEN], dtype=jnp.int32)

    decoder = PallasGreedySearchDecoder(params)
    tokens, scores = decoder.forward(input_seq, input_length,
                                     speaker_id=0, sos=SOS, eos=EOS)
    jax.block_until_ready((tokens, scores))
    print("KERNEL_OK")
</pallas_src>

<mosaic_0001>
module attributes {stable_mosaic.version = 11 : i64} {
  func.func @seq2seq_greedy_kernel(%arg0: memref<8x32xf32, #tpu.memory_space<vmem>>, %arg1: memref<1x32xf32, #tpu.memory_space<vmem>>, %arg2: memref<1x32xf32, #tpu.memory_space<vmem>>, %arg3: memref<32x128xf32, #tpu.memory_space<vmem>>, %arg4: memref<32x128xf32, #tpu.memory_space<vmem>>, %arg5: memref<1x128xf32, #tpu.memory_space<vmem>>, %arg6: memref<1x128xf32, #tpu.memory_space<vmem>>, %arg7: memref<32x32xf32, #tpu.memory_space<vmem>>, %arg8: memref<1x32xf32, #tpu.memory_space<vmem>>, %arg9: memref<32x32xf32, #tpu.memory_space<vmem>>, %arg10: memref<32x128xf32, #tpu.memory_space<vmem>>, %arg11: memref<32x128xf32, #tpu.memory_space<vmem>>, %arg12: memref<32x128xf32, #tpu.memory_space<vmem>>, %arg13: memref<1x128xf32, #tpu.memory_space<vmem>>, %arg14: memref<1x128xf32, #tpu.memory_space<vmem>>, %arg15: memref<32x32xf32, #tpu.memory_space<vmem>>, %arg16: memref<32x32xf32, #tpu.memory_space<vmem>>, %arg17: memref<1x32xf32, #tpu.memory_space<vmem>>, %arg18: memref<32x32xf32, #tpu.memory_space<vmem>>, %arg19: memref<1x32xf32, #tpu.memory_space<vmem>>, %arg20: memref<1x128xi32, #tpu.memory_space<vmem>>, %arg21: memref<1x128xf32, #tpu.memory_space<vmem>>, %arg22: memref<8x32xf32, #tpu.memory_space<vmem>>, %arg23: memref<8x128xf32, #tpu.memory_space<vmem>>) attributes {dimension_semantics = [], scalar_prefetch = 0 : i64, scratch_operands = 2 : i64, tpu.core_type = #tpu.core_type<tc>} {
    %c0 = arith.constant 0 : index
    %c0_0 = arith.constant 0 : index
    %0 = vector.load %arg0[%c0, %c0_0] : memref<8x32xf32, #tpu.memory_space<vmem>>, vector<8x32xf32>
    %c0_1 = arith.constant 0 : index
    %c0_2 = arith.constant 0 : index
    %1 = vector.load %arg3[%c0_1, %c0_2] : memref<32x128xf32, #tpu.memory_space<vmem>>, vector<32x128xf32>
    %cst = arith.constant dense<0.000000e+00> : vector<8x128xf32>
    %2 = tpu.matmul %0, %1, %cst {dimension_numbers = #tpu.dot_dimension_numbers<[1], [0], [0], [1], [0, 0, 1, 1], [], []>} : vector<8x32xf32>, vector<32x128xf32>, vector<8x128xf32> -> vector<8x128xf32>
    %c0_3 = arith.constant 0 : index
    %c0_4 = arith.constant 0 : index
    %3 = vector.load %arg5[%c0_3, %c0_4] : memref<1x128xf32, #tpu.memory_space<vmem>>, vector<1x128xf32>
    %4 = vector.broadcast %3 : vector<1x128xf32> to vector<8x128xf32>
    %5 = arith.addf %2, %4 : vector<8x128xf32>
    %c0_5 = arith.constant 0 : index
    %c0_6 = arith.constant 0 : index
    %6 = vector.load %arg23[%c0_5, %c0_6] : memref<8x128xf32, #tpu.memory_space<vmem>>, vector<8x128xf32>
    tpu.vector_store %arg23[%c0_5, %c0_6], %5 {strides = array<i32>} : memref<8x128xf32, #tpu.memory_space<vmem>>, vector<8x128xf32>,
    %cst_7 = arith.constant 0.000000e+00 : f32
    %7 = vector.broadcast %cst_7 : f32 to vector<1x32xf32>
    %c0_i32 = arith.constant 0 : i32
    %8 = arith.index_cast %c0_i32 : i32 to index
    %c0_8 = arith.constant 0 : index
    %9 = vector.load %arg23[%8, %c0_8] : memref<8x128xf32, #tpu.memory_space<vmem>>, vector<1x128xf32>
    %c0_9 = arith.constant 0 : index
    %c0_10 = arith.constant 0 : index
    %10 = vector.load %arg4[%c0_9, %c0_10] : memref<32x128xf32, #tpu.memory_space<vmem>>, vector<32x128xf32>
    %cst_11 = arith.constant dense<0.000000e+00> : vector<1x128xf32>
    %11 = tpu.matmul %7, %10, %cst_11 {dimension_numbers = #tpu.dot_dimension_numbers<[1], [0], [0], [1], [0, 0, 1, 1], [], []>} : vector<1x32xf32>, vector<32x128xf32>, vector<1x128xf32> -> vector<1x128xf32>
    %c0_12 = arith.constant 0 : index
    %c0_13 = arith.constant 0 : index
    %12 = vector.load %arg6[%c0_12, %c0_13] : memref<1x128xf32, #tpu.memory_space<vmem>>, vector<1x128xf32>
    %13 = arith.addf %11, %12 : vector<1x128xf32>
    %14 = vector.extract_strided_slice %9 {offsets = [0, 0], sizes = [1, 32], strides = [1, 1]} : vector<1x128xf32> to vector<1x32xf32>
    %15 = vector.extract_strided_slice %13 {offsets = [0, 0], sizes = [1, 32], strides = [1, 1]} : vector<1x128xf32> to vector<1x32xf32>
    %16 = arith.addf %14, %15 : vector<1x32xf32>
    %cst_14 = arith.constant 0.000000e+00 : f32
    %17 = vector.broadcast %cst_14 : f32 to vector<1x32xf32>
    %18 = arith.subf %17, %16 : vector<1x32xf32>
    %19 = math.exp %18 : vector<1x32xf32>
    %cst_15 = arith.constant 1.000000e+00 : f32
    %20 = vector.broadcast %cst_15 : f32 to vector<1x32xf32>
    %21 = arith.addf %20, %19 : vector<1x32xf32>
    %cst_16 = arith.constant 1.000000e+00 : f32
    %22 = vector.broadcast %cst_16 : f32 to vector<1x32xf32>
    %23 = arith.divf %22, %21 : vector<1x32xf32>
    %24 = vector.extract_strided_slice %9 {offsets = [0, 32], sizes = [1, 32], strides = [1, 1]} : vector<1x128xf32> to vector<1x32xf32>
    %25 = vector.extract_strided_slice %13 {offsets = [0, 32], sizes = [1, 32], strides = [1, 1]} : vector<1x128xf32> to vector<1x32xf32>
    %26 = arith.addf %24, %25 : vector<1x32xf32>
    %cst_17 = arith.constant 0.000000e+00 : f32
    %27 = vector.broadcast %cst_17 : f32 to vector<1x32xf32>
    %28 = arith.subf %27, %26 : vector<1x32xf32>
    %29 = math.exp %28 : vector<1x32xf32>
    %cst_18 = arith.constant 1.000000e+00 : f32
    %30 = vector.broadcast %cst_18 : f32 to vector<1x32xf32>
    %31 = arith.addf %30, %29 : vector<1x32xf32>
    %cst_19 = arith.constant 1.000000e+00 : f32
    %32 = vector.broadcast %cst_19 : f32 to vector<1x32xf32>
    %33 = arith.divf %32, %31 : vector<1x32xf32>
    %34 = vector.extract_strided_slice %9 {offsets = [0, 64], sizes = [1, 32], strides = [1, 1]} : vector<1x128xf32> to vector<1x32xf32>
    %35 = vector.extract_strided_slice %13 {offsets = [0, 64], sizes = [1, 32], strides = [1, 1]} : vector<1x128xf32> to vector<1x32xf32>
    %36 = arith.mulf %23, %35 : vector<1x32xf32>
    %37 = arith.addf %34, %36 : vector<1x32xf32>
    %38 = math.tanh %37 : vector<1x32xf32>
    %cst_20 = arith.constant 1.000000e+00 : f32
    %39 = vector.broadcast %cst_20 : f32 to vector<1x32xf32>
    %40 = arith.subf %39, %33 : vector<1x32xf32>
    %41 = arith.mulf %40, %38 : vector<1x32xf32>
    %42 = arith.mulf %33, %7 : vector<1x32xf32>
    %43 = arith.addf %41, %42 : vector<1x32xf32>
    %44 = arith.index_cast %c0_i32 : i32 to index
    %c0_21 = arith.constant 0 : index
    %45 = vector.load %arg22[%44, %c0_21] : memref<8x32xf32, #tpu.memory_space<vmem>>, vector<1x32xf32>
    tpu.vector_store %arg22[%44, %c0_21], %43 {strides = array<i32>} : memref<8x32xf32, #tpu.memory_space<vmem>>, vector<1x32xf32>,
    %c1_i32 = arith.constant 1 : i32
    %46 = arith.index_cast %c1_i32 : i32 to index
    %c0_22 = arith.constant 0 : index
    %47 = vector.load %arg23[%46, %c0_22] : memref<8x128xf32, #tpu.memory_space<vmem>>, vector<1x128xf32>
    %c0_23 = arith.constant 0 : index
    %c0_24 = arith.constant 0 : index
    %48 = vector.load %arg4[%c0_23, %c0_24] : memref<32x128xf32, #tpu.memory_space<vmem>>, vector<32x128xf32>
    %cst_25 = arith.constant dense<0.000000e+00> : vector<1x128xf32>
    %49 = tpu.matmul %43, %48, %cst_25 {dimension_numbers = #tpu.dot_dimension_numbers<[1], [0], [0], [1], [0, 0, 1, 1], [], []>} : vector<1x32xf32>, vector<32x128xf32>, vector<1x128xf32> -> vector<1x128xf32>
    %c0_26 = arith.constant 0 : index
    %c0_27 = arith.constant 0 : index
    %50 = vector.load %arg6[%c0_26, %c0_27] : memref<1x128xf32, #tpu.memory_space<vmem>>, vector<1x128xf32>
    %51 = arith.addf %49, %50 : vector<1x128xf32>
    %52 = vector.extract_strided_slice %47 {offsets = [0, 0], sizes = [1, 32], strides = [1, 1]} : vector<1x128xf32> to vector<1x32xf32>
    %53 = vector.extract_strided_slice %51 {offsets = [0, 0], sizes = [1, 32], strides = [1, 1]} : vector<1x128xf32> to vector<1x32xf32>
    %54 = arith.addf %52, %53 : vector<1x32xf32>
    %cst_28 = arith.constant 0.000000e+00 : f32
    %55 = vector.broadcast %cst_28 : f32 to vector<1x32xf32>
    %56 = arith.subf %55, %54 : vector<1x32xf32>
    %57 = math.exp %56 : vector<1x32xf32>
    %cst_29 = arith.constant 1.000000e+00 : f32
    %58 = vector.broadcast %cst_29 : f32 to vector<1x32xf32>
    %59 = arith.addf %58, %57 : vector<1x32xf32>
    %cst_30 = arith.constant 1.000000e+00 : f32
    %60 = vector.broadcast %cst_30 : f32 to vector<1x32xf32>
    %61 = arith.divf %60, %59 : vector<1x32xf32>
    %62 = vector.extract_strided_slice %47 {offsets = [0, 32], sizes = [1, 32], strides = [1, 1]} : vector<1x128xf32> to vector<1x32xf32>
    %63 = vector.extract_strided_slice %51 {offsets = [0, 32], sizes = [1, 32], strides = [1, 1]} : vector<1x128xf32> to vector<1x32xf32>
    %64 = arith.addf %62, %63 : vector<1x32xf32>
    %cst_31 = arith.constant 0.000000e+00 : f32
    %65 = vector.broadcast %cst_31 : f32 to vector<1x32xf32>
    %66 = arith.subf %65, %64 : vector<1x32xf32>
    %67 = math.exp %66 : vector<1x32xf32>
    %cst_32 = arith.constant 1.000000e+00 : f32
    %68 = vector.broadcast %cst_32 : f32 to vector<1x32xf32>
    %69 = arith.addf %68, %67 : vector<1x32xf32>
    %cst_33 = arith.constant 1.000000e+00 : f32
    %70 = vector.broadcast %cst_33 : f32 to vector<1x32xf32>
    %71 = arith.divf %70, %69 : vector<1x32xf32>
    %72 = vector.extract_strided_slice %47 {offsets = [0, 64], sizes = [1, 32], strides = [1, 1]} : vector<1x128xf32> to vector<1x32xf32>
    %73 = vector.extract_strided_slice %51 {offsets = [0, 64], sizes = [1, 32], strides = [1, 1]} : vector<1x128xf32> to vector<1x32xf32>
    %74 = arith.mulf %61, %73 : vector<1x32xf32>
    %75 = arith.addf %72, %74 : vector<1x32xf32>
    %76 = math.tanh %75 : vector<1x32xf32>
    %cst_34 = arith.constant 1.000000e+00 : f32
    %77 = vector.broadcast %cst_34 : f32 to vector<1x32xf32>
    %78 = arith.subf %77, %71 : vector<1x32xf32>
    %79 = arith.mulf %78, %76 : vector<1x32xf32>
    %80 = arith.mulf %71, %43 : vector<1x32xf32>
    %81 = arith.addf %79, %80 : vector<1x32xf32>
    %82 = arith.index_cast %c1_i32 : i32 to index
    %c0_35 = arith.constant 0 : index
    %83 = vector.load %arg22[%82, %c0_35] : memref<8x32xf32, #tpu.memory_space<vmem>>, vector<1x32xf32>
    tpu.vector_store %arg22[%82, %c0_35], %81 {strides = array<i32>} : memref<8x32xf32, #tpu.memory_space<vmem>>, vector<1x32xf32>,
    %c2_i32 = arith.constant 2 : i32
    %84 = arith.index_cast %c2_i32 : i32 to index
    %c0_36 = arith.constant 0 : index
    %85 = vector.load %arg23[%84, %c0_36] : memref<8x128xf32, #tpu.memory_space<vmem>>, vector<1x128xf32>
    %c0_37 = arith.constant 0 : index
    %c0_38 = arith.constant 0 : index
    %86 = vector.load %arg4[%c0_37, %c0_38] : memref<32x128xf32, #tpu.memory_space<vmem>>, vector<32x128xf32>
    %cst_39 = arith.constant dense<0.000000e+00> : vector<1x128xf32>
    %87 = tpu.matmul %81, %86, %cst_39 {dimension_numbers = #tpu.dot_dimension_numbers<[1], [0], [0], [1], [0, 0, 1, 1], [], []>} : vector<1x32xf32>, vector<32x128xf32>, vector<1x128xf32> -> vector<1x128xf32>
    %c0_40 = arith.constant 0 : index
    %c0_41 = arith.constant 0 : index
    %88 = vector.load %arg6[%c0_40, %c0_41] : memref<1x128xf32, #tpu.memory_space<vmem>>, vector<1x128xf32>
    %89 = arith.addf %87, %88 : vector<1x128xf32>
    %90 = vector.extract_strided_slice %85 {offsets = [0, 0], sizes = [1, 32], strides = [1, 1]} : vector<1x128xf32> to vector<1x32xf32>
    %91 = vector.extract_strided_slice %89 {offsets = [0, 0], sizes = [1, 32], strides = [1, 1]} : vector<1x128xf32> to vector<1x32xf32>
    %92 = arith.addf %90, %91 : vector<1x32xf32>
    %cst_42 = arith.constant 0.000000e+00 : f32
    %93 = vector.broadcast %cst_42 : f32 to vector<1x32xf32>
    %94 = arith.subf %93, %92 : vector<1x32xf32>
    %95 = math.exp %94 : vector<1x32xf32>
    %cst_43 = arith.constant 1.000000e+00 : f32
    %96 = vector.broadcast %cst_43 : f32 to vector<1x32xf32>
    %97 = arith.addf %96, %95 : vector<1x32xf32>
    %cst_44 = arith.constant 1.000000e+00 : f32
    %98 = vector.broadcast %cst_44 : f32 to vector<1x32xf32>
    %99 = arith.divf %98, %97 : vector<1x32xf32>
    %100 = vector.extract_strided_slice %85 {offsets = [0, 32], sizes = [1, 32], strides = [1, 1]} : vector<1x128xf32> to vector<1x32xf32>
    %101 = vector.extract_strided_slice %89 {offsets = [0, 32], sizes = [1, 32], strides = [1, 1]} : vector<1x128xf32> to vector<1x32xf32>
    %102 = arith.addf %100, %101 : vector<1x32xf32>
    %cst_45 = arith.constant 0.000000e+00 : f32
    %103 = vector.broadcast %cst_45 : f32 to vector<1x32xf32>
    %104 = arith.subf %103, %102 : vector<1x32xf32>
    %105 = math.exp %104 : vector<1x32xf32>
    %cst_46 = arith.constant 1.000000e+00 : f32
    %106 = vector.broadcast %cst_46 : f32 to vector<1x32xf32>
    %107 = arith.addf %106, %105 : vector<1x32xf32>
    %cst_47 = arith.constant 1.000000e+00 : f32
    %108 = vector.broadcast %cst_47 : f32 to vector<1x32xf32>
    %109 = arith.divf %108, %107 : vector<1x32xf32>
    %110 = vector.extract_strided_slice %85 {offsets = [0, 64], sizes = [1, 32], strides = [1, 1]} : vector<1x128xf32> to vector<1x32xf32>
    %111 = vector.extract_strided_slice %89 {offsets = [0, 64], sizes = [1, 32], strides = [1, 1]} : vector<1x128xf32> to vector<1x32xf32>
    %112 = arith.mulf %99, %111 : vector<1x32xf32>
    %113 = arith.addf %110, %112 : vector<1x32xf32>
    %114 = math.tanh %113 : vector<1x32xf32>
    %cst_48 = arith.constant 1.000000e+00 : f32
    %115 = vector.broadcast %cst_48 : f32 to vector<1x32xf32>
    %116 = arith.subf %115, %109 : vector<1x32xf32>
    %117 = arith.mulf %116, %114 : vector<1x32xf32>
    %118 = arith.mulf %109, %81 : vector<1x32xf32>
    %119 = arith.addf %117, %118 : vector<1x32xf32>
    %120 = arith.index_cast %c2_i32 : i32 to index
    %c0_49 = arith.constant 0 : index
    %121 = vector.load %arg22[%120, %c0_49] : memref<8x32xf32, #tpu.memory_space<vmem>>, vector<1x32xf32>
    tpu.vector_store %arg22[%120, %c0_49], %119 {strides = array<i32>} : memref<8x32xf32, #tpu.memory_space<vmem>>, vector<1x32xf32>,
    %c3_i32 = arith.constant 3 : i32
    %122 = arith.index_cast %c3_i32 : i32 to index
    %c0_50 = arith.constant 0 : index
    %123 = vector.load %arg23[%122, %c0_50] : memref<8x128xf32, #tpu.memory_space<vmem>>, vector<1x128xf32>
    %c0_51 = arith.constant 0 : index
    %c0_52 = arith.constant 0 : index
    %124 = vector.load %arg4[%c0_51, %c0_52] : memref<32x128xf32, #tpu.memory_space<vmem>>, vector<32x128xf32>
    %cst_53 = arith.constant dense<0.000000e+00> : vector<1x128xf32>
    %125 = tpu.matmul %119, %124, %cst_53 {dimension_numbers = #tpu.dot_dimension_numbers<[1], [0], [0], [1], [0, 0, 1, 1], [], []>} : vector<1x32xf32>, vector<32x128xf32>, vector<1x128xf32> -> vector<1x128xf32>
    %c0_54 = arith.constant 0 : index
    %c0_55 = arith.constant 0 : index
    %126 = vector.load %arg6[%c0_54, %c0_55] : memref<1x128xf32, #tpu.memory_space<vmem>>, vector<1x128xf32>
    %127 = arith.addf %125, %126 : vector<1x128xf32>
    %128 = vector.extract_strided_slice %123 {offsets = [0, 0], sizes = [1, 32], strides = [1, 1]} : vector<1x128xf32> to vector<1x32xf32>
    %129 = vector.extract_strided_slice %127 {offsets = [0, 0], sizes = [1, 32], strides = [1, 1]} : vector<1x128xf32> to vector<1x32xf32>
    %130 = arith.addf %128, %129 : vector<1x32xf32>
    %cst_56 = arith.constant 0.000000e+00 : f32
    %131 = vector.broadcast %cst_56 : f32 to vector<1x32xf32>
    %132 = arith.subf %131, %130 : vector<1x32xf32>
    %133 = math.exp %132 : vector<1x32xf32>
    %cst_57 = arith.constant 1.000000e+00 : f32
    %134 = vector.broadcast %cst_57 : f32 to vector<1x32xf32>
    %135 = arith.addf %134, %133 : vector<1x32xf32>
    %cst_58 = arith.constant 1.000000e+00 : f32
    %136 = vector.broadcast %cst_58 : f32 to vector<1x32xf32>
    %137 = arith.divf %136, %135 : vector<1x32xf32>
    %138 = vector.extract_strided_slice %123 {offsets = [0, 32], sizes = [1, 32], strides = [1, 1]} : vector<1x128xf32> to vector<1x32xf32>
    %139 = vector.extract_strided_slice %127 {offsets = [0, 32], sizes = [1, 32], strides = [1, 1]} : vector<1x128xf32> to vector<1x32xf32>
    %140 = arith.addf %138, %139 : vector<1x32xf32>
    %cst_59 = arith.constant 0.000000e+00 : f32
    %141 = vector.broadcast %cst_59 : f32 to vector<1x32xf32>
    %142 = arith.subf %141, %140 : vector<1x32xf32>
    %143 = math.exp %142 : vector<1x32xf32>
    %cst_60 = arith.constant 1.000000e+00 : f32
    %144 = vector.broadcast %cst_60 : f32 to vector<1x32xf32>
    %145 = arith.addf %144, %143 : vector<1x32xf32>
    %cst_61 = arith.constant 1.000000e+00 : f32
    %146 = vector.broadcast %cst_61 : f32 to vector<1x32xf32>
    %147 = arith.divf %146, %145 : vector<1x32xf32>
    %148 = vector.extract_strided_slice %123 {offsets = [0, 64], sizes = [1, 32], strides = [1, 1]} : vector<1x128xf32> to vector<1x32xf32>
    %149 = vector.extract_strided_slice %127 {offsets = [0, 64], sizes = [1, 32], strides = [1, 1]} : vector<1x128xf32> to vector<1x32xf32>
    %150 = arith.mulf %137, %149 : vector<1x32xf32>
    %151 = arith.addf %148, %150 : vector<1x32xf32>
    %152 = math.tanh %151 : vector<1x32xf32>
    %cst_62 = arith.constant 1.000000e+00 : f32
    %153 = vector.broadcast %cst_62 : f32 to vector<1x32xf32>
    %154 = arith.subf %153, %147 : vector<1x32xf32>
    %155 = arith.mulf %154, %152 : vector<1x32xf32>
    %156 = arith.mulf %147, %119 : vector<1x32xf32>
    %157 = arith.addf %155, %156 : vector<1x32xf32>
    %158 = arith.index_cast %c3_i32 : i32 to index
    %c0_63 = arith.constant 0 : index
    %159 = vector.load %arg22[%158, %c0_63] : memref<8x32xf32, #tpu.memory_space<vmem>>, vector<1x32xf32>
    tpu.vector_store %arg22[%158, %c0_63], %157 {strides = array<i32>} : memref<8x32xf32, #tpu.memory_space<vmem>>, vector<1x32xf32>,
    %c4_i32 = arith.constant 4 : i32
    %160 = arith.index_cast %c4_i32 : i32 to index
    %c0_64 = arith.constant 0 : index
    %161 = vector.load %arg23[%160, %c0_64] : memref<8x128xf32, #tpu.memory_space<vmem>>, vector<1x128xf32>
    %c0_65 = arith.constant 0 : index
    %c0_66 = arith.constant 0 : index
    %162 = vector.load %arg4[%c0_65, %c0_66] : memref<32x128xf32, #tpu.memory_space<vmem>>, vector<32x128xf32>
    %cst_67 = arith.constant dense<0.000000e+00> : vector<1x128xf32>
    %163 = tpu.matmul %157, %162, %cst_67 {dimension_numbers = #tpu.dot_dimension_numbers<[1], [0], [0], [1], [0, 0, 1, 1], [], []>} : vector<1x32xf32>, vector<32x128xf32>, vector<1x128xf32> -> vector<1x128xf32>
    %c0_68 = arith.constant 0 : index
    %c0_69 = arith.constant 0 : index
    %164 = vector.load %arg6[%c0_68, %c0_69] : memref<1x128xf32, #tpu.memory_space<vmem>>, vector<1x128xf32>
    %165 = arith.addf %163, %164 : vector<1x128xf32>
    %166 = vector.extract_strided_slice %161 {offsets = [0, 0], sizes = [1, 32], strides = [1, 1]} : vector<1x128xf32> to vector<1x32xf32>
    %167 = vector.extract_strided_slice %165 {offsets = [0, 0], sizes = [1, 32], strides = [1, 1]} : vector<1x128xf32> to vector<1x32xf32>
    %168 = arith.addf %166, %167 : vector<1x32xf32>
    %cst_70 = arith.constant 0.000000e+00 : f32
    %169 = vector.broadcast %cst_70 : f32 to vector<1x32xf32>
    %170 = arith.subf %169, %168 : vector<1x32xf32>
    %171 = math.exp %170 : vector<1x32xf32>
    %cst_71 = arith.constant 1.000000e+00 : f32
    %172 = vector.broadcast %cst_71 : f32 to vector<1x32xf32>
    %173 = arith.addf %172, %171 : vector<1x32xf32>
    %cst_72 = arith.constant 1.000000e+00 : f32
    %174 = vector.broadcast %cst_72 : f32 to vector<1x32xf32>
    %175 = arith.divf %174, %173 : vector<1x32xf32>
    %176 = vector.extract_strided_slice %161 {offsets = [0, 32], sizes = [1, 32], strides = [1, 1]} : vector<1x128xf32> to vector<1x32xf32>
    %177 = vector.extract_strided_slice %165 {offsets = [0, 32], sizes = [1, 32], strides = [1, 1]} : vector<1x128xf32> to vector<1x32xf32>
    %178 = arith.addf %176, %177 : vector<1x32xf32>
    %cst_73 = arith.constant 0.000000e+00 : f32
    %179 = vector.broadcast %cst_73 : f32 to vector<1x32xf32>
    %180 = arith.subf %179, %178 : vector<1x32xf32>
    %181 = math.exp %180 : vector<1x32xf32>
    %cst_74 = arith.constant 1.000000e+00 : f32
    %182 = vector.broadcast %cst_74 : f32 to vector<1x32xf32>
    %183 = arith.addf %182, %181 : vector<1x32xf32>
    %cst_75 = arith.constant 1.000000e+00 : f32
    %184 = vector.broadcast %cst_75 : f32 to vector<1x32xf32>
    %185 = arith.divf %184, %183 : vector<1x32xf32>
    %186 = vector.extract_strided_slice %161 {offsets = [0, 64], sizes = [1, 32], strides = [1, 1]} : vector<1x128xf32> to vector<1x32xf32>
    %187 = vector.extract_strided_slice %165 {offsets = [0, 64], sizes = [1, 32], strides = [1, 1]} : vector<1x128xf32> to vector<1x32xf32>
    %188 = arith.mulf %175, %187 : vector<1x32xf32>
    %189 = arith.addf %186, %188 : vector<1x32xf32>
    %190 = math.tanh %189 : vector<1x32xf32>
    %cst_76 = arith.constant 1.000000e+00 : f32
    %191 = vector.broadcast %cst_76 : f32 to vector<1x32xf32>
    %192 = arith.subf %191, %185 : vector<1x32xf32>
    %193 = arith.mulf %192, %190 : vector<1x32xf32>
    %194 = arith.mulf %185, %157 : vector<1x32xf32>
    %195 = arith.addf %193, %194 : vector<1x32xf32>
    %196 = arith.index_cast %c4_i32 : i32 to index
    %c0_77 = arith.constant 0 : index
    %197 = vector.load %arg22[%196, %c0_77] : memref<8x32xf32, #tpu.memory_space<vmem>>, vector<1x32xf32>
    tpu.vector_store %arg22[%196, %c0_77], %195 {strides = array<i32>} : memref<8x32xf32, #tpu.memory_space<vmem>>, vector<1x32xf32>,
    %c5_i32 = arith.constant 5 : i32
    %198 = arith.index_cast %c5_i32 : i32 to index
    %c0_78 = arith.constant 0 : index
    %199 = vector.load %arg23[%198, %c0_78] : memref<8x128xf32, #tpu.memory_space<vmem>>, vector<1x128xf32>
    %c0_79 = arith.constant 0 : index
    %c0_80 = arith.constant 0 : index
    %200 = vector.load %arg4[%c0_79, %c0_80] : memref<32x128xf32, #tpu.memory_space<vmem>>, vector<32x128xf32>
    %cst_81 = arith.constant dense<0.000000e+00> : vector<1x128xf32>
    %201 = tpu.matmul %195, %200, %cst_81 {dimension_numbers = #tpu.dot_dimension_numbers<[1], [0], [0], [1], [0, 0, 1, 1], [], []>} : vector<1x32xf32>, vector<32x128xf32>, vector<1x128xf32> -> vector<1x128xf32>
    %c0_82 = arith.constant 0 : index
    %c0_83 = arith.constant 0 : index
    %202 = vector.load %arg6[%c0_82, %c0_83] : memref<1x128xf32, #tpu.memory_space<vmem>>, vector<1x128xf32>
    %203 = arith.addf %201, %202 : vector<1x128xf32>
    %204 = vector.extract_strided_slice %199 {offsets = [0, 0], sizes = [1, 32], strides = [1, 1]} : vector<1x128xf32> to vector<1x32xf32>
    %205 = vector.extract_strided_slice %203 {offsets = [0, 0], sizes = [1, 32], strides = [1, 1]} : vector<1x128xf32> to vector<1x32xf32>
    %206 = arith.addf %204, %205 : vector<1x32xf32>
    %cst_84 = arith.constant 0.000000e+00 : f32
    %207 = vector.broadcast %cst_84 : f32 to vector<1x32xf32>
    %208 = arith.subf %207, %206 : vector<1x32xf32>
    %209 = math.exp %208 : vector<1x32xf32>
    %cst_85 = arith.constant 1.000000e+00 : f32
    %210 = vector.broadcast %cst_85 : f32 to vector<1x32xf32>
    %211 = arith.addf %210, %209 : vector<1x32xf32>
    %cst_86 = arith.constant 1.000000e+00 : f32
    %212 = vector.broadcast %cst_86 : f32 to vector<1x32xf32>
    %213 = arith.divf %212, %211 : vector<1x32xf32>
    %214 = vector.extract_strided_slice %199 {offsets = [0, 32], sizes = [1, 32], strides = [1, 1]} : vector<1x128xf32> to vector<1x32xf32>
    %215 = vector.extract_strided_slice %203 {offsets = [0, 32], sizes = [1, 32], strides = [1, 1]} : vector<1x128xf32> to vector<1x32xf32>
    %216 = arith.addf %214, %215 : vector<1x32xf32>
    %cst_87 = arith.constant 0.000000e+00 : f32
    %217 = vector.broadcast %cst_87 : f32 to vector<1x32xf32>
    %218 = arith.subf %217, %216 : vector<1x32xf32>
    %219 = math.exp %218 : vector<1x32xf32>
    %cst_88 = arith.constant 1.000000e+00 : f32
    %220 = vector.broadcast %cst_88 : f32 to vector<1x32xf32>
    %221 = arith.addf %220, %219 : vector<1x32xf32>
    %cst_89 = arith.constant 1.000000e+00 : f32
    %222 = vector.broadcast %cst_89 : f32 to vector<1x32xf32>
    %223 = arith.divf %222, %221 : vector<1x32xf32>
    %224 = vector.extract_strided_slice %199 {offsets = [0, 64], sizes = [1, 32], strides = [1, 1]} : vector<1x128xf32> to vector<1x32xf32>
    %225 = vector.extract_strided_slice %203 {offsets = [0, 64], sizes = [1, 32], strides = [1, 1]} : vector<1x128xf32> to vector<1x32xf32>
    %226 = arith.mulf %213, %225 : vector<1x32xf32>
    %227 = arith.addf %224, %226 : vector<1x32xf32>
    %228 = math.tanh %227 : vector<1x32xf32>
    %cst_90 = arith.constant 1.000000e+00 : f32
    %229 = vector.broadcast %cst_90 : f32 to vector<1x32xf32>
    %230 = arith.subf %229, %223 : vector<1x32xf32>
    %231 = arith.mulf %230, %228 : vector<1x32xf32>
    %232 = arith.mulf %223, %195 : vector<1x32xf32>
    %233 = arith.addf %231, %232 : vector<1x32xf32>
    %234 = arith.index_cast %c5_i32 : i32 to index
    %c0_91 = arith.constant 0 : index
    %235 = vector.load %arg22[%234, %c0_91] : memref<8x32xf32, #tpu.memory_space<vmem>>, vector<1x32xf32>
    tpu.vector_store %arg22[%234, %c0_91], %233 {strides = array<i32>} : memref<8x32xf32, #tpu.memory_space<vmem>>, vector<1x32xf32>,
    %c6_i32 = arith.constant 6 : i32
    %236 = arith.index_cast %c6_i32 : i32 to index
    %c0_92 = arith.constant 0 : index
    %237 = vector.load %arg23[%236, %c0_92] : memref<8x128xf32, #tpu.memory_space<vmem>>, vector<1x128xf32>
    %c0_93 = arith.constant 0 : index
    %c0_94 = arith.constant 0 : index
    %238 = vector.load %arg4[%c0_93, %c0_94] : memref<32x128xf32, #tpu.memory_space<vmem>>, vector<32x128xf32>
    %cst_95 = arith.constant dense<0.000000e+00> : vector<1x128xf32>
    %239 = tpu.matmul %233, %238, %cst_95 {dimension_numbers = #tpu.dot_dimension_numbers<[1], [0], [0], [1], [0, 0, 1, 1], [], []>} : vector<1x32xf32>, vector<32x128xf32>, vector<1x128xf32> -> vector<1x128xf32>
    %c0_96 = arith.constant 0 : index
    %c0_97 = arith.constant 0 : index
    %240 = vector.load %arg6[%c0_96, %c0_97] : memref<1x128xf32, #tpu.memory_space<vmem>>, vector<1x128xf32>
    %241 = arith.addf %239, %240 : vector<1x128xf32>
    %242 = vector.extract_strided_slice %237 {offsets = [0, 0], sizes = [1, 32], strides = [1, 1]} : vector<1x128xf32> to vector<1x32xf32>
    %243 = vector.extract_strided_slice %241 {offsets = [0, 0], sizes = [1, 32], strides = [1, 1]} : vector<1x128xf32> to vector<1x32xf32>
    %244 = arith.addf %242, %243 : vector<1x32xf32>
    %cst_98 = arith.constant 0.000000e+00 : f32
    %245 = vector.broadcast %cst_98 : f32 to vector<1x32xf32>
    %246 = arith.subf %245, %244 : vector<1x32xf32>
    %247 = math.exp %246 : vector<1x32xf32>
    %cst_99 = arith.constant 1.000000e+00 : f32
    %248 = vector.broadcast %cst_99 : f32 to vector<1x32xf32>
    %249 = arith.addf %248, %247 : vector<1x32xf32>
    %cst_100 = arith.constant 1.000000e+00 : f32
    %250 = vector.broadcast %cst_100 : f32 to vector<1x32xf32>
    %251 = arith.divf %250, %249 : vector<1x32xf32>
    %252 = vector.extract_strided_slice %237 {offsets = [0, 32], sizes = [1, 32], strides = [1, 1]} : vector<1x128xf32> to vector<1x32xf32>
    %253 = vector.extract_strided_slice %241 {offsets = [0, 32], sizes = [1, 32], strides = [1, 1]} : vector<1x128xf32> to vector<1x32xf32>
    %254 = arith.addf %252, %253 : vector<1x32xf32>
    %cst_101 = arith.constant 0.000000e+00 : f32
    %255 = vector.broadcast %cst_101 : f32 to vector<1x32xf32>
    %256 = arith.subf %255, %254 : vector<1x32xf32>
    %257 = math.exp %256 : vector<1x32xf32>
    %cst_102 = arith.constant 1.000000e+00 : f32
    %258 = vector.broadcast %cst_102 : f32 to vector<1x32xf32>
    %259 = arith.addf %258, %257 : vector<1x32xf32>
    %cst_103 = arith.constant 1.000000e+00 : f32
    %260 = vector.broadcast %cst_103 : f32 to vector<1x32xf32>
    %261 = arith.divf %260, %259 : vector<1x32xf32>
    %262 = vector.extract_strided_slice %237 {offsets = [0, 64], sizes = [1, 32], strides = [1, 1]} : vector<1x128xf32> to vector<1x32xf32>
    %263 = vector.extract_strided_slice %241 {offsets = [0, 64], sizes = [1, 32], strides = [1, 1]} : vector<1x128xf32> to vector<1x32xf32>
    %264 = arith.mulf %251, %263 : vector<1x32xf32>
    %265 = arith.addf %262, %264 : vector<1x32xf32>
    %266 = math.tanh %265 : vector<1x32xf32>
    %cst_104 = arith.constant 1.000000e+00 : f32
    %267 = vector.broadcast %cst_104 : f32 to vector<1x32xf32>
    %268 = arith.subf %267, %261 : vector<1x32xf32>
    %269 = arith.mulf %268, %266 : vector<1x32xf32>
    %270 = arith.mulf %261, %233 : vector<1x32xf32>
    %271 = arith.addf %269, %270 : vector<1x32xf32>
    %272 = arith.index_cast %c6_i32 : i32 to index
    %c0_105 = arith.constant 0 : index
    %273 = vector.load %arg22[%272, %c0_105] : memref<8x32xf32, #tpu.memory_space<vmem>>, vector<1x32xf32>
    tpu.vector_store %arg22[%272, %c0_105], %271 {strides = array<i32>} : memref<8x32xf32, #tpu.memory_space<vmem>>, vector<1x32xf32>,
    %c7_i32 = arith.constant 7 : i32
    %274 = arith.index_cast %c7_i32 : i32 to index
    %c0_106 = arith.constant 0 : index
    %275 = vector.load %arg23[%274, %c0_106] : memref<8x128xf32, #tpu.memory_space<vmem>>, vector<1x128xf32>
    %c0_107 = arith.constant 0 : index
    %c0_108 = arith.constant 0 : index
    %276 = vector.load %arg4[%c0_107, %c0_108] : memref<32x128xf32, #tpu.memory_space<vmem>>, vector<32x128xf32>
    %cst_109 = arith.constant dense<0.000000e+00> : vector<1x128xf32>
    %277 = tpu.matmul %271, %276, %cst_109 {dimension_numbers = #tpu.dot_dimension_numbers<[1], [0], [0], [1], [0, 0, 1, 1], [], []>} : vector<1x32xf32>, vector<32x128xf32>, vector<1x128xf32> -> vector<1x128xf32>
    %c0_110 = arith.constant 0 : index
    %c0_111 = arith.constant 0 : index
    %278 = vector.load %arg6[%c0_110, %c0_111] : memref<1x128xf32, #tpu.memory_space<vmem>>, vector<1x128xf32>
    %279 = arith.addf %277, %278 : vector<1x128xf32>
    %280 = vector.extract_strided_slice %275 {offsets = [0, 0], sizes = [1, 32], strides = [1, 1]} : vector<1x128xf32> to vector<1x32xf32>
    %281 = vector.extract_strided_slice %279 {offsets = [0, 0], sizes = [1, 32], strides = [1, 1]} : vector<1x128xf32> to vector<1x32xf32>
    %282 = arith.addf %280, %281 : vector<1x32xf32>
    %cst_112 = arith.constant 0.000000e+00 : f32
    %283 = vector.broadcast %cst_112 : f32 to vector<1x32xf32>
    %284 = arith.subf %283, %282 : vector<1x32xf32>
    %285 = math.exp %284 : vector<1x32xf32>
    %cst_113 = arith.constant 1.000000e+00 : f32
    %286 = vector.broadcast %cst_113 : f32 to vector<1x32xf32>
    %287 = arith.addf %286, %285 : vector<1x32xf32>
    %cst_114 = arith.constant 1.000000e+00 : f32
    %288 = vector.broadcast %cst_114 : f32 to vector<1x32xf32>
    %289 = arith.divf %288, %287 : vector<1x32xf32>
    %290 = vector.extract_strided_slice %275 {offsets = [0, 32], sizes = [1, 32], strides = [1, 1]} : vector<1x128xf32> to vector<1x32xf32>
    %291 = vector.extract_strided_slice %279 {offsets = [0, 32], sizes = [1, 32], strides = [1, 1]} : vector<1x128xf32> to vector<1x32xf32>
    %292 = arith.addf %290, %291 : vector<1x32xf32>
    %cst_115 = arith.constant 0.000000e+00 : f32
    %293 = vector.broadcast %cst_115 : f32 to vector<1x32xf32>
    %294 = arith.subf %293, %292 : vector<1x32xf32>
    %295 = math.exp %294 : vector<1x32xf32>
    %cst_116 = arith.constant 1.000000e+00 : f32
    %296 = vector.broadcast %cst_116 : f32 to vector<1x32xf32>
    %297 = arith.addf %296, %295 : vector<1x32xf32>
    %cst_117 = arith.constant 1.000000e+00 : f32
    %298 = vector.broadcast %cst_117 : f32 to vector<1x32xf32>
    %299 = arith.divf %298, %297 : vector<1x32xf32>
    %300 = vector.extract_strided_slice %275 {offsets = [0, 64], sizes = [1, 32], strides = [1, 1]} : vector<1x128xf32> to vector<1x32xf32>
    %301 = vector.extract_strided_slice %279 {offsets = [0, 64], sizes = [1, 32], strides = [1, 1]} : vector<1x128xf32> to vector<1x32xf32>
    %302 = arith.mulf %289, %301 : vector<1x32xf32>
    %303 = arith.addf %300, %302 : vector<1x32xf32>
    %304 = math.tanh %303 : vector<1x32xf32>
    %cst_118 = arith.constant 1.000000e+00 : f32
    %305 = vector.broadcast %cst_118 : f32 to vector<1x32xf32>
    %306 = arith.subf %305, %299 : vector<1x32xf32>
    %307 = arith.mulf %306, %304 : vector<1x32xf32>
    %308 = arith.mulf %299, %271 : vector<1x32xf32>
    %309 = arith.addf %307, %308 : vector<1x32xf32>
    %310 = arith.index_cast %c7_i32 : i32 to index
    %c0_119 = arith.constant 0 : index
    %311 = vector.load %arg22[%310, %c0_119] : memref<8x32xf32, #tpu.memory_space<vmem>>, vector<1x32xf32>
    tpu.vector_store %arg22[%310, %c0_119], %309 {strides = array<i32>} : memref<8x32xf32, #tpu.memory_space<vmem>>, vector<1x32xf32>,
    %c8_i32 = arith.constant 8 : i32
    %c0_120 = arith.constant 0 : index
    %c0_121 = arith.constant 0 : index
    %312 = vector.load %arg7[%c0_120, %c0_121] : memref<32x32xf32, #tpu.memory_space<vmem>>, vector<32x32xf32>
    %cst_122 = arith.constant dense<0.000000e+00> : vector<1x32xf32>
    %313 = tpu.matmul %309, %312, %cst_122 {dimension_numbers = #tpu.dot_dimension_numbers<[1], [0], [0], [1], [0, 0, 1, 1], [], []>} : vector<1x32xf32>, vector<32x32xf32>, vector<1x32xf32> -> vector<1x32xf32>
    %c0_123 = arith.constant 0 : index
    %c0_124 = arith.constant 0 : index
    %314 = vector.load %arg8[%c0_123, %c0_124] : memref<1x32xf32, #tpu.memory_space<vmem>>, vector<1x32xf32>
    %315 = arith.addf %313, %314 : vector<1x32xf32>
    %316 = math.tanh %315 : vector<1x32xf32>
    %c0_125 = arith.constant 0 : index
    %c0_126 = arith.constant 0 : index
    %317 = vector.load %arg22[%c0_125, %c0_126] : memref<8x32xf32, #tpu.memory_space<vmem>>, vector<8x32xf32>
    %c0_127 = arith.constant 0 : index
    %c0_128 = arith.constant 0 : index
    %318 = vector.load %arg1[%c0_127, %c0_128] : memref<1x32xf32, #tpu.memory_space<vmem>>, vector<1x32xf32>
    %c0_129 = arith.constant 0 : index
    %c0_130 = arith.constant 0 : index
    %319 = vector.load %arg11[%c0_129, %c0_130] : memref<32x128xf32, #tpu.memory_space<vmem>>, vector<32x128xf32>
    %cst_131 = arith.constant dense<0.000000e+00> : vector<1x128xf32>
    %320 = tpu.matmul %318, %319, %cst_131 {dimension_numbers = #tpu.dot_dimension_numbers<[1], [0], [0], [1], [0, 0, 1, 1], [], []>} : vector<1x32xf32>, vector<32x128xf32>, vector<1x128xf32> -> vector<1x128xf32>
    %c0_132 = arith.constant 0 : index
    %c0_133 = arith.constant 0 : index
    %321 = vector.load %arg13[%c0_132, %c0_133] : memref<1x128xf32, #tpu.memory_space<vmem>>, vector<1x128xf32>
    %322 = arith.addf %320, %321 : vector<1x128xf32>
    %323 = tpu.iota {dimensions = array<i32: 1>} : vector<1x32xi32>
    %324 = tpu.iota {dimensions = array<i32: 1>} : vector<1x128xi32>
    %c0_i32_134 = arith.constant 0 : i32
    %325 = vector.broadcast %c0_i32_134 : i32 to vector<1x128xi32>
    %cst_135 = arith.constant 0.000000e+00 : f32
    %326 = vector.broadcast %cst_135 : f32 to vector<1x128xf32>
    %c0_136 = arith.constant 0 : index
    %c0_137 = arith.constant 0 : index
    %327 = vector.load %arg2[%c0_136, %c0_137] : memref<1x32xf32, #tpu.memory_space<vmem>>, vector<1x32xf32>
    %c0_i32_138 = arith.constant 0 : i32
    %c0_139 = arith.constant 0 : index
    %c0_140 = arith.constant 0 : index
    %328 = vector.load %arg9[%c0_139, %c0_140] : memref<32x32xf32, #tpu.memory_space<vmem>>, vector<32x32xf32>
    %cst_141 = arith.constant dense<0.000000e+00> : vector<1x32xf32>
    %329 = tpu.matmul %327, %328, %cst_141 {dimension_numbers = #tpu.dot_dimension_numbers<[1], [0], [0], [1], [0, 0, 1, 1], [], []>} : vector<1x32xf32>, vector<32x32xf32>, vector<1x32xf32> -> vector<1x32xf32>
    %c0_142 = arith.constant 0 : index
    %c0_143 = arith.constant 0 : index
    %330 = vector.load %arg10[%c0_142, %c0_143] : memref<32x128xf32, #tpu.memory_space<vmem>>, vector<32x128xf32>
    %cst_144 = arith.constant dense<0.000000e+00> : vector<1x128xf32>
    %331 = tpu.matmul %329, %330, %cst_144 {dimension_numbers = #tpu.dot_dimension_numbers<[1], [0], [0], [1], [0, 0, 1, 1], [], []>} : vector<1x32xf32>, vector<32x128xf32>, vector<1x128xf32> -> vector<1x128xf32>
    %332 = arith.addf %331, %322 : vector<1x128xf32>
    %c0_145 = arith.constant 0 : index
    %c0_146 = arith.constant 0 : index
    %333 = vector.load %arg12[%c0_145, %c0_146] : memref<32x128xf32, #tpu.memory_space<vmem>>, vector<32x128xf32>
    %cst_147 = arith.constant dense<0.000000e+00> : vector<1x128xf32>
    %334 = tpu.matmul %316, %333, %cst_147 {dimension_numbers = #tpu.dot_dimension_numbers<[1], [0], [0], [1], [0, 0, 1, 1], [], []>} : vector<1x32xf32>, vector<32x128xf32>, vector<1x128xf32> -> vector<1x128xf32>
    %c0_148 = arith.constant 0 : index
    %c0_149 = arith.constant 0 : index
    %335 = vector.load %arg14[%c0_148, %c0_149] : memref<1x128xf32, #tpu.memory_space<vmem>>, vector<1x128xf32>
    %336 = arith.addf %334, %335 : vector<1x128xf32>
    %337 = vector.extract_strided_slice %332 {offsets = [0, 0], sizes = [1, 32], strides = [1, 1]} : vector<1x128xf32> to vector<1x32xf32>
    %338 = vector.extract_strided_slice %336 {offsets = [0, 0], sizes = [1, 32], strides = [1, 1]} : vector<1x128xf32> to vector<1x32xf32>
    %339 = arith.addf %337, %338 : vector<1x32xf32>
    %cst_150 = arith.constant 0.000000e+00 : f32
    %340 = vector.broadcast %cst_150 : f32 to vector<1x32xf32>
    %341 = arith.subf %340, %339 : vector<1x32xf32>
    %342 = math.exp %341 : vector<1x32xf32>
    %cst_151 = arith.constant 1.000000e+00 : f32
    %343 = vector.broadcast %cst_151 : f32 to vector<1x32xf32>
    %344 = arith.addf %343, %342 : vector<1x32xf32>
    %cst_152 = arith.constant 1.000000e+00 : f32
    %345 = vector.broadcast %cst_152 : f32 to vector<1x32xf32>
    %346 = arith.divf %345, %344 : vector<1x32xf32>
    %347 = vector.extract_strided_slice %332 {offsets = [0, 32], sizes = [1, 32], strides = [1, 1]} : vector<1x128xf32> to vector<1x32xf32>
    %348 = vector.extract_strided_slice %336 {offsets = [0, 32], sizes = [1, 32], strides = [1, 1]} : vector<1x128xf32> to vector<1x32xf32>
    %349 = arith.addf %347, %348 : vector<1x32xf32>
    %cst_153 = arith.constant 0.000000e+00 : f32
    %350 = vector.broadcast %cst_153 : f32 to vector<1x32xf32>
    %351 = arith.subf %350, %349 : vector<1x32xf32>
    %352 = math.exp %351 : vector<1x32xf32>
    %cst_154 = arith.constant 1.000000e+00 : f32
    %353 = vector.broadcast %cst_154 : f32 to vector<1x32xf32>
    %354 = arith.addf %353, %352 : vector<1x32xf32>
    %cst_155 = arith.constant 1.000000e+00 : f32
    %355 = vector.broadcast %cst_155 : f32 to vector<1x32xf32>
    %356 = arith.divf %355, %354 : vector<1x32xf32>
    %357 = vector.extract_strided_slice %332 {offsets = [0, 64], sizes = [1, 32], strides = [1, 1]} : vector<1x128xf32> to vector<1x32xf32>
    %358 = vector.extract_strided_slice %336 {offsets = [0, 64], sizes = [1, 32], strides = [1, 1]} : vector<1x128xf32> to vector<1x32xf32>
    %359 = arith.mulf %346, %358 : vector<1x32xf32>
    %360 = arith.addf %357, %359 : vector<1x32xf32>
    %361 = math.tanh %360 : vector<1x32xf32>
    %cst_156 = arith.constant 1.000000e+00 : f32
    %362 = vector.broadcast %cst_156 : f32 to vector<1x32xf32>
    %363 = arith.subf %362, %356 : vector<1x32xf32>
    %364 = arith.mulf %363, %361 : vector<1x32xf32>
    %365 = arith.mulf %356, %316 : vector<1x32xf32>
    %366 = arith.addf %364, %365 : vector<1x32xf32>
    %cst_157 = arith.constant dense<0.000000e+00> : vector<1x8xf32>
    %367 = tpu.matmul %366, %317, %cst_157 {dimension_numbers = #tpu.dot_dimension_numbers<[1], [1], [0], [0], [0, 0, 1, 0], [], []>} : vector<1x32xf32>, vector<8x32xf32>, vector<1x8xf32> -> vector<1x8xf32>
    %cst_158 = arith.constant dense<0xFF800000> : vector<1xf32>
    %368 = vector.multi_reduction <maximumf>, %367, %cst_158 [1] : vector<1x8xf32> to vector<1xf32>
    %369 = vector.shape_cast %368 : vector<1xf32> to vector<1x1xf32>
    %370 = vector.broadcast %369 : vector<1x1xf32> to vector<1x8xf32>
    %371 = arith.subf %367, %370 : vector<1x8xf32>
    %372 = math.exp %371 : vector<1x8xf32>
    %cst_159 = arith.constant dense<0.000000e+00> : vector<1xf32>
    %373 = vector.multi_reduction <add>, %372, %cst_159 [1] : vector<1x8xf32> to vector<1xf32>
    %374 = vector.shape_cast %373 : vector<1xf32> to vector<1x1xf32>
    %375 = tpu.reciprocal %374 {approx = true} : vector<1x1xf32> -> vector<1x1xf32>
    %376 = vector.broadcast %375 : vector<1x1xf32> to vector<1x8xf32>
    %377 = arith.mulf %372, %376 : vector<1x8xf32>
    %cst_160 = arith.constant dense<0.000000e+00> : vector<1x32xf32>
    %378 = tpu.matmul %377, %317, %cst_160 {dimension_numbers = #tpu.dot_dimension_numbers<[1], [0], [0], [1], [0, 0, 1, 1], [], []>} : vector<1x8xf32>, vector<8x32xf32>, vector<1x32xf32> -> vector<1x32xf32>
    %c0_161 = arith.constant 0 : index
    %c0_162 = arith.constant 0 : index
    %379 = vector.load %arg15[%c0_161, %c0_162] : memref<32x32xf32, #tpu.memory_space<vmem>>, vector<32x32xf32>
    %cst_163 = arith.constant dense<0.000000e+00> : vector<1x32xf32>
    %380 = tpu.matmul %366, %379, %cst_163 {dimension_numbers = #tpu.dot_dimension_numbers<[1], [0], [0], [1], [0, 0, 1, 1], [], []>} : vector<1x32xf32>, vector<32x32xf32>, vector<1x32xf32> -> vector<1x32xf32>
    %c0_164 = arith.constant 0 : index
    %c0_165 = arith.constant 0 : index
    %381 = vector.load %arg16[%c0_164, %c0_165] : memref<32x32xf32, #tpu.memory_space<vmem>>, vector<32x32xf32>
    %cst_166 = arith.constant dense<0.000000e+00> : vector<1x32xf32>
    %382 = tpu.matmul %378, %381, %cst_166 {dimension_numbers = #tpu.dot_dimension_numbers<[1], [0], [0], [1], [0, 0, 1, 1], [], []>} : vector<1x32xf32>, vector<32x32xf32>, vector<1x32xf32> -> vector<1x32xf32>
    %383 = arith.addf %380, %382 : vector<1x32xf32>
    %c0_167 = arith.constant 0 : index
    %c0_168 = arith.constant 0 : index
    %384 = vector.load %arg17[%c0_167, %c0_168] : memref<1x32xf32, #tpu.memory_space<vmem>>, vector<1x32xf32>
    %385 = arith.addf %383, %384 : vector<1x32xf32>
    %386 = math.tanh %385 : vector<1x32xf32>
    %c0_169 = arith.constant 0 : index
    %c0_170 = arith.constant 0 : index
    %387 = vector.load %arg18[%c0_169, %c0_170] : memref<32x32xf32, #tpu.memory_space<vmem>>, vector<32x32xf32>
    %cst_171 = arith.constant dense<0.000000e+00> : vector<1x32xf32>
    %388 = tpu.matmul %386, %387, %cst_171 {dimension_numbers = #tpu.dot_dimension_numbers<[1], [0], [0], [1], [0, 0, 1, 1], [], []>} : vector<1x32xf32>, vector<32x32xf32>, vector<1x32xf32> -> vector<1x32xf32>
    %c0_172 = arith.constant 0 : index
    %c0_173 = arith.constant 0 : index
    %389 = vector.load %arg19[%c0_172, %c0_173] : memref<1x32xf32, #tpu.memory_space<vmem>>, vector<1x32xf32>
    %390 = arith.addf %388, %389 : vector<1x32xf32>
    %cst_174 = arith.constant dense<0xFF800000> : vector<1xf32>
    %391 = vector.multi_reduction <maximumf>, %390, %cst_174 [1] : vector<1x32xf32> to vector<1xf32>
    %392 = vector.shape_cast %391 : vector<1xf32> to vector<1x1xf32>
    %393 = vector.broadcast %392 : vector<1x1xf32> to vector<1x32xf32>
    %394 = arith.subf %390, %393 : vector<1x32xf32>
    %395 = math.exp %394 : vector<1x32xf32>
    %cst_175 = arith.constant dense<0.000000e+00> : vector<1xf32>
    %396 = vector.multi_reduction <add>, %395, %cst_175 [1] : vector<1x32xf32> to vector<1xf32>
    %397 = vector.shape_cast %396 : vector<1xf32> to vector<1x1xf32>
    %cst_176 = arith.constant 1.000000e+00 : f32
    %398 = vector.broadcast %cst_176 : f32 to vector<1x1xf32>
    %399 = arith.divf %398, %397 : vector<1x1xf32>
    %400 = vector.broadcast %392 : vector<1x1xf32> to vector<1x32xf32>
    %401 = arith.cmpf oge, %390, %400 : vector<1x32xf32>
    %402 = arith.sitofp %323 : vector<1x32xi32> to vector<1x32xf32>
    %cst_177 = arith.constant 3.200000e+01 : f32
    %403 = vector.broadcast %cst_177 : f32 to vector<1x32xf32>
    %404 = arith.select %401, %402, %403 : vector<1x32xi1>, vector<1x32xf32>
    %cst_178 = arith.constant dense<0x7F800000> : vector<1xf32>
    %405 = vector.multi_reduction <minimumf>, %404, %cst_178 [1] : vector<1x32xf32> to vector<1xf32>
    %406 = vector.shape_cast %405 : vector<1xf32> to vector<1x1xf32>
    %407 = arith.fptosi %406 : vector<1x1xf32> to vector<1x1xi32>
    %408 = vector.broadcast %407 : vector<1x1xi32> to vector<1x32xi32>
    %409 = arith.cmpi eq, %323, %408 : vector<1x32xi32>
    %410 = arith.extui %409 : vector<1x32xi1> to vector<1x32xi32>
    %411 = arith.sitofp %410 : vector<1x32xi32> to vector<1x32xf32>
    %412 = vector.broadcast %c0_i32_138 : i32 to vector<1x128xi32>
    %413 = arith.cmpi eq, %324, %412 : vector<1x128xi32>
    %414 = vector.shape_cast %407 : vector<1x1xi32> to vector<1x1xi32>
    %415 = vector.broadcast %414 : vector<1x1xi32> to vector<1x128xi32>
    %416 = arith.select %413, %415, %325 : vector<1x128xi1>, vector<1x128xi32>
    %417 = vector.shape_cast %399 : vector<1x1xf32> to vector<1x1xf32>
    %418 = vector.broadcast %417 : vector<1x1xf32> to vector<1x128xf32>
    %419 = arith.select %413, %418, %326 : vector<1x128xi1>, vector<1x128xf32>
    %c1_i32_179 = arith.constant 1 : i32
    %c0_180 = arith.constant 0 : index
    %c0_181 = arith.constant 0 : index
    %420 = vector.load %arg9[%c0_180, %c0_181] : memref<32x32xf32, #tpu.memory_space<vmem>>, vector<32x32xf32>
    %cst_182 = arith.constant dense<0.000000e+00> : vector<1x32xf32>
    %421 = tpu.matmul %411, %420, %cst_182 {dimension_numbers = #tpu.dot_dimension_numbers<[1], [0], [0], [1], [0, 0, 1, 1], [], []>} : vector<1x32xf32>, vector<32x32xf32>, vector<1x32xf32> -> vector<1x32xf32>
    %c0_183 = arith.constant 0 : index
    %c0_184 = arith.constant 0 : index
    %422 = vector.load %arg10[%c0_183, %c0_184] : memref<32x128xf32, #tpu.memory_space<vmem>>, vector<32x128xf32>
    %cst_185 = arith.constant dense<0.000000e+00> : vector<1x128xf32>
    %423 = tpu.matmul %421, %422, %cst_185 {dimension_numbers = #tpu.dot_dimension_numbers<[1], [0], [0], [1], [0, 0, 1, 1], [], []>} : vector<1x32xf32>, vector<32x128xf32>, vector<1x128xf32> -> vector<1x128xf32>
    %424 = arith.addf %423, %322 : vector<1x128xf32>
    %c0_186 = arith.constant 0 : index
    %c0_187 = arith.constant 0 : index
    %425 = vector.load %arg12[%c0_186, %c0_187] : memref<32x128xf32, #tpu.memory_space<vmem>>, vector<32x128xf32>
    %cst_188 = arith.constant dense<0.000000e+00> : vector<1x128xf32>
    %426 = tpu.matmul %366, %425, %cst_188 {dimension_numbers = #tpu.dot_dimension_numbers<[1], [0], [0], [1], [0, 0, 1, 1], [], []>} : vector<1x32xf32>, vector<32x128xf32>, vector<1x128xf32> -> vector<1x128xf32>
    %c0_189 = arith.constant 0 : index
    %c0_190 = arith.constant 0 : index
    %427 = vector.load %arg14[%c0_189, %c0_190] : memref<1x128xf32, #tpu.memory_space<vmem>>, vector<1x128xf32>
    %428 = arith.addf %426, %427 : vector<1x128xf32>
    %429 = vector.extract_strided_slice %424 {offsets = [0, 0], sizes = [1, 32], strides = [1, 1]} : vector<1x128xf32> to vector<1x32xf32>
    %430 = vector.extract_strided_slice %428 {offsets = [0, 0], sizes = [1, 32], strides = [1, 1]} : vector<1x128xf32> to vector<1x32xf32>
    %431 = arith.addf %429, %430 : vector<1x32xf32>
    %cst_191 = arith.constant 0.000000e+00 : f32
    %432 = vector.broadcast %cst_191 : f32 to vector<1x32xf32>
    %433 = arith.subf %432, %431 : vector<1x32xf32>
    %434 = math.exp %433 : vector<1x32xf32>
    %cst_192 = arith.constant 1.000000e+00 : f32
    %435 = vector.broadcast %cst_192 : f32 to vector<1x32xf32>
    %436 = arith.addf %435, %434 : vector<1x32xf32>
    %cst_193 = arith.constant 1.000000e+00 : f32
    %437 = vector.broadcast %cst_193 : f32 to vector<1x32xf32>
    %438 = arith.divf %437, %436 : vector<1x32xf32>
    %439 = vector.extract_strided_slice %424 {offsets = [0, 32], sizes = [1, 32], strides = [1, 1]} : vector<1x128xf32> to vector<1x32xf32>
    %440 = vector.extract_strided_slice %428 {offsets = [0, 32], sizes = [1, 32], strides = [1, 1]} : vector<1x128xf32> to vector<1x32xf32>
    %441 = arith.addf %439, %440 : vector<1x32xf32>
    %cst_194 = arith.constant 0.000000e+00 : f32
    %442 = vector.broadcast %cst_194 : f32 to vector<1x32xf32>
    %443 = arith.subf %442, %441 : vector<1x32xf32>
    %444 = math.exp %443 : vector<1x32xf32>
    %cst_195 = arith.constant 1.000000e+00 : f32
    %445 = vector.broadcast %cst_195 : f32 to vector<1x32xf32>
    %446 = arith.addf %445, %444 : vector<1x32xf32>
    %cst_196 = arith.constant 1.000000e+00 : f32
    %447 = vector.broadcast %cst_196 : f32 to vector<1x32xf32>
    %448 = arith.divf %447, %446 : vector<1x32xf32>
    %449 = vector.extract_strided_slice %424 {offsets = [0, 64], sizes = [1, 32], strides = [1, 1]} : vector<1x128xf32> to vector<1x32xf32>
    %450 = vector.extract_strided_slice %428 {offsets = [0, 64], sizes = [1, 32], strides = [1, 1]} : vector<1x128xf32> to vector<1x32xf32>
    %451 = arith.mulf %438, %450 : vector<1x32xf32>
    %452 = arith.addf %449, %451 : vector<1x32xf32>
    %453 = math.tanh %452 : vector<1x32xf32>
    %cst_197 = arith.constant 1.000000e+00 : f32
    %454 = vector.broadcast %cst_197 : f32 to vector<1x32xf32>
    %455 = arith.subf %454, %448 : vector<1x32xf32>
    %456 = arith.mulf %455, %453 : vector<1x32xf32>
    %457 = arith.mulf %448, %366 : vector<1x32xf32>
    %458 = arith.addf %456, %457 : vector<1x32xf32>
    %cst_198 = arith.constant dense<0.000000e+00> : vector<1x8xf32>
    %459 = tpu.matmul %458, %317, %cst_198 {dimension_numbers = #tpu.dot_dimension_numbers<[1], [1], [0], [0], [0, 0, 1, 0], [], []>} : vector<1x32xf32>, vector<8x32xf32>, vector<1x8xf32> -> vector<1x8xf32>
    %cst_199 = arith.constant dense<0xFF800000> : vector<1xf32>
    %460 = vector.multi_reduction <maximumf>, %459, %cst_199 [1] : vector<1x8xf32> to vector<1xf32>
    %461 = vector.shape_cast %460 : vector<1xf32> to vector<1x1xf32>
    %462 = vector.broadcast %461 : vector<1x1xf32> to vector<1x8xf32>
    %463 = arith.subf %459, %462 : vector<1x8xf32>
    %464 = math.exp %463 : vector<1x8xf32>
    %cst_200 = arith.constant dense<0.000000e+00> : vector<1xf32>
    %465 = vector.multi_reduction <add>, %464, %cst_200 [1] : vector<1x8xf32> to vector<1xf32>
    %466 = vector.shape_cast %465 : vector<1xf32> to vector<1x1xf32>
    %467 = tpu.reciprocal %466 {approx = true} : vector<1x1xf32> -> vector<1x1xf32>
    %468 = vector.broadcast %467 : vector<1x1xf32> to vector<1x8xf32>
    %469 = arith.mulf %464, %468 : vector<1x8xf32>
    %cst_201 = arith.constant dense<0.000000e+00> : vector<1x32xf32>
    %470 = tpu.matmul %469, %317, %cst_201 {dimension_numbers = #tpu.dot_dimension_numbers<[1], [0], [0], [1], [0, 0, 1, 1], [], []>} : vector<1x8xf32>, vector<8x32xf32>, vector<1x32xf32> -> vector<1x32xf32>
    %c0_202 = arith.constant 0 : index
    %c0_203 = arith.constant 0 : index
    %471 = vector.load %arg15[%c0_202, %c0_203] : memref<32x32xf32, #tpu.memory_space<vmem>>, vector<32x32xf32>
    %cst_204 = arith.constant dense<0.000000e+00> : vector<1x32xf32>
    %472 = tpu.matmul %458, %471, %cst_204 {dimension_numbers = #tpu.dot_dimension_numbers<[1], [0], [0], [1], [0, 0, 1, 1], [], []>} : vector<1x32xf32>, vector<32x32xf32>, vector<1x32xf32> -> vector<1x32xf32>
    %c0_205 = arith.constant 0 : index
    %c0_206 = arith.constant 0 : index
    %473 = vector.load %arg16[%c0_205, %c0_206] : memref<32x32xf32, #tpu.memory_space<vmem>>, vector<32x32xf32>
    %cst_207 = arith.constant dense<0.000000e+00> : vector<1x32xf32>
    %474 = tpu.matmul %470, %473, %cst_207 {dimension_numbers = #tpu.dot_dimension_numbers<[1], [0], [0], [1], [0, 0, 1, 1], [], []>} : vector<1x32xf32>, vector<32x32xf32>, vector<1x32xf32> -> vector<1x32xf32>
    %475 = arith.addf %472, %474 : vector<1x32xf32>
    %c0_208 = arith.constant 0 : index
    %c0_209 = arith.constant 0 : index
    %476 = vector.load %arg17[%c0_208, %c0_209] : memref<1x32xf32, #tpu.memory_space<vmem>>, vector<1x32xf32>
    %477 = arith.addf %475, %476 : vector<1x32xf32>
    %478 = math.tanh %477 : vector<1x32xf32>
    %c0_210 = arith.constant 0 : index
    %c0_211 = arith.constant 0 : index
    %479 = vector.load %arg18[%c0_210, %c0_211] : memref<32x32xf32, #tpu.memory_space<vmem>>, vector<32x32xf32>
    %cst_212 = arith.constant dense<0.000000e+00> : vector<1x32xf32>
    %480 = tpu.matmul %478, %479, %cst_212 {dimension_numbers = #tpu.dot_dimension_numbers<[1], [0], [0], [1], [0, 0, 1, 1], [], []>} : vector<1x32xf32>, vector<32x32xf32>, vector<1x32xf32> -> vector<1x32xf32>
    %c0_213 = arith.constant 0 : index
    %c0_214 = arith.constant 0 : index
    %481 = vector.load %arg19[%c0_213, %c0_214] : memref<1x32xf32, #tpu.memory_space<vmem>>, vector<1x32xf32>
    %482 = arith.addf %480, %481 : vector<1x32xf32>
    %cst_215 = arith.constant dense<0xFF800000> : vector<1xf32>
    %483 = vector.multi_reduction <maximumf>, %482, %cst_215 [1] : vector<1x32xf32> to vector<1xf32>
    %484 = vector.shape_cast %483 : vector<1xf32> to vector<1x1xf32>
    %485 = vector.broadcast %484 : vector<1x1xf32> to vector<1x32xf32>
    %486 = arith.subf %482, %485 : vector<1x32xf32>
    %487 = math.exp %486 : vector<1x32xf32>
    %cst_216 = arith.constant dense<0.000000e+00> : vector<1xf32>
    %488 = vector.multi_reduction <add>, %487, %cst_216 [1] : vector<1x32xf32> to vector<1xf32>
    %489 = vector.shape_cast %488 : vector<1xf32> to vector<1x1xf32>
    %cst_217 = arith.constant 1.000000e+00 : f32
    %490 = vector.broadcast %cst_217 : f32 to vector<1x1xf32>
    %491 = arith.divf %490, %489 : vector<1x1xf32>
    %492 = vector.broadcast %484 : vector<1x1xf32> to vector<1x32xf32>
    %493 = arith.cmpf oge, %482, %492 : vector<1x32xf32>
    %494 = arith.sitofp %323 : vector<1x32xi32> to vector<1x32xf32>
    %cst_218 = arith.constant 3.200000e+01 : f32
    %495 = vector.broadcast %cst_218 : f32 to vector<1x32xf32>
    %496 = arith.select %493, %494, %495 : vector<1x32xi1>, vector<1x32xf32>
    %cst_219 = arith.constant dense<0x7F800000> : vector<1xf32>
    %497 = vector.multi_reduction <minimumf>, %496, %cst_219 [1] : vector<1x32xf32> to vector<1xf32>
    %498 = vector.shape_cast %497 : vector<1xf32> to vector<1x1xf32>
    %499 = arith.fptosi %498 : vector<1x1xf32> to vector<1x1xi32>
    %500 = vector.broadcast %499 : vector<1x1xi32> to vector<1x32xi32>
    %501 = arith.cmpi eq, %323, %500 : vector<1x32xi32>
    %502 = arith.extui %501 : vector<1x32xi1> to vector<1x32xi32>
    %503 = arith.sitofp %502 : vector<1x32xi32> to vector<1x32xf32>
    %504 = vector.broadcast %c1_i32_179 : i32 to vector<1x128xi32>
    %505 = arith.cmpi eq, %324, %504 : vector<1x128xi32>
    %506 = vector.shape_cast %499 : vector<1x1xi32> to vector<1x1xi32>
    %507 = vector.broadcast %506 : vector<1x1xi32> to vector<1x128xi32>
    %508 = arith.select %505, %507, %416 : vector<1x128xi1>, vector<1x128xi32>
    %509 = vector.shape_cast %491 : vector<1x1xf32> to vector<1x1xf32>
    %510 = vector.broadcast %509 : vector<1x1xf32> to vector<1x128xf32>
    %511 = arith.select %505, %510, %419 : vector<1x128xi1>, vector<1x128xf32>
    %c2_i32_220 = arith.constant 2 : i32
    %c0_221 = arith.constant 0 : index
    %c0_222 = arith.constant 0 : index
    %512 = vector.load %arg9[%c0_221, %c0_222] : memref<32x32xf32, #tpu.memory_space<vmem>>, vector<32x32xf32>
    %cst_223 = arith.constant dense<0.000000e+00> : vector<1x32xf32>
    %513 = tpu.matmul %503, %512, %cst_223 {dimension_numbers = #tpu.dot_dimension_numbers<[1], [0], [0], [1], [0, 0, 1, 1], [], []>} : vector<1x32xf32>, vector<32x32xf32>, vector<1x32xf32> -> vector<1x32xf32>
    %c0_224 = arith.constant 0 : index
    %c0_225 = arith.constant 0 : index
    %514 = vector.load %arg10[%c0_224, %c0_225] : memref<32x128xf32, #tpu.memory_space<vmem>>, vector<32x128xf32>
    %cst_226 = arith.constant dense<0.000000e+00> : vector<1x128xf32>
    %515 = tpu.matmul %513, %514, %cst_226 {dimension_numbers = #tpu.dot_dimension_numbers<[1], [0], [0], [1], [0, 0, 1, 1], [], []>} : vector<1x32xf32>, vector<32x128xf32>, vector<1x128xf32> -> vector<1x128xf32>
    %516 = arith.addf %515, %322 : vector<1x128xf32>
    %c0_227 = arith.constant 0 : index
    %c0_228 = arith.constant 0 : index
    %517 = vector.load %arg12[%c0_227, %c0_228] : memref<32x128xf32, #tpu.memory_space<vmem>>, vector<32x128xf32>
    %cst_229 = arith.constant dense<0.000000e+00> : vector<1x128xf32>
    %518 = tpu.matmul %458, %517, %cst_229 {dimension_numbers = #tpu.dot_dimension_numbers<[1], [0], [0], [1], [0, 0, 1, 1], [], []>} : vector<1x32xf32>, vector<32x128xf32>, vector<1x128xf32> -> vector<1x128xf32>
    %c0_230 = arith.constant 0 : index
    %c0_231 = arith.constant 0 : index
    %519 = vector.load %arg14[%c0_230, %c0_231] : memref<1x128xf32, #tpu.memory_space<vmem>>, vector<1x128xf32>
    %520 = arith.addf %518, %519 : vector<1x128xf32>
    %521 = vector.extract_strided_slice %516 {offsets = [0, 0], sizes = [1, 32], strides = [1, 1]} : vector<1x128xf32> to vector<1x32xf32>
    %522 = vector.extract_strided_slice %520 {offsets = [0, 0], sizes = [1, 32], strides = [1, 1]} : vector<1x128xf32> to vector<1x32xf32>
    %523 = arith.addf %521, %522 : vector<1x32xf32>
    %cst_232 = arith.constant 0.000000e+00 : f32
    %524 = vector.broadcast %cst_232 : f32 to vector<1x32xf32>
    %525 = arith.subf %524, %523 : vector<1x32xf32>
    %526 = math.exp %525 : vector<1x32xf32>
    %cst_233 = arith.constant 1.000000e+00 : f32
    %527 = vector.broadcast %cst_233 : f32 to vector<1x32xf32>
    %528 = arith.addf %527, %526 : vector<1x32xf32>
    %cst_234 = arith.constant 1.000000e+00 : f32
    %529 = vector.broadcast %cst_234 : f32 to vector<1x32xf32>
    %530 = arith.divf %529, %528 : vector<1x32xf32>
    %531 = vector.extract_strided_slice %516 {offsets = [0, 32], sizes = [1, 32], strides = [1, 1]} : vector<1x128xf32> to vector<1x32xf32>
    %532 = vector.extract_strided_slice %520 {offsets = [0, 32], sizes = [1, 32], strides = [1, 1]} : vector<1x128xf32> to vector<1x32xf32>
    %533 = arith.addf %531, %532 : vector<1x32xf32>
    %cst_235 = arith.constant 0.000000e+00 : f32
    %534 = vector.broadcast %cst_235 : f32 to vector<1x32xf32>
    %535 = arith.subf %534, %533 : vector<1x32xf32>
    %536 = math.exp %535 : vector<1x32xf32>
    %cst_236 = arith.constant 1.000000e+00 : f32
    %537 = vector.broadcast %cst_236 : f32 to vector<1x32xf32>
    %538 = arith.addf %537, %536 : vector<1x32xf32>
    %cst_237 = arith.constant 1.000000e+00 : f32
    %539 = vector.broadcast %cst_237 : f32 to vector<1x32xf32>
    %540 = arith.divf %539, %538 : vector<1x32xf32>
    %541 = vector.extract_strided_slice %516 {offsets = [0, 64], sizes = [1, 32], strides = [1, 1]} : vector<1x128xf32> to vector<1x32xf32>
    %542 = vector.extract_strided_slice %520 {offsets = [0, 64], sizes = [1, 32], strides = [1, 1]} : vector<1x128xf32> to vector<1x32xf32>
    %543 = arith.mulf %530, %542 : vector<1x32xf32>
    %544 = arith.addf %541, %543 : vector<1x32xf32>
    %545 = math.tanh %544 : vector<1x32xf32>
    %cst_238 = arith.constant 1.000000e+00 : f32
    %546 = vector.broadcast %cst_238 : f32 to vector<1x32xf32>
    %547 = arith.subf %546, %540 : vector<1x32xf32>
    %548 = arith.mulf %547, %545 : vector<1x32xf32>
    %549 = arith.mulf %540, %458 : vector<1x32xf32>
    %550 = arith.addf %548, %549 : vector<1x32xf32>
    %cst_239 = arith.constant dense<0.000000e+00> : vector<1x8xf32>
    %551 = tpu.matmul %550, %317, %cst_239 {dimension_numbers = #tpu.dot_dimension_numbers<[1], [1], [0], [0], [0, 0, 1, 0], [], []>} : vector<1x32xf32>, vector<8x32xf32>, vector<1x8xf32> -> vector<1x8xf32>
    %cst_240 = arith.constant dense<0xFF800000> : vector<1xf32>
    %552 = vector.multi_reduction <maximumf>, %551, %cst_240 [1] : vector<1x8xf32> to vector<1xf32>
    %553 = vector.shape_cast %552 : vector<1xf32> to vector<1x1xf32>
    %554 = vector.broadcast %553 : vector<1x1xf32> to vector<1x8xf32>
    %555 = arith.subf %551, %554 : vector<1x8xf32>
    %556 = math.exp %555 : vector<1x8xf32>
    %cst_241 = arith.constant dense<0.000000e+00> : vector<1xf32>
    %557 = vector.multi_reduction <add>, %556, %cst_241 [1] : vector<1x8xf32> to vector<1xf32>
    %558 = vector.shape_cast %557 : vector<1xf32> to vector<1x1xf32>
    %559 = tpu.reciprocal %558 {approx = true} : vector<1x1xf32> -> vector<1x1xf32>
    %560 = vector.broadcast %559 : vector<1x1xf32> to vector<1x8xf32>
    %561 = arith.mulf %556, %560 : vector<1x8xf32>
    %cst_242 = arith.constant dense<0.000000e+00> : vector<1x32xf32>
    %562 = tpu.matmul %561, %317, %cst_242 {dimension_numbers = #tpu.dot_dimension_numbers<[1], [0], [0], [1], [0, 0, 1, 1], [], []>} : vector<1x8xf32>, vector<8x32xf32>, vector<1x32xf32> -> vector<1x32xf32>
    %c0_243 = arith.constant 0 : index
    %c0_244 = arith.constant 0 : index
    %563 = vector.load %arg15[%c0_243, %c0_244] : memref<32x32xf32, #tpu.memory_space<vmem>>, vector<32x32xf32>
    %cst_245 = arith.constant dense<0.000000e+00> : vector<1x32xf32>
    %564 = tpu.matmul %550, %563, %cst_245 {dimension_numbers = #tpu.dot_dimension_numbers<[1], [0], [0], [1], [0, 0, 1, 1], [], []>} : vector<1x32xf32>, vector<32x32xf32>, vector<1x32xf32> -> vector<1x32xf32>
    %c0_246 = arith.constant 0 : index
    %c0_247 = arith.constant 0 : index
    %565 = vector.load %arg16[%c0_246, %c0_247] : memref<32x32xf32, #tpu.memory_space<vmem>>, vector<32x32xf32>
    %cst_248 = arith.constant dense<0.000000e+00> : vector<1x32xf32>
    %566 = tpu.matmul %562, %565, %cst_248 {dimension_numbers = #tpu.dot_dimension_numbers<[1], [0], [0], [1], [0, 0, 1, 1], [], []>} : vector<1x32xf32>, vector<32x32xf32>, vector<1x32xf32> -> vector<1x32xf32>
    %567 = arith.addf %564, %566 : vector<1x32xf32>
    %c0_249 = arith.constant 0 : index
    %c0_250 = arith.constant 0 : index
    %568 = vector.load %arg17[%c0_249, %c0_250] : memref<1x32xf32, #tpu.memory_space<vmem>>, vector<1x32xf32>
    %569 = arith.addf %567, %568 : vector<1x32xf32>
    %570 = math.tanh %569 : vector<1x32xf32>
    %c0_251 = arith.constant 0 : index
    %c0_252 = arith.constant 0 : index
    %571 = vector.load %arg18[%c0_251, %c0_252] : memref<32x32xf32, #tpu.memory_space<vmem>>, vector<32x32xf32>
    %cst_253 = arith.constant dense<0.000000e+00> : vector<1x32xf32>
    %572 = tpu.matmul %570, %571, %cst_253 {dimension_numbers = #tpu.dot_dimension_numbers<[1], [0], [0], [1], [0, 0, 1, 1], [], []>} : vector<1x32xf32>, vector<32x32xf32>, vector<1x32xf32> -> vector<1x32xf32>
    %c0_254 = arith.constant 0 : index
    %c0_255 = arith.constant 0 : index
    %573 = vector.load %arg19[%c0_254, %c0_255] : memref<1x32xf32, #tpu.memory_space<vmem>>, vector<1x32xf32>
    %574 = arith.addf %572, %573 : vector<1x32xf32>
    %cst_256 = arith.constant dense<0xFF800000> : vector<1xf32>
    %575 = vector.multi_reduction <maximumf>, %574, %cst_256 [1] : vector<1x32xf32> to vector<1xf32>
    %576 = vector.shape_cast %575 : vector<1xf32> to vector<1x1xf32>
    %577 = vector.broadcast %576 : vector<1x1xf32> to vector<1x32xf32>
    %578 = arith.subf %574, %577 : vector<1x32xf32>
    %579 = math.exp %578 : vector<1x32xf32>
    %cst_257 = arith.constant dense<0.000000e+00> : vector<1xf32>
    %580 = vector.multi_reduction <add>, %579, %cst_257 [1] : vector<1x32xf32> to vector<1xf32>
    %581 = vector.shape_cast %580 : vector<1xf32> to vector<1x1xf32>
    %cst_258 = arith.constant 1.000000e+00 : f32
    %582 = vector.broadcast %cst_258 : f32 to vector<1x1xf32>
    %583 = arith.divf %582, %581 : vector<1x1xf32>
    %584 = vector.broadcast %576 : vector<1x1xf32> to vector<1x32xf32>
    %585 = arith.cmpf oge, %574, %584 : vector<1x32xf32>
    %586 = arith.sitofp %323 : vector<1x32xi32> to vector<1x32xf32>
    %cst_259 = arith.constant 3.200000e+01 : f32
    %587 = vector.broadcast %cst_259 : f32 to vector<1x32xf32>
    %588 = arith.select %585, %586, %587 : vector<1x32xi1>, vector<1x32xf32>
    %cst_260 = arith.constant dense<0x7F800000> : vector<1xf32>
    %589 = vector.multi_reduction <minimumf>, %588, %cst_260 [1] : vector<1x32xf32> to vector<1xf32>
    %590 = vector.shape_cast %589 : vector<1xf32> to vector<1x1xf32>
    %591 = arith.fptosi %590 : vector<1x1xf32> to vector<1x1xi32>
    %592 = vector.broadcast %591 : vector<1x1xi32> to vector<1x32xi32>
    %593 = arith.cmpi eq, %323, %592 : vector<1x32xi32>
    %594 = arith.extui %593 : vector<1x32xi1> to vector<1x32xi32>
    %595 = arith.sitofp %594 : vector<1x32xi32> to vector<1x32xf32>
    %596 = vector.broadcast %c2_i32_220 : i32 to vector<1x128xi32>
    %597 = arith.cmpi eq, %324, %596 : vector<1x128xi32>
    %598 = vector.shape_cast %591 : vector<1x1xi32> to vector<1x1xi32>
    %599 = vector.broadcast %598 : vector<1x1xi32> to vector<1x128xi32>
    %600 = arith.select %597, %599, %508 : vector<1x128xi1>, vector<1x128xi32>
    %601 = vector.shape_cast %583 : vector<1x1xf32> to vector<1x1xf32>
    %602 = vector.broadcast %601 : vector<1x1xf32> to vector<1x128xf32>
    %603 = arith.select %597, %602, %511 : vector<1x128xi1>, vector<1x128xf32>
    %c3_i32_261 = arith.constant 3 : i32
    %c0_262 = arith.constant 0 : index
    %c0_263 = arith.constant 0 : index
    %604 = vector.load %arg9[%c0_262, %c0_263] : memref<32x32xf32, #tpu.memory_space<vmem>>, vector<32x32xf32>
    %cst_264 = arith.constant dense<0.000000e+00> : vector<1x32xf32>
    %605 = tpu.matmul %595, %604, %cst_264 {dimension_numbers = #tpu.dot_dimension_numbers<[1], [0], [0], [1], [0, 0, 1, 1], [], []>} : vector<1x32xf32>, vector<32x32xf32>, vector<1x32xf32> -> vector<1x32xf32>
    %c0_265 = arith.constant 0 : index
    %c0_266 = arith.constant 0 : index
    %606 = vector.load %arg10[%c0_265, %c0_266] : memref<32x128xf32, #tpu.memory_space<vmem>>, vector<32x128xf32>
    %cst_267 = arith.constant dense<0.000000e+00> : vector<1x128xf32>
    %607 = tpu.matmul %605, %606, %cst_267 {dimension_numbers = #tpu.dot_dimension_numbers<[1], [0], [0], [1], [0, 0, 1, 1], [], []>} : vector<1x32xf32>, vector<32x128xf32>, vector<1x128xf32> -> vector<1x128xf32>
    %608 = arith.addf %607, %322 : vector<1x128xf32>
    %c0_268 = arith.constant 0 : index
    %c0_269 = arith.constant 0 : index
    %609 = vector.load %arg12[%c0_268, %c0_269] : memref<32x128xf32, #tpu.memory_space<vmem>>, vector<32x128xf32>
    %cst_270 = arith.constant dense<0.000000e+00> : vector<1x128xf32>
    %610 = tpu.matmul %550, %609, %cst_270 {dimension_numbers = #tpu.dot_dimension_numbers<[1], [0], [0], [1], [0, 0, 1, 1], [], []>} : vector<1x32xf32>, vector<32x128xf32>, vector<1x128xf32> -> vector<1x128xf32>
    %c0_271 = arith.constant 0 : index
    %c0_272 = arith.constant 0 : index
    %611 = vector.load %arg14[%c0_271, %c0_272] : memref<1x128xf32, #tpu.memory_space<vmem>>, vector<1x128xf32>
    %612 = arith.addf %610, %611 : vector<1x128xf32>
    %613 = vector.extract_strided_slice %608 {offsets = [0, 0], sizes = [1, 32], strides = [1, 1]} : vector<1x128xf32> to vector<1x32xf32>
    %614 = vector.extract_strided_slice %612 {offsets = [0, 0], sizes = [1, 32], strides = [1, 1]} : vector<1x128xf32> to vector<1x32xf32>
    %615 = arith.addf %613, %614 : vector<1x32xf32>
    %cst_273 = arith.constant 0.000000e+00 : f32
    %616 = vector.broadcast %cst_273 : f32 to vector<1x32xf32>
    %617 = arith.subf %616, %615 : vector<1x32xf32>
    %618 = math.exp %617 : vector<1x32xf32>
    %cst_274 = arith.constant 1.000000e+00 : f32
    %619 = vector.broadcast %cst_274 : f32 to vector<1x32xf32>
    %620 = arith.addf %619, %618 : vector<1x32xf32>
    %cst_275 = arith.constant 1.000000e+00 : f32
    %621 = vector.broadcast %cst_275 : f32 to vector<1x32xf32>
    %622 = arith.divf %621, %620 : vector<1x32xf32>
    %623 = vector.extract_strided_slice %608 {offsets = [0, 32], sizes = [1, 32], strides = [1, 1]} : vector<1x128xf32> to vector<1x32xf32>
    %624 = vector.extract_strided_slice %612 {offsets = [0, 32], sizes = [1, 32], strides = [1, 1]} : vector<1x128xf32> to vector<1x32xf32>
    %625 = arith.addf %623, %624 : vector<1x32xf32>
    %cst_276 = arith.constant 0.000000e+00 : f32
    %626 = vector.broadcast %cst_276 : f32 to vector<1x32xf32>
    %627 = arith.subf %626, %625 : vector<1x32xf32>
    %628 = math.exp %627 : vector<1x32xf32>
    %cst_277 = arith.constant 1.000000e+00 : f32
    %629 = vector.broadcast %cst_277 : f32 to vector<1x32xf32>
    %630 = arith.addf %629, %628 : vector<1x32xf32>
    %cst_278 = arith.constant 1.000000e+00 : f32
    %631 = vector.broadcast %cst_278 : f32 to vector<1x32xf32>
    %632 = arith.divf %631, %630 : vector<1x32xf32>
    %633 = vector.extract_strided_slice %608 {offsets = [0, 64], sizes = [1, 32], strides = [1, 1]} : vector<1x128xf32> to vector<1x32xf32>
    %634 = vector.extract_strided_slice %612 {offsets = [0, 64], sizes = [1, 32], strides = [1, 1]} : vector<1x128xf32> to vector<1x32xf32>
    %635 = arith.mulf %622, %634 : vector<1x32xf32>
    %636 = arith.addf %633, %635 : vector<1x32xf32>
    %637 = math.tanh %636 : vector<1x32xf32>
    %cst_279 = arith.constant 1.000000e+00 : f32
    %638 = vector.broadcast %cst_279 : f32 to vector<1x32xf32>
    %639 = arith.subf %638, %632 : vector<1x32xf32>
    %640 = arith.mulf %639, %637 : vector<1x32xf32>
    %641 = arith.mulf %632, %550 : vector<1x32xf32>
    %642 = arith.addf %640, %641 : vector<1x32xf32>
    %cst_280 = arith.constant dense<0.000000e+00> : vector<1x8xf32>
    %643 = tpu.matmul %642, %317, %cst_280 {dimension_numbers = #tpu.dot_dimension_numbers<[1], [1], [0], [0], [0, 0, 1, 0], [], []>} : vector<1x32xf32>, vector<8x32xf32>, vector<1x8xf32> -> vector<1x8xf32>
    %cst_281 = arith.constant dense<0xFF800000> : vector<1xf32>
    %644 = vector.multi_reduction <maximumf>, %643, %cst_281 [1] : vector<1x8xf32> to vector<1xf32>
    %645 = vector.shape_cast %644 : vector<1xf32> to vector<1x1xf32>
    %646 = vector.broadcast %645 : vector<1x1xf32> to vector<1x8xf32>
    %647 = arith.subf %643, %646 : vector<1x8xf32>
    %648 = math.exp %647 : vector<1x8xf32>
    %cst_282 = arith.constant dense<0.000000e+00> : vector<1xf32>
    %649 = vector.multi_reduction <add>, %648, %cst_282 [1] : vector<1x8xf32> to vector<1xf32>
    %650 = vector.shape_cast %649 : vector<1xf32> to vector<1x1xf32>
    %651 = tpu.reciprocal %650 {approx = true} : vector<1x1xf32> -> vector<1x1xf32>
    %652 = vector.broadcast %651 : vector<1x1xf32> to vector<1x8xf32>
    %653 = arith.mulf %648, %652 : vector<1x8xf32>
    %cst_283 = arith.constant dense<0.000000e+00> : vector<1x32xf32>
    %654 = tpu.matmul %653, %317, %cst_283 {dimension_numbers = #tpu.dot_dimension_numbers<[1], [0], [0], [1], [0, 0, 1, 1], [], []>} : vector<1x8xf32>, vector<8x32xf32>, vector<1x32xf32> -> vector<1x32xf32>
    %c0_284 = arith.constant 0 : index
    %c0_285 = arith.constant 0 : index
    %655 = vector.load %arg15[%c0_284, %c0_285] : memref<32x32xf32, #tpu.memory_space<vmem>>, vector<32x32xf32>
    %cst_286 = arith.constant dense<0.000000e+00> : vector<1x32xf32>
    %656 = tpu.matmul %642, %655, %cst_286 {dimension_numbers = #tpu.dot_dimension_numbers<[1], [0], [0], [1], [0, 0, 1, 1], [], []>} : vector<1x32xf32>, vector<32x32xf32>, vector<1x32xf32> -> vector<1x32xf32>
    %c0_287 = arith.constant 0 : index
    %c0_288 = arith.constant 0 : index
    %657 = vector.load %arg16[%c0_287, %c0_288] : memref<32x32xf32, #tpu.memory_space<vmem>>, vector<32x32xf32>
    %cst_289 = arith.constant dense<0.000000e+00> : vector<1x32xf32>
    %658 = tpu.matmul %654, %657, %cst_289 {dimension_numbers = #tpu.dot_dimension_numbers<[1], [0], [0], [1], [0, 0, 1, 1], [], []>} : vector<1x32xf32>, vector<32x32xf32>, vector<1x32xf32> -> vector<1x32xf32>
    %659 = arith.addf %656, %658 : vector<1x32xf32>
    %c0_290 = arith.constant 0 : index
    %c0_291 = arith.constant 0 : index
    %660 = vector.load %arg17[%c0_290, %c0_291] : memref<1x32xf32, #tpu.memory_space<vmem>>, vector<1x32xf32>
    %661 = arith.addf %659, %660 : vector<1x32xf32>
    %662 = math.tanh %661 : vector<1x32xf32>
    %c0_292 = arith.constant 0 : index
    %c0_293 = arith.constant 0 : index
    %663 = vector.load %arg18[%c0_292, %c0_293] : memref<32x32xf32, #tpu.memory_space<vmem>>, vector<32x32xf32>
    %cst_294 = arith.constant dense<0.000000e+00> : vector<1x32xf32>
    %664 = tpu.matmul %662, %663, %cst_294 {dimension_numbers = #tpu.dot_dimension_numbers<[1], [0], [0], [1], [0, 0, 1, 1], [], []>} : vector<1x32xf32>, vector<32x32xf32>, vector<1x32xf32> -> vector<1x32xf32>
    %c0_295 = arith.constant 0 : index
    %c0_296 = arith.constant 0 : index
    %665 = vector.load %arg19[%c0_295, %c0_296] : memref<1x32xf32, #tpu.memory_space<vmem>>, vector<1x32xf32>
    %666 = arith.addf %664, %665 : vector<1x32xf32>
    %cst_297 = arith.constant dense<0xFF800000> : vector<1xf32>
    %667 = vector.multi_reduction <maximumf>, %666, %cst_297 [1] : vector<1x32xf32> to vector<1xf32>
    %668 = vector.shape_cast %667 : vector<1xf32> to vector<1x1xf32>
    %669 = vector.broadcast %668 : vector<1x1xf32> to vector<1x32xf32>
    %670 = arith.subf %666, %669 : vector<1x32xf32>
    %671 = math.exp %670 : vector<1x32xf32>
    %cst_298 = arith.constant dense<0.000000e+00> : vector<1xf32>
    %672 = vector.multi_reduction <add>, %671, %cst_298 [1] : vector<1x32xf32> to vector<1xf32>
    %673 = vector.shape_cast %672 : vector<1xf32> to vector<1x1xf32>
    %cst_299 = arith.constant 1.000000e+00 : f32
    %674 = vector.broadcast %cst_299 : f32 to vector<1x1xf32>
    %675 = arith.divf %674, %673 : vector<1x1xf32>
    %676 = vector.broadcast %668 : vector<1x1xf32> to vector<1x32xf32>
    %677 = arith.cmpf oge, %666, %676 : vector<1x32xf32>
    %678 = arith.sitofp %323 : vector<1x32xi32> to vector<1x32xf32>
    %cst_300 = arith.constant 3.200000e+01 : f32
    %679 = vector.broadcast %cst_300 : f32 to vector<1x32xf32>
    %680 = arith.select %677, %678, %679 : vector<1x32xi1>, vector<1x32xf32>
    %cst_301 = arith.constant dense<0x7F800000> : vector<1xf32>
    %681 = vector.multi_reduction <minimumf>, %680, %cst_301 [1] : vector<1x32xf32> to vector<1xf32>
    %682 = vector.shape_cast %681 : vector<1xf32> to vector<1x1xf32>
    %683 = arith.fptosi %682 : vector<1x1xf32> to vector<1x1xi32>
    %684 = vector.broadcast %683 : vector<1x1xi32> to vector<1x32xi32>
    %685 = arith.cmpi eq, %323, %684 : vector<1x32xi32>
    %686 = arith.extui %685 : vector<1x32xi1> to vector<1x32xi32>
    %687 = arith.sitofp %686 : vector<1x32xi32> to vector<1x32xf32>
    %688 = vector.broadcast %c3_i32_261 : i32 to vector<1x128xi32>
    %689 = arith.cmpi eq, %324, %688 : vector<1x128xi32>
    %690 = vector.shape_cast %683 : vector<1x1xi32> to vector<1x1xi32>
    %691 = vector.broadcast %690 : vector<1x1xi32> to vector<1x128xi32>
    %692 = arith.select %689, %691, %600 : vector<1x128xi1>, vector<1x128xi32>
    %693 = vector.shape_cast %675 : vector<1x1xf32> to vector<1x1xf32>
    %694 = vector.broadcast %693 : vector<1x1xf32> to vector<1x128xf32>
    %695 = arith.select %689, %694, %603 : vector<1x128xi1>, vector<1x128xf32>
    %c4_i32_302 = arith.constant 4 : i32
    %c0_303 = arith.constant 0 : index
    %c0_304 = arith.constant 0 : index
    %696 = vector.load %arg9[%c0_303, %c0_304] : memref<32x32xf32, #tpu.memory_space<vmem>>, vector<32x32xf32>
    %cst_305 = arith.constant dense<0.000000e+00> : vector<1x32xf32>
    %697 = tpu.matmul %687, %696, %cst_305 {dimension_numbers = #tpu.dot_dimension_numbers<[1], [0], [0], [1], [0, 0, 1, 1], [], []>} : vector<1x32xf32>, vector<32x32xf32>, vector<1x32xf32> -> vector<1x32xf32>
    %c0_306 = arith.constant 0 : index
    %c0_307 = arith.constant 0 : index
    %698 = vector.load %arg10[%c0_306, %c0_307] : memref<32x128xf32, #tpu.memory_space<vmem>>, vector<32x128xf32>
    %cst_308 = arith.constant dense<0.000000e+00> : vector<1x128xf32>
    %699 = tpu.matmul %697, %698, %cst_308 {dimension_numbers = #tpu.dot_dimension_numbers<[1], [0], [0], [1], [0, 0, 1, 1], [], []>} : vector<1x32xf32>, vector<32x128xf32>, vector<1x128xf32> -> vector<1x128xf32>
    %700 = arith.addf %699, %322 : vector<1x128xf32>
    %c0_309 = arith.constant 0 : index
    %c0_310 = arith.constant 0 : index
    %701 = vector.load %arg12[%c0_309, %c0_310] : memref<32x128xf32, #tpu.memory_space<vmem>>, vector<32x128xf32>
    %cst_311 = arith.constant dense<0.000000e+00> : vector<1x128xf32>
    %702 = tpu.matmul %642, %701, %cst_311 {dimension_numbers = #tpu.dot_dimension_numbers<[1], [0], [0], [1], [0, 0, 1, 1], [], []>} : vector<1x32xf32>, vector<32x128xf32>, vector<1x128xf32> -> vector<1x128xf32>
    %c0_312 = arith.constant 0 : index
    %c0_313 = arith.constant 0 : index
    %703 = vector.load %arg14[%c0_312, %c0_313] : memref<1x128xf32, #tpu.memory_space<vmem>>, vector<1x128xf32>
    %704 = arith.addf %702, %703 : vector<1x128xf32>
    %705 = vector.extract_strided_slice %700 {offsets = [0, 0], sizes = [1, 32], strides = [1, 1]} : vector<1x128xf32> to vector<1x32xf32>
    %706 = vector.extract_strided_slice %704 {offsets = [0, 0], sizes = [1, 32], strides = [1, 1]} : vector<1x128xf32> to vector<1x32xf32>
    %707 = arith.addf %705, %706 : vector<1x32xf32>
    %cst_314 = arith.constant 0.000000e+00 : f32
    %708 = vector.broadcast %cst_314 : f32 to vector<1x32xf32>
    %709 = arith.subf %708, %707 : vector<1x32xf32>
    %710 = math.exp %709 : vector<1x32xf32>
    %cst_315 = arith.constant 1.000000e+00 : f32
    %711 = vector.broadcast %cst_315 : f32 to vector<1x32xf32>
    %712 = arith.addf %711, %710 : vector<1x32xf32>
    %cst_316 = arith.constant 1.000000e+00 : f32
    %713 = vector.broadcast %cst_316 : f32 to vector<1x32xf32>
    %714 = arith.divf %713, %712 : vector<1x32xf32>
    %715 = vector.extract_strided_slice %700 {offsets = [0, 32], sizes = [1, 32], strides = [1, 1]} : vector<1x128xf32> to vector<1x32xf32>
    %716 = vector.extract_strided_slice %704 {offsets = [0, 32], sizes = [1, 32], strides = [1, 1]} : vector<1x128xf32> to vector<1x32xf32>
    %717 = arith.addf %715, %716 : vector<1x32xf32>
    %cst_317 = arith.constant 0.000000e+00 : f32
    %718 = vector.broadcast %cst_317 : f32 to vector<1x32xf32>
    %719 = arith.subf %718, %717 : vector<1x32xf32>
    %720 = math.exp %719 : vector<1x32xf32>
    %cst_318 = arith.constant 1.000000e+00 : f32
    %721 = vector.broadcast %cst_318 : f32 to vector<1x32xf32>
    %722 = arith.addf %721, %720 : vector<1x32xf32>
    %cst_319 = arith.constant 1.000000e+00 : f32
    %723 = vector.broadcast %cst_319 : f32 to vector<1x32xf32>
    %724 = arith.divf %723, %722 : vector<1x32xf32>
    %725 = vector.extract_strided_slice %700 {offsets = [0, 64], sizes = [1, 32], strides = [1, 1]} : vector<1x128xf32> to vector<1x32xf32>
    %726 = vector.extract_strided_slice %704 {offsets = [0, 64], sizes = [1, 32], strides = [1, 1]} : vector<1x128xf32> to vector<1x32xf32>
    %727 = arith.mulf %714, %726 : vector<1x32xf32>
    %728 = arith.addf %725, %727 : vector<1x32xf32>
    %729 = math.tanh %728 : vector<1x32xf32>
    %cst_320 = arith.constant 1.000000e+00 : f32
    %730 = vector.broadcast %cst_320 : f32 to vector<1x32xf32>
    %731 = arith.subf %730, %724 : vector<1x32xf32>
    %732 = arith.mulf %731, %729 : vector<1x32xf32>
    %733 = arith.mulf %724, %642 : vector<1x32xf32>
    %734 = arith.addf %732, %733 : vector<1x32xf32>
    %cst_321 = arith.constant dense<0.000000e+00> : vector<1x8xf32>
    %735 = tpu.matmul %734, %317, %cst_321 {dimension_numbers = #tpu.dot_dimension_numbers<[1], [1], [0], [0], [0, 0, 1, 0], [], []>} : vector<1x32xf32>, vector<8x32xf32>, vector<1x8xf32> -> vector<1x8xf32>
    %cst_322 = arith.constant dense<0xFF800000> : vector<1xf32>
    %736 = vector.multi_reduction <maximumf>, %735, %cst_322 [1] : vector<1x8xf32> to vector<1xf32>
    %737 = vector.shape_cast %736 : vector<1xf32> to vector<1x1xf32>
    %738 = vector.broadcast %737 : vector<1x1xf32> to vector<1x8xf32>
    %739 = arith.subf %735, %738 : vector<1x8xf32>
    %740 = math.exp %739 : vector<1x8xf32>
    %cst_323 = arith.constant dense<0.000000e+00> : vector<1xf32>
    %741 = vector.multi_reduction <add>, %740, %cst_323 [1] : vector<1x8xf32> to vector<1xf32>
    %742 = vector.shape_cast %741 : vector<1xf32> to vector<1x1xf32>
    %743 = tpu.reciprocal %742 {approx = true} : vector<1x1xf32> -> vector<1x1xf32>
    %744 = vector.broadcast %743 : vector<1x1xf32> to vector<1x8xf32>
    %745 = arith.mulf %740, %744 : vector<1x8xf32>
    %cst_324 = arith.constant dense<0.000000e+00> : vector<1x32xf32>
    %746 = tpu.matmul %745, %317, %cst_324 {dimension_numbers = #tpu.dot_dimension_numbers<[1], [0], [0], [1], [0, 0, 1, 1], [], []>} : vector<1x8xf32>, vector<8x32xf32>, vector<1x32xf32> -> vector<1x32xf32>
    %c0_325 = arith.constant 0 : index
    %c0_326 = arith.constant 0 : index
    %747 = vector.load %arg15[%c0_325, %c0_326] : memref<32x32xf32, #tpu.memory_space<vmem>>, vector<32x32xf32>
    %cst_327 = arith.constant dense<0.000000e+00> : vector<1x32xf32>
    %748 = tpu.matmul %734, %747, %cst_327 {dimension_numbers = #tpu.dot_dimension_numbers<[1], [0], [0], [1], [0, 0, 1, 1], [], []>} : vector<1x32xf32>, vector<32x32xf32>, vector<1x32xf32> -> vector<1x32xf32>
    %c0_328 = arith.constant 0 : index
    %c0_329 = arith.constant 0 : index
    %749 = vector.load %arg16[%c0_328, %c0_329] : memref<32x32xf32, #tpu.memory_space<vmem>>, vector<32x32xf32>
    %cst_330 = arith.constant dense<0.000000e+00> : vector<1x32xf32>
    %750 = tpu.matmul %746, %749, %cst_330 {dimension_numbers = #tpu.dot_dimension_numbers<[1], [0], [0], [1], [0, 0, 1, 1], [], []>} : vector<1x32xf32>, vector<32x32xf32>, vector<1x32xf32> -> vector<1x32xf32>
    %751 = arith.addf %748, %750 : vector<1x32xf32>
    %c0_331 = arith.constant 0 : index
    %c0_332 = arith.constant 0 : index
    %752 = vector.load %arg17[%c0_331, %c0_332] : memref<1x32xf32, #tpu.memory_space<vmem>>, vector<1x32xf32>
    %753 = arith.addf %751, %752 : vector<1x32xf32>
    %754 = math.tanh %753 : vector<1x32xf32>
    %c0_333 = arith.constant 0 : index
    %c0_334 = arith.constant 0 : index
    %755 = vector.load %arg18[%c0_333, %c0_334] : memref<32x32xf32, #tpu.memory_space<vmem>>, vector<32x32xf32>
    %cst_335 = arith.constant dense<0.000000e+00> : vector<1x32xf32>
    %756 = tpu.matmul %754, %755, %cst_335 {dimension_numbers = #tpu.dot_dimension_numbers<[1], [0], [0], [1], [0, 0, 1, 1], [], []>} : vector<1x32xf32>, vector<32x32xf32>, vector<1x32xf32> -> vector<1x32xf32>
    %c0_336 = arith.constant 0 : index
    %c0_337 = arith.constant 0 : index
    %757 = vector.load %arg19[%c0_336, %c0_337] : memref<1x32xf32, #tpu.memory_space<vmem>>, vector<1x32xf32>
    %758 = arith.addf %756, %757 : vector<1x32xf32>
    %cst_338 = arith.constant dense<0xFF800000> : vector<1xf32>
    %759 = vector.multi_reduction <maximumf>, %758, %cst_338 [1] : vector<1x32xf32> to vector<1xf32>
    %760 = vector.shape_cast %759 : vector<1xf32> to vector<1x1xf32>
    %761 = vector.broadcast %760 : vector<1x1xf32> to vector<1x32xf32>
    %762 = arith.subf %758, %761 : vector<1x32xf32>
    %763 = math.exp %762 : vector<1x32xf32>
    %cst_339 = arith.constant dense<0.000000e+00> : vector<1xf32>
    %764 = vector.multi_reduction <add>, %763, %cst_339 [1] : vector<1x32xf32> to vector<1xf32>
    %765 = vector.shape_cast %764 : vector<1xf32> to vector<1x1xf32>
    %cst_340 = arith.constant 1.000000e+00 : f32
    %766 = vector.broadcast %cst_340 : f32 to vector<1x1xf32>
    %767 = arith.divf %766, %765 : vector<1x1xf32>
    %768 = vector.broadcast %760 : vector<1x1xf32> to vector<1x32xf32>
    %769 = arith.cmpf oge, %758, %768 : vector<1x32xf32>
    %770 = arith.sitofp %323 : vector<1x32xi32> to vector<1x32xf32>
    %cst_341 = arith.constant 3.200000e+01 : f32
    %771 = vector.broadcast %cst_341 : f32 to vector<1x32xf32>
    %772 = arith.select %769, %770, %771 : vector<1x32xi1>, vector<1x32xf32>
    %cst_342 = arith.constant dense<0x7F800000> : vector<1xf32>
    %773 = vector.multi_reduction <minimumf>, %772, %cst_342 [1] : vector<1x32xf32> to vector<1xf32>
    %774 = vector.shape_cast %773 : vector<1xf32> to vector<1x1xf32>
    %775 = arith.fptosi %774 : vector<1x1xf32> to vector<1x1xi32>
    %776 = vector.broadcast %775 : vector<1x1xi32> to vector<1x32xi32>
    %777 = arith.cmpi eq, %323, %776 : vector<1x32xi32>
    %778 = arith.extui %777 : vector<1x32xi1> to vector<1x32xi32>
    %779 = arith.sitofp %778 : vector<1x32xi32> to vector<1x32xf32>
    %780 = vector.broadcast %c4_i32_302 : i32 to vector<1x128xi32>
    %781 = arith.cmpi eq, %324, %780 : vector<1x128xi32>
    %782 = vector.shape_cast %775 : vector<1x1xi32> to vector<1x1xi32>
    %783 = vector.broadcast %782 : vector<1x1xi32> to vector<1x128xi32>
    %784 = arith.select %781, %783, %692 : vector<1x128xi1>, vector<1x128xi32>
    %785 = vector.shape_cast %767 : vector<1x1xf32> to vector<1x1xf32>
    %786 = vector.broadcast %785 : vector<1x1xf32> to vector<1x128xf32>
    %787 = arith.select %781, %786, %695 : vector<1x128xi1>, vector<1x128xf32>
    %c5_i32_343 = arith.constant 5 : i32
    %c0_344 = arith.constant 0 : index
    %c0_345 = arith.constant 0 : index
    %788 = vector.load %arg9[%c0_344, %c0_345] : memref<32x32xf32, #tpu.memory_space<vmem>>, vector<32x32xf32>
    %cst_346 = arith.constant dense<0.000000e+00> : vector<1x32xf32>
    %789 = tpu.matmul %779, %788, %cst_346 {dimension_numbers = #tpu.dot_dimension_numbers<[1], [0], [0], [1], [0, 0, 1, 1], [], []>} : vector<1x32xf32>, vector<32x32xf32>, vector<1x32xf32> -> vector<1x32xf32>
    %c0_347 = arith.constant 0 : index
    %c0_348 = arith.constant 0 : index
    %790 = vector.load %arg10[%c0_347, %c0_348] : memref<32x128xf32, #tpu.memory_space<vmem>>, vector<32x128xf32>
    %cst_349 = arith.constant dense<0.000000e+00> : vector<1x128xf32>
    %791 = tpu.matmul %789, %790, %cst_349 {dimension_numbers = #tpu.dot_dimension_numbers<[1], [0], [0], [1], [0, 0, 1, 1], [], []>} : vector<1x32xf32>, vector<32x128xf32>, vector<1x128xf32> -> vector<1x128xf32>
    %792 = arith.addf %791, %322 : vector<1x128xf32>
    %c0_350 = arith.constant 0 : index
    %c0_351 = arith.constant 0 : index
    %793 = vector.load %arg12[%c0_350, %c0_351] : memref<32x128xf32, #tpu.memory_space<vmem>>, vector<32x128xf32>
    %cst_352 = arith.constant dense<0.000000e+00> : vector<1x128xf32>
    %794 = tpu.matmul %734, %793, %cst_352 {dimension_numbers = #tpu.dot_dimension_numbers<[1], [0], [0], [1], [0, 0, 1, 1], [], []>} : vector<1x32xf32>, vector<32x128xf32>, vector<1x128xf32> -> vector<1x128xf32>
    %c0_353 = arith.constant 0 : index
    %c0_354 = arith.constant 0 : index
    %795 = vector.load %arg14[%c0_353, %c0_354] : memref<1x128xf32, #tpu.memory_space<vmem>>, vector<1x128xf32>
    %796 = arith.addf %794, %795 : vector<1x128xf32>
    %797 = vector.extract_strided_slice %792 {offsets = [0, 0], sizes = [1, 32], strides = [1, 1]} : vector<1x128xf32> to vector<1x32xf32>
    %798 = vector.extract_strided_slice %796 {offsets = [0, 0], sizes = [1, 32], strides = [1, 1]} : vector<1x128xf32> to vector<1x32xf32>
    %799 = arith.addf %797, %798 : vector<1x32xf32>
    %cst_355 = arith.constant 0.000000e+00 : f32
    %800 = vector.broadcast %cst_355 : f32 to vector<1x32xf32>
    %801 = arith.subf %800, %799 : vector<1x32xf32>
    %802 = math.exp %801 : vector<1x32xf32>
    %cst_356 = arith.constant 1.000000e+00 : f32
    %803 = vector.broadcast %cst_356 : f32 to vector<1x32xf32>
    %804 = arith.addf %803, %802 : vector<1x32xf32>
    %cst_357 = arith.constant 1.000000e+00 : f32
    %805 = vector.broadcast %cst_357 : f32 to vector<1x32xf32>
    %806 = arith.divf %805, %804 : vector<1x32xf32>
    %807 = vector.extract_strided_slice %792 {offsets = [0, 32], sizes = [1, 32], strides = [1, 1]} : vector<1x128xf32> to vector<1x32xf32>
    %808 = vector.extract_strided_slice %796 {offsets = [0, 32], sizes = [1, 32], strides = [1, 1]} : vector<1x128xf32> to vector<1x32xf32>
    %809 = arith.addf %807, %808 : vector<1x32xf32>
    %cst_358 = arith.constant 0.000000e+00 : f32
    %810 = vector.broadcast %cst_358 : f32 to vector<1x32xf32>
    %811 = arith.subf %810, %809 : vector<1x32xf32>
    %812 = math.exp %811 : vector<1x32xf32>
    %cst_359 = arith.constant 1.000000e+00 : f32
    %813 = vector.broadcast %cst_359 : f32 to vector<1x32xf32>
    %814 = arith.addf %813, %812 : vector<1x32xf32>
    %cst_360 = arith.constant 1.000000e+00 : f32
    %815 = vector.broadcast %cst_360 : f32 to vector<1x32xf32>
    %816 = arith.divf %815, %814 : vector<1x32xf32>
    %817 = vector.extract_strided_slice %792 {offsets = [0, 64], sizes = [1, 32], strides = [1, 1]} : vector<1x128xf32> to vector<1x32xf32>
    %818 = vector.extract_strided_slice %796 {offsets = [0, 64], sizes = [1, 32], strides = [1, 1]} : vector<1x128xf32> to vector<1x32xf32>
    %819 = arith.mulf %806, %818 : vector<1x32xf32>
    %820 = arith.addf %817, %819 : vector<1x32xf32>
    %821 = math.tanh %820 : vector<1x32xf32>
    %cst_361 = arith.constant 1.000000e+00 : f32
    %822 = vector.broadcast %cst_361 : f32 to vector<1x32xf32>
    %823 = arith.subf %822, %816 : vector<1x32xf32>
    %824 = arith.mulf %823, %821 : vector<1x32xf32>
    %825 = arith.mulf %816, %734 : vector<1x32xf32>
    %826 = arith.addf %824, %825 : vector<1x32xf32>
    %cst_362 = arith.constant dense<0.000000e+00> : vector<1x8xf32>
    %827 = tpu.matmul %826, %317, %cst_362 {dimension_numbers = #tpu.dot_dimension_numbers<[1], [1], [0], [0], [0, 0, 1, 0], [], []>} : vector<1x32xf32>, vector<8x32xf32>, vector<1x8xf32> -> vector<1x8xf32>
    %cst_363 = arith.constant dense<0xFF800000> : vector<1xf32>
    %828 = vector.multi_reduction <maximumf>, %827, %cst_363 [1] : vector<1x8xf32> to vector<1xf32>
    %829 = vector.shape_cast %828 : vector<1xf32> to vector<1x1xf32>
    %830 = vector.broadcast %829 : vector<1x1xf32> to vector<1x8xf32>
    %831 = arith.subf %827, %830 : vector<1x8xf32>
    %832 = math.exp %831 : vector<1x8xf32>
    %cst_364 = arith.constant dense<0.000000e+00> : vector<1xf32>
    %833 = vector.multi_reduction <add>, %832, %cst_364 [1] : vector<1x8xf32> to vector<1xf32>
    %834 = vector.shape_cast %833 : vector<1xf32> to vector<1x1xf32>
    %835 = tpu.reciprocal %834 {approx = true} : vector<1x1xf32> -> vector<1x1xf32>
    %836 = vector.broadcast %835 : vector<1x1xf32> to vector<1x8xf32>
    %837 = arith.mulf %832, %836 : vector<1x8xf32>
    %cst_365 = arith.constant dense<0.000000e+00> : vector<1x32xf32>
    %838 = tpu.matmul %837, %317, %cst_365 {dimension_numbers = #tpu.dot_dimension_numbers<[1], [0], [0], [1], [0, 0, 1, 1], [], []>} : vector<1x8xf32>, vector<8x32xf32>, vector<1x32xf32> -> vector<1x32xf32>
    %c0_366 = arith.constant 0 : index
    %c0_367 = arith.constant 0 : index
    %839 = vector.load %arg15[%c0_366, %c0_367] : memref<32x32xf32, #tpu.memory_space<vmem>>, vector<32x32xf32>
    %cst_368 = arith.constant dense<0.000000e+00> : vector<1x32xf32>
    %840 = tpu.matmul %826, %839, %cst_368 {dimension_numbers = #tpu.dot_dimension_numbers<[1], [0], [0], [1], [0, 0, 1, 1], [], []>} : vector<1x32xf32>, vector<32x32xf32>, vector<1x32xf32> -> vector<1x32xf32>
    %c0_369 = arith.constant 0 : index
    %c0_370 = arith.constant 0 : index
    %841 = vector.load %arg16[%c0_369, %c0_370] : memref<32x32xf32, #tpu.memory_space<vmem>>, vector<32x32xf32>
    %cst_371 = arith.constant dense<0.000000e+00> : vector<1x32xf32>
    %842 = tpu.matmul %838, %841, %cst_371 {dimension_numbers = #tpu.dot_dimension_numbers<[1], [0], [0], [1], [0, 0, 1, 1], [], []>} : vector<1x32xf32>, vector<32x32xf32>, vector<1x32xf32> -> vector<1x32xf32>
    %843 = arith.addf %840, %842 : vector<1x32xf32>
    %c0_372 = arith.constant 0 : index
    %c0_373 = arith.constant 0 : index
    %844 = vector.load %arg17[%c0_372, %c0_373] : memref<1x32xf32, #tpu.memory_space<vmem>>, vector<1x32xf32>
    %845 = arith.addf %843, %844 : vector<1x32xf32>
    %846 = math.tanh %845 : vector<1x32xf32>
    %c0_374 = arith.constant 0 : index
    %c0_375 = arith.constant 0 : index
    %847 = vector.load %arg18[%c0_374, %c0_375] : memref<32x32xf32, #tpu.memory_space<vmem>>, vector<32x32xf32>
    %cst_376 = arith.constant dense<0.000000e+00> : vector<1x32xf32>
    %848 = tpu.matmul %846, %847, %cst_376 {dimension_numbers = #tpu.dot_dimension_numbers<[1], [0], [0], [1], [0, 0, 1, 1], [], []>} : vector<1x32xf32>, vector<32x32xf32>, vector<1x32xf32> -> vector<1x32xf32>
    %c0_377 = arith.constant 0 : index
    %c0_378 = arith.constant 0 : index
    %849 = vector.load %arg19[%c0_377, %c0_378] : memref<1x32xf32, #tpu.memory_space<vmem>>, vector<1x32xf32>
    %850 = arith.addf %848, %849 : vector<1x32xf32>
    %cst_379 = arith.constant dense<0xFF800000> : vector<1xf32>
    %851 = vector.multi_reduction <maximumf>, %850, %cst_379 [1] : vector<1x32xf32> to vector<1xf32>
    %852 = vector.shape_cast %851 : vector<1xf32> to vector<1x1xf32>
    %853 = vector.broadcast %852 : vector<1x1xf32> to vector<1x32xf32>
    %854 = arith.subf %850, %853 : vector<1x32xf32>
    %855 = math.exp %854 : vector<1x32xf32>
    %cst_380 = arith.constant dense<0.000000e+00> : vector<1xf32>
    %856 = vector.multi_reduction <add>, %855, %cst_380 [1] : vector<1x32xf32> to vector<1xf32>
    %857 = vector.shape_cast %856 : vector<1xf32> to vector<1x1xf32>
    %cst_381 = arith.constant 1.000000e+00 : f32
    %858 = vector.broadcast %cst_381 : f32 to vector<1x1xf32>
    %859 = arith.divf %858, %857 : vector<1x1xf32>
    %860 = vector.broadcast %852 : vector<1x1xf32> to vector<1x32xf32>
    %861 = arith.cmpf oge, %850, %860 : vector<1x32xf32>
    %862 = arith.sitofp %323 : vector<1x32xi32> to vector<1x32xf32>
    %cst_382 = arith.constant 3.200000e+01 : f32
    %863 = vector.broadcast %cst_382 : f32 to vector<1x32xf32>
    %864 = arith.select %861, %862, %863 : vector<1x32xi1>, vector<1x32xf32>
    %cst_383 = arith.constant dense<0x7F800000> : vector<1xf32>
    %865 = vector.multi_reduction <minimumf>, %864, %cst_383 [1] : vector<1x32xf32> to vector<1xf32>
    %866 = vector.shape_cast %865 : vector<1xf32> to vector<1x1xf32>
    %867 = arith.fptosi %866 : vector<1x1xf32> to vector<1x1xi32>
    %868 = vector.broadcast %867 : vector<1x1xi32> to vector<1x32xi32>
    %869 = arith.cmpi eq, %323, %868 : vector<1x32xi32>
    %870 = arith.extui %869 : vector<1x32xi1> to vector<1x32xi32>
    %871 = arith.sitofp %870 : vector<1x32xi32> to vector<1x32xf32>
    %872 = vector.broadcast %c5_i32_343 : i32 to vector<1x128xi32>
    %873 = arith.cmpi eq, %324, %872 : vector<1x128xi32>
    %874 = vector.shape_cast %867 : vector<1x1xi32> to vector<1x1xi32>
    %875 = vector.broadcast %874 : vector<1x1xi32> to vector<1x128xi32>
    %876 = arith.select %873, %875, %784 : vector<1x128xi1>, vector<1x128xi32>
    %877 = vector.shape_cast %859 : vector<1x1xf32> to vector<1x1xf32>
    %878 = vector.broadcast %877 : vector<1x1xf32> to vector<1x128xf32>
    %879 = arith.select %873, %878, %787 : vector<1x128xi1>, vector<1x128xf32>
    %c6_i32_384 = arith.constant 6 : i32
    %c0_385 = arith.constant 0 : index
    %c0_386 = arith.constant 0 : index
    %880 = vector.load %arg20[%c0_385, %c0_386] : memref<1x128xi32, #tpu.memory_space<vmem>>, vector<1x128xi32>
    tpu.vector_store %arg20[%c0_385, %c0_386], %876 {strides = array<i32>} : memref<1x128xi32, #tpu.memory_space<vmem>>, vector<1x128xi32>,
    %c0_387 = arith.constant 0 : index
    %c0_388 = arith.constant 0 : index
    %881 = vector.load %arg21[%c0_387, %c0_388] : memref<1x128xf32, #tpu.memory_space<vmem>>, vector<1x128xf32>
    tpu.vector_store %arg21[%c0_387, %c0_388], %879 {strides = array<i32>} : memref<1x128xf32, #tpu.memory_space<vmem>>, vector<1x128xf32>,
    return
  }
}

</mosaic_0001>

<llo_original>
// kernel: _greedy_forward.1
$region0: #{_greedy_forward.1}
  #allocation0 [shape = 'u32[]', space=smem, size = 0x4, offset = 0x4, fixed_abs, tag = 'smem constant byte address 0x4 - core index']
  #allocation1 [shape = 'u32[144,128]{1,0:T(1,128)}', space=vmem, size = 0x12000, scoped, tag = 'internal scratch']
  #allocation2 [shape = 'f32[8,32]{1,0:T(8,128)}', space=vmem, size = 0x1000, scoped, tag = 'scratch operand']
  #allocation3 [shape = 'f32[8,128]{1,0:T(8,128)}', space=vmem, size = 0x1000, scoped, tag = 'scratch operand']
  %s0 = inlined_call_operand.vmem [shape: f32[8,32], index: 0, kind: input, shape index: {}]
  %s1 = inlined_call_operand.vmem [shape: f32[1,32], index: 1, kind: input, shape index: {}]
  %s2 = inlined_call_operand.vmem [shape: f32[1,32], index: 2, kind: input, shape index: {}]
  %s3 = inlined_call_operand.vmem [shape: f32[32,128], index: 3, kind: input, shape index: {}]
  %s4 = inlined_call_operand.vmem [shape: f32[32,128], index: 4, kind: input, shape index: {}]
  %s5 = inlined_call_operand.vmem [shape: f32[1,128], index: 5, kind: input, shape index: {}]
  %s6 = inlined_call_operand.vmem [shape: f32[1,128], index: 6, kind: input, shape index: {}]
  %s7 = inlined_call_operand.vmem [shape: f32[32,32], index: 7, kind: input, shape index: {}]
  %s8 = inlined_call_operand.vmem [shape: f32[1,32], index: 8, kind: input, shape index: {}]
  %s9 = inlined_call_operand.vmem [shape: f32[32,32], index: 9, kind: input, shape index: {}]
  %s10 = inlined_call_operand.hbm [shape: f32[32,128], index: 10, kind: input, shape index: {}]
  %s11 = inlined_call_operand.hbm [shape: f32[32,128], index: 11, kind: input, shape index: {}]
  %s12 = inlined_call_operand.hbm [shape: f32[32,128], index: 12, kind: input, shape index: {}]
  %s13 = inlined_call_operand.vmem [shape: f32[1,128], index: 13, kind: input, shape index: {}]
  %s14 = inlined_call_operand.hbm [shape: f32[1,128], index: 14, kind: input, shape index: {}]
  %s15 = inlined_call_operand.hbm [shape: f32[32,32], index: 15, kind: input, shape index: {}]
  %s16 = inlined_call_operand.hbm [shape: f32[32,32], index: 16, kind: input, shape index: {}]
  %s17 = inlined_call_operand.hbm [shape: f32[1,32], index: 17, kind: input, shape index: {}]
  %s18 = inlined_call_operand.hbm [shape: f32[32,32], index: 18, kind: input, shape index: {}]
  %s19 = inlined_call_operand.hbm [shape: f32[1,32], index: 19, kind: input, shape index: {}]
  %s20 = inlined_call_operand.vmem [shape: s32[1,128], index: 20, kind: output, shape index: {0}]
  %s21 = inlined_call_operand.vmem [shape: f32[1,128], index: 21, kind: output, shape index: {1}]
  %22 = xla_tuple %s20, %s21
  %s23 = sld [smem:[#allocation0]]
  $region134: #{_greedy_forward.1} parent=0
    _
  %s25 = ssub.s32 1, %s23
  %s26 = scalar_select 0, %s25, %s23
  $region1: #{_greedy_forward.1} parent=0
    #allocation4 [shape = 'u8[16384]{0}', space=vmem, size = 0x4000, scoped, tag = 'input window, operand 10, single buffered']
    #allocation5 [shape = 's32[1]{0}', space=sflag, size = 0x4, scoped, tag = 'scoped memory for _greedy_forward.1']
    #allocation6 [shape = 'u8[16384]{0}', space=vmem, size = 0x4000, scoped, tag = 'input window, operand 11, single buffered']
    #allocation7 [shape = 's32[1]{0}', space=sflag, size = 0x4, scoped, tag = 'scoped memory for _greedy_forward.1']
    #allocation8 [shape = 'u8[16384]{0}', space=vmem, size = 0x4000, scoped, tag = 'input window, operand 12, single buffered']
    #allocation9 [shape = 'u8[512]{0}', space=vmem, size = 0x400, scoped, tag = 'input window, operand 14, single buffered']
    #allocation10 [shape = 's32[1]{0}', space=sflag, size = 0x4, scoped, tag = 'scoped memory for _greedy_forward.1']
    #allocation11 [shape = 'u8[16384]{0}', space=vmem, size = 0x4000, scoped, tag = 'input window, operand 15, single buffered']
    #allocation12 [shape = 'u8[16384]{0}', space=vmem, size = 0x4000, scoped, tag = 'input window, operand 16, single buffered']
    #allocation13 [shape = 's32[1]{0}', space=sflag, size = 0x4, scoped, tag = 'scoped memory for _greedy_forward.1']
    #allocation14 [shape = 'u8[512]{0}', space=vmem, size = 0x400, scoped, tag = 'input window, operand 17, single buffered']
    #allocation15 [shape = 'u8[16384]{0}', space=vmem, size = 0x4000, scoped, tag = 'input window, operand 18, single buffered']
    #allocation16 [shape = 's32[1]{0}', space=sflag, size = 0x4, scoped, tag = 'scoped memory for _greedy_forward.1']
    #allocation17 [shape = 'u8[512]{0}', space=vmem, size = 0x400, scoped, tag = 'input window, operand 19, single buffered']
    %27 = vsyncpa [#allocation5], 0
    %28 = vsyncpa [#allocation7], 0
    %29 = vsyncpa [#allocation10], 0
    %30 = vsyncpa [#allocation13], 0
    %31 = vsyncpa [#allocation16], 0
    // Predicated region
    $region2: #{_greedy_forward.1} parent=1 // pred_check
      _
    $region3: #{_greedy_forward.1} parent=1 // pred_check_branch
      %33 = sbr.rel (0) target = $region5
    $region4: #{_greedy_forward.1} parent=1 // pred_region
      _
    $region5: #{_greedy_forward.1} parent=1 // pred_fallthru
      _
    // Predicated region
    $region6: #{_greedy_forward.1} parent=1 // pred_check
      _
    $region7: #{_greedy_forward.1} parent=1 // pred_check_branch
      %35 = sbr.rel (0) target = $region9
    $region8: #{_greedy_forward.1} parent=1 // pred_region
      _
    $region9: #{_greedy_forward.1} parent=1 // pred_fallthru
      _
    // Predicated region
    $region10: #{_greedy_forward.1} parent=1 // pred_check
      _
    $region11: #{_greedy_forward.1} parent=1 // pred_check_branch
      %37 = sbr.rel (0) target = $region13
    $region12: #{_greedy_forward.1} parent=1 // pred_region
      _
    $region13: #{_greedy_forward.1} parent=1 // pred_fallthru
      _
    // Predicated region
    $region14: #{_greedy_forward.1} parent=1 // pred_check
      _
    $region15: #{_greedy_forward.1} parent=1 // pred_check_branch
      %39 = sbr.rel (0) target = $region17
    $region16: #{_greedy_forward.1} parent=1 // pred_region
      _
    $region17: #{_greedy_forward.1} parent=1 // pred_fallthru
      _
    // Predicated region
    $region18: #{_greedy_forward.1} parent=1 // pred_check
      _
    $region19: #{_greedy_forward.1} parent=1 // pred_check_branch
      %41 = sbr.rel (0) target = $region21
    $region20: #{_greedy_forward.1} parent=1 // pred_region
      _
    $region21: #{_greedy_forward.1} parent=1 // pred_fallthru
      _
    // Predicated region
    $region22: #{_greedy_forward.1} parent=1 // pred_check
      _
    $region23: #{_greedy_forward.1} parent=1 // pred_check_branch
      %43 = sbr.rel (0) target = $region25
    $region24: #{_greedy_forward.1} parent=1 // pred_region
      _
    $region25: #{_greedy_forward.1} parent=1 // pred_fallthru
      _
    // Predicated region
    $region26: #{_greedy_forward.1} parent=1 // pred_check
      _
    $region27: #{_greedy_forward.1} parent=1 // pred_check_branch
      %45 = sbr.rel (0) target = $region29
    $region28: #{_greedy_forward.1} parent=1 // pred_region
      _
    $region29: #{_greedy_forward.1} parent=1 // pred_fallthru
      _
    // Predicated region
    $region30: #{_greedy_forward.1} parent=1 // pred_check
      _
    $region31: #{_greedy_forward.1} parent=1 // pred_check_branch
      %47 = sbr.rel (0) target = $region33
    $region32: #{_greedy_forward.1} parent=1 // pred_region
      _
    $region33: #{_greedy_forward.1} parent=1 // pred_fallthru
      _
    // Predicated region
    $region34: #{_greedy_forward.1} parent=1 // pred_check
      _
    $region35: #{_greedy_forward.1} parent=1 // pred_check_branch
      %49 = sbr.rel (0) target = $region37
    $region36: #{_greedy_forward.1} parent=1 // pred_region
      _
    $region37: #{_greedy_forward.1} parent=1 // pred_fallthru
      _
    // Predicated region
    $region38: #{_greedy_forward.1} parent=1 // pred_check
      _
    $region39: #{_greedy_forward.1} parent=1 // pred_check_branch
      %51 = sbr.rel (0) target = $region41
    $region40: #{_greedy_forward.1} parent=1 // pred_region
      _
    $region41: #{_greedy_forward.1} parent=1 // pred_fallthru
      _
    // Predicated region
    $region42: #{_greedy_forward.1} parent=1 // pred_check
      _
    $region43: #{_greedy_forward.1} parent=1 // pred_check_branch
      %53 = sbr.rel (0) target = $region45
    $region44: #{_greedy_forward.1} parent=1 // pred_region
      %s55 = ssub.s32 512, 512
      %56 = vsyncadd [#allocation5], %s55
      %s57 = sshll.u32 [#allocation4], 4
      %s58 = int_to_ptr.vmem [resolvable:$true] %s57
      %63 = dma.hbm_to_vmem [thread:$0]  %s10, 512, %s58, [#allocation5], 128, 128, 8
    $region45: #{_greedy_forward.1} parent=1 // pred_fallthru
      _
    // Predicated region
    $region46: #{_greedy_forward.1} parent=1 // pred_check
      _
    $region47: #{_greedy_forward.1} parent=1 // pred_check_branch
      %65 = sbr.rel (0) target = $region49
    $region48: #{_greedy_forward.1} parent=1 // pred_region
      %s67 = ssub.s32 512, 512
      %68 = vsyncadd [#allocation7], %s67
      %s69 = sshll.u32 [#allocation6], 4
      %s70 = int_to_ptr.vmem [resolvable:$true] %s69
      %75 = dma.hbm_to_vmem [thread:$0]  %s11, 512, %s70, [#allocation7], 128, 128, 8
    $region49: #{_greedy_forward.1} parent=1 // pred_fallthru
      _
    // Predicated region
    $region50: #{_greedy_forward.1} parent=1 // pred_check
      _
    $region51: #{_greedy_forward.1} parent=1 // pred_check_branch
      %77 = sbr.rel (0) target = $region53
    $region52: #{_greedy_forward.1} parent=1 // pred_region
      %s79 = ssub.s32 512, 512
      %80 = vsyncadd [#allocation7], %s79
      %s81 = sshll.u32 [#allocation8], 4
      %s82 = int_to_ptr.vmem [resolvable:$true] %s81
      %87 = dma.hbm_to_vmem [thread:$0]  %s12, 512, %s82, [#allocation7], 128, 128, 8
    $region53: #{_greedy_forward.1} parent=1 // pred_fallthru
      _
    // Predicated region
    $region54: #{_greedy_forward.1} parent=1 // pred_check
      _
    $region55: #{_greedy_forward.1} parent=1 // pred_check_branch
      %89 = sbr.rel (0) target = $region57
    $region56: #{_greedy_forward.1} parent=1 // pred_region
      _
    $region57: #{_greedy_forward.1} parent=1 // pred_fallthru
      _
    // Predicated region
    $region58: #{_greedy_forward.1} parent=1 // pred_check
      _
    $region59: #{_greedy_forward.1} parent=1 // pred_check_branch
      %91 = sbr.rel (0) target = $region61
    $region60: #{_greedy_forward.1} parent=1 // pred_region
      %s93 = ssub.s32 16, 16
      %94 = vsyncadd [#allocation10], %s93
      %s96 = sshll.u32 [#allocation9], 4
      %s97 = int_to_ptr.vmem [resolvable:$true] %s96
      %99 = dma.hbm_to_vmem [thread:$0]  %s14, 16, %s97, [#allocation10]
    $region61: #{_greedy_forward.1} parent=1 // pred_fallthru
      _
    // Predicated region
    $region62: #{_greedy_forward.1} parent=1 // pred_check
      _
    $region63: #{_greedy_forward.1} parent=1 // pred_check_branch
      %101 = sbr.rel (0) target = $region65
    $region64: #{_greedy_forward.1} parent=1 // pred_region
      %s103 = ssub.s32 512, 512
      %104 = vsyncadd [#allocation10], %s103
      %s105 = sshll.u32 [#allocation11], 4
      %s106 = int_to_ptr.vmem [resolvable:$true] %s105
      %111 = dma.hbm_to_vmem [thread:$0]  %s15, 512, %s106, [#allocation10], 128, 128, 8
    $region65: #{_greedy_forward.1} parent=1 // pred_fallthru
      _
    // Predicated region
    $region66: #{_greedy_forward.1} parent=1 // pred_check
      _
    $region67: #{_greedy_forward.1} parent=1 // pred_check_branch
      %113 = sbr.rel (0) target = $region69
    $region68: #{_greedy_forward.1} parent=1 // pred_region
      %s115 = ssub.s32 512, 512
      %116 = vsyncadd [#allocation13], %s115
      %s117 = sshll.u32 [#allocation12], 4
      %s118 = int_to_ptr.vmem [resolvable:$true] %s117
      %123 = dma.hbm_to_vmem [thread:$0]  %s16, 512, %s118, [#allocation13], 128, 128, 8
    $region69: #{_greedy_forward.1} parent=1 // pred_fallthru
      _
    // Predicated region
    $region70: #{_greedy_forward.1} parent=1 // pred_check
      _
    $region71: #{_greedy_forward.1} parent=1 // pred_check_branch
      %125 = sbr.rel (0) target = $region73
    $region72: #{_greedy_forward.1} parent=1 // pred_region
      %s127 = ssub.s32 16, 16
      %128 = vsyncadd [#allocation13], %s127
      %s130 = sshll.u32 [#allocation14], 4
      %s131 = int_to_ptr.vmem [resolvable:$true] %s130
      %133 = dma.hbm_to_vmem [thread:$0]  %s17, 16, %s131, [#allocation13]
    $region73: #{_greedy_forward.1} parent=1 // pred_fallthru
      _
    // Predicated region
    $region74: #{_greedy_forward.1} parent=1 // pred_check
      _
    $region75: #{_greedy_forward.1} parent=1 // pred_check_branch
      %135 = sbr.rel (0) target = $region77
    $region76: #{_greedy_forward.1} parent=1 // pred_region
      %s137 = ssub.s32 512, 512
      %138 = vsyncadd [#allocation16], %s137
      %s139 = sshll.u32 [#allocation15], 4
      %s140 = int_to_ptr.vmem [resolvable:$true] %s139
      %145 = dma.hbm_to_vmem [thread:$0]  %s18, 512, %s140, [#allocation16], 128, 128, 8
    $region77: #{_greedy_forward.1} parent=1 // pred_fallthru
      _
    // Predicated region
    $region78: #{_greedy_forward.1} parent=1 // pred_check
      _
    $region79: #{_greedy_forward.1} parent=1 // pred_check_branch
      %147 = sbr.rel (0) target = $region81
    $region80: #{_greedy_forward.1} parent=1 // pred_region
      %s149 = ssub.s32 16, 16
      %150 = vsyncadd [#allocation16], %s149
      %s152 = sshll.u32 [#allocation17], 4
      %s153 = int_to_ptr.vmem [resolvable:$true] %s152
      %155 = dma.hbm_to_vmem [thread:$0]  %s19, 16, %s153, [#allocation16]
    $region81: #{_greedy_forward.1} parent=1 // pred_fallthru
      _
    // Predicated region
    $region82: #{_greedy_forward.1} parent=1 // pred_check
      _
    $region83: #{_greedy_forward.1} parent=1 // pred_check_branch
      %157 = sbr.rel (0) target = $region85
    $region84: #{_greedy_forward.1} parent=1 // pred_region
      %158 = dma.done [#allocation5], 512
    $region85: #{_greedy_forward.1} parent=1 // pred_fallthru
      _
    // Predicated region
    $region86: #{_greedy_forward.1} parent=1 // pred_check
      _
    $region87: #{_greedy_forward.1} parent=1 // pred_check_branch
      %160 = sbr.rel (0) target = $region89
    $region88: #{_greedy_forward.1} parent=1 // pred_region
      %161 = dma.done [#allocation7], 512
    $region89: #{_greedy_forward.1} parent=1 // pred_fallthru
      _
    // Predicated region
    $region90: #{_greedy_forward.1} parent=1 // pred_check
      _
    $region91: #{_greedy_forward.1} parent=1 // pred_check_branch
      %163 = sbr.rel (0) target = $region93
    $region92: #{_greedy_forward.1} parent=1 // pred_region
      %164 = dma.done [#allocation7], 512
    $region93: #{_greedy_forward.1} parent=1 // pred_fallthru
      _
    // Predicated region
    $region94: #{_greedy_forward.1} parent=1 // pred_check
      _
    $region95: #{_greedy_forward.1} parent=1 // pred_check_branch
      %166 = sbr.rel (0) target = $region97
    $region96: #{_greedy_forward.1} parent=1 // pred_region
      %167 = dma.done [#allocation10], 16
    $region97: #{_greedy_forward.1} parent=1 // pred_fallthru
      _
    // Predicated region
    $region98: #{_greedy_forward.1} parent=1 // pred_check
      _
    $region99: #{_greedy_forward.1} parent=1 // pred_check_branch
      %169 = sbr.rel (0) target = $region101
    $region100: #{_greedy_forward.1} parent=1 // pred_region
      %170 = dma.done [#allocation10], 512
    $region101: #{_greedy_forward.1} parent=1 // pred_fallthru
      _
    // Predicated region
    $region102: #{_greedy_forward.1} parent=1 // pred_check
      _
    $region103: #{_greedy_forward.1} parent=1 // pred_check_branch
      %172 = sbr.rel (0) target = $region105
    $region104: #{_greedy_forward.1} parent=1 // pred_region
      %173 = dma.done [#allocation13], 512
    $region105: #{_greedy_forward.1} parent=1 // pred_fallthru
      _
    // Predicated region
    $region106: #{_greedy_forward.1} parent=1 // pred_check
      _
    $region107: #{_greedy_forward.1} parent=1 // pred_check_branch
      %175 = sbr.rel (0) target = $region109
    $region108: #{_greedy_forward.1} parent=1 // pred_region
      %176 = dma.done [#allocation13], 16
    $region109: #{_greedy_forward.1} parent=1 // pred_fallthru
      _
    // Predicated region
    $region110: #{_greedy_forward.1} parent=1 // pred_check
      _
    $region111: #{_greedy_forward.1} parent=1 // pred_check_branch
      %178 = sbr.rel (0) target = $region113
    $region112: #{_greedy_forward.1} parent=1 // pred_region
      %179 = dma.done [#allocation16], 512
    $region113: #{_greedy_forward.1} parent=1 // pred_fallthru
      _
    // Predicated region
    $region114: #{_greedy_forward.1} parent=1 // pred_check
      _
    $region115: #{_greedy_forward.1} parent=1 // pred_check_branch
      %181 = sbr.rel (0) target = $region117
    $region116: #{_greedy_forward.1} parent=1 // pred_region
      %182 = dma.done [#allocation16], 16
    $region117: #{_greedy_forward.1} parent=1 // pred_fallthru
      _
    %v183 = vld [vmem:[%s0] sm:$0xff]
    %v184 = vld [vmem:[%s3] sm:$0xff]
    %v185 = vld [vmem:[%s3 + $0x8] sm:$0xff]
    %v186 = vld [vmem:[%s3 + $0x10] sm:$0xff]
    %v187 = vld [vmem:[%s3 + $0x18] sm:$0xff]
    %v188 = vld [vmem:[%s5] sm:$0x1]
    %v190 = vlaneseq
    %v191 = vshrl.u32 %v190, 7
    %v192 = vsub.s32 0, %v191
    %v193 = vrot.slane %v188, %v192
    %vm195 = vcmask 261120
    %v197 = vsel %vm195, %v183, 0
    %199 = vmatprep.subr.mxu0 0.0
    %200 = vmatpush1.msra.mxu0 %v184
    %201 = vmatprep.subr.mxu0 0.0
    %202 = vmatpush1.msra.mxu0 %v185
    %203 = vmatprep.subr.mxu0 0.0
    %204 = vmatpush1.msra.mxu0 %v186
    %205 = vmatprep.subr.mxu0 0.0
    %206 = vmatpush1.msra.mxu0 %v187
    %207 = vmatprep.subr.mxu0 0.0
    %208 = vmatpush1.msra.mxu0 0.0
    %209 = vmatprep.subr.mxu0 0.0
    %210 = vmatpush1.msra.mxu0 0.0
    %211 = vmatprep.subr.mxu0 0.0
    %212 = vmatpush1.msra.mxu0 0.0
    %213 = vmatprep.subr.mxu0 0.0
    %214 = vmatpush1.msra.mxu0 0.0
    %215 = vmatprep.subr.mxu0 0.0
    %216 = vmatpush1.msra.mxu0 0.0
    %217 = vmatprep.subr.mxu0 0.0
    %218 = vmatpush1.msra.mxu0 0.0
    %219 = vmatprep.subr.mxu0 0.0
    %220 = vmatpush1.msra.mxu0 0.0
    %221 = vmatprep.subr.mxu0 0.0
    %222 = vmatpush1.msra.mxu0 0.0
    %223 = vmatprep.subr.mxu0 0.0
    %224 = vmatpush1.msra.mxu0 0.0
    %225 = vmatprep.subr.mxu0 0.0
    %226 = vmatpush1.msra.mxu0 0.0
    %227 = vmatprep.subr.mxu0 0.0
    %228 = vmatpush1.msra.mxu0 0.0
    %229 = vmatprep.subr.mxu0 0.0
    %230 = vmatpush1.msra.mxu0 0.0
    %231 = vmatprep.subr.mxu0 0.0
    %232 = vmatpush1.msra.mxu0 0.0
    %233 = vmatprep.subr.mxu0 0.0
    %234 = vmatpush1.msra.mxu0 0.0
    %235 = vmatprep.subr.mxu0 0.0
    %236 = vmatpush1.msra.mxu0 0.0
    %237 = vmatprep.subr.mxu0 0.0
    %238 = vmatpush1.msra.mxu0 0.0
    %239 = vmatprep.subr.mxu0 0.0
    %240 = vmatpush1.msra.mxu0 0.0
    %241 = vmatprep.subr.mxu0 0.0
    %242 = vmatpush1.msra.mxu0 0.0
    %243 = vmatprep.subr.mxu0 0.0
    %244 = vmatpush1.msra.mxu0 0.0
    %245 = vmatprep.subr.mxu0 0.0
    %246 = vmatpush1.msra.mxu0 0.0
    %247 = vmatprep.subr.mxu0 0.0
    %248 = vmatpush1.msra.mxu0 0.0
    %249 = vmatprep.subr.mxu0 0.0
    %250 = vmatpush1.msra.mxu0 0.0
    %251 = vmatprep.subr.mxu0 0.0
    %252 = vmatpush1.msra.mxu0 0.0
    %253 = vmatprep.subr.mxu0 0.0
    %254 = vmatpush1.msra.mxu0 0.0
    %255 = vmatprep.subr.mxu0 0.0
    %256 = vmatpush1.msra.mxu0 0.0
    %257 = vmatprep.subr.mxu0 0.0
    %258 = vmatpush1.msra.mxu0 0.0
    %259 = vmatprep.subr.mxu0 0.0
    %260 = vmatpush1.msra.mxu0 0.0
    %261 = vmatprep.subr.mxu0 0.0
    %262 = vmatpush1.msra.mxu0 0.0
    %263 = vmatprep.mubr.f32.mxu0 0.0
    %264 = vmatmul.mubr.f32.gmra.mrb[0].mxu0 %v197
    %v265 = vpop.f32.mrb[0].mxu0
    %v266 = vadd.f32 %v193, %v265
    %v267 = vpop.f32.mrb[0].mxu0
    %268 = vdwg.mxu0
    %269 = vst [vmem:[#allocation3] sm:$0xff] %v266
    %v270 = vld [vmem:[#allocation3] sm:$0x1]
    %v271 = vld [vmem:[%s4] sm:$0xff]
    %v272 = vld [vmem:[%s4 + $0x8] sm:$0xff]
    %v273 = vld [vmem:[%s4 + $0x10] sm:$0xff]
    %v274 = vld [vmem:[%s4 + $0x18] sm:$0xff]
    %v275 = vld [vmem:[%s6] sm:$0x1]
    %v277 = vsel %vm195, 0.0, 0
    %279 = vmatprep.subr.mxu0 0.0
    %280 = vmatpush1.msra.mxu0 %v271
    %281 = vmatprep.subr.mxu0 0.0
    %282 = vmatpush1.msra.mxu0 %v272
    %283 = vmatprep.subr.mxu0 0.0
    %284 = vmatpush1.msra.mxu0 %v273
    %285 = vmatprep.subr.mxu0 0.0
    %286 = vmatpush1.msra.mxu0 %v274
    %287 = vmatprep.subr.mxu0 0.0
    %288 = vmatpush1.msra.mxu0 0.0
    %289 = vmatprep.subr.mxu0 0.0
    %290 = vmatpush1.msra.mxu0 0.0
    %291 = vmatprep.subr.mxu0 0.0
    %292 = vmatpush1.msra.mxu0 0.0
    %293 = vmatprep.subr.mxu0 0.0
    %294 = vmatpush1.msra.mxu0 0.0
    %295 = vmatprep.subr.mxu0 0.0
    %296 = vmatpush1.msra.mxu0 0.0
    %297 = vmatprep.subr.mxu0 0.0
    %298 = vmatpush1.msra.mxu0 0.0
    %299 = vmatprep.subr.mxu0 0.0
    %300 = vmatpush1.msra.mxu0 0.0
    %301 = vmatprep.subr.mxu0 0.0
    %302 = vmatpush1.msra.mxu0 0.0
    %303 = vmatprep.subr.mxu0 0.0
    %304 = vmatpush1.msra.mxu0 0.0
    %305 = vmatprep.subr.mxu0 0.0
    %306 = vmatpush1.msra.mxu0 0.0
    %307 = vmatprep.subr.mxu0 0.0
    %308 = vmatpush1.msra.mxu0 0.0
    %309 = vmatprep.subr.mxu0 0.0
    %310 = vmatpush1.msra.mxu0 0.0
    %311 = vmatprep.subr.mxu0 0.0
    %312 = vmatpush1.msra.mxu0 0.0
    %313 = vmatprep.subr.mxu0 0.0
    %314 = vmatpush1.msra.mxu0 0.0
    %315 = vmatprep.subr.mxu0 0.0
    %316 = vmatpush1.msra.mxu0 0.0
    %317 = vmatprep.subr.mxu0 0.0
    %318 = vmatpush1.msra.mxu0 0.0
    %319 = vmatprep.subr.mxu0 0.0
    %320 = vmatpush1.msra.mxu0 0.0
    %321 = vmatprep.subr.mxu0 0.0
    %322 = vmatpush1.msra.mxu0 0.0
    %323 = vmatprep.subr.mxu0 0.0
    %324 = vmatpush1.msra.mxu0 0.0
    %325 = vmatprep.subr.mxu0 0.0
    %326 = vmatpush1.msra.mxu0 0.0
    %327 = vmatprep.subr.mxu0 0.0
    %328 = vmatpush1.msra.mxu0 0.0
    %329 = vmatprep.subr.mxu0 0.0
    %330 = vmatpush1.msra.mxu0 0.0
    %331 = vmatprep.subr.mxu0 0.0
    %332 = vmatpush1.msra.mxu0 0.0
    %333 = vmatprep.subr.mxu0 0.0
    %334 = vmatpush1.msra.mxu0 0.0
    %335 = vmatprep.subr.mxu0 0.0
    %336 = vmatpush1.msra.mxu0 0.0
    %337 = vmatprep.subr.mxu0 0.0
    %338 = vmatpush1.msra.mxu0 0.0
    %339 = vmatprep.subr.mxu0 0.0
    %340 = vmatpush1.msra.mxu0 0.0
    %341 = vmatprep.subr.mxu0 0.0
    %342 = vmatpush1.msra.mxu0 0.0
    %343 = vmatprep.mubr.f32.mxu0 0.0
    %344 = vmatmul.mubr.f32.gmra.mrb[0].mxu0 %v277
    %v345 = vpop.f32.mrb[0].mxu0
    %v346 = vadd.f32 %v275, %v345
    %v347 = vpop.f32.mrb[0].mxu0
    %348 = vdwg.mxu0
    %v349 = vadd.f32 %v270, %v346
    %v350 = vsub.f32 0.0, %v349
    %v351 = vmul.f32 %v350, 1.442695
    %v352 = vpow.pop %v351
    %v353 = vadd.f32 %v352, 1.0
    %v354 = vrcp.pop %v353
    %v355 = vmul.f32 1.0, %v354
    %357 = vrot.lane.b32.xlu0 %v346, 64
    %v358 = vpop.permute.xlu0 %357
    %v360 = vmul.f32 %v355, %v358
    %362 = vrot.lane.b32.xlu0 %v360, 64
    %v363 = vpop.permute.xlu0 %362
    %v365 = vadd.f32 %v270, %v363
    %v366 = vtanh.pop %v365
    %v367 = vsub.f32 1.0, %v355
    %369 = vrot.lane.b32.xlu0 %v366, 96
    %v370 = vpop.permute.xlu0 %369
    %v372 = vmul.f32 %v367, %v370
    %v373 = vmul.f32 %v355, 0.0
    %v374 = vadd.f32 %v372, %v373
    %376 = vrot.lane.b32.xlu0 %v374, 96
    %v377 = vpop.permute.xlu0 %376
    %vm379 = vcmask 253952
    %380 = vst.msk [vmem:[#allocation2] sm:$0x1] %vm379, %v377
    %v381 = vld [vmem:[#allocation3 + $0x1] sm:$0x1]
    %v382 = vld [vmem:[%s4] sm:$0xff]
    %v383 = vld [vmem:[%s4 + $0x8] sm:$0xff]
    %v384 = vld [vmem:[%s4 + $0x10] sm:$0xff]
    %v385 = vld [vmem:[%s4 + $0x18] sm:$0xff]
    %v386 = vld [vmem:[%s6] sm:$0x1]
    %v387 = vsel %vm195, %v377, 0
    %389 = vmatprep.subr.mxu0 0.0
    %390 = vmatpush1.msra.mxu0 %v382
    %391 = vmatprep.subr.mxu0 0.0
    %392 = vmatpush1.msra.mxu0 %v383
    %393 = vmatprep.subr.mxu0 0.0
    %394 = vmatpush1.msra.mxu0 %v384
    %395 = vmatprep.subr.mxu0 0.0
    %396 = vmatpush1.msra.mxu0 %v385
    %397 = vmatprep.subr.mxu0 0.0
    %398 = vmatpush1.msra.mxu0 0.0
    %399 = vmatprep.subr.mxu0 0.0
    %400 = vmatpush1.msra.mxu0 0.0
    %401 = vmatprep.subr.mxu0 0.0
    %402 = vmatpush1.msra.mxu0 0.0
    %403 = vmatprep.subr.mxu0 0.0
    %404 = vmatpush1.msra.mxu0 0.0
    %405 = vmatprep.subr.mxu0 0.0
    %406 = vmatpush1.msra.mxu0 0.0
    %407 = vmatprep.subr.mxu0 0.0
    %408 = vmatpush1.msra.mxu0 0.0
    %409 = vmatprep.subr.mxu0 0.0
    %410 = vmatpush1.msra.mxu0 0.0
    %411 = vmatprep.subr.mxu0 0.0
    %412 = vmatpush1.msra.mxu0 0.0
    %413 = vmatprep.subr.mxu0 0.0
    %414 = vmatpush1.msra.mxu0 0.0
    %415 = vmatprep.subr.mxu0 0.0
    %416 = vmatpush1.msra.mxu0 0.0
    %417 = vmatprep.subr.mxu0 0.0
    %418 = vmatpush1.msra.mxu0 0.0
    %419 = vmatprep.subr.mxu0 0.0
    %420 = vmatpush1.msra.mxu0 0.0
    %421 = vmatprep.subr.mxu0 0.0
    %422 = vmatpush1.msra.mxu0 0.0
    %423 = vmatprep.subr.mxu0 0.0
    %424 = vmatpush1.msra.mxu0 0.0
    %425 = vmatprep.subr.mxu0 0.0
    %426 = vmatpush1.msra.mxu0 0.0
    %427 = vmatprep.subr.mxu0 0.0
    %428 = vmatpush1.msra.mxu0 0.0
    %429 = vmatprep.subr.mxu0 0.0
    %430 = vmatpush1.msra.mxu0 0.0
    %431 = vmatprep.subr.mxu0 0.0
    %432 = vmatpush1.msra.mxu0 0.0
    %433 = vmatprep.subr.mxu0 0.0
    %434 = vmatpush1.msra.mxu0 0.0
    %435 = vmatprep.subr.mxu0 0.0
    %436 = vmatpush1.msra.mxu0 0.0
    %437 = vmatprep.subr.mxu0 0.0
    %438 = vmatpush1.msra.mxu0 0.0
    %439 = vmatprep.subr.mxu0 0.0
    %440 = vmatpush1.msra.mxu0 0.0
    %441 = vmatprep.subr.mxu0 0.0
    %442 = vmatpush1.msra.mxu0 0.0
    %443 = vmatprep.subr.mxu0 0.0
    %444 = vmatpush1.msra.mxu0 0.0
    %445 = vmatprep.subr.mxu0 0.0
    %446 = vmatpush1.msra.mxu0 0.0
    %447 = vmatprep.subr.mxu0 0.0
    %448 = vmatpush1.msra.mxu0 0.0
    %449 = vmatprep.subr.mxu0 0.0
    %450 = vmatpush1.msra.mxu0 0.0
    %451 = vmatprep.subr.mxu0 0.0
    %452 = vmatpush1.msra.mxu0 0.0
    %453 = vmatprep.mubr.f32.mxu0 0.0
    %454 = vmatmul.mubr.f32.gmra.mrb[0].mxu0 %v387
    %v455 = vpop.f32.mrb[0].mxu0
    %v456 = vadd.f32 %v386, %v455
    %v457 = vpop.f32.mrb[0].mxu0
    %458 = vdwg.mxu0
    %v459 = vadd.f32 %v381, %v456
    %v460 = vsub.f32 0.0, %v459
    %v461 = vmul.f32 %v460, 1.442695
    %v462 = vpow.pop %v461
    %v463 = vadd.f32 %v462, 1.0
    %v464 = vrcp.pop %v463
    %v465 = vmul.f32 1.0, %v464
    %467 = vrot.lane.b32.xlu0 %v456, 64
    %v468 = vpop.permute.xlu0 %467
    %v470 = vmul.f32 %v465, %v468
    %472 = vrot.lane.b32.xlu0 %v470, 64
    %v473 = vpop.permute.xlu0 %472
    %v475 = vadd.f32 %v381, %v473
    %v476 = vtanh.pop %v475
    %v477 = vsub.f32 1.0, %v465
    %479 = vrot.lane.b32.xlu0 %v476, 96
    %v480 = vpop.permute.xlu0 %479
    %v482 = vmul.f32 %v477, %v480
    %v483 = vmul.f32 %v465, %v374
    %v484 = vadd.f32 %v482, %v483
    %486 = vrot.lane.b32.xlu0 %v484, 96
    %v487 = vpop.permute.xlu0 %486
    %489 = vst.msk [vmem:[#allocation2 + $0x1] sm:$0x1] %vm379, %v487
    %v490 = vld [vmem:[#allocation3 + $0x2] sm:$0x1]
    %v491 = vld [vmem:[%s4] sm:$0xff]
    %v492 = vld [vmem:[%s4 + $0x8] sm:$0xff]
    %v493 = vld [vmem:[%s4 + $0x10] sm:$0xff]
    %v494 = vld [vmem:[%s4 + $0x18] sm:$0xff]
    %v495 = vld [vmem:[%s6] sm:$0x1]
    %v496 = vsel %vm195, %v487, 0
    %498 = vmatprep.subr.mxu0 0.0
    %499 = vmatpush1.msra.mxu0 %v491
    %500 = vmatprep.subr.mxu0 0.0
    %501 = vmatpush1.msra.mxu0 %v492
    %502 = vmatprep.subr.mxu0 0.0
    %503 = vmatpush1.msra.mxu0 %v493
    %504 = vmatprep.subr.mxu0 0.0
    %505 = vmatpush1.msra.mxu0 %v494
    %506 = vmatprep.subr.mxu0 0.0
    %507 = vmatpush1.msra.mxu0 0.0
    %508 = vmatprep.subr.mxu0 0.0
    %509 = vmatpush1.msra.mxu0 0.0
    %510 = vmatprep.subr.mxu0 0.0
    %511 = vmatpush1.msra.mxu0 0.0
    %512 = vmatprep.subr.mxu0 0.0
    %513 = vmatpush1.msra.mxu0 0.0
    %514 = vmatprep.subr.mxu0 0.0
    %515 = vmatpush1.msra.mxu0 0.0
    %516 = vmatprep.subr.mxu0 0.0
    %517 = vmatpush1.msra.mxu0 0.0
    %518 = vmatprep.subr.mxu0 0.0
    %519 = vmatpush1.msra.mxu0 0.0
    %520 = vmatprep.subr.mxu0 0.0
    %521 = vmatpush1.msra.mxu0 0.0
    %522 = vmatprep.subr.mxu0 0.0
    %523 = vmatpush1.msra.mxu0 0.0
    %524 = vmatprep.subr.mxu0 0.0
    %525 = vmatpush1.msra.mxu0 0.0
    %526 = vmatprep.subr.mxu0 0.0
    %527 = vmatpush1.msra.mxu0 0.0
    %528 = vmatprep.subr.mxu0 0.0
    %529 = vmatpush1.msra.mxu0 0.0
    %530 = vmatprep.subr.mxu0 0.0
    %531 = vmatpush1.msra.mxu0 0.0
    %532 = vmatprep.subr.mxu0 0.0
    %533 = vmatpush1.msra.mxu0 0.0
    %534 = vmatprep.subr.mxu0 0.0
    %535 = vmatpush1.msra.mxu0 0.0
    %536 = vmatprep.subr.mxu0 0.0
    %537 = vmatpush1.msra.mxu0 0.0
    %538 = vmatprep.subr.mxu0 0.0
    %539 = vmatpush1.msra.mxu0 0.0
    %540 = vmatprep.subr.mxu0 0.0
    %541 = vmatpush1.msra.mxu0 0.0
    %542 = vmatprep.subr.mxu0 0.0
    %543 = vmatpush1.msra.mxu0 0.0
    %544 = vmatprep.subr.mxu0 0.0
    %545 = vmatpush1.msra.mxu0 0.0
    %546 = vmatprep.subr.mxu0 0.0
    %547 = vmatpush1.msra.mxu0 0.0
    %548 = vmatprep.subr.mxu0 0.0
    %549 = vmatpush1.msra.mxu0 0.0
    %550 = vmatprep.subr.mxu0 0.0
    %551 = vmatpush1.msra.mxu0 0.0
    %552 = vmatprep.subr.mxu0 0.0
    %553 = vmatpush1.msra.mxu0 0.0
    %554 = vmatprep.subr.mxu0 0.0
    %555 = vmatpush1.msra.mxu0 0.0
    %556 = vmatprep.subr.mxu0 0.0
    %557 = vmatpush1.msra.mxu0 0.0
    %558 = vmatprep.subr.mxu0 0.0
    %559 = vmatpush1.msra.mxu0 0.0
    %560 = vmatprep.subr.mxu0 0.0
    %561 = vmatpush1.msra.mxu0 0.0
    %562 = vmatprep.mubr.f32.mxu0 0.0
    %563 = vmatmul.mubr.f32.gmra.mrb[0].mxu0 %v496
    %v564 = vpop.f32.mrb[0].mxu0
    %v565 = vadd.f32 %v495, %v564
    %v566 = vpop.f32.mrb[0].mxu0
    %567 = vdwg.mxu0
    %v568 = vadd.f32 %v490, %v565
    %v569 = vsub.f32 0.0, %v568
    %v570 = vmul.f32 %v569, 1.442695
    %v571 = vpow.pop %v570
    %v572 = vadd.f32 %v571, 1.0
    %v573 = vrcp.pop %v572
    %v574 = vmul.f32 1.0, %v573
    %576 = vrot.lane.b32.xlu0 %v565, 64
    %v577 = vpop.permute.xlu0 %576
    %v579 = vmul.f32 %v574, %v577
    %581 = vrot.lane.b32.xlu0 %v579, 64
    %v582 = vpop.permute.xlu0 %581
    %v584 = vadd.f32 %v490, %v582
    %v585 = vtanh.pop %v584
    %v586 = vsub.f32 1.0, %v574
    %588 = vrot.lane.b32.xlu0 %v585, 96
    %v589 = vpop.permute.xlu0 %588
    %v591 = vmul.f32 %v586, %v589
    %v592 = vmul.f32 %v574, %v484
    %v593 = vadd.f32 %v591, %v592
    %595 = vrot.lane.b32.xlu0 %v593, 96
    %v596 = vpop.permute.xlu0 %595
    %598 = vst.msk [vmem:[#allocation2 + $0x2] sm:$0x1] %vm379, %v596
    %v599 = vld [vmem:[#allocation3 + $0x3] sm:$0x1]
    %v600 = vld [vmem:[%s4] sm:$0xff]
    %v601 = vld [vmem:[%s4 + $0x8] sm:$0xff]
    %v602 = vld [vmem:[%s4 + $0x10] sm:$0xff]
    %v603 = vld [vmem:[%s4 + $0x18] sm:$0xff]
    %v604 = vld [vmem:[%s6] sm:$0x1]
    %v605 = vsel %vm195, %v596, 0
    %607 = vmatprep.subr.mxu0 0.0
    %608 = vmatpush1.msra.mxu0 %v600
    %609 = vmatprep.subr.mxu0 0.0
    %610 = vmatpush1.msra.mxu0 %v601
    %611 = vmatprep.subr.mxu0 0.0
    %612 = vmatpush1.msra.mxu0 %v602
    %613 = vmatprep.subr.mxu0 0.0
    %614 = vmatpush1.msra.mxu0 %v603
    %615 = vmatprep.subr.mxu0 0.0
    %616 = vmatpush1.msra.mxu0 0.0
    %617 = vmatprep.subr.mxu0 0.0
    %618 = vmatpush1.msra.mxu0 0.0
    %619 = vmatprep.subr.mxu0 0.0
    %620 = vmatpush1.msra.mxu0 0.0
    %621 = vmatprep.subr.mxu0 0.0
    %622 = vmatpush1.msra.mxu0 0.0
    %623 = vmatprep.subr.mxu0 0.0
    %624 = vmatpush1.msra.mxu0 0.0
    %625 = vmatprep.subr.mxu0 0.0
    %626 = vmatpush1.msra.mxu0 0.0
    %627 = vmatprep.subr.mxu0 0.0
    %628 = vmatpush1.msra.mxu0 0.0
    %629 = vmatprep.subr.mxu0 0.0
    %630 = vmatpush1.msra.mxu0 0.0
    %631 = vmatprep.subr.mxu0 0.0
    %632 = vmatpush1.msra.mxu0 0.0
    %633 = vmatprep.subr.mxu0 0.0
    %634 = vmatpush1.msra.mxu0 0.0
    %635 = vmatprep.subr.mxu0 0.0
    %636 = vmatpush1.msra.mxu0 0.0
    %637 = vmatprep.subr.mxu0 0.0
    %638 = vmatpush1.msra.mxu0 0.0
    %639 = vmatprep.subr.mxu0 0.0
    %640 = vmatpush1.msra.mxu0 0.0
    %641 = vmatprep.subr.mxu0 0.0
    %642 = vmatpush1.msra.mxu0 0.0
    %643 = vmatprep.subr.mxu0 0.0
    %644 = vmatpush1.msra.mxu0 0.0
    %645 = vmatprep.subr.mxu0 0.0
    %646 = vmatpush1.msra.mxu0 0.0
    %647 = vmatprep.subr.mxu0 0.0
    %648 = vmatpush1.msra.mxu0 0.0
    %649 = vmatprep.subr.mxu0 0.0
    %650 = vmatpush1.msra.mxu0 0.0
    %651 = vmatprep.subr.mxu0 0.0
    %652 = vmatpush1.msra.mxu0 0.0
    %653 = vmatprep.subr.mxu0 0.0
    %654 = vmatpush1.msra.mxu0 0.0
    %655 = vmatprep.subr.mxu0 0.0
    %656 = vmatpush1.msra.mxu0 0.0
    %657 = vmatprep.subr.mxu0 0.0
    %658 = vmatpush1.msra.mxu0 0.0
    %659 = vmatprep.subr.mxu0 0.0
    %660 = vmatpush1.msra.mxu0 0.0
    %661 = vmatprep.subr.mxu0 0.0
    %662 = vmatpush1.msra.mxu0 0.0
    %663 = vmatprep.subr.mxu0 0.0
    %664 = vmatpush1.msra.mxu0 0.0
    %665 = vmatprep.subr.mxu0 0.0
    %666 = vmatpush1.msra.mxu0 0.0
    %667 = vmatprep.subr.mxu0 0.0
    %668 = vmatpush1.msra.mxu0 0.0
    %669 = vmatprep.subr.mxu0 0.0
    %670 = vmatpush1.msra.mxu0 0.0
    %671 = vmatprep.mubr.f32.mxu0 0.0
    %672 = vmatmul.mubr.f32.gmra.mrb[0].mxu0 %v605
    %v673 = vpop.f32.mrb[0].mxu0
    %v674 = vadd.f32 %v604, %v673
    %v675 = vpop.f32.mrb[0].mxu0
    %676 = vdwg.mxu0
    %v677 = vadd.f32 %v599, %v674
    %v678 = vsub.f32 0.0, %v677
    %v679 = vmul.f32 %v678, 1.442695
    %v680 = vpow.pop %v679
    %v681 = vadd.f32 %v680, 1.0
    %v682 = vrcp.pop %v681
    %v683 = vmul.f32 1.0, %v682
    %685 = vrot.lane.b32.xlu0 %v674, 64
    %v686 = vpop.permute.xlu0 %685
    %v688 = vmul.f32 %v683, %v686
    %690 = vrot.lane.b32.xlu0 %v688, 64
    %v691 = vpop.permute.xlu0 %690
    %v693 = vadd.f32 %v599, %v691
    %v694 = vtanh.pop %v693
    %v695 = vsub.f32 1.0, %v683
    %697 = vrot.lane.b32.xlu0 %v694, 96
    %v698 = vpop.permute.xlu0 %697
    %v700 = vmul.f32 %v695, %v698
    %v701 = vmul.f32 %v683, %v593
    %v702 = vadd.f32 %v700, %v701
    %704 = vrot.lane.b32.xlu0 %v702, 96
    %v705 = vpop.permute.xlu0 %704
    %707 = vst.msk [vmem:[#allocation2 + $0x3] sm:$0x1] %vm379, %v705
    %v708 = vld [vmem:[#allocation3 + $0x4] sm:$0x1]
    %v709 = vld [vmem:[%s4] sm:$0xff]
    %v710 = vld [vmem:[%s4 + $0x8] sm:$0xff]
    %v711 = vld [vmem:[%s4 + $0x10] sm:$0xff]
    %v712 = vld [vmem:[%s4 + $0x18] sm:$0xff]
    %v713 = vld [vmem:[%s6] sm:$0x1]
    %v714 = vsel %vm195, %v705, 0
    %716 = vmatprep.subr.mxu0 0.0
    %717 = vmatpush1.msra.mxu0 %v709
    %718 = vmatprep.subr.mxu0 0.0
    %719 = vmatpush1.msra.mxu0 %v710
    %720 = vmatprep.subr.mxu0 0.0
    %721 = vmatpush1.msra.mxu0 %v711
    %722 = vmatprep.subr.mxu0 0.0
    %723 = vmatpush1.msra.mxu0 %v712
    %724 = vmatprep.subr.mxu0 0.0
    %725 = vmatpush1.msra.mxu0 0.0
    %726 = vmatprep.subr.mxu0 0.0
    %727 = vmatpush1.msra.mxu0 0.0
    %728 = vmatprep.subr.mxu0 0.0
    %729 = vmatpush1.msra.mxu0 0.0
    %730 = vmatprep.subr.mxu0 0.0
    %731 = vmatpush1.msra.mxu0 0.0
    %732 = vmatprep.subr.mxu0 0.0
    %733 = vmatpush1.msra.mxu0 0.0
    %734 = vmatprep.subr.mxu0 0.0
    %735 = vmatpush1.msra.mxu0 0.0
    %736 = vmatprep.subr.mxu0 0.0
    %737 = vmatpush1.msra.mxu0 0.0
    %738 = vmatprep.subr.mxu0 0.0
    %739 = vmatpush1.msra.mxu0 0.0
    %740 = vmatprep.subr.mxu0 0.0
    %741 = vmatpush1.msra.mxu0 0.0
    %742 = vmatprep.subr.mxu0 0.0
    %743 = vmatpush1.msra.mxu0 0.0
    %744 = vmatprep.subr.mxu0 0.0
    %745 = vmatpush1.msra.mxu0 0.0
    %746 = vmatprep.subr.mxu0 0.0
    %747 = vmatpush1.msra.mxu0 0.0
    %748 = vmatprep.subr.mxu0 0.0
    %749 = vmatpush1.msra.mxu0 0.0
    %750 = vmatprep.subr.mxu0 0.0
    %751 = vmatpush1.msra.mxu0 0.0
    %752 = vmatprep.subr.mxu0 0.0
    %753 = vmatpush1.msra.mxu0 0.0
    %754 = vmatprep.subr.mxu0 0.0
    %755 = vmatpush1.msra.mxu0 0.0
    %756 = vmatprep.subr.mxu0 0.0
    %757 = vmatpush1.msra.mxu0 0.0
    %758 = vmatprep.subr.mxu0 0.0
    %759 = vmatpush1.msra.mxu0 0.0
    %760 = vmatprep.subr.mxu0 0.0
    %761 = vmatpush1.msra.mxu0 0.0
    %762 = vmatprep.subr.mxu0 0.0
    %763 = vmatpush1.msra.mxu0 0.0
    %764 = vmatprep.subr.mxu0 0.0
    %765 = vmatpush1.msra.mxu0 0.0
    %766 = vmatprep.subr.mxu0 0.0
    %767 = vmatpush1.msra.mxu0 0.0
    %768 = vmatprep.subr.mxu0 0.0
    %769 = vmatpush1.msra.mxu0 0.0
    %770 = vmatprep.subr.mxu0 0.0
    %771 = vmatpush1.msra.mxu0 0.0
    %772 = vmatprep.subr.mxu0 0.0
    %773 = vmatpush1.msra.mxu0 0.0
    %774 = vmatprep.subr.mxu0 0.0
    %775 = vmatpush1.msra.mxu0 0.0
    %776 = vmatprep.subr.mxu0 0.0
    %777 = vmatpush1.msra.mxu0 0.0
    %778 = vmatprep.subr.mxu0 0.0
    %779 = vmatpush1.msra.mxu0 0.0
    %780 = vmatprep.mubr.f32.mxu0 0.0
    %781 = vmatmul.mubr.f32.gmra.mrb[0].mxu0 %v714
    %v782 = vpop.f32.mrb[0].mxu0
    %v783 = vadd.f32 %v713, %v782
    %v784 = vpop.f32.mrb[0].mxu0
    %785 = vdwg.mxu0
    %v786 = vadd.f32 %v708, %v783
    %v787 = vsub.f32 0.0, %v786
    %v788 = vmul.f32 %v787, 1.442695
    %v789 = vpow.pop %v788
    %v790 = vadd.f32 %v789, 1.0
    %v791 = vrcp.pop %v790
    %v792 = vmul.f32 1.0, %v791
    %794 = vrot.lane.b32.xlu0 %v783, 64
    %v795 = vpop.permute.xlu0 %794
    %v797 = vmul.f32 %v792, %v795
    %799 = vrot.lane.b32.xlu0 %v797, 64
    %v800 = vpop.permute.xlu0 %799
    %v802 = vadd.f32 %v708, %v800
    %v803 = vtanh.pop %v802
    %v804 = vsub.f32 1.0, %v792
    %806 = vrot.lane.b32.xlu0 %v803, 96
    %v807 = vpop.permute.xlu0 %806
    %v809 = vmul.f32 %v804, %v807
    %v810 = vmul.f32 %v792, %v702
    %v811 = vadd.f32 %v809, %v810
    %813 = vrot.lane.b32.xlu0 %v811, 96
    %v814 = vpop.permute.xlu0 %813
    %816 = vst.msk [vmem:[#allocation2 + $0x4] sm:$0x1] %vm379, %v814
    %v817 = vld [vmem:[#allocation3 + $0x5] sm:$0x1]
    %v818 = vld [vmem:[%s4] sm:$0xff]
    %v819 = vld [vmem:[%s4 + $0x8] sm:$0xff]
    %v820 = vld [vmem:[%s4 + $0x10] sm:$0xff]
    %v821 = vld [vmem:[%s4 + $0x18] sm:$0xff]
    %v822 = vld [vmem:[%s6] sm:$0x1]
    %v823 = vsel %vm195, %v814, 0
    %825 = vmatprep.subr.mxu0 0.0
    %826 = vmatpush1.msra.mxu0 %v818
    %827 = vmatprep.subr.mxu0 0.0
    %828 = vmatpush1.msra.mxu0 %v819
    %829 = vmatprep.subr.mxu0 0.0
    %830 = vmatpush1.msra.mxu0 %v820
    %831 = vmatprep.subr.mxu0 0.0
    %832 = vmatpush1.msra.mxu0 %v821
    %833 = vmatprep.subr.mxu0 0.0
    %834 = vmatpush1.msra.mxu0 0.0
    %835 = vmatprep.subr.mxu0 0.0
    %836 = vmatpush1.msra.mxu0 0.0
    %837 = vmatprep.subr.mxu0 0.0
    %838 = vmatpush1.msra.mxu0 0.0
    %839 = vmatprep.subr.mxu0 0.0
    %840 = vmatpush1.msra.mxu0 0.0
    %841 = vmatprep.subr.mxu0 0.0
    %842 = vmatpush1.msra.mxu0 0.0
    %843 = vmatprep.subr.mxu0 0.0
    %844 = vmatpush1.msra.mxu0 0.0
    %845 = vmatprep.subr.mxu0 0.0
    %846 = vmatpush1.msra.mxu0 0.0
    %847 = vmatprep.subr.mxu0 0.0
    %848 = vmatpush1.msra.mxu0 0.0
    %849 = vmatprep.subr.mxu0 0.0
    %850 = vmatpush1.msra.mxu0 0.0
    %851 = vmatprep.subr.mxu0 0.0
    %852 = vmatpush1.msra.mxu0 0.0
    %853 = vmatprep.subr.mxu0 0.0
    %854 = vmatpush1.msra.mxu0 0.0
    %855 = vmatprep.subr.mxu0 0.0
    %856 = vmatpush1.msra.mxu0 0.0
    %857 = vmatprep.subr.mxu0 0.0
    %858 = vmatpush1.msra.mxu0 0.0
    %859 = vmatprep.subr.mxu0 0.0
    %860 = vmatpush1.msra.mxu0 0.0
    %861 = vmatprep.subr.mxu0 0.0
    %862 = vmatpush1.msra.mxu0 0.0
    %863 = vmatprep.subr.mxu0 0.0
    %864 = vmatpush1.msra.mxu0 0.0
    %865 = vmatprep.subr.mxu0 0.0
    %866 = vmatpush1.msra.mxu0 0.0
    %867 = vmatprep.subr.mxu0 0.0
    %868 = vmatpush1.msra.mxu0 0.0
    %869 = vmatprep.subr.mxu0 0.0
    %870 = vmatpush1.msra.mxu0 0.0
    %871 = vmatprep.subr.mxu0 0.0
    %872 = vmatpush1.msra.mxu0 0.0
    %873 = vmatprep.subr.mxu0 0.0
    %874 = vmatpush1.msra.mxu0 0.0
    %875 = vmatprep.subr.mxu0 0.0
    %876 = vmatpush1.msra.mxu0 0.0
    %877 = vmatprep.subr.mxu0 0.0
    %878 = vmatpush1.msra.mxu0 0.0
    %879 = vmatprep.subr.mxu0 0.0
    %880 = vmatpush1.msra.mxu0 0.0
    %881 = vmatprep.subr.mxu0 0.0
    %882 = vmatpush1.msra.mxu0 0.0
    %883 = vmatprep.subr.mxu0 0.0
    %884 = vmatpush1.msra.mxu0 0.0
    %885 = vmatprep.subr.mxu0 0.0
    %886 = vmatpush1.msra.mxu0 0.0
    %887 = vmatprep.subr.mxu0 0.0
    %888 = vmatpush1.msra.mxu0 0.0
    %889 = vmatprep.mubr.f32.mxu0 0.0
    %890 = vmatmul.mubr.f32.gmra.mrb[0].mxu0 %v823
    %v891 = vpop.f32.mrb[0].mxu0
    %v892 = vadd.f32 %v822, %v891
    %v893 = vpop.f32.mrb[0].mxu0
    %894 = vdwg.mxu0
    %v895 = vadd.f32 %v817, %v892
    %v896 = vsub.f32 0.0, %v895
    %v897 = vmul.f32 %v896, 1.442695
    %v898 = vpow.pop %v897
    %v899 = vadd.f32 %v898, 1.0
    %v900 = vrcp.pop %v899
    %v901 = vmul.f32 1.0, %v900
    %903 = vrot.lane.b32.xlu0 %v892, 64
    %v904 = vpop.permute.xlu0 %903
    %v906 = vmul.f32 %v901, %v904
    %908 = vrot.lane.b32.xlu0 %v906, 64
    %v909 = vpop.permute.xlu0 %908
    %v911 = vadd.f32 %v817, %v909
    %v912 = vtanh.pop %v911
    %v913 = vsub.f32 1.0, %v901
    %915 = vrot.lane.b32.xlu0 %v912, 96
    %v916 = vpop.permute.xlu0 %915
    %v918 = vmul.f32 %v913, %v916
    %v919 = vmul.f32 %v901, %v811
    %v920 = vadd.f32 %v918, %v919
    %922 = vrot.lane.b32.xlu0 %v920, 96
    %v923 = vpop.permute.xlu0 %922
    %925 = vst.msk [vmem:[#allocation2 + $0x5] sm:$0x1] %vm379, %v923
    %v926 = vld [vmem:[#allocation3 + $0x6] sm:$0x1]
    %v927 = vld [vmem:[%s4] sm:$0xff]
    %v928 = vld [vmem:[%s4 + $0x8] sm:$0xff]
    %v929 = vld [vmem:[%s4 + $0x10] sm:$0xff]
    %v930 = vld [vmem:[%s4 + $0x18] sm:$0xff]
    %v931 = vld [vmem:[%s6] sm:$0x1]
    %v932 = vsel %vm195, %v923, 0
    %934 = vmatprep.subr.mxu0 0.0
    %935 = vmatpush1.msra.mxu0 %v927
    %936 = vmatprep.subr.mxu0 0.0
    %937 = vmatpush1.msra.mxu0 %v928
    %938 = vmatprep.subr.mxu0 0.0
    %939 = vmatpush1.msra.mxu0 %v929
    %940 = vmatprep.subr.mxu0 0.0
    %941 = vmatpush1.msra.mxu0 %v930
    %942 = vmatprep.subr.mxu0 0.0
    %943 = vmatpush1.msra.mxu0 0.0
    %944 = vmatprep.subr.mxu0 0.0
    %945 = vmatpush1.msra.mxu0 0.0
    %946 = vmatprep.subr.mxu0 0.0
    %947 = vmatpush1.msra.mxu0 0.0
    %948 = vmatprep.subr.mxu0 0.0
    %949 = vmatpush1.msra.mxu0 0.0
    %950 = vmatprep.subr.mxu0 0.0
    %951 = vmatpush1.msra.mxu0 0.0
    %952 = vmatprep.subr.mxu0 0.0
    %953 = vmatpush1.msra.mxu0 0.0
    %954 = vmatprep.subr.mxu0 0.0
    %955 = vmatpush1.msra.mxu0 0.0
    %956 = vmatprep.subr.mxu0 0.0
    %957 = vmatpush1.msra.mxu0 0.0
    %958 = vmatprep.subr.mxu0 0.0
    %959 = vmatpush1.msra.mxu0 0.0
    %960 = vmatprep.subr.mxu0 0.0
    %961 = vmatpush1.msra.mxu0 0.0
    %962 = vmatprep.subr.mxu0 0.0
    %963 = vmatpush1.msra.mxu0 0.0
    %964 = vmatprep.subr.mxu0 0.0
    %965 = vmatpush1.msra.mxu0 0.0
    %966 = vmatprep.subr.mxu0 0.0
    %967 = vmatpush1.msra.mxu0 0.0
    %968 = vmatprep.subr.mxu0 0.0
    %969 = vmatpush1.msra.mxu0 0.0
    %970 = vmatprep.subr.mxu0 0.0
    %971 = vmatpush1.msra.mxu0 0.0
    %972 = vmatprep.subr.mxu0 0.0
    %973 = vmatpush1.msra.mxu0 0.0
    %974 = vmatprep.subr.mxu0 0.0
    %975 = vmatpush1.msra.mxu0 0.0
    %976 = vmatprep.subr.mxu0 0.0
    %977 = vmatpush1.msra.mxu0 0.0
    %978 = vmatprep.subr.mxu0 0.0
    %979 = vmatpush1.msra.mxu0 0.0
    %980 = vmatprep.subr.mxu0 0.0
    %981 = vmatpush1.msra.mxu0 0.0
    %982 = vmatprep.subr.mxu0 0.0
    %983 = vmatpush1.msra.mxu0 0.0
    %984 = vmatprep.subr.mxu0 0.0
    %985 = vmatpush1.msra.mxu0 0.0
    %986 = vmatprep.subr.mxu0 0.0
    %987 = vmatpush1.msra.mxu0 0.0
    %988 = vmatprep.subr.mxu0 0.0
    %989 = vmatpush1.msra.mxu0 0.0
    %990 = vmatprep.subr.mxu0 0.0
    %991 = vmatpush1.msra.mxu0 0.0
    %992 = vmatprep.subr.mxu0 0.0
    %993 = vmatpush1.msra.mxu0 0.0
    %994 = vmatprep.subr.mxu0 0.0
    %995 = vmatpush1.msra.mxu0 0.0
    %996 = vmatprep.subr.mxu0 0.0
    %997 = vmatpush1.msra.mxu0 0.0
    %998 = vmatprep.mubr.f32.mxu0 0.0
    %999 = vmatmul.mubr.f32.gmra.mrb[0].mxu0 %v932
    %v1000 = vpop.f32.mrb[0].mxu0
    %v1001 = vadd.f32 %v931, %v1000
    %v1002 = vpop.f32.mrb[0].mxu0
    %1003 = vdwg.mxu0
    %v1004 = vadd.f32 %v926, %v1001
    %v1005 = vsub.f32 0.0, %v1004
    %v1006 = vmul.f32 %v1005, 1.442695
    %v1007 = vpow.pop %v1006
    %v1008 = vadd.f32 %v1007, 1.0
    %v1009 = vrcp.pop %v1008
    %v1010 = vmul.f32 1.0, %v1009
    %1012 = vrot.lane.b32.xlu0 %v1001, 64
    %v1013 = vpop.permute.xlu0 %1012
    %v1015 = vmul.f32 %v1010, %v1013
    %1017 = vrot.lane.b32.xlu0 %v1015, 64
    %v1018 = vpop.permute.xlu0 %1017
    %v1020 = vadd.f32 %v926, %v1018
    %v1021 = vtanh.pop %v1020
    %v1022 = vsub.f32 1.0, %v1010
    %1024 = vrot.lane.b32.xlu0 %v1021, 96
    %v1025 = vpop.permute.xlu0 %1024
    %v1027 = vmul.f32 %v1022, %v1025
    %v1028 = vmul.f32 %v1010, %v920
    %v1029 = vadd.f32 %v1027, %v1028
    %1031 = vrot.lane.b32.xlu0 %v1029, 96
    %v1032 = vpop.permute.xlu0 %1031
    %1034 = vst.msk [vmem:[#allocation2 + $0x6] sm:$0x1] %vm379, %v1032
    %v1035 = vld [vmem:[#allocation3 + $0x7] sm:$0x1]
    %v1036 = vld [vmem:[%s4] sm:$0xff]
    %v1037 = vld [vmem:[%s4 + $0x8] sm:$0xff]
    %v1038 = vld [vmem:[%s4 + $0x10] sm:$0xff]
    %v1039 = vld [vmem:[%s4 + $0x18] sm:$0xff]
    %v1040 = vld [vmem:[%s6] sm:$0x1]
    %v1041 = vsel %vm195, %v1032, 0
    %1043 = vmatprep.subr.mxu0 0.0
    %1044 = vmatpush1.msra.mxu0 %v1036
    %1045 = vmatprep.subr.mxu0 0.0
    %1046 = vmatpush1.msra.mxu0 %v1037
    %1047 = vmatprep.subr.mxu0 0.0
    %1048 = vmatpush1.msra.mxu0 %v1038
    %1049 = vmatprep.subr.mxu0 0.0
    %1050 = vmatpush1.msra.mxu0 %v1039
    %1051 = vmatprep.subr.mxu0 0.0
    %1052 = vmatpush1.msra.mxu0 0.0
    %1053 = vmatprep.subr.mxu0 0.0
    %1054 = vmatpush1.msra.mxu0 0.0
    %1055 = vmatprep.subr.mxu0 0.0
    %1056 = vmatpush1.msra.mxu0 0.0
    %1057 = vmatprep.subr.mxu0 0.0
    %1058 = vmatpush1.msra.mxu0 0.0
    %1059 = vmatprep.subr.mxu0 0.0
    %1060 = vmatpush1.msra.mxu0 0.0
    %1061 = vmatprep.subr.mxu0 0.0
    %1062 = vmatpush1.msra.mxu0 0.0
    %1063 = vmatprep.subr.mxu0 0.0
    %1064 = vmatpush1.msra.mxu0 0.0
    %1065 = vmatprep.subr.mxu0 0.0
    %1066 = vmatpush1.msra.mxu0 0.0
    %1067 = vmatprep.subr.mxu0 0.0
    %1068 = vmatpush1.msra.mxu0 0.0
    %1069 = vmatprep.subr.mxu0 0.0
    %1070 = vmatpush1.msra.mxu0 0.0
    %1071 = vmatprep.subr.mxu0 0.0
    %1072 = vmatpush1.msra.mxu0 0.0
    %1073 = vmatprep.subr.mxu0 0.0
    %1074 = vmatpush1.msra.mxu0 0.0
    %1075 = vmatprep.subr.mxu0 0.0
    %1076 = vmatpush1.msra.mxu0 0.0
    %1077 = vmatprep.subr.mxu0 0.0
    %1078 = vmatpush1.msra.mxu0 0.0
    %1079 = vmatprep.subr.mxu0 0.0
    %1080 = vmatpush1.msra.mxu0 0.0
    %1081 = vmatprep.subr.mxu0 0.0
    %1082 = vmatpush1.msra.mxu0 0.0
    %1083 = vmatprep.subr.mxu0 0.0
    %1084 = vmatpush1.msra.mxu0 0.0
    %1085 = vmatprep.subr.mxu0 0.0
    %1086 = vmatpush1.msra.mxu0 0.0
    %1087 = vmatprep.subr.mxu0 0.0
    %1088 = vmatpush1.msra.mxu0 0.0
    %1089 = vmatprep.subr.mxu0 0.0
    %1090 = vmatpush1.msra.mxu0 0.0
    %1091 = vmatprep.subr.mxu0 0.0
    %1092 = vmatpush1.msra.mxu0 0.0
    %1093 = vmatprep.subr.mxu0 0.0
    %1094 = vmatpush1.msra.mxu0 0.0
    %1095 = vmatprep.subr.mxu0 0.0
    %1096 = vmatpush1.msra.mxu0 0.0
    %1097 = vmatprep.subr.mxu0 0.0
    %1098 = vmatpush1.msra.mxu0 0.0
    %1099 = vmatprep.subr.mxu0 0.0
    %1100 = vmatpush1.msra.mxu0 0.0
    %1101 = vmatprep.subr.mxu0 0.0
    %1102 = vmatpush1.msra.mxu0 0.0
    %1103 = vmatprep.subr.mxu0 0.0
    %1104 = vmatpush1.msra.mxu0 0.0
    %1105 = vmatprep.subr.mxu0 0.0
    %1106 = vmatpush1.msra.mxu0 0.0
    %1107 = vmatprep.mubr.f32.mxu0 0.0
    %1108 = vmatmul.mubr.f32.gmra.mrb[0].mxu0 %v1041
    %v1109 = vpop.f32.mrb[0].mxu0
    %v1110 = vadd.f32 %v1040, %v1109
    %v1111 = vpop.f32.mrb[0].mxu0
    %1112 = vdwg.mxu0
    %v1113 = vadd.f32 %v1035, %v1110
    %v1114 = vsub.f32 0.0, %v1113
    %v1115 = vmul.f32 %v1114, 1.442695
    %v1116 = vpow.pop %v1115
    %v1117 = vadd.f32 %v1116, 1.0
    %v1118 = vrcp.pop %v1117
    %v1119 = vmul.f32 1.0, %v1118
    %1121 = vrot.lane.b32.xlu0 %v1110, 64
    %v1122 = vpop.permute.xlu0 %1121
    %v1124 = vmul.f32 %v1119, %v1122
    %1126 = vrot.lane.b32.xlu0 %v1124, 64
    %v1127 = vpop.permute.xlu0 %1126
    %v1129 = vadd.f32 %v1035, %v1127
    %v1130 = vtanh.pop %v1129
    %v1131 = vsub.f32 1.0, %v1119
    %1133 = vrot.lane.b32.xlu0 %v1130, 96
    %v1134 = vpop.permute.xlu0 %1133
    %v1136 = vmul.f32 %v1131, %v1134
    %v1137 = vmul.f32 %v1119, %v1029
    %v1138 = vadd.f32 %v1136, %v1137
    %1140 = vrot.lane.b32.xlu0 %v1138, 96
    %v1141 = vpop.permute.xlu0 %1140
    %1143 = vst.msk [vmem:[#allocation2 + $0x7] sm:$0x1] %vm379, %v1141
    %v1144 = vld [vmem:[%s7] sm:$0xff]
    %v1145 = vld [vmem:[%s7 + $0x8] sm:$0xff]
    %v1146 = vld [vmem:[%s7 + $0x10] sm:$0xff]
    %v1147 = vld [vmem:[%s7 + $0x18] sm:$0xff]
    %v1148 = vld [vmem:[%s8] sm:$0x1]
    %v1149 = vsel %vm195, %v1141, 0
    %1151 = vmatprep.subr.mxu0 0.0
    %1152 = vmatpush1.msra.mxu0 %v1144
    %1153 = vmatprep.subr.mxu0 0.0
    %1154 = vmatpush1.msra.mxu0 %v1145
    %1155 = vmatprep.subr.mxu0 0.0
    %1156 = vmatpush1.msra.mxu0 %v1146
    %1157 = vmatprep.subr.mxu0 0.0
    %1158 = vmatpush1.msra.mxu0 %v1147
    %1159 = vmatprep.subr.mxu0 0.0
    %1160 = vmatpush1.msra.mxu0 0.0
    %1161 = vmatprep.subr.mxu0 0.0
    %1162 = vmatpush1.msra.mxu0 0.0
    %1163 = vmatprep.subr.mxu0 0.0
    %1164 = vmatpush1.msra.mxu0 0.0
    %1165 = vmatprep.subr.mxu0 0.0
    %1166 = vmatpush1.msra.mxu0 0.0
    %1167 = vmatprep.subr.mxu0 0.0
    %1168 = vmatpush1.msra.mxu0 0.0
    %1169 = vmatprep.subr.mxu0 0.0
    %1170 = vmatpush1.msra.mxu0 0.0
    %1171 = vmatprep.subr.mxu0 0.0
    %1172 = vmatpush1.msra.mxu0 0.0
    %1173 = vmatprep.subr.mxu0 0.0
    %1174 = vmatpush1.msra.mxu0 0.0
    %1175 = vmatprep.subr.mxu0 0.0
    %1176 = vmatpush1.msra.mxu0 0.0
    %1177 = vmatprep.subr.mxu0 0.0
    %1178 = vmatpush1.msra.mxu0 0.0
    %1179 = vmatprep.subr.mxu0 0.0
    %1180 = vmatpush1.msra.mxu0 0.0
    %1181 = vmatprep.subr.mxu0 0.0
    %1182 = vmatpush1.msra.mxu0 0.0
    %1183 = vmatprep.subr.mxu0 0.0
    %1184 = vmatpush1.msra.mxu0 0.0
    %1185 = vmatprep.subr.mxu0 0.0
    %1186 = vmatpush1.msra.mxu0 0.0
    %1187 = vmatprep.subr.mxu0 0.0
    %1188 = vmatpush1.msra.mxu0 0.0
    %1189 = vmatprep.subr.mxu0 0.0
    %1190 = vmatpush1.msra.mxu0 0.0
    %1191 = vmatprep.subr.mxu0 0.0
    %1192 = vmatpush1.msra.mxu0 0.0
    %1193 = vmatprep.subr.mxu0 0.0
    %1194 = vmatpush1.msra.mxu0 0.0
    %1195 = vmatprep.subr.mxu0 0.0
    %1196 = vmatpush1.msra.mxu0 0.0
    %1197 = vmatprep.subr.mxu0 0.0
    %1198 = vmatpush1.msra.mxu0 0.0
    %1199 = vmatprep.subr.mxu0 0.0
    %1200 = vmatpush1.msra.mxu0 0.0
    %1201 = vmatprep.subr.mxu0 0.0
    %1202 = vmatpush1.msra.mxu0 0.0
    %1203 = vmatprep.subr.mxu0 0.0
    %1204 = vmatpush1.msra.mxu0 0.0
    %1205 = vmatprep.subr.mxu0 0.0
    %1206 = vmatpush1.msra.mxu0 0.0
    %1207 = vmatprep.subr.mxu0 0.0
    %1208 = vmatpush1.msra.mxu0 0.0
    %1209 = vmatprep.subr.mxu0 0.0
    %1210 = vmatpush1.msra.mxu0 0.0
    %1211 = vmatprep.subr.mxu0 0.0
    %1212 = vmatpush1.msra.mxu0 0.0
    %1213 = vmatprep.subr.mxu0 0.0
    %1214 = vmatpush1.msra.mxu0 0.0
    %1215 = vmatprep.mubr.f32.mxu0 0.0
    %1216 = vmatmul.mubr.f32.gmra.mrb[0].mxu0 %v1149
    %v1217 = vpop.f32.mrb[0].mxu0
    %v1218 = vadd.f32 %v1148, %v1217
    %v1219 = vpop.f32.mrb[0].mxu0
    %1220 = vdwg.mxu0
    %v1221 = vtanh.pop %v1218
    %v1222 = vld [vmem:[#allocation2] sm:$0xff]
    %v1223 = vld [vmem:[%s1] sm:$0x1]
    %v1224 = vld [vmem:[#allocation6] sm:$0xff]
    %v1225 = vld [vmem:[#allocation6 + $0x8] sm:$0xff]
    %v1226 = vld [vmem:[#allocation6 + $0x10] sm:$0xff]
    %v1227 = vld [vmem:[#allocation6 + $0x18] sm:$0xff]
    %v1228 = vld [vmem:[%s13] sm:$0x1]
    %v1230 = vsel %vm195, %v1223, 0
    %1232 = vmatprep.subr.mxu0 0.0
    %1233 = vmatpush1.msra.mxu0 %v1224
    %1234 = vmatprep.subr.mxu0 0.0
    %1235 = vmatpush1.msra.mxu0 %v1225
    %1236 = vmatprep.subr.mxu0 0.0
    %1237 = vmatpush1.msra.mxu0 %v1226
    %1238 = vmatprep.subr.mxu0 0.0
    %1239 = vmatpush1.msra.mxu0 %v1227
    %1240 = vmatprep.subr.mxu0 0.0
    %1241 = vmatpush1.msra.mxu0 0.0
    %1242 = vmatprep.subr.mxu0 0.0
    %1243 = vmatpush1.msra.mxu0 0.0
    %1244 = vmatprep.subr.mxu0 0.0
    %1245 = vmatpush1.msra.mxu0 0.0
    %1246 = vmatprep.subr.mxu0 0.0
    %1247 = vmatpush1.msra.mxu0 0.0
    %1248 = vmatprep.subr.mxu0 0.0
    %1249 = vmatpush1.msra.mxu0 0.0
    %1250 = vmatprep.subr.mxu0 0.0
    %1251 = vmatpush1.msra.mxu0 0.0
    %1252 = vmatprep.subr.mxu0 0.0
    %1253 = vmatpush1.msra.mxu0 0.0
    %1254 = vmatprep.subr.mxu0 0.0
    %1255 = vmatpush1.msra.mxu0 0.0
    %1256 = vmatprep.subr.mxu0 0.0
    %1257 = vmatpush1.msra.mxu0 0.0
    %1258 = vmatprep.subr.mxu0 0.0
    %1259 = vmatpush1.msra.mxu0 0.0
    %1260 = vmatprep.subr.mxu0 0.0
    %1261 = vmatpush1.msra.mxu0 0.0
    %1262 = vmatprep.subr.mxu0 0.0
    %1263 = vmatpush1.msra.mxu0 0.0
    %1264 = vmatprep.subr.mxu0 0.0
    %1265 = vmatpush1.msra.mxu0 0.0
    %1266 = vmatprep.subr.mxu0 0.0
    %1267 = vmatpush1.msra.mxu0 0.0
    %1268 = vmatprep.subr.mxu0 0.0
    %1269 = vmatpush1.msra.mxu0 0.0
    %1270 = vmatprep.subr.mxu0 0.0
    %1271 = vmatpush1.msra.mxu0 0.0
    %1272 = vmatprep.subr.mxu0 0.0
    %1273 = vmatpush1.msra.mxu0 0.0
    %1274 = vmatprep.subr.mxu0 0.0
    %1275 = vmatpush1.msra.mxu0 0.0
    %1276 = vmatprep.subr.mxu0 0.0
    %1277 = vmatpush1.msra.mxu0 0.0
    %1278 = vmatprep.subr.mxu0 0.0
    %1279 = vmatpush1.msra.mxu0 0.0
    %1280 = vmatprep.subr.mxu0 0.0
    %1281 = vmatpush1.msra.mxu0 0.0
    %1282 = vmatprep.subr.mxu0 0.0
    %1283 = vmatpush1.msra.mxu0 0.0
    %1284 = vmatprep.subr.mxu0 0.0
    %1285 = vmatpush1.msra.mxu0 0.0
    %1286 = vmatprep.subr.mxu0 0.0
    %1287 = vmatpush1.msra.mxu0 0.0
    %1288 = vmatprep.subr.mxu0 0.0
    %1289 = vmatpush1.msra.mxu0 0.0
    %1290 = vmatprep.subr.mxu0 0.0
    %1291 = vmatpush1.msra.mxu0 0.0
    %1292 = vmatprep.subr.mxu0 0.0
    %1293 = vmatpush1.msra.mxu0 0.0
    %1294 = vmatprep.subr.mxu0 0.0
    %1295 = vmatpush1.msra.mxu0 0.0
    %1296 = vmatprep.mubr.f32.mxu0 0.0
    %1297 = vmatmul.mubr.f32.gmra.mrb[0].mxu0 %v1230
    %v1298 = vpop.f32.mrb[0].mxu0
    %v1299 = vadd.f32 %v1228, %v1298
    %v1300 = vpop.f32.mrb[0].mxu0
    %1301 = vdwg.mxu0
    %v1302 = vlaneseq
    %v1303 = vand.u32 %v1302, 127
    %v1304 = vld [vmem:[%s2] sm:$0x1]
    %v1305 = vld [vmem:[%s9] sm:$0xff]
    %v1306 = vld [vmem:[%s9 + $0x8] sm:$0xff]
    %v1307 = vld [vmem:[%s9 + $0x10] sm:$0xff]
    %v1308 = vld [vmem:[%s9 + $0x18] sm:$0xff]
    %v1310 = vsel %vm195, %v1304, 0
    %1312 = vmatprep.subr.mxu0 0.0
    %1313 = vmatpush1.msra.mxu0 %v1305
    %1314 = vmatprep.subr.mxu0 0.0
    %1315 = vmatpush1.msra.mxu0 %v1306
    %1316 = vmatprep.subr.mxu0 0.0
    %1317 = vmatpush1.msra.mxu0 %v1307
    %1318 = vmatprep.subr.mxu0 0.0
    %1319 = vmatpush1.msra.mxu0 %v1308
    %1320 = vmatprep.subr.mxu0 0.0
    %1321 = vmatpush1.msra.mxu0 0.0
    %1322 = vmatprep.subr.mxu0 0.0
    %1323 = vmatpush1.msra.mxu0 0.0
    %1324 = vmatprep.subr.mxu0 0.0
    %1325 = vmatpush1.msra.mxu0 0.0
    %1326 = vmatprep.subr.mxu0 0.0
    %1327 = vmatpush1.msra.mxu0 0.0
    %1328 = vmatprep.subr.mxu0 0.0
    %1329 = vmatpush1.msra.mxu0 0.0
    %1330 = vmatprep.subr.mxu0 0.0
    %1331 = vmatpush1.msra.mxu0 0.0
    %1332 = vmatprep.subr.mxu0 0.0
    %1333 = vmatpush1.msra.mxu0 0.0
    %1334 = vmatprep.subr.mxu0 0.0
    %1335 = vmatpush1.msra.mxu0 0.0
    %1336 = vmatprep.subr.mxu0 0.0
    %1337 = vmatpush1.msra.mxu0 0.0
    %1338 = vmatprep.subr.mxu0 0.0
    %1339 = vmatpush1.msra.mxu0 0.0
    %1340 = vmatprep.subr.mxu0 0.0
    %1341 = vmatpush1.msra.mxu0 0.0
    %1342 = vmatprep.subr.mxu0 0.0
    %1343 = vmatpush1.msra.mxu0 0.0
    %1344 = vmatprep.subr.mxu0 0.0
    %1345 = vmatpush1.msra.mxu0 0.0
    %1346 = vmatprep.subr.mxu0 0.0
    %1347 = vmatpush1.msra.mxu0 0.0
    %1348 = vmatprep.subr.mxu0 0.0
    %1349 = vmatpush1.msra.mxu0 0.0
    %1350 = vmatprep.subr.mxu0 0.0
    %1351 = vmatpush1.msra.mxu0 0.0
    %1352 = vmatprep.subr.mxu0 0.0
    %1353 = vmatpush1.msra.mxu0 0.0
    %1354 = vmatprep.subr.mxu0 0.0
    %1355 = vmatpush1.msra.mxu0 0.0
    %1356 = vmatprep.subr.mxu0 0.0
    %1357 = vmatpush1.msra.mxu0 0.0
    %1358 = vmatprep.subr.mxu0 0.0
    %1359 = vmatpush1.msra.mxu0 0.0
    %1360 = vmatprep.subr.mxu0 0.0
    %1361 = vmatpush1.msra.mxu0 0.0
    %1362 = vmatprep.subr.mxu0 0.0
    %1363 = vmatpush1.msra.mxu0 0.0
    %1364 = vmatprep.subr.mxu0 0.0
    %1365 = vmatpush1.msra.mxu0 0.0
    %1366 = vmatprep.subr.mxu0 0.0
    %1367 = vmatpush1.msra.mxu0 0.0
    %1368 = vmatprep.subr.mxu0 0.0
    %1369 = vmatpush1.msra.mxu0 0.0
    %1370 = vmatprep.subr.mxu0 0.0
    %1371 = vmatpush1.msra.mxu0 0.0
    %1372 = vmatprep.subr.mxu0 0.0
    %1373 = vmatpush1.msra.mxu0 0.0
    %1374 = vmatprep.subr.mxu0 0.0
    %1375 = vmatpush1.msra.mxu0 0.0
    %1376 = vmatprep.mubr.f32.mxu0 0.0
    %1377 = vmatmul.mubr.f32.gmra.mrb[0].mxu0 %v1310
    %v1378 = vpop.f32.mrb[0].mxu0
    %v1379 = vadd.f32 0.0, %v1378
    %v1380 = vpop.f32.mrb[0].mxu0
    %1381 = vdwg.mxu0
    %v1382 = vld [vmem:[#allocation4] sm:$0xff]
    %v1383 = vld [vmem:[#allocation4 + $0x8] sm:$0xff]
    %v1384 = vld [vmem:[#allocation4 + $0x10] sm:$0xff]
    %v1385 = vld [vmem:[#allocation4 + $0x18] sm:$0xff]
    %v1387 = vsel %vm195, %v1379, 0
    %1389 = vmatprep.subr.mxu0 0.0
    %1390 = vmatpush1.msra.mxu0 %v1382
    %1391 = vmatprep.subr.mxu0 0.0
    %1392 = vmatpush1.msra.mxu0 %v1383
    %1393 = vmatprep.subr.mxu0 0.0
    %1394 = vmatpush1.msra.mxu0 %v1384
    %1395 = vmatprep.subr.mxu0 0.0
    %1396 = vmatpush1.msra.mxu0 %v1385
    %1397 = vmatprep.subr.mxu0 0.0
    %1398 = vmatpush1.msra.mxu0 0.0
    %1399 = vmatprep.subr.mxu0 0.0
    %1400 = vmatpush1.msra.mxu0 0.0
    %1401 = vmatprep.subr.mxu0 0.0
    %1402 = vmatpush1.msra.mxu0 0.0
    %1403 = vmatprep.subr.mxu0 0.0
    %1404 = vmatpush1.msra.mxu0 0.0
    %1405 = vmatprep.subr.mxu0 0.0
    %1406 = vmatpush1.msra.mxu0 0.0
    %1407 = vmatprep.subr.mxu0 0.0
    %1408 = vmatpush1.msra.mxu0 0.0
    %1409 = vmatprep.subr.mxu0 0.0
    %1410 = vmatpush1.msra.mxu0 0.0
    %1411 = vmatprep.subr.mxu0 0.0
    %1412 = vmatpush1.msra.mxu0 0.0
    %1413 = vmatprep.subr.mxu0 0.0
    %1414 = vmatpush1.msra.mxu0 0.0
    %1415 = vmatprep.subr.mxu0 0.0
    %1416 = vmatpush1.msra.mxu0 0.0
    %1417 = vmatprep.subr.mxu0 0.0
    %1418 = vmatpush1.msra.mxu0 0.0
    %1419 = vmatprep.subr.mxu0 0.0
    %1420 = vmatpush1.msra.mxu0 0.0
    %1421 = vmatprep.subr.mxu0 0.0
    %1422 = vmatpush1.msra.mxu0 0.0
    %1423 = vmatprep.subr.mxu0 0.0
    %1424 = vmatpush1.msra.mxu0 0.0
    %1425 = vmatprep.subr.mxu0 0.0
    %1426 = vmatpush1.msra.mxu0 0.0
    %1427 = vmatprep.subr.mxu0 0.0
    %1428 = vmatpush1.msra.mxu0 0.0
    %1429 = vmatprep.subr.mxu0 0.0
    %1430 = vmatpush1.msra.mxu0 0.0
    %1431 = vmatprep.subr.mxu0 0.0
    %1432 = vmatpush1.msra.mxu0 0.0
    %1433 = vmatprep.subr.mxu0 0.0
    %1434 = vmatpush1.msra.mxu0 0.0
    %1435 = vmatprep.subr.mxu0 0.0
    %1436 = vmatpush1.msra.mxu0 0.0
    %1437 = vmatprep.subr.mxu0 0.0
    %1438 = vmatpush1.msra.mxu0 0.0
    %1439 = vmatprep.subr.mxu0 0.0
    %1440 = vmatpush1.msra.mxu0 0.0
    %1441 = vmatprep.subr.mxu0 0.0
    %1442 = vmatpush1.msra.mxu0 0.0
    %1443 = vmatprep.subr.mxu0 0.0
    %1444 = vmatpush1.msra.mxu0 0.0
    %1445 = vmatprep.subr.mxu0 0.0
    %1446 = vmatpush1.msra.mxu0 0.0
    %1447 = vmatprep.subr.mxu0 0.0
    %1448 = vmatpush1.msra.mxu0 0.0
    %1449 = vmatprep.subr.mxu0 0.0
    %1450 = vmatpush1.msra.mxu0 0.0
    %1451 = vmatprep.subr.mxu0 0.0
    %1452 = vmatpush1.msra.mxu0 0.0
    %1453 = vmatprep.mubr.f32.mxu0 0.0
    %1454 = vmatmul.mubr.f32.gmra.mrb[0].mxu0 %v1387
    %v1455 = vpop.f32.mrb[0].mxu0
    %v1456 = vadd.f32 %v1299, %v1455
    %v1457 = vpop.f32.mrb[0].mxu0
    %1458 = vdwg.mxu0
    %v1459 = vld [vmem:[#allocation8] sm:$0xff]
    %v1460 = vld [vmem:[#allocation8 + $0x8] sm:$0xff]
    %v1461 = vld [vmem:[#allocation8 + $0x10] sm:$0xff]
    %v1462 = vld [vmem:[#allocation8 + $0x18] sm:$0xff]
    %v1463 = vld [vmem:[#allocation9] sm:$0x1]
    %v1465 = vsel %vm195, %v1221, 0
    %1467 = vmatprep.subr.mxu0 0.0
    %1468 = vmatpush1.msra.mxu0 %v1459
    %1469 = vmatprep.subr.mxu0 0.0
    %1470 = vmatpush1.msra.mxu0 %v1460
    %1471 = vmatprep.subr.mxu0 0.0
    %1472 = vmatpush1.msra.mxu0 %v1461
    %1473 = vmatprep.subr.mxu0 0.0
    %1474 = vmatpush1.msra.mxu0 %v1462
    %1475 = vmatprep.subr.mxu0 0.0
    %1476 = vmatpush1.msra.mxu0 0.0
    %1477 = vmatprep.subr.mxu0 0.0
    %1478 = vmatpush1.msra.mxu0 0.0
    %1479 = vmatprep.subr.mxu0 0.0
    %1480 = vmatpush1.msra.mxu0 0.0
    %1481 = vmatprep.subr.mxu0 0.0
    %1482 = vmatpush1.msra.mxu0 0.0
    %1483 = vmatprep.subr.mxu0 0.0
    %1484 = vmatpush1.msra.mxu0 0.0
    %1485 = vmatprep.subr.mxu0 0.0
    %1486 = vmatpush1.msra.mxu0 0.0
    %1487 = vmatprep.subr.mxu0 0.0
    %1488 = vmatpush1.msra.mxu0 0.0
    %1489 = vmatprep.subr.mxu0 0.0
    %1490 = vmatpush1.msra.mxu0 0.0
    %1491 = vmatprep.subr.mxu0 0.0
    %1492 = vmatpush1.msra.mxu0 0.0
    %1493 = vmatprep.subr.mxu0 0.0
    %1494 = vmatpush1.msra.mxu0 0.0
    %1495 = vmatprep.subr.mxu0 0.0
    %1496 = vmatpush1.msra.mxu0 0.0
    %1497 = vmatprep.subr.mxu0 0.0
    %1498 = vmatpush1.msra.mxu0 0.0
    %1499 = vmatprep.subr.mxu0 0.0
    %1500 = vmatpush1.msra.mxu0 0.0
    %1501 = vmatprep.subr.mxu0 0.0
    %1502 = vmatpush1.msra.mxu0 0.0
    %1503 = vmatprep.subr.mxu0 0.0
    %1504 = vmatpush1.msra.mxu0 0.0
    %1505 = vmatprep.subr.mxu0 0.0
    %1506 = vmatpush1.msra.mxu0 0.0
    %1507 = vmatprep.subr.mxu0 0.0
    %1508 = vmatpush1.msra.mxu0 0.0
    %1509 = vmatprep.subr.mxu0 0.0
    %1510 = vmatpush1.msra.mxu0 0.0
    %1511 = vmatprep.subr.mxu0 0.0
    %1512 = vmatpush1.msra.mxu0 0.0
    %1513 = vmatprep.subr.mxu0 0.0
    %1514 = vmatpush1.msra.mxu0 0.0
    %1515 = vmatprep.subr.mxu0 0.0
    %1516 = vmatpush1.msra.mxu0 0.0
    %1517 = vmatprep.subr.mxu0 0.0
    %1518 = vmatpush1.msra.mxu0 0.0
    %1519 = vmatprep.subr.mxu0 0.0
    %1520 = vmatpush1.msra.mxu0 0.0
    %1521 = vmatprep.subr.mxu0 0.0
    %1522 = vmatpush1.msra.mxu0 0.0
    %1523 = vmatprep.subr.mxu0 0.0
    %1524 = vmatpush1.msra.mxu0 0.0
    %1525 = vmatprep.subr.mxu0 0.0
    %1526 = vmatpush1.msra.mxu0 0.0
    %1527 = vmatprep.subr.mxu0 0.0
    %1528 = vmatpush1.msra.mxu0 0.0
    %1529 = vmatprep.subr.mxu0 0.0
    %1530 = vmatpush1.msra.mxu0 0.0
    %1531 = vmatprep.mubr.f32.mxu0 0.0
    %1532 = vmatmul.mubr.f32.gmra.mrb[0].mxu0 %v1465
    %v1533 = vpop.f32.mrb[0].mxu0
    %v1534 = vadd.f32 %v1463, %v1533
    %v1535 = vpop.f32.mrb[0].mxu0
    %1536 = vdwg.mxu0
    %v1537 = vadd.f32 %v1456, %v1534
    %v1538 = vsub.f32 0.0, %v1537
    %v1539 = vmul.f32 %v1538, 1.442695
    %v1540 = vpow.pop %v1539
    %v1541 = vadd.f32 %v1540, 1.0
    %v1542 = vrcp.pop %v1541
    %v1543 = vmul.f32 1.0, %v1542
    %1545 = vrot.lane.b32.xlu0 %v1534, 64
    %v1546 = vpop.permute.xlu0 %1545
    %v1548 = vmul.f32 %v1543, %v1546
    %1550 = vrot.lane.b32.xlu0 %v1548, 64
    %v1551 = vpop.permute.xlu0 %1550
    %v1553 = vadd.f32 %v1456, %v1551
    %v1554 = vtanh.pop %v1553
    %v1555 = vsub.f32 1.0, %v1543
    %1557 = vrot.lane.b32.xlu0 %v1554, 96
    %v1558 = vpop.permute.xlu0 %1557
    %v1560 = vmul.f32 %v1555, %v1558
    %1561 = vrot.lane.b32.xlu0 %v1221, 32
    %v1562 = vpop.permute.xlu0 %1561
    %v1564 = vmul.f32 %v1543, %v1562
    %v1565 = vadd.f32 %v1560, %v1564
    %1567 = vrot.lane.b32.xlu0 %v1565, 96
    %v1568 = vpop.permute.xlu0 %1567
    %v1569 = vsel %vm195, %v1568, 0
    %v1572 = vsel %vm195, %v1222, 0
    %1574 = vmatprep.subr.mxu0 0.0
    %1575 = vmatpush1.xpose.msra.mxu0 %v1572
    %1576 = vmatprep.subr.mxu0 0.0
    %1577 = vmatpush1.xpose.msra.mxu0 0.0
    %1578 = vmatprep.subr.mxu0 0.0
    %1579 = vmatpush1.xpose.msra.mxu0 0.0
    %1580 = vmatprep.subr.mxu0 0.0
    %1581 = vmatpush1.xpose.msra.mxu0 0.0
    %1582 = vmatprep.subr.mxu0 0.0
    %1583 = vmatpush1.xpose.msra.mxu0 0.0
    %1584 = vmatprep.subr.mxu0 0.0
    %1585 = vmatpush1.xpose.msra.mxu0 0.0
    %1586 = vmatprep.subr.mxu0 0.0
    %1587 = vmatpush1.xpose.msra.mxu0 0.0
    %1588 = vmatprep.subr.mxu0 0.0
    %1589 = vmatpush1.xpose.msra.mxu0 0.0
    %1590 = vmatprep.subr.mxu0 0.0
    %1591 = vmatpush1.xpose.msra.mxu0 0.0
    %1592 = vmatprep.subr.mxu0 0.0
    %1593 = vmatpush1.xpose.msra.mxu0 0.0
    %1594 = vmatprep.subr.mxu0 0.0
    %1595 = vmatpush1.xpose.msra.mxu0 0.0
    %1596 = vmatprep.subr.mxu0 0.0
    %1597 = vmatpush1.xpose.msra.mxu0 0.0
    %1598 = vmatprep.subr.mxu0 0.0
    %1599 = vmatpush1.xpose.msra.mxu0 0.0
    %1600 = vmatprep.subr.mxu0 0.0
    %1601 = vmatpush1.xpose.msra.mxu0 0.0
    %1602 = vmatprep.subr.mxu0 0.0
    %1603 = vmatpush1.xpose.msra.mxu0 0.0
    %1604 = vmatprep.subr.mxu0 0.0
    %1605 = vmatpush1.xpose.msra.mxu0 0.0
    %1606 = vmatprep.subr.mxu0 0.0
    %1607 = vmatpush1.xpose.msra.mxu0 0.0
    %1608 = vmatprep.subr.mxu0 0.0
    %1609 = vmatpush1.xpose.msra.mxu0 0.0
    %1610 = vmatprep.subr.mxu0 0.0
    %1611 = vmatpush1.xpose.msra.mxu0 0.0
    %1612 = vmatprep.subr.mxu0 0.0
    %1613 = vmatpush1.xpose.msra.mxu0 0.0
    %1614 = vmatprep.subr.mxu0 0.0
    %1615 = vmatpush1.xpose.msra.mxu0 0.0
    %1616 = vmatprep.subr.mxu0 0.0
    %1617 = vmatpush1.xpose.msra.mxu0 0.0
    %1618 = vmatprep.subr.mxu0 0.0
    %1619 = vmatpush1.xpose.msra.mxu0 0.0
    %1620 = vmatprep.subr.mxu0 0.0
    %1621 = vmatpush1.xpose.msra.mxu0 0.0
    %1622 = vmatprep.subr.mxu0 0.0
    %1623 = vmatpush1.xpose.msra.mxu0 0.0
    %1624 = vmatprep.subr.mxu0 0.0
    %1625 = vmatpush1.xpose.msra.mxu0 0.0
    %1626 = vmatprep.subr.mxu0 0.0
    %1627 = vmatpush1.xpose.msra.mxu0 0.0
    %1628 = vmatprep.subr.mxu0 0.0
    %1629 = vmatpush1.xpose.msra.mxu0 0.0
    %1630 = vmatprep.subr.mxu0 0.0
    %1631 = vmatpush1.xpose.msra.mxu0 0.0
    %1632 = vmatprep.subr.mxu0 0.0
    %1633 = vmatpush1.xpose.msra.mxu0 0.0
    %1634 = vmatprep.subr.mxu0 0.0
    %1635 = vmatpush1.xpose.msra.mxu0 0.0
    %1636 = vmatprep.subr.mxu0 0.0
    %1637 = vmatpush1.xpose.msra.mxu0 0.0
    %1638 = vmatprep.mubr.f32.mxu0 0.0
    %1639 = vmatmul.mubr.f32.gmra.mrb[0].mxu0 %v1569
    %v1640 = vpop.f32.mrb[0].mxu0
    %v1641 = vadd.f32 0.0, %v1640
    %v1642 = vpop.f32.mrb[0].mxu0
    %1643 = vdwg.mxu0
    %vm1644 = vcmask 57344
    %v1645 = vsel %vm1644, %v1641, -inf
    %1646 = vmax.xlane.f32.xlu0 %v1645
    %v1647 = vpop.xlane.xlu0 %1646
    %v1648 = vsub.f32 %v1641, %v1647
    %v1649 = vmul.f32 %v1648, 1.442695
    %v1650 = vpow.pop %v1649
    %v1651 = vsel %vm1644, %v1650, 0.0
    %1652 = vadd.xlane.f32.xlu0 %v1651
    %v1653 = vpop.xlane.xlu0 %1652
    %v1654 = vrcp.pop %v1653
    %v1655 = vmul.f32 %v1650, %v1654
    %vm1656 = vcmask 64512
    %v1658 = vsel %vm1656, %v1655, 0
    %1660 = vmatprep.subr.mxu0 0.0
    %1661 = vmatpush1.msra.mxu0 %v1222
    %1662 = vmatprep.subr.mxu0 0.0
    %1663 = vmatpush1.msra.mxu0 0.0
    %1664 = vmatprep.subr.mxu0 0.0
    %1665 = vmatpush1.msra.mxu0 0.0
    %1666 = vmatprep.subr.mxu0 0.0
    %1667 = vmatpush1.msra.mxu0 0.0
    %1668 = vmatprep.subr.mxu0 0.0
    %1669 = vmatpush1.msra.mxu0 0.0
    %1670 = vmatprep.subr.mxu0 0.0
    %1671 = vmatpush1.msra.mxu0 0.0
    %1672 = vmatprep.subr.mxu0 0.0
    %1673 = vmatpush1.msra.mxu0 0.0
    %1674 = vmatprep.subr.mxu0 0.0
    %1675 = vmatpush1.msra.mxu0 0.0
    %1676 = vmatprep.subr.mxu0 0.0
    %1677 = vmatpush1.msra.mxu0 0.0
    %1678 = vmatprep.subr.mxu0 0.0
    %1679 = vmatpush1.msra.mxu0 0.0
    %1680 = vmatprep.subr.mxu0 0.0
    %1681 = vmatpush1.msra.mxu0 0.0
    %1682 = vmatprep.subr.mxu0 0.0
    %1683 = vmatpush1.msra.mxu0 0.0
    %1684 = vmatprep.subr.mxu0 0.0
    %1685 = vmatpush1.msra.mxu0 0.0
    %1686 = vmatprep.subr.mxu0 0.0
    %1687 = vmatpush1.msra.mxu0 0.0
    %1688 = vmatprep.subr.mxu0 0.0
    %1689 = vmatpush1.msra.mxu0 0.0
    %1690 = vmatprep.subr.mxu0 0.0
    %1691 = vmatpush1.msra.mxu0 0.0
    %1692 = vmatprep.subr.mxu0 0.0
    %1693 = vmatpush1.msra.mxu0 0.0
    %1694 = vmatprep.subr.mxu0 0.0
    %1695 = vmatpush1.msra.mxu0 0.0
    %1696 = vmatprep.subr.mxu0 0.0
    %1697 = vmatpush1.msra.mxu0 0.0
    %1698 = vmatprep.subr.mxu0 0.0
    %1699 = vmatpush1.msra.mxu0 0.0
    %1700 = vmatprep.subr.mxu0 0.0
    %1701 = vmatpush1.msra.mxu0 0.0
    %1702 = vmatprep.subr.mxu0 0.0
    %1703 = vmatpush1.msra.mxu0 0.0
    %1704 = vmatprep.subr.mxu0 0.0
    %1705 = vmatpush1.msra.mxu0 0.0
    %1706 = vmatprep.subr.mxu0 0.0
    %1707 = vmatpush1.msra.mxu0 0.0
    %1708 = vmatprep.subr.mxu0 0.0
    %1709 = vmatpush1.msra.mxu0 0.0
    %1710 = vmatprep.subr.mxu0 0.0
    %1711 = vmatpush1.msra.mxu0 0.0
    %1712 = vmatprep.subr.mxu0 0.0
    %1713 = vmatpush1.msra.mxu0 0.0
    %1714 = vmatprep.subr.mxu0 0.0
    %1715 = vmatpush1.msra.mxu0 0.0
    %1716 = vmatprep.subr.mxu0 0.0
    %1717 = vmatpush1.msra.mxu0 0.0
    %1718 = vmatprep.subr.mxu0 0.0
    %1719 = vmatpush1.msra.mxu0 0.0
    %1720 = vmatprep.subr.mxu0 0.0
    %1721 = vmatpush1.msra.mxu0 0.0
    %1722 = vmatprep.subr.mxu0 0.0
    %1723 = vmatpush1.msra.mxu0 0.0
    %1724 = vmatprep.mubr.f32.mxu0 0.0
    %1725 = vmatmul.mubr.f32.gmra.mrb[0].mxu0 %v1658
    %v1726 = vpop.f32.mrb[0].mxu0
    %v1727 = vadd.f32 0.0, %v1726
    %v1728 = vpop.f32.mrb[0].mxu0
    %1729 = vdwg.mxu0
    %v1730 = vld [vmem:[#allocation11] sm:$0xff]
    %v1731 = vld [vmem:[#allocation11 + $0x8] sm:$0xff]
    %v1732 = vld [vmem:[#allocation11 + $0x10] sm:$0xff]
    %v1733 = vld [vmem:[#allocation11 + $0x18] sm:$0xff]
    %v1734 = vld [vmem:[#allocation12] sm:$0xff]
    %v1735 = vld [vmem:[#allocation12 + $0x8] sm:$0xff]
    %v1736 = vld [vmem:[#allocation12 + $0x10] sm:$0xff]
    %v1737 = vld [vmem:[#allocation12 + $0x18] sm:$0xff]
    %v1739 = vsel %vm195, %v1727, 0
    %1741 = vmatprep.subr.mxu0 0.0
    %1742 = vmatpush1.msra.mxu0 %v1734
    %1743 = vmatprep.subr.mxu0 0.0
    %1744 = vmatpush1.msra.mxu0 %v1735
    %1745 = vmatprep.subr.mxu0 0.0
    %1746 = vmatpush1.msra.mxu0 %v1736
    %1747 = vmatprep.subr.mxu0 0.0
    %1748 = vmatpush1.msra.mxu0 %v1737
    %1749 = vmatprep.subr.mxu0 0.0
    %1750 = vmatpush1.msra.mxu0 0.0
    %1751 = vmatprep.subr.mxu0 0.0
    %1752 = vmatpush1.msra.mxu0 0.0
    %1753 = vmatprep.subr.mxu0 0.0
    %1754 = vmatpush1.msra.mxu0 0.0
    %1755 = vmatprep.subr.mxu0 0.0
    %1756 = vmatpush1.msra.mxu0 0.0
    %1757 = vmatprep.subr.mxu0 0.0
    %1758 = vmatpush1.msra.mxu0 0.0
    %1759 = vmatprep.subr.mxu0 0.0
    %1760 = vmatpush1.msra.mxu0 0.0
    %1761 = vmatprep.subr.mxu0 0.0
    %1762 = vmatpush1.msra.mxu0 0.0
    %1763 = vmatprep.subr.mxu0 0.0
    %1764 = vmatpush1.msra.mxu0 0.0
    %1765 = vmatprep.subr.mxu0 0.0
    %1766 = vmatpush1.msra.mxu0 0.0
    %1767 = vmatprep.subr.mxu0 0.0
    %1768 = vmatpush1.msra.mxu0 0.0
    %1769 = vmatprep.subr.mxu0 0.0
    %1770 = vmatpush1.msra.mxu0 0.0
    %1771 = vmatprep.subr.mxu0 0.0
    %1772 = vmatpush1.msra.mxu0 0.0
    %1773 = vmatprep.subr.mxu0 0.0
    %1774 = vmatpush1.msra.mxu0 0.0
    %1775 = vmatprep.subr.mxu0 0.0
    %1776 = vmatpush1.msra.mxu0 0.0
    %1777 = vmatprep.subr.mxu0 0.0
    %1778 = vmatpush1.msra.mxu0 0.0
    %1779 = vmatprep.subr.mxu0 0.0
    %1780 = vmatpush1.msra.mxu0 0.0
    %1781 = vmatprep.subr.mxu0 0.0
    %1782 = vmatpush1.msra.mxu0 0.0
    %1783 = vmatprep.subr.mxu0 0.0
    %1784 = vmatpush1.msra.mxu0 0.0
    %1785 = vmatprep.subr.mxu0 0.0
    %1786 = vmatpush1.msra.mxu0 0.0
    %1787 = vmatprep.subr.mxu0 0.0
    %1788 = vmatpush1.msra.mxu0 0.0
    %1789 = vmatprep.subr.mxu0 0.0
    %1790 = vmatpush1.msra.mxu0 0.0
    %1791 = vmatprep.subr.mxu0 0.0
    %1792 = vmatpush1.msra.mxu0 0.0
    %1793 = vmatprep.subr.mxu0 0.0
    %1794 = vmatpush1.msra.mxu0 0.0
    %1795 = vmatprep.subr.mxu0 0.0
    %1796 = vmatpush1.msra.mxu0 0.0
    %1797 = vmatprep.subr.mxu0 0.0
    %1798 = vmatpush1.msra.mxu0 0.0
    %1799 = vmatprep.subr.mxu0 0.0
    %1800 = vmatpush1.msra.mxu0 0.0
    %1801 = vmatprep.subr.mxu0 0.0
    %1802 = vmatpush1.msra.mxu0 0.0
    %1803 = vmatprep.subr.mxu0 0.0
    %1804 = vmatpush1.msra.mxu0 0.0
    %1805 = vmatprep.mubr.f32.mxu0 0.0
    %1806 = vmatmul.mubr.f32.gmra.mrb[0].mxu0 %v1739
    %v1807 = vpop.f32.mrb[0].mxu0
    %v1808 = vadd.f32 0.0, %v1807
    %v1809 = vpop.f32.mrb[0].mxu0
    %1810 = vdwg.mxu0
    %1811 = vmatprep.subr.mxu0 0.0
    %1812 = vmatpush1.msra.mxu0 %v1730
    %1813 = vmatprep.subr.mxu0 0.0
    %1814 = vmatpush1.msra.mxu0 %v1731
    %1815 = vmatprep.subr.mxu0 0.0
    %1816 = vmatpush1.msra.mxu0 %v1732
    %1817 = vmatprep.subr.mxu0 0.0
    %1818 = vmatpush1.msra.mxu0 %v1733
    %1819 = vmatprep.subr.mxu0 0.0
    %1820 = vmatpush1.msra.mxu0 0.0
    %1821 = vmatprep.subr.mxu0 0.0
    %1822 = vmatpush1.msra.mxu0 0.0
    %1823 = vmatprep.subr.mxu0 0.0
    %1824 = vmatpush1.msra.mxu0 0.0
    %1825 = vmatprep.subr.mxu0 0.0
    %1826 = vmatpush1.msra.mxu0 0.0
    %1827 = vmatprep.subr.mxu0 0.0
    %1828 = vmatpush1.msra.mxu0 0.0
    %1829 = vmatprep.subr.mxu0 0.0
    %1830 = vmatpush1.msra.mxu0 0.0
    %1831 = vmatprep.subr.mxu0 0.0
    %1832 = vmatpush1.msra.mxu0 0.0
    %1833 = vmatprep.subr.mxu0 0.0
    %1834 = vmatpush1.msra.mxu0 0.0
    %1835 = vmatprep.subr.mxu0 0.0
    %1836 = vmatpush1.msra.mxu0 0.0
    %1837 = vmatprep.subr.mxu0 0.0
    %1838 = vmatpush1.msra.mxu0 0.0
    %1839 = vmatprep.subr.mxu0 0.0
    %1840 = vmatpush1.msra.mxu0 0.0
    %1841 = vmatprep.subr.mxu0 0.0
    %1842 = vmatpush1.msra.mxu0 0.0
    %1843 = vmatprep.subr.mxu0 0.0
    %1844 = vmatpush1.msra.mxu0 0.0
    %1845 = vmatprep.subr.mxu0 0.0
    %1846 = vmatpush1.msra.mxu0 0.0
    %1847 = vmatprep.subr.mxu0 0.0
    %1848 = vmatpush1.msra.mxu0 0.0
    %1849 = vmatprep.subr.mxu0 0.0
    %1850 = vmatpush1.msra.mxu0 0.0
    %1851 = vmatprep.subr.mxu0 0.0
    %1852 = vmatpush1.msra.mxu0 0.0
    %1853 = vmatprep.subr.mxu0 0.0
    %1854 = vmatpush1.msra.mxu0 0.0
    %1855 = vmatprep.subr.mxu0 0.0
    %1856 = vmatpush1.msra.mxu0 0.0
    %1857 = vmatprep.subr.mxu0 0.0
    %1858 = vmatpush1.msra.mxu0 0.0
    %1859 = vmatprep.subr.mxu0 0.0
    %1860 = vmatpush1.msra.mxu0 0.0
    %1861 = vmatprep.subr.mxu0 0.0
    %1862 = vmatpush1.msra.mxu0 0.0
    %1863 = vmatprep.subr.mxu0 0.0
    %1864 = vmatpush1.msra.mxu0 0.0
    %1865 = vmatprep.subr.mxu0 0.0
    %1866 = vmatpush1.msra.mxu0 0.0
    %1867 = vmatprep.subr.mxu0 0.0
    %1868 = vmatpush1.msra.mxu0 0.0
    %1869 = vmatprep.subr.mxu0 0.0
    %1870 = vmatpush1.msra.mxu0 0.0
    %1871 = vmatprep.subr.mxu0 0.0
    %1872 = vmatpush1.msra.mxu0 0.0
    %1873 = vmatprep.subr.mxu0 0.0
    %1874 = vmatpush1.msra.mxu0 0.0
    %1875 = vmatprep.mubr.f32.mxu0 0.0
    %1876 = vmatmul.mubr.f32.gmra.mrb[0].mxu0 %v1569
    %v1877 = vpop.f32.mrb[0].mxu0
    %v1878 = vadd.f32 %v1808, %v1877
    %v1879 = vpop.f32.mrb[0].mxu0
    %1880 = vdwg.mxu0
    %v1881 = vld [vmem:[#allocation14] sm:$0x1]
    %v1882 = vadd.f32 %v1878, %v1881
    %v1883 = vtanh.pop %v1882
    %v1884 = vld [vmem:[#allocation15] sm:$0xff]
    %v1885 = vld [vmem:[#allocation15 + $0x8] sm:$0xff]
    %v1886 = vld [vmem:[#allocation15 + $0x10] sm:$0xff]
    %v1887 = vld [vmem:[#allocation15 + $0x18] sm:$0xff]
    %v1888 = vld [vmem:[#allocation17] sm:$0x1]
    %v1890 = vsel %vm195, %v1883, 0
    %1892 = vmatprep.subr.mxu0 0.0
    %1893 = vmatpush1.msra.mxu0 %v1884
    %1894 = vmatprep.subr.mxu0 0.0
    %1895 = vmatpush1.msra.mxu0 %v1885
    %1896 = vmatprep.subr.mxu0 0.0
    %1897 = vmatpush1.msra.mxu0 %v1886
    %1898 = vmatprep.subr.mxu0 0.0
    %1899 = vmatpush1.msra.mxu0 %v1887
    %1900 = vmatprep.subr.mxu0 0.0
    %1901 = vmatpush1.msra.mxu0 0.0
    %1902 = vmatprep.subr.mxu0 0.0
    %1903 = vmatpush1.msra.mxu0 0.0
    %1904 = vmatprep.subr.mxu0 0.0
    %1905 = vmatpush1.msra.mxu0 0.0
    %1906 = vmatprep.subr.mxu0 0.0
    %1907 = vmatpush1.msra.mxu0 0.0
    %1908 = vmatprep.subr.mxu0 0.0
    %1909 = vmatpush1.msra.mxu0 0.0
    %1910 = vmatprep.subr.mxu0 0.0
    %1911 = vmatpush1.msra.mxu0 0.0
    %1912 = vmatprep.subr.mxu0 0.0
    %1913 = vmatpush1.msra.mxu0 0.0
    %1914 = vmatprep.subr.mxu0 0.0
    %1915 = vmatpush1.msra.mxu0 0.0
    %1916 = vmatprep.subr.mxu0 0.0
    %1917 = vmatpush1.msra.mxu0 0.0
    %1918 = vmatprep.subr.mxu0 0.0
    %1919 = vmatpush1.msra.mxu0 0.0
    %1920 = vmatprep.subr.mxu0 0.0
    %1921 = vmatpush1.msra.mxu0 0.0
    %1922 = vmatprep.subr.mxu0 0.0
    %1923 = vmatpush1.msra.mxu0 0.0
    %1924 = vmatprep.subr.mxu0 0.0
    %1925 = vmatpush1.msra.mxu0 0.0
    %1926 = vmatprep.subr.mxu0 0.0
    %1927 = vmatpush1.msra.mxu0 0.0
    %1928 = vmatprep.subr.mxu0 0.0
    %1929 = vmatpush1.msra.mxu0 0.0
    %1930 = vmatprep.subr.mxu0 0.0
    %1931 = vmatpush1.msra.mxu0 0.0
    %1932 = vmatprep.subr.mxu0 0.0
    %1933 = vmatpush1.msra.mxu0 0.0
    %1934 = vmatprep.subr.mxu0 0.0
    %1935 = vmatpush1.msra.mxu0 0.0
    %1936 = vmatprep.subr.mxu0 0.0
    %1937 = vmatpush1.msra.mxu0 0.0
    %1938 = vmatprep.subr.mxu0 0.0
    %1939 = vmatpush1.msra.mxu0 0.0
    %1940 = vmatprep.subr.mxu0 0.0
    %1941 = vmatpush1.msra.mxu0 0.0
    %1942 = vmatprep.subr.mxu0 0.0
    %1943 = vmatpush1.msra.mxu0 0.0
    %1944 = vmatprep.subr.mxu0 0.0
    %1945 = vmatpush1.msra.mxu0 0.0
    %1946 = vmatprep.subr.mxu0 0.0
    %1947 = vmatpush1.msra.mxu0 0.0
    %1948 = vmatprep.subr.mxu0 0.0
    %1949 = vmatpush1.msra.mxu0 0.0
    %1950 = vmatprep.subr.mxu0 0.0
    %1951 = vmatpush1.msra.mxu0 0.0
    %1952 = vmatprep.subr.mxu0 0.0
    %1953 = vmatpush1.msra.mxu0 0.0
    %1954 = vmatprep.subr.mxu0 0.0
    %1955 = vmatpush1.msra.mxu0 0.0
    %1956 = vmatprep.mubr.f32.mxu0 0.0
    %1957 = vmatmul.mubr.f32.gmra.mrb[0].mxu0 %v1890
    %v1958 = vpop.f32.mrb[0].mxu0
    %v1959 = vadd.f32 %v1888, %v1958
    %v1960 = vpop.f32.mrb[0].mxu0
    %1961 = vdwg.mxu0
    %v1962 = vsel %vm379, %v1959, -inf
    %1963 = vmax.xlane.f32.xlu0 %v1962
    %v1964 = vpop.xlane.xlu0 %1963
    %v1965 = vsub.f32 %v1959, %v1964
    %v1966 = vmul.f32 %v1965, 1.442695
    %v1967 = vpow.pop %v1966
    %v1968 = vsel %vm379, %v1967, 0.0
    %1969 = vadd.xlane.f32.xlu0 %v1968
    %v1970 = vpop.xlane.xlu0 %1969
    %v1971 = vrcp.pop %v1970
    %v1972 = vmul.f32 1.0, %v1971
    %vm1973 = vcmp.ge.f32.partialorder %v1959, %v1964
    %v1974 = vcvt.s32.f32 %v1303
    %v1975 = vsel %vm1973, %v1974, 32.0
    %v1976 = vsel %vm379, %v1975, inf
    %1977 = vmin.xlane.f32.xlu0 %v1976
    %v1978 = vpop.xlane.xlu0 %1977
    %v1979 = vcvt.f32.s32.to.zero.pseudo %v1978
    %vm1980 = vcmp.eq.s32.totalorder %v1303, %v1979
    %v1981 = vsel %vm1980, 1, 0
    %v1982 = vcvt.s32.f32 %v1981
    %vm1983 = vcmp.eq.s32.totalorder %v1303, 0
    %v1984 = vsel %vm1983, %v1979, 0
    %v1985 = vsel %vm1983, %v1972, 0.0
    %v1987 = vsel %vm195, %v1982, 0
    %1989 = vmatprep.subr.mxu0 0.0
    %1990 = vmatpush1.msra.mxu0 %v1305
    %1991 = vmatprep.subr.mxu0 0.0
    %1992 = vmatpush1.msra.mxu0 %v1306
    %1993 = vmatprep.subr.mxu0 0.0
    %1994 = vmatpush1.msra.mxu0 %v1307
    %1995 = vmatprep.subr.mxu0 0.0
    %1996 = vmatpush1.msra.mxu0 %v1308
    %1997 = vmatprep.subr.mxu0 0.0
    %1998 = vmatpush1.msra.mxu0 0.0
    %1999 = vmatprep.subr.mxu0 0.0
    %2000 = vmatpush1.msra.mxu0 0.0
    %2001 = vmatprep.subr.mxu0 0.0
    %2002 = vmatpush1.msra.mxu0 0.0
    %2003 = vmatprep.subr.mxu0 0.0
    %2004 = vmatpush1.msra.mxu0 0.0
    %2005 = vmatprep.subr.mxu0 0.0
    %2006 = vmatpush1.msra.mxu0 0.0
    %2007 = vmatprep.subr.mxu0 0.0
    %2008 = vmatpush1.msra.mxu0 0.0
    %2009 = vmatprep.subr.mxu0 0.0
    %2010 = vmatpush1.msra.mxu0 0.0
    %2011 = vmatprep.subr.mxu0 0.0
    %2012 = vmatpush1.msra.mxu0 0.0
    %2013 = vmatprep.subr.mxu0 0.0
    %2014 = vmatpush1.msra.mxu0 0.0
    %2015 = vmatprep.subr.mxu0 0.0
    %2016 = vmatpush1.msra.mxu0 0.0
    %2017 = vmatprep.subr.mxu0 0.0
    %2018 = vmatpush1.msra.mxu0 0.0
    %2019 = vmatprep.subr.mxu0 0.0
    %2020 = vmatpush1.msra.mxu0 0.0
    %2021 = vmatprep.subr.mxu0 0.0
    %2022 = vmatpush1.msra.mxu0 0.0
    %2023 = vmatprep.subr.mxu0 0.0
    %2024 = vmatpush1.msra.mxu0 0.0
    %2025 = vmatprep.subr.mxu0 0.0
    %2026 = vmatpush1.msra.mxu0 0.0
    %2027 = vmatprep.subr.mxu0 0.0
    %2028 = vmatpush1.msra.mxu0 0.0
    %2029 = vmatprep.subr.mxu0 0.0
    %2030 = vmatpush1.msra.mxu0 0.0
    %2031 = vmatprep.subr.mxu0 0.0
    %2032 = vmatpush1.msra.mxu0 0.0
    %2033 = vmatprep.subr.mxu0 0.0
    %2034 = vmatpush1.msra.mxu0 0.0
    %2035 = vmatprep.subr.mxu0 0.0
    %2036 = vmatpush1.msra.mxu0 0.0
    %2037 = vmatprep.subr.mxu0 0.0
    %2038 = vmatpush1.msra.mxu0 0.0
    %2039 = vmatprep.subr.mxu0 0.0
    %2040 = vmatpush1.msra.mxu0 0.0
    %2041 = vmatprep.subr.mxu0 0.0
    %2042 = vmatpush1.msra.mxu0 0.0
    %2043 = vmatprep.subr.mxu0 0.0
    %2044 = vmatpush1.msra.mxu0 0.0
    %2045 = vmatprep.subr.mxu0 0.0
    %2046 = vmatpush1.msra.mxu0 0.0
    %2047 = vmatprep.subr.mxu0 0.0
    %2048 = vmatpush1.msra.mxu0 0.0
    %2049 = vmatprep.subr.mxu0 0.0
    %2050 = vmatpush1.msra.mxu0 0.0
    %2051 = vmatprep.subr.mxu0 0.0
    %2052 = vmatpush1.msra.mxu0 0.0
    %2053 = vmatprep.mubr.f32.mxu0 0.0
    %2054 = vmatmul.mubr.f32.gmra.mrb[0].mxu0 %v1987
    %v2055 = vpop.f32.mrb[0].mxu0
    %v2056 = vadd.f32 0.0, %v2055
    %v2057 = vpop.f32.mrb[0].mxu0
    %2058 = vdwg.mxu0
    %v2060 = vsel %vm195, %v2056, 0
    %2062 = vmatprep.subr.mxu0 0.0
    %2063 = vmatpush1.msra.mxu0 %v1382
    %2064 = vmatprep.subr.mxu0 0.0
    %2065 = vmatpush1.msra.mxu0 %v1383
    %2066 = vmatprep.subr.mxu0 0.0
    %2067 = vmatpush1.msra.mxu0 %v1384
    %2068 = vmatprep.subr.mxu0 0.0
    %2069 = vmatpush1.msra.mxu0 %v1385
    %2070 = vmatprep.subr.mxu0 0.0
    %2071 = vmatpush1.msra.mxu0 0.0
    %2072 = vmatprep.subr.mxu0 0.0
    %2073 = vmatpush1.msra.mxu0 0.0
    %2074 = vmatprep.subr.mxu0 0.0
    %2075 = vmatpush1.msra.mxu0 0.0
    %2076 = vmatprep.subr.mxu0 0.0
    %2077 = vmatpush1.msra.mxu0 0.0
    %2078 = vmatprep.subr.mxu0 0.0
    %2079 = vmatpush1.msra.mxu0 0.0
    %2080 = vmatprep.subr.mxu0 0.0
    %2081 = vmatpush1.msra.mxu0 0.0
    %2082 = vmatprep.subr.mxu0 0.0
    %2083 = vmatpush1.msra.mxu0 0.0
    %2084 = vmatprep.subr.mxu0 0.0
    %2085 = vmatpush1.msra.mxu0 0.0
    %2086 = vmatprep.subr.mxu0 0.0
    %2087 = vmatpush1.msra.mxu0 0.0
    %2088 = vmatprep.subr.mxu0 0.0
    %2089 = vmatpush1.msra.mxu0 0.0
    %2090 = vmatprep.subr.mxu0 0.0
    %2091 = vmatpush1.msra.mxu0 0.0
    %2092 = vmatprep.subr.mxu0 0.0
    %2093 = vmatpush1.msra.mxu0 0.0
    %2094 = vmatprep.subr.mxu0 0.0
    %2095 = vmatpush1.msra.mxu0 0.0
    %2096 = vmatprep.subr.mxu0 0.0
    %2097 = vmatpush1.msra.mxu0 0.0
    %2098 = vmatprep.subr.mxu0 0.0
    %2099 = vmatpush1.msra.mxu0 0.0
    %2100 = vmatprep.subr.mxu0 0.0
    %2101 = vmatpush1.msra.mxu0 0.0
    %2102 = vmatprep.subr.mxu0 0.0
    %2103 = vmatpush1.msra.mxu0 0.0
    %2104 = vmatprep.subr.mxu0 0.0
    %2105 = vmatpush1.msra.mxu0 0.0
    %2106 = vmatprep.subr.mxu0 0.0
    %2107 = vmatpush1.msra.mxu0 0.0
    %2108 = vmatprep.subr.mxu0 0.0
    %2109 = vmatpush1.msra.mxu0 0.0
    %2110 = vmatprep.subr.mxu0 0.0
    %2111 = vmatpush1.msra.mxu0 0.0
    %2112 = vmatprep.subr.mxu0 0.0
    %2113 = vmatpush1.msra.mxu0 0.0
    %2114 = vmatprep.subr.mxu0 0.0
    %2115 = vmatpush1.msra.mxu0 0.0
    %2116 = vmatprep.subr.mxu0 0.0
    %2117 = vmatpush1.msra.mxu0 0.0
    %2118 = vmatprep.subr.mxu0 0.0
    %2119 = vmatpush1.msra.mxu0 0.0
    %2120 = vmatprep.subr.mxu0 0.0
    %2121 = vmatpush1.msra.mxu0 0.0
    %2122 = vmatprep.subr.mxu0 0.0
    %2123 = vmatpush1.msra.mxu0 0.0
    %2124 = vmatprep.subr.mxu0 0.0
    %2125 = vmatpush1.msra.mxu0 0.0
    %2126 = vmatprep.mubr.f32.mxu0 0.0
    %2127 = vmatmul.mubr.f32.gmra.mrb[0].mxu0 %v2060
    %v2128 = vpop.f32.mrb[0].mxu0
    %v2129 = vadd.f32 %v1299, %v2128
    %v2130 = vpop.f32.mrb[0].mxu0
    %2131 = vdwg.mxu0
    %2132 = vmatprep.subr.mxu0 0.0
    %2133 = vmatpush1.msra.mxu0 %v1459
    %2134 = vmatprep.subr.mxu0 0.0
    %2135 = vmatpush1.msra.mxu0 %v1460
    %2136 = vmatprep.subr.mxu0 0.0
    %2137 = vmatpush1.msra.mxu0 %v1461
    %2138 = vmatprep.subr.mxu0 0.0
    %2139 = vmatpush1.msra.mxu0 %v1462
    %2140 = vmatprep.subr.mxu0 0.0
    %2141 = vmatpush1.msra.mxu0 0.0
    %2142 = vmatprep.subr.mxu0 0.0
    %2143 = vmatpush1.msra.mxu0 0.0
    %2144 = vmatprep.subr.mxu0 0.0
    %2145 = vmatpush1.msra.mxu0 0.0
    %2146 = vmatprep.subr.mxu0 0.0
    %2147 = vmatpush1.msra.mxu0 0.0
    %2148 = vmatprep.subr.mxu0 0.0
    %2149 = vmatpush1.msra.mxu0 0.0
    %2150 = vmatprep.subr.mxu0 0.0
    %2151 = vmatpush1.msra.mxu0 0.0
    %2152 = vmatprep.subr.mxu0 0.0
    %2153 = vmatpush1.msra.mxu0 0.0
    %2154 = vmatprep.subr.mxu0 0.0
    %2155 = vmatpush1.msra.mxu0 0.0
    %2156 = vmatprep.subr.mxu0 0.0
    %2157 = vmatpush1.msra.mxu0 0.0
    %2158 = vmatprep.subr.mxu0 0.0
    %2159 = vmatpush1.msra.mxu0 0.0
    %2160 = vmatprep.subr.mxu0 0.0
    %2161 = vmatpush1.msra.mxu0 0.0
    %2162 = vmatprep.subr.mxu0 0.0
    %2163 = vmatpush1.msra.mxu0 0.0
    %2164 = vmatprep.subr.mxu0 0.0
    %2165 = vmatpush1.msra.mxu0 0.0
    %2166 = vmatprep.subr.mxu0 0.0
    %2167 = vmatpush1.msra.mxu0 0.0
    %2168 = vmatprep.subr.mxu0 0.0
    %2169 = vmatpush1.msra.mxu0 0.0
    %2170 = vmatprep.subr.mxu0 0.0
    %2171 = vmatpush1.msra.mxu0 0.0
    %2172 = vmatprep.subr.mxu0 0.0
    %2173 = vmatpush1.msra.mxu0 0.0
    %2174 = vmatprep.subr.mxu0 0.0
    %2175 = vmatpush1.msra.mxu0 0.0
    %2176 = vmatprep.subr.mxu0 0.0
    %2177 = vmatpush1.msra.mxu0 0.0
    %2178 = vmatprep.subr.mxu0 0.0
    %2179 = vmatpush1.msra.mxu0 0.0
    %2180 = vmatprep.subr.mxu0 0.0
    %2181 = vmatpush1.msra.mxu0 0.0
    %2182 = vmatprep.subr.mxu0 0.0
    %2183 = vmatpush1.msra.mxu0 0.0
    %2184 = vmatprep.subr.mxu0 0.0
    %2185 = vmatpush1.msra.mxu0 0.0
    %2186 = vmatprep.subr.mxu0 0.0
    %2187 = vmatpush1.msra.mxu0 0.0
    %2188 = vmatprep.subr.mxu0 0.0
    %2189 = vmatpush1.msra.mxu0 0.0
    %2190 = vmatprep.subr.mxu0 0.0
    %2191 = vmatpush1.msra.mxu0 0.0
    %2192 = vmatprep.subr.mxu0 0.0
    %2193 = vmatpush1.msra.mxu0 0.0
    %2194 = vmatprep.subr.mxu0 0.0
    %2195 = vmatpush1.msra.mxu0 0.0
    %2196 = vmatprep.mubr.f32.mxu0 0.0
    %2197 = vmatmul.mubr.f32.gmra.mrb[0].mxu0 %v1569
    %v2198 = vpop.f32.mrb[0].mxu0
    %v2199 = vadd.f32 %v1463, %v2198
    %v2200 = vpop.f32.mrb[0].mxu0
    %2201 = vdwg.mxu0
    %v2202 = vadd.f32 %v2129, %v2199
    %v2203 = vsub.f32 0.0, %v2202
    %v2204 = vmul.f32 %v2203, 1.442695
    %v2205 = vpow.pop %v2204
    %v2206 = vadd.f32 %v2205, 1.0
    %v2207 = vrcp.pop %v2206
    %v2208 = vmul.f32 1.0, %v2207
    %2210 = vrot.lane.b32.xlu0 %v2199, 64
    %v2211 = vpop.permute.xlu0 %2210
    %v2213 = vmul.f32 %v2208, %v2211
    %2215 = vrot.lane.b32.xlu0 %v2213, 64
    %v2216 = vpop.permute.xlu0 %2215
    %v2218 = vadd.f32 %v2129, %v2216
    %v2219 = vtanh.pop %v2218
    %v2220 = vsub.f32 1.0, %v2208
    %2222 = vrot.lane.b32.xlu0 %v2219, 96
    %v2223 = vpop.permute.xlu0 %2222
    %v2225 = vmul.f32 %v2220, %v2223
    %v2226 = vmul.f32 %v2208, %v1565
    %v2227 = vadd.f32 %v2225, %v2226
    %2229 = vrot.lane.b32.xlu0 %v2227, 96
    %v2230 = vpop.permute.xlu0 %2229
    %v2231 = vsel %vm195, %v2230, 0
    %2233 = vmatprep.subr.mxu0 0.0
    %2234 = vmatpush1.xpose.msra.mxu0 %v1572
    %2235 = vmatprep.subr.mxu0 0.0
    %2236 = vmatpush1.xpose.msra.mxu0 0.0
    %2237 = vmatprep.subr.mxu0 0.0
    %2238 = vmatpush1.xpose.msra.mxu0 0.0
    %2239 = vmatprep.subr.mxu0 0.0
    %2240 = vmatpush1.xpose.msra.mxu0 0.0
    %2241 = vmatprep.subr.mxu0 0.0
    %2242 = vmatpush1.xpose.msra.mxu0 0.0
    %2243 = vmatprep.subr.mxu0 0.0
    %2244 = vmatpush1.xpose.msra.mxu0 0.0
    %2245 = vmatprep.subr.mxu0 0.0
    %2246 = vmatpush1.xpose.msra.mxu0 0.0
    %2247 = vmatprep.subr.mxu0 0.0
    %2248 = vmatpush1.xpose.msra.mxu0 0.0
    %2249 = vmatprep.subr.mxu0 0.0
    %2250 = vmatpush1.xpose.msra.mxu0 0.0
    %2251 = vmatprep.subr.mxu0 0.0
    %2252 = vmatpush1.xpose.msra.mxu0 0.0
    %2253 = vmatprep.subr.mxu0 0.0
    %2254 = vmatpush1.xpose.msra.mxu0 0.0
    %2255 = vmatprep.subr.mxu0 0.0
    %2256 = vmatpush1.xpose.msra.mxu0 0.0
    %2257 = vmatprep.subr.mxu0 0.0
    %2258 = vmatpush1.xpose.msra.mxu0 0.0
    %2259 = vmatprep.subr.mxu0 0.0
    %2260 = vmatpush1.xpose.msra.mxu0 0.0
    %2261 = vmatprep.subr.mxu0 0.0
    %2262 = vmatpush1.xpose.msra.mxu0 0.0
    %2263 = vmatprep.subr.mxu0 0.0
    %2264 = vmatpush1.xpose.msra.mxu0 0.0
    %2265 = vmatprep.subr.mxu0 0.0
    %2266 = vmatpush1.xpose.msra.mxu0 0.0
    %2267 = vmatprep.subr.mxu0 0.0
    %2268 = vmatpush1.xpose.msra.mxu0 0.0
    %2269 = vmatprep.subr.mxu0 0.0
    %2270 = vmatpush1.xpose.msra.mxu0 0.0
    %2271 = vmatprep.subr.mxu0 0.0
    %2272 = vmatpush1.xpose.msra.mxu0 0.0
    %2273 = vmatprep.subr.mxu0 0.0
    %2274 = vmatpush1.xpose.msra.mxu0 0.0
    %2275 = vmatprep.subr.mxu0 0.0
    %2276 = vmatpush1.xpose.msra.mxu0 0.0
    %2277 = vmatprep.subr.mxu0 0.0
    %2278 = vmatpush1.xpose.msra.mxu0 0.0
    %2279 = vmatprep.subr.mxu0 0.0
    %2280 = vmatpush1.xpose.msra.mxu0 0.0
    %2281 = vmatprep.subr.mxu0 0.0
    %2282 = vmatpush1.xpose.msra.mxu0 0.0
    %2283 = vmatprep.subr.mxu0 0.0
    %2284 = vmatpush1.xpose.msra.mxu0 0.0
    %2285 = vmatprep.subr.mxu0 0.0
    %2286 = vmatpush1.xpose.msra.mxu0 0.0
    %2287 = vmatprep.subr.mxu0 0.0
    %2288 = vmatpush1.xpose.msra.mxu0 0.0
    %2289 = vmatprep.subr.mxu0 0.0
    %2290 = vmatpush1.xpose.msra.mxu0 0.0
    %2291 = vmatprep.subr.mxu0 0.0
    %2292 = vmatpush1.xpose.msra.mxu0 0.0
    %2293 = vmatprep.subr.mxu0 0.0
    %2294 = vmatpush1.xpose.msra.mxu0 0.0
    %2295 = vmatprep.subr.mxu0 0.0
    %2296 = vmatpush1.xpose.msra.mxu0 0.0
    %2297 = vmatprep.mubr.f32.mxu0 0.0
    %2298 = vmatmul.mubr.f32.gmra.mrb[0].mxu0 %v2231
    %v2299 = vpop.f32.mrb[0].mxu0
    %v2300 = vadd.f32 0.0, %v2299
    %v2301 = vpop.f32.mrb[0].mxu0
    %2302 = vdwg.mxu0
    %v2303 = vsel %vm1644, %v2300, -inf
    %2304 = vmax.xlane.f32.xlu0 %v2303
    %v2305 = vpop.xlane.xlu0 %2304
    %v2306 = vsub.f32 %v2300, %v2305
    %v2307 = vmul.f32 %v2306, 1.442695
    %v2308 = vpow.pop %v2307
    %v2309 = vsel %vm1644, %v2308, 0.0
    %2310 = vadd.xlane.f32.xlu0 %v2309
    %v2311 = vpop.xlane.xlu0 %2310
    %v2312 = vrcp.pop %v2311
    %v2313 = vmul.f32 %v2308, %v2312
    %v2315 = vsel %vm1656, %v2313, 0
    %2317 = vmatprep.subr.mxu0 0.0
    %2318 = vmatpush1.msra.mxu0 %v1222
    %2319 = vmatprep.subr.mxu0 0.0
    %2320 = vmatpush1.msra.mxu0 0.0
    %2321 = vmatprep.subr.mxu0 0.0
    %2322 = vmatpush1.msra.mxu0 0.0
    %2323 = vmatprep.subr.mxu0 0.0
    %2324 = vmatpush1.msra.mxu0 0.0
    %2325 = vmatprep.subr.mxu0 0.0
    %2326 = vmatpush1.msra.mxu0 0.0
    %2327 = vmatprep.subr.mxu0 0.0
    %2328 = vmatpush1.msra.mxu0 0.0
    %2329 = vmatprep.subr.mxu0 0.0
    %2330 = vmatpush1.msra.mxu0 0.0
    %2331 = vmatprep.subr.mxu0 0.0
    %2332 = vmatpush1.msra.mxu0 0.0
    %2333 = vmatprep.subr.mxu0 0.0
    %2334 = vmatpush1.msra.mxu0 0.0
    %2335 = vmatprep.subr.mxu0 0.0
    %2336 = vmatpush1.msra.mxu0 0.0
    %2337 = vmatprep.subr.mxu0 0.0
    %2338 = vmatpush1.msra.mxu0 0.0
    %2339 = vmatprep.subr.mxu0 0.0
    %2340 = vmatpush1.msra.mxu0 0.0
    %2341 = vmatprep.subr.mxu0 0.0
    %2342 = vmatpush1.msra.mxu0 0.0
    %2343 = vmatprep.subr.mxu0 0.0
    %2344 = vmatpush1.msra.mxu0 0.0
    %2345 = vmatprep.subr.mxu0 0.0
    %2346 = vmatpush1.msra.mxu0 0.0
    %2347 = vmatprep.subr.mxu0 0.0
    %2348 = vmatpush1.msra.mxu0 0.0
    %2349 = vmatprep.subr.mxu0 0.0
    %2350 = vmatpush1.msra.mxu0 0.0
    %2351 = vmatprep.subr.mxu0 0.0
    %2352 = vmatpush1.msra.mxu0 0.0
    %2353 = vmatprep.subr.mxu0 0.0
    %2354 = vmatpush1.msra.mxu0 0.0
    %2355 = vmatprep.subr.mxu0 0.0
    %2356 = vmatpush1.msra.mxu0 0.0
    %2357 = vmatprep.subr.mxu0 0.0
    %2358 = vmatpush1.msra.mxu0 0.0
    %2359 = vmatprep.subr.mxu0 0.0
    %2360 = vmatpush1.msra.mxu0 0.0
    %2361 = vmatprep.subr.mxu0 0.0
    %2362 = vmatpush1.msra.mxu0 0.0
    %2363 = vmatprep.subr.mxu0 0.0
    %2364 = vmatpush1.msra.mxu0 0.0
    %2365 = vmatprep.subr.mxu0 0.0
    %2366 = vmatpush1.msra.mxu0 0.0
    %2367 = vmatprep.subr.mxu0 0.0
    %2368 = vmatpush1.msra.mxu0 0.0
    %2369 = vmatprep.subr.mxu0 0.0
    %2370 = vmatpush1.msra.mxu0 0.0
    %2371 = vmatprep.subr.mxu0 0.0
    %2372 = vmatpush1.msra.mxu0 0.0
    %2373 = vmatprep.subr.mxu0 0.0
    %2374 = vmatpush1.msra.mxu0 0.0
    %2375 = vmatprep.subr.mxu0 0.0
    %2376 = vmatpush1.msra.mxu0 0.0
    %2377 = vmatprep.subr.mxu0 0.0
    %2378 = vmatpush1.msra.mxu0 0.0
    %2379 = vmatprep.subr.mxu0 0.0
    %2380 = vmatpush1.msra.mxu0 0.0
    %2381 = vmatprep.mubr.f32.mxu0 0.0
    %2382 = vmatmul.mubr.f32.gmra.mrb[0].mxu0 %v2315
    %v2383 = vpop.f32.mrb[0].mxu0
    %v2384 = vadd.f32 0.0, %v2383
    %v2385 = vpop.f32.mrb[0].mxu0
    %2386 = vdwg.mxu0
    %v2388 = vsel %vm195, %v2384, 0
    %2390 = vmatprep.subr.mxu0 0.0
    %2391 = vmatpush1.msra.mxu0 %v1734
    %2392 = vmatprep.subr.mxu0 0.0
    %2393 = vmatpush1.msra.mxu0 %v1735
    %2394 = vmatprep.subr.mxu0 0.0
    %2395 = vmatpush1.msra.mxu0 %v1736
    %2396 = vmatprep.subr.mxu0 0.0
    %2397 = vmatpush1.msra.mxu0 %v1737
    %2398 = vmatprep.subr.mxu0 0.0
    %2399 = vmatpush1.msra.mxu0 0.0
    %2400 = vmatprep.subr.mxu0 0.0
    %2401 = vmatpush1.msra.mxu0 0.0
    %2402 = vmatprep.subr.mxu0 0.0
    %2403 = vmatpush1.msra.mxu0 0.0
    %2404 = vmatprep.subr.mxu0 0.0
    %2405 = vmatpush1.msra.mxu0 0.0
    %2406 = vmatprep.subr.mxu0 0.0
    %2407 = vmatpush1.msra.mxu0 0.0
    %2408 = vmatprep.subr.mxu0 0.0
    %2409 = vmatpush1.msra.mxu0 0.0
    %2410 = vmatprep.subr.mxu0 0.0
    %2411 = vmatpush1.msra.mxu0 0.0
    %2412 = vmatprep.subr.mxu0 0.0
    %2413 = vmatpush1.msra.mxu0 0.0
    %2414 = vmatprep.subr.mxu0 0.0
    %2415 = vmatpush1.msra.mxu0 0.0
    %2416 = vmatprep.subr.mxu0 0.0
    %2417 = vmatpush1.msra.mxu0 0.0
    %2418 = vmatprep.subr.mxu0 0.0
    %2419 = vmatpush1.msra.mxu0 0.0
    %2420 = vmatprep.subr.mxu0 0.0
    %2421 = vmatpush1.msra.mxu0 0.0
    %2422 = vmatprep.subr.mxu0 0.0
    %2423 = vmatpush1.msra.mxu0 0.0
    %2424 = vmatprep.subr.mxu0 0.0
    %2425 = vmatpush1.msra.mxu0 0.0
    %2426 = vmatprep.subr.mxu0 0.0
    %2427 = vmatpush1.msra.mxu0 0.0
    %2428 = vmatprep.subr.mxu0 0.0
    %2429 = vmatpush1.msra.mxu0 0.0
    %2430 = vmatprep.subr.mxu0 0.0
    %2431 = vmatpush1.msra.mxu0 0.0
    %2432 = vmatprep.subr.mxu0 0.0
    %2433 = vmatpush1.msra.mxu0 0.0
    %2434 = vmatprep.subr.mxu0 0.0
    %2435 = vmatpush1.msra.mxu0 0.0
    %2436 = vmatprep.subr.mxu0 0.0
    %2437 = vmatpush1.msra.mxu0 0.0
    %2438 = vmatprep.subr.mxu0 0.0
    %2439 = vmatpush1.msra.mxu0 0.0
    %2440 = vmatprep.subr.mxu0 0.0
    %2441 = vmatpush1.msra.mxu0 0.0
    %2442 = vmatprep.subr.mxu0 0.0
    %2443 = vmatpush1.msra.mxu0 0.0
    %2444 = vmatprep.subr.mxu0 0.0
    %2445 = vmatpush1.msra.mxu0 0.0
    %2446 = vmatprep.subr.mxu0 0.0
    %2447 = vmatpush1.msra.mxu0 0.0
    %2448 = vmatprep.subr.mxu0 0.0
    %2449 = vmatpush1.msra.mxu0 0.0
    %2450 = vmatprep.subr.mxu0 0.0
    %2451 = vmatpush1.msra.mxu0 0.0
    %2452 = vmatprep.subr.mxu0 0.0
    %2453 = vmatpush1.msra.mxu0 0.0
    %2454 = vmatprep.mubr.f32.mxu0 0.0
    %2455 = vmatmul.mubr.f32.gmra.mrb[0].mxu0 %v2388
    %v2456 = vpop.f32.mrb[0].mxu0
    %v2457 = vadd.f32 0.0, %v2456
    %v2458 = vpop.f32.mrb[0].mxu0
    %2459 = vdwg.mxu0
    %2460 = vmatprep.subr.mxu0 0.0
    %2461 = vmatpush1.msra.mxu0 %v1730
    %2462 = vmatprep.subr.mxu0 0.0
    %2463 = vmatpush1.msra.mxu0 %v1731
    %2464 = vmatprep.subr.mxu0 0.0
    %2465 = vmatpush1.msra.mxu0 %v1732
    %2466 = vmatprep.subr.mxu0 0.0
    %2467 = vmatpush1.msra.mxu0 %v1733
    %2468 = vmatprep.subr.mxu0 0.0
    %2469 = vmatpush1.msra.mxu0 0.0
    %2470 = vmatprep.subr.mxu0 0.0
    %2471 = vmatpush1.msra.mxu0 0.0
    %2472 = vmatprep.subr.mxu0 0.0
    %2473 = vmatpush1.msra.mxu0 0.0
    %2474 = vmatprep.subr.mxu0 0.0
    %2475 = vmatpush1.msra.mxu0 0.0
    %2476 = vmatprep.subr.mxu0 0.0
    %2477 = vmatpush1.msra.mxu0 0.0
    %2478 = vmatprep.subr.mxu0 0.0
    %2479 = vmatpush1.msra.mxu0 0.0
    %2480 = vmatprep.subr.mxu0 0.0
    %2481 = vmatpush1.msra.mxu0 0.0
    %2482 = vmatprep.subr.mxu0 0.0
    %2483 = vmatpush1.msra.mxu0 0.0
    %2484 = vmatprep.subr.mxu0 0.0
    %2485 = vmatpush1.msra.mxu0 0.0
    %2486 = vmatprep.subr.mxu0 0.0
    %2487 = vmatpush1.msra.mxu0 0.0
    %2488 = vmatprep.subr.mxu0 0.0
    %2489 = vmatpush1.msra.mxu0 0.0
    %2490 = vmatprep.subr.mxu0 0.0
    %2491 = vmatpush1.msra.mxu0 0.0
    %2492 = vmatprep.subr.mxu0 0.0
    %2493 = vmatpush1.msra.mxu0 0.0
    %2494 = vmatprep.subr.mxu0 0.0
    %2495 = vmatpush1.msra.mxu0 0.0
    %2496 = vmatprep.subr.mxu0 0.0
    %2497 = vmatpush1.msra.mxu0 0.0
    %2498 = vmatprep.subr.mxu0 0.0
    %2499 = vmatpush1.msra.mxu0 0.0
    %2500 = vmatprep.subr.mxu0 0.0
    %2501 = vmatpush1.msra.mxu0 0.0
    %2502 = vmatprep.subr.mxu0 0.0
    %2503 = vmatpush1.msra.mxu0 0.0
    %2504 = vmatprep.subr.mxu0 0.0
    %2505 = vmatpush1.msra.mxu0 0.0
    %2506 = vmatprep.subr.mxu0 0.0
    %2507 = vmatpush1.msra.mxu0 0.0
    %2508 = vmatprep.subr.mxu0 0.0
    %2509 = vmatpush1.msra.mxu0 0.0
    %2510 = vmatprep.subr.mxu0 0.0
    %2511 = vmatpush1.msra.mxu0 0.0
    %2512 = vmatprep.subr.mxu0 0.0
    %2513 = vmatpush1.msra.mxu0 0.0
    %2514 = vmatprep.subr.mxu0 0.0
    %2515 = vmatpush1.msra.mxu0 0.0
    %2516 = vmatprep.subr.mxu0 0.0
    %2517 = vmatpush1.msra.mxu0 0.0
    %2518 = vmatprep.subr.mxu0 0.0
    %2519 = vmatpush1.msra.mxu0 0.0
    %2520 = vmatprep.subr.mxu0 0.0
    %2521 = vmatpush1.msra.mxu0 0.0
    %2522 = vmatprep.subr.mxu0 0.0
    %2523 = vmatpush1.msra.mxu0 0.0
    %2524 = vmatprep.mubr.f32.mxu0 0.0
    %2525 = vmatmul.mubr.f32.gmra.mrb[0].mxu0 %v2231
    %v2526 = vpop.f32.mrb[0].mxu0
    %v2527 = vadd.f32 %v2457, %v2526
    %v2528 = vpop.f32.mrb[0].mxu0
    %2529 = vdwg.mxu0
    %v2530 = vadd.f32 %v2527, %v1881
    %v2531 = vtanh.pop %v2530
    %v2533 = vsel %vm195, %v2531, 0
    %2535 = vmatprep.subr.mxu0 0.0
    %2536 = vmatpush1.msra.mxu0 %v1884
    %2537 = vmatprep.subr.mxu0 0.0
    %2538 = vmatpush1.msra.mxu0 %v1885
    %2539 = vmatprep.subr.mxu0 0.0
    %2540 = vmatpush1.msra.mxu0 %v1886
    %2541 = vmatprep.subr.mxu0 0.0
    %2542 = vmatpush1.msra.mxu0 %v1887
    %2543 = vmatprep.subr.mxu0 0.0
    %2544 = vmatpush1.msra.mxu0 0.0
    %2545 = vmatprep.subr.mxu0 0.0
    %2546 = vmatpush1.msra.mxu0 0.0
    %2547 = vmatprep.subr.mxu0 0.0
    %2548 = vmatpush1.msra.mxu0 0.0
    %2549 = vmatprep.subr.mxu0 0.0
    %2550 = vmatpush1.msra.mxu0 0.0
    %2551 = vmatprep.subr.mxu0 0.0
    %2552 = vmatpush1.msra.mxu0 0.0
    %2553 = vmatprep.subr.mxu0 0.0
    %2554 = vmatpush1.msra.mxu0 0.0
    %2555 = vmatprep.subr.mxu0 0.0
    %2556 = vmatpush1.msra.mxu0 0.0
    %2557 = vmatprep.subr.mxu0 0.0
    %2558 = vmatpush1.msra.mxu0 0.0
    %2559 = vmatprep.subr.mxu0 0.0
    %2560 = vmatpush1.msra.mxu0 0.0
    %2561 = vmatprep.subr.mxu0 0.0
    %2562 = vmatpush1.msra.mxu0 0.0
    %2563 = vmatprep.subr.mxu0 0.0
    %2564 = vmatpush1.msra.mxu0 0.0
    %2565 = vmatprep.subr.mxu0 0.0
    %2566 = vmatpush1.msra.mxu0 0.0
    %2567 = vmatprep.subr.mxu0 0.0
    %2568 = vmatpush1.msra.mxu0 0.0
    %2569 = vmatprep.subr.mxu0 0.0
    %2570 = vmatpush1.msra.mxu0 0.0
    %2571 = vmatprep.subr.mxu0 0.0
    %2572 = vmatpush1.msra.mxu0 0.0
    %2573 = vmatprep.subr.mxu0 0.0
    %2574 = vmatpush1.msra.mxu0 0.0
    %2575 = vmatprep.subr.mxu0 0.0
    %2576 = vmatpush1.msra.mxu0 0.0
    %2577 = vmatprep.subr.mxu0 0.0
    %2578 = vmatpush1.msra.mxu0 0.0
    %2579 = vmatprep.subr.mxu0 0.0
    %2580 = vmatpush1.msra.mxu0 0.0
    %2581 = vmatprep.subr.mxu0 0.0
    %2582 = vmatpush1.msra.mxu0 0.0
    %2583 = vmatprep.subr.mxu0 0.0
    %2584 = vmatpush1.msra.mxu0 0.0
    %2585 = vmatprep.subr.mxu0 0.0
    %2586 = vmatpush1.msra.mxu0 0.0
    %2587 = vmatprep.subr.mxu0 0.0
    %2588 = vmatpush1.msra.mxu0 0.0
    %2589 = vmatprep.subr.mxu0 0.0
    %2590 = vmatpush1.msra.mxu0 0.0
    %2591 = vmatprep.subr.mxu0 0.0
    %2592 = vmatpush1.msra.mxu0 0.0
    %2593 = vmatprep.subr.mxu0 0.0
    %2594 = vmatpush1.msra.mxu0 0.0
    %2595 = vmatprep.subr.mxu0 0.0
    %2596 = vmatpush1.msra.mxu0 0.0
    %2597 = vmatprep.subr.mxu0 0.0
    %2598 = vmatpush1.msra.mxu0 0.0
    %2599 = vmatprep.mubr.f32.mxu0 0.0
    %2600 = vmatmul.mubr.f32.gmra.mrb[0].mxu0 %v2533
    %v2601 = vpop.f32.mrb[0].mxu0
    %v2602 = vadd.f32 %v1888, %v2601
    %v2603 = vpop.f32.mrb[0].mxu0
    %2604 = vdwg.mxu0
    %v2605 = vsel %vm379, %v2602, -inf
    %2606 = vmax.xlane.f32.xlu0 %v2605
    %v2607 = vpop.xlane.xlu0 %2606
    %v2608 = vsub.f32 %v2602, %v2607
    %v2609 = vmul.f32 %v2608, 1.442695
    %v2610 = vpow.pop %v2609
    %v2611 = vsel %vm379, %v2610, 0.0
    %2612 = vadd.xlane.f32.xlu0 %v2611
    %v2613 = vpop.xlane.xlu0 %2612
    %v2614 = vrcp.pop %v2613
    %v2615 = vmul.f32 1.0, %v2614
    %vm2616 = vcmp.ge.f32.partialorder %v2602, %v2607
    %v2617 = vsel %vm2616, %v1974, 32.0
    %v2618 = vsel %vm379, %v2617, inf
    %2619 = vmin.xlane.f32.xlu0 %v2618
    %v2620 = vpop.xlane.xlu0 %2619
    %v2621 = vcvt.f32.s32.to.zero.pseudo %v2620
    %vm2622 = vcmp.eq.s32.totalorder %v1303, %v2621
    %v2623 = vsel %vm2622, 1, 0
    %v2624 = vcvt.s32.f32 %v2623
    %vm2625 = vcmp.eq.s32.totalorder %v1303, 1
    %v2626 = vsel %vm2625, %v2621, %v1984
    %v2627 = vsel %vm2625, %v2615, %v1985
    %v2629 = vsel %vm195, %v2624, 0
    %2631 = vmatprep.subr.mxu0 0.0
    %2632 = vmatpush1.msra.mxu0 %v1305
    %2633 = vmatprep.subr.mxu0 0.0
    %2634 = vmatpush1.msra.mxu0 %v1306
    %2635 = vmatprep.subr.mxu0 0.0
    %2636 = vmatpush1.msra.mxu0 %v1307
    %2637 = vmatprep.subr.mxu0 0.0
    %2638 = vmatpush1.msra.mxu0 %v1308
    %2639 = vmatprep.subr.mxu0 0.0
    %2640 = vmatpush1.msra.mxu0 0.0
    %2641 = vmatprep.subr.mxu0 0.0
    %2642 = vmatpush1.msra.mxu0 0.0
    %2643 = vmatprep.subr.mxu0 0.0
    %2644 = vmatpush1.msra.mxu0 0.0
    %2645 = vmatprep.subr.mxu0 0.0
    %2646 = vmatpush1.msra.mxu0 0.0
    %2647 = vmatprep.subr.mxu0 0.0
    %2648 = vmatpush1.msra.mxu0 0.0
    %2649 = vmatprep.subr.mxu0 0.0
    %2650 = vmatpush1.msra.mxu0 0.0
    %2651 = vmatprep.subr.mxu0 0.0
    %2652 = vmatpush1.msra.mxu0 0.0
    %2653 = vmatprep.subr.mxu0 0.0
    %2654 = vmatpush1.msra.mxu0 0.0
    %2655 = vmatprep.subr.mxu0 0.0
    %2656 = vmatpush1.msra.mxu0 0.0
    %2657 = vmatprep.subr.mxu0 0.0
    %2658 = vmatpush1.msra.mxu0 0.0
    %2659 = vmatprep.subr.mxu0 0.0
    %2660 = vmatpush1.msra.mxu0 0.0
    %2661 = vmatprep.subr.mxu0 0.0
    %2662 = vmatpush1.msra.mxu0 0.0
    %2663 = vmatprep.subr.mxu0 0.0
    %2664 = vmatpush1.msra.mxu0 0.0
    %2665 = vmatprep.subr.mxu0 0.0
    %2666 = vmatpush1.msra.mxu0 0.0
    %2667 = vmatprep.subr.mxu0 0.0
    %2668 = vmatpush1.msra.mxu0 0.0
    %2669 = vmatprep.subr.mxu0 0.0
    %2670 = vmatpush1.msra.mxu0 0.0
    %2671 = vmatprep.subr.mxu0 0.0
    %2672 = vmatpush1.msra.mxu0 0.0
    %2673 = vmatprep.subr.mxu0 0.0
    %2674 = vmatpush1.msra.mxu0 0.0
    %2675 = vmatprep.subr.mxu0 0.0
    %2676 = vmatpush1.msra.mxu0 0.0
    %2677 = vmatprep.subr.mxu0 0.0
    %2678 = vmatpush1.msra.mxu0 0.0
    %2679 = vmatprep.subr.mxu0 0.0
    %2680 = vmatpush1.msra.mxu0 0.0
    %2681 = vmatprep.subr.mxu0 0.0
    %2682 = vmatpush1.msra.mxu0 0.0
    %2683 = vmatprep.subr.mxu0 0.0
    %2684 = vmatpush1.msra.mxu0 0.0
    %2685 = vmatprep.subr.mxu0 0.0
    %2686 = vmatpush1.msra.mxu0 0.0
    %2687 = vmatprep.subr.mxu0 0.0
    %2688 = vmatpush1.msra.mxu0 0.0
    %2689 = vmatprep.subr.mxu0 0.0
    %2690 = vmatpush1.msra.mxu0 0.0
    %2691 = vmatprep.subr.mxu0 0.0
    %2692 = vmatpush1.msra.mxu0 0.0
    %2693 = vmatprep.subr.mxu0 0.0
    %2694 = vmatpush1.msra.mxu0 0.0
    %2695 = vmatprep.mubr.f32.mxu0 0.0
    %2696 = vmatmul.mubr.f32.gmra.mrb[0].mxu0 %v2629
    %v2697 = vpop.f32.mrb[0].mxu0
    %v2698 = vadd.f32 0.0, %v2697
    %v2699 = vpop.f32.mrb[0].mxu0
    %2700 = vdwg.mxu0
    %v2702 = vsel %vm195, %v2698, 0
    %2704 = vmatprep.subr.mxu0 0.0
    %2705 = vmatpush1.msra.mxu0 %v1382
    %2706 = vmatprep.subr.mxu0 0.0
    %2707 = vmatpush1.msra.mxu0 %v1383
    %2708 = vmatprep.subr.mxu0 0.0
    %2709 = vmatpush1.msra.mxu0 %v1384
    %2710 = vmatprep.subr.mxu0 0.0
    %2711 = vmatpush1.msra.mxu0 %v1385
    %2712 = vmatprep.subr.mxu0 0.0
    %2713 = vmatpush1.msra.mxu0 0.0
    %2714 = vmatprep.subr.mxu0 0.0
    %2715 = vmatpush1.msra.mxu0 0.0
    %2716 = vmatprep.subr.mxu0 0.0
    %2717 = vmatpush1.msra.mxu0 0.0
    %2718 = vmatprep.subr.mxu0 0.0
    %2719 = vmatpush1.msra.mxu0 0.0
    %2720 = vmatprep.subr.mxu0 0.0
    %2721 = vmatpush1.msra.mxu0 0.0
    %2722 = vmatprep.subr.mxu0 0.0
    %2723 = vmatpush1.msra.mxu0 0.0
    %2724 = vmatprep.subr.mxu0 0.0
    %2725 = vmatpush1.msra.mxu0 0.0
    %2726 = vmatprep.subr.mxu0 0.0
    %2727 = vmatpush1.msra.mxu0 0.0
    %2728 = vmatprep.subr.mxu0 0.0
    %2729 = vmatpush1.msra.mxu0 0.0
    %2730 = vmatprep.subr.mxu0 0.0
    %2731 = vmatpush1.msra.mxu0 0.0
    %2732 = vmatprep.subr.mxu0 0.0
    %2733 = vmatpush1.msra.mxu0 0.0
    %2734 = vmatprep.subr.mxu0 0.0
    %2735 = vmatpush1.msra.mxu0 0.0
    %2736 = vmatprep.subr.mxu0 0.0
    %2737 = vmatpush1.msra.mxu0 0.0
    %2738 = vmatprep.subr.mxu0 0.0
    %2739 = vmatpush1.msra.mxu0 0.0
    %2740 = vmatprep.subr.mxu0 0.0
    %2741 = vmatpush1.msra.mxu0 0.0
    %2742 = vmatprep.subr.mxu0 0.0
    %2743 = vmatpush1.msra.mxu0 0.0
    %2744 = vmatprep.subr.mxu0 0.0
    %2745 = vmatpush1.msra.mxu0 0.0
    %2746 = vmatprep.subr.mxu0 0.0
    %2747 = vmatpush1.msra.mxu0 0.0
    %2748 = vmatprep.subr.mxu0 0.0
    %2749 = vmatpush1.msra.mxu0 0.0
    %2750 = vmatprep.subr.mxu0 0.0
    %2751 = vmatpush1.msra.mxu0 0.0
    %2752 = vmatprep.subr.mxu0 0.0
    %2753 = vmatpush1.msra.mxu0 0.0
    %2754 = vmatprep.subr.mxu0 0.0
    %2755 = vmatpush1.msra.mxu0 0.0
    %2756 = vmatprep.subr.mxu0 0.0
    %2757 = vmatpush1.msra.mxu0 0.0
    %2758 = vmatprep.subr.mxu0 0.0
    %2759 = vmatpush1.msra.mxu0 0.0
    %2760 = vmatprep.subr.mxu0 0.0
    %2761 = vmatpush1.msra.mxu0 0.0
    %2762 = vmatprep.subr.mxu0 0.0
    %2763 = vmatpush1.msra.mxu0 0.0
    %2764 = vmatprep.subr.mxu0 0.0
    %2765 = vmatpush1.msra.mxu0 0.0
    %2766 = vmatprep.subr.mxu0 0.0
    %2767 = vmatpush1.msra.mxu0 0.0
    %2768 = vmatprep.mubr.f32.mxu0 0.0
    %2769 = vmatmul.mubr.f32.gmra.mrb[0].mxu0 %v2702
    %v2770 = vpop.f32.mrb[0].mxu0
    %v2771 = vadd.f32 %v1299, %v2770
    %v2772 = vpop.f32.mrb[0].mxu0
    %2773 = vdwg.mxu0
    %2774 = vmatprep.subr.mxu0 0.0
    %2775 = vmatpush1.msra.mxu0 %v1459
    %2776 = vmatprep.subr.mxu0 0.0
    %2777 = vmatpush1.msra.mxu0 %v1460
    %2778 = vmatprep.subr.mxu0 0.0
    %2779 = vmatpush1.msra.mxu0 %v1461
    %2780 = vmatprep.subr.mxu0 0.0
    %2781 = vmatpush1.msra.mxu0 %v1462
    %2782 = vmatprep.subr.mxu0 0.0
    %2783 = vmatpush1.msra.mxu0 0.0
    %2784 = vmatprep.subr.mxu0 0.0
    %2785 = vmatpush1.msra.mxu0 0.0
    %2786 = vmatprep.subr.mxu0 0.0
    %2787 = vmatpush1.msra.mxu0 0.0
    %2788 = vmatprep.subr.mxu0 0.0
    %2789 = vmatpush1.msra.mxu0 0.0
    %2790 = vmatprep.subr.mxu0 0.0
    %2791 = vmatpush1.msra.mxu0 0.0
    %2792 = vmatprep.subr.mxu0 0.0
    %2793 = vmatpush1.msra.mxu0 0.0
    %2794 = vmatprep.subr.mxu0 0.0
    %2795 = vmatpush1.msra.mxu0 0.0
    %2796 = vmatprep.subr.mxu0 0.0
    %2797 = vmatpush1.msra.mxu0 0.0
    %2798 = vmatprep.subr.mxu0 0.0
    %2799 = vmatpush1.msra.mxu0 0.0
    %2800 = vmatprep.subr.mxu0 0.0
    %2801 = vmatpush1.msra.mxu0 0.0
    %2802 = vmatprep.subr.mxu0 0.0
    %2803 = vmatpush1.msra.mxu0 0.0
    %2804 = vmatprep.subr.mxu0 0.0
    %2805 = vmatpush1.msra.mxu0 0.0
    %2806 = vmatprep.subr.mxu0 0.0
    %2807 = vmatpush1.msra.mxu0 0.0
    %2808 = vmatprep.subr.mxu0 0.0
    %2809 = vmatpush1.msra.mxu0 0.0
    %2810 = vmatprep.subr.mxu0 0.0
    %2811 = vmatpush1.msra.mxu0 0.0
    %2812 = vmatprep.subr.mxu0 0.0
    %2813 = vmatpush1.msra.mxu0 0.0
    %2814 = vmatprep.subr.mxu0 0.0
    %2815 = vmatpush1.msra.mxu0 0.0
    %2816 = vmatprep.subr.mxu0 0.0
    %2817 = vmatpush1.msra.mxu0 0.0
    %2818 = vmatprep.subr.mxu0 0.0
    %2819 = vmatpush1.msra.mxu0 0.0
    %2820 = vmatprep.subr.mxu0 0.0
    %2821 = vmatpush1.msra.mxu0 0.0
    %2822 = vmatprep.subr.mxu0 0.0
    %2823 = vmatpush1.msra.mxu0 0.0
    %2824 = vmatprep.subr.mxu0 0.0
    %2825 = vmatpush1.msra.mxu0 0.0
    %2826 = vmatprep.subr.mxu0 0.0
    %2827 = vmatpush1.msra.mxu0 0.0
    %2828 = vmatprep.subr.mxu0 0.0
    %2829 = vmatpush1.msra.mxu0 0.0
    %2830 = vmatprep.subr.mxu0 0.0
    %2831 = vmatpush1.msra.mxu0 0.0
    %2832 = vmatprep.subr.mxu0 0.0
    %2833 = vmatpush1.msra.mxu0 0.0
    %2834 = vmatprep.subr.mxu0 0.0
    %2835 = vmatpush1.msra.mxu0 0.0
    %2836 = vmatprep.subr.mxu0 0.0
    %2837 = vmatpush1.msra.mxu0 0.0
    %2838 = vmatprep.mubr.f32.mxu0 0.0
    %2839 = vmatmul.mubr.f32.gmra.mrb[0].mxu0 %v2231
    %v2840 = vpop.f32.mrb[0].mxu0
    %v2841 = vadd.f32 %v1463, %v2840
    %v2842 = vpop.f32.mrb[0].mxu0
    %2843 = vdwg.mxu0
    %v2844 = vadd.f32 %v2771, %v2841
    %v2845 = vsub.f32 0.0, %v2844
    %v2846 = vmul.f32 %v2845, 1.442695
    %v2847 = vpow.pop %v2846
    %v2848 = vadd.f32 %v2847, 1.0
    %v2849 = vrcp.pop %v2848
    %v2850 = vmul.f32 1.0, %v2849
    %2852 = vrot.lane.b32.xlu0 %v2841, 64
    %v2853 = vpop.permute.xlu0 %2852
    %v2855 = vmul.f32 %v2850, %v2853
    %2857 = vrot.lane.b32.xlu0 %v2855, 64
    %v2858 = vpop.permute.xlu0 %2857
    %v2860 = vadd.f32 %v2771, %v2858
    %v2861 = vtanh.pop %v2860
    %v2862 = vsub.f32 1.0, %v2850
    %2864 = vrot.lane.b32.xlu0 %v2861, 96
    %v2865 = vpop.permute.xlu0 %2864
    %v2867 = vmul.f32 %v2862, %v2865
    %v2868 = vmul.f32 %v2850, %v2227
    %v2869 = vadd.f32 %v2867, %v2868
    %2871 = vrot.lane.b32.xlu0 %v2869, 96
    %v2872 = vpop.permute.xlu0 %2871
    %v2873 = vsel %vm195, %v2872, 0
    %2875 = vmatprep.subr.mxu0 0.0
    %2876 = vmatpush1.xpose.msra.mxu0 %v1572
    %2877 = vmatprep.subr.mxu0 0.0
    %2878 = vmatpush1.xpose.msra.mxu0 0.0
    %2879 = vmatprep.subr.mxu0 0.0
    %2880 = vmatpush1.xpose.msra.mxu0 0.0
    %2881 = vmatprep.subr.mxu0 0.0
    %2882 = vmatpush1.xpose.msra.mxu0 0.0
    %2883 = vmatprep.subr.mxu0 0.0
    %2884 = vmatpush1.xpose.msra.mxu0 0.0
    %2885 = vmatprep.subr.mxu0 0.0
    %2886 = vmatpush1.xpose.msra.mxu0 0.0
    %2887 = vmatprep.subr.mxu0 0.0
    %2888 = vmatpush1.xpose.msra.mxu0 0.0
    %2889 = vmatprep.subr.mxu0 0.0
    %2890 = vmatpush1.xpose.msra.mxu0 0.0
    %2891 = vmatprep.subr.mxu0 0.0
    %2892 = vmatpush1.xpose.msra.mxu0 0.0
    %2893 = vmatprep.subr.mxu0 0.0
    %2894 = vmatpush1.xpose.msra.mxu0 0.0
    %2895 = vmatprep.subr.mxu0 0.0
    %2896 = vmatpush1.xpose.msra.mxu0 0.0
    %2897 = vmatprep.subr.mxu0 0.0
    %2898 = vmatpush1.xpose.msra.mxu0 0.0
    %2899 = vmatprep.subr.mxu0 0.0
    %2900 = vmatpush1.xpose.msra.mxu0 0.0
    %2901 = vmatprep.subr.mxu0 0.0
    %2902 = vmatpush1.xpose.msra.mxu0 0.0
    %2903 = vmatprep.subr.mxu0 0.0
    %2904 = vmatpush1.xpose.msra.mxu0 0.0
    %2905 = vmatprep.subr.mxu0 0.0
    %2906 = vmatpush1.xpose.msra.mxu0 0.0
    %2907 = vmatprep.subr.mxu0 0.0
    %2908 = vmatpush1.xpose.msra.mxu0 0.0
    %2909 = vmatprep.subr.mxu0 0.0
    %2910 = vmatpush1.xpose.msra.mxu0 0.0
    %2911 = vmatprep.subr.mxu0 0.0
    %2912 = vmatpush1.xpose.msra.mxu0 0.0
    %2913 = vmatprep.subr.mxu0 0.0
    %2914 = vmatpush1.xpose.msra.mxu0 0.0
    %2915 = vmatprep.subr.mxu0 0.0
    %2916 = vmatpush1.xpose.msra.mxu0 0.0
    %2917 = vmatprep.subr.mxu0 0.0
    %2918 = vmatpush1.xpose.msra.mxu0 0.0
    %2919 = vmatprep.subr.mxu0 0.0
    %2920 = vmatpush1.xpose.msra.mxu0 0.0
    %2921 = vmatprep.subr.mxu0 0.0
    %2922 = vmatpush1.xpose.msra.mxu0 0.0
    %2923 = vmatprep.subr.mxu0 0.0
    %2924 = vmatpush1.xpose.msra.mxu0 0.0
    %2925 = vmatprep.subr.mxu0 0.0
    %2926 = vmatpush1.xpose.msra.mxu0 0.0
    %2927 = vmatprep.subr.mxu0 0.0
    %2928 = vmatpush1.xpose.msra.mxu0 0.0
    %2929 = vmatprep.subr.mxu0 0.0
    %2930 = vmatpush1.xpose.msra.mxu0 0.0
    %2931 = vmatprep.subr.mxu0 0.0
    %2932 = vmatpush1.xpose.msra.mxu0 0.0
    %2933 = vmatprep.subr.mxu0 0.0
    %2934 = vmatpush1.xpose.msra.mxu0 0.0
    %2935 = vmatprep.subr.mxu0 0.0
    %2936 = vmatpush1.xpose.msra.mxu0 0.0
    %2937 = vmatprep.subr.mxu0 0.0
    %2938 = vmatpush1.xpose.msra.mxu0 0.0
    %2939 = vmatprep.mubr.f32.mxu0 0.0
    %2940 = vmatmul.mubr.f32.gmra.mrb[0].mxu0 %v2873
    %v2941 = vpop.f32.mrb[0].mxu0
    %v2942 = vadd.f32 0.0, %v2941
    %v2943 = vpop.f32.mrb[0].mxu0
    %2944 = vdwg.mxu0
    %v2945 = vsel %vm1644, %v2942, -inf
    %2946 = vmax.xlane.f32.xlu0 %v2945
    %v2947 = vpop.xlane.xlu0 %2946
    %v2948 = vsub.f32 %v2942, %v2947
    %v2949 = vmul.f32 %v2948, 1.442695
    %v2950 = vpow.pop %v2949
    %v2951 = vsel %vm1644, %v2950, 0.0
    %2952 = vadd.xlane.f32.xlu0 %v2951
    %v2953 = vpop.xlane.xlu0 %2952
    %v2954 = vrcp.pop %v2953
    %v2955 = vmul.f32 %v2950, %v2954
    %v2957 = vsel %vm1656, %v2955, 0
    %2959 = vmatprep.subr.mxu0 0.0
    %2960 = vmatpush1.msra.mxu0 %v1222
    %2961 = vmatprep.subr.mxu0 0.0
    %2962 = vmatpush1.msra.mxu0 0.0
    %2963 = vmatprep.subr.mxu0 0.0
    %2964 = vmatpush1.msra.mxu0 0.0
    %2965 = vmatprep.subr.mxu0 0.0
    %2966 = vmatpush1.msra.mxu0 0.0
    %2967 = vmatprep.subr.mxu0 0.0
    %2968 = vmatpush1.msra.mxu0 0.0
    %2969 = vmatprep.subr.mxu0 0.0
    %2970 = vmatpush1.msra.mxu0 0.0
    %2971 = vmatprep.subr.mxu0 0.0
    %2972 = vmatpush1.msra.mxu0 0.0
    %2973 = vmatprep.subr.mxu0 0.0
    %2974 = vmatpush1.msra.mxu0 0.0
    %2975 = vmatprep.subr.mxu0 0.0
    %2976 = vmatpush1.msra.mxu0 0.0
    %2977 = vmatprep.subr.mxu0 0.0
    %2978 = vmatpush1.msra.mxu0 0.0
    %2979 = vmatprep.subr.mxu0 0.0
    %2980 = vmatpush1.msra.mxu0 0.0
    %2981 = vmatprep.subr.mxu0 0.0
    %2982 = vmatpush1.msra.mxu0 0.0
    %2983 = vmatprep.subr.mxu0 0.0
    %2984 = vmatpush1.msra.mxu0 0.0
    %2985 = vmatprep.subr.mxu0 0.0
    %2986 = vmatpush1.msra.mxu0 0.0
    %2987 = vmatprep.subr.mxu0 0.0
    %2988 = vmatpush1.msra.mxu0 0.0
    %2989 = vmatprep.subr.mxu0 0.0
    %2990 = vmatpush1.msra.mxu0 0.0
    %2991 = vmatprep.subr.mxu0 0.0
    %2992 = vmatpush1.msra.mxu0 0.0
    %2993 = vmatprep.subr.mxu0 0.0
    %2994 = vmatpush1.msra.mxu0 0.0
    %2995 = vmatprep.subr.mxu0 0.0
    %2996 = vmatpush1.msra.mxu0 0.0
    %2997 = vmatprep.subr.mxu0 0.0
    %2998 = vmatpush1.msra.mxu0 0.0
    %2999 = vmatprep.subr.mxu0 0.0
    %3000 = vmatpush1.msra.mxu0 0.0
    %3001 = vmatprep.subr.mxu0 0.0
    %3002 = vmatpush1.msra.mxu0 0.0
    %3003 = vmatprep.subr.mxu0 0.0
    %3004 = vmatpush1.msra.mxu0 0.0
    %3005 = vmatprep.subr.mxu0 0.0
    %3006 = vmatpush1.msra.mxu0 0.0
    %3007 = vmatprep.subr.mxu0 0.0
    %3008 = vmatpush1.msra.mxu0 0.0
    %3009 = vmatprep.subr.mxu0 0.0
    %3010 = vmatpush1.msra.mxu0 0.0
    %3011 = vmatprep.subr.mxu0 0.0
    %3012 = vmatpush1.msra.mxu0 0.0
    %3013 = vmatprep.subr.mxu0 0.0
    %3014 = vmatpush1.msra.mxu0 0.0
    %3015 = vmatprep.subr.mxu0 0.0
    %3016 = vmatpush1.msra.mxu0 0.0
    %3017 = vmatprep.subr.mxu0 0.0
    %3018 = vmatpush1.msra.mxu0 0.0
    %3019 = vmatprep.subr.mxu0 0.0
    %3020 = vmatpush1.msra.mxu0 0.0
    %3021 = vmatprep.subr.mxu0 0.0
    %3022 = vmatpush1.msra.mxu0 0.0
    %3023 = vmatprep.mubr.f32.mxu0 0.0
    %3024 = vmatmul.mubr.f32.gmra.mrb[0].mxu0 %v2957
    %v3025 = vpop.f32.mrb[0].mxu0
    %v3026 = vadd.f32 0.0, %v3025
    %v3027 = vpop.f32.mrb[0].mxu0
    %3028 = vdwg.mxu0
    %v3030 = vsel %vm195, %v3026, 0
    %3032 = vmatprep.subr.mxu0 0.0
    %3033 = vmatpush1.msra.mxu0 %v1734
    %3034 = vmatprep.subr.mxu0 0.0
    %3035 = vmatpush1.msra.mxu0 %v1735
    %3036 = vmatprep.subr.mxu0 0.0
    %3037 = vmatpush1.msra.mxu0 %v1736
    %3038 = vmatprep.subr.mxu0 0.0
    %3039 = vmatpush1.msra.mxu0 %v1737
    %3040 = vmatprep.subr.mxu0 0.0
    %3041 = vmatpush1.msra.mxu0 0.0
    %3042 = vmatprep.subr.mxu0 0.0
    %3043 = vmatpush1.msra.mxu0 0.0
    %3044 = vmatprep.subr.mxu0 0.0
    %3045 = vmatpush1.msra.mxu0 0.0
    %3046 = vmatprep.subr.mxu0 0.0
    %3047 = vmatpush1.msra.mxu0 0.0
    %3048 = vmatprep.subr.mxu0 0.0
    %3049 = vmatpush1.msra.mxu0 0.0
    %3050 = vmatprep.subr.mxu0 0.0
    %3051 = vmatpush1.msra.mxu0 0.0
    %3052 = vmatprep.subr.mxu0 0.0
    %3053 = vmatpush1.msra.mxu0 0.0
    %3054 = vmatprep.subr.mxu0 0.0
    %3055 = vmatpush1.msra.mxu0 0.0
    %3056 = vmatprep.subr.mxu0 0.0
    %3057 = vmatpush1.msra.mxu0 0.0
    %3058 = vmatprep.subr.mxu0 0.0
    %3059 = vmatpush1.msra.mxu0 0.0
    %3060 = vmatprep.subr.mxu0 0.0
    %3061 = vmatpush1.msra.mxu0 0.0
    %3062 = vmatprep.subr.mxu0 0.0
    %3063 = vmatpush1.msra.mxu0 0.0
    %3064 = vmatprep.subr.mxu0 0.0
    %3065 = vmatpush1.msra.mxu0 0.0
    %3066 = vmatprep.subr.mxu0 0.0
    %3067 = vmatpush1.msra.mxu0 0.0
    %3068 = vmatprep.subr.mxu0 0.0
    %3069 = vmatpush1.msra.mxu0 0.0
    %3070 = vmatprep.subr.mxu0 0.0
    %3071 = vmatpush1.msra.mxu0 0.0
    %3072 = vmatprep.subr.mxu0 0.0
    %3073 = vmatpush1.msra.mxu0 0.0
    %3074 = vmatprep.subr.mxu0 0.0
    %3075 = vmatpush1.msra.mxu0 0.0
    %3076 = vmatprep.subr.mxu0 0.0
    %3077 = vmatpush1.msra.mxu0 0.0
    %3078 = vmatprep.subr.mxu0 0.0
    %3079 = vmatpush1.msra.mxu0 0.0
    %3080 = vmatprep.subr.mxu0 0.0
    %3081 = vmatpush1.msra.mxu0 0.0
    %3082 = vmatprep.subr.mxu0 0.0
    %3083 = vmatpush1.msra.mxu0 0.0
    %3084 = vmatprep.subr.mxu0 0.0
    %3085 = vmatpush1.msra.mxu0 0.0
    %3086 = vmatprep.subr.mxu0 0.0
    %3087 = vmatpush1.msra.mxu0 0.0
    %3088 = vmatprep.subr.mxu0 0.0
    %3089 = vmatpush1.msra.mxu0 0.0
    %3090 = vmatprep.subr.mxu0 0.0
    %3091 = vmatpush1.msra.mxu0 0.0
    %3092 = vmatprep.subr.mxu0 0.0
    %3093 = vmatpush1.msra.mxu0 0.0
    %3094 = vmatprep.subr.mxu0 0.0
    %3095 = vmatpush1.msra.mxu0 0.0
    %3096 = vmatprep.mubr.f32.mxu0 0.0
    %3097 = vmatmul.mubr.f32.gmra.mrb[0].mxu0 %v3030
    %v3098 = vpop.f32.mrb[0].mxu0
    %v3099 = vadd.f32 0.0, %v3098
    %v3100 = vpop.f32.mrb[0].mxu0
    %3101 = vdwg.mxu0
    %3102 = vmatprep.subr.mxu0 0.0
    %3103 = vmatpush1.msra.mxu0 %v1730
    %3104 = vmatprep.subr.mxu0 0.0
    %3105 = vmatpush1.msra.mxu0 %v1731
    %3106 = vmatprep.subr.mxu0 0.0
    %3107 = vmatpush1.msra.mxu0 %v1732
    %3108 = vmatprep.subr.mxu0 0.0
    %3109 = vmatpush1.msra.mxu0 %v1733
    %3110 = vmatprep.subr.mxu0 0.0
    %3111 = vmatpush1.msra.mxu0 0.0
    %3112 = vmatprep.subr.mxu0 0.0
    %3113 = vmatpush1.msra.mxu0 0.0
    %3114 = vmatprep.subr.mxu0 0.0
    %3115 = vmatpush1.msra.mxu0 0.0
    %3116 = vmatprep.subr.mxu0 0.0
    %3117 = vmatpush1.msra.mxu0 0.0
    %3118 = vmatprep.subr.mxu0 0.0
    %3119 = vmatpush1.msra.mxu0 0.0
    %3120 = vmatprep.subr.mxu0 0.0
    %3121 = vmatpush1.msra.mxu0 0.0
    %3122 = vmatprep.subr.mxu0 0.0
    %3123 = vmatpush1.msra.mxu0 0.0
    %3124 = vmatprep.subr.mxu0 0.0
    %3125 = vmatpush1.msra.mxu0 0.0
    %3126 = vmatprep.subr.mxu0 0.0
    %3127 = vmatpush1.msra.mxu0 0.0
    %3128 = vmatprep.subr.mxu0 0.0
    %3129 = vmatpush1.msra.mxu0 0.0
    %3130 = vmatprep.subr.mxu0 0.0
    %3131 = vmatpush1.msra.mxu0 0.0
    %3132 = vmatprep.subr.mxu0 0.0
    %3133 = vmatpush1.msra.mxu0 0.0
    %3134 = vmatprep.subr.mxu0 0.0
    %3135 = vmatpush1.msra.mxu0 0.0
    %3136 = vmatprep.subr.mxu0 0.0
    %3137 = vmatpush1.msra.mxu0 0.0
    %3138 = vmatprep.subr.mxu0 0.0
    %3139 = vmatpush1.msra.mxu0 0.0
    %3140 = vmatprep.subr.mxu0 0.0
    %3141 = vmatpush1.msra.mxu0 0.0
    %3142 = vmatprep.subr.mxu0 0.0
    %3143 = vmatpush1.msra.mxu0 0.0
    %3144 = vmatprep.subr.mxu0 0.0
    %3145 = vmatpush1.msra.mxu0 0.0
    %3146 = vmatprep.subr.mxu0 0.0
    %3147 = vmatpush1.msra.mxu0 0.0
    %3148 = vmatprep.subr.mxu0 0.0
    %3149 = vmatpush1.msra.mxu0 0.0
    %3150 = vmatprep.subr.mxu0 0.0
    %3151 = vmatpush1.msra.mxu0 0.0
    %3152 = vmatprep.subr.mxu0 0.0
    %3153 = vmatpush1.msra.mxu0 0.0
    %3154 = vmatprep.subr.mxu0 0.0
    %3155 = vmatpush1.msra.mxu0 0.0
    %3156 = vmatprep.subr.mxu0 0.0
    %3157 = vmatpush1.msra.mxu0 0.0
    %3158 = vmatprep.subr.mxu0 0.0
    %3159 = vmatpush1.msra.mxu0 0.0
    %3160 = vmatprep.subr.mxu0 0.0
    %3161 = vmatpush1.msra.mxu0 0.0
    %3162 = vmatprep.subr.mxu0 0.0
    %3163 = vmatpush1.msra.mxu0 0.0
    %3164 = vmatprep.subr.mxu0 0.0
    %3165 = vmatpush1.msra.mxu0 0.0
    %3166 = vmatprep.mubr.f32.mxu0 0.0
    %3167 = vmatmul.mubr.f32.gmra.mrb[0].mxu0 %v2873
    %v3168 = vpop.f32.mrb[0].mxu0
    %v3169 = vadd.f32 %v3099, %v3168
    %v3170 = vpop.f32.mrb[0].mxu0
    %3171 = vdwg.mxu0
    %v3172 = vadd.f32 %v3169, %v1881
    %v3173 = vtanh.pop %v3172
    %v3175 = vsel %vm195, %v3173, 0
    %3177 = vmatprep.subr.mxu0 0.0
    %3178 = vmatpush1.msra.mxu0 %v1884
    %3179 = vmatprep.subr.mxu0 0.0
    %3180 = vmatpush1.msra.mxu0 %v1885
    %3181 = vmatprep.subr.mxu0 0.0
    %3182 = vmatpush1.msra.mxu0 %v1886
    %3183 = vmatprep.subr.mxu0 0.0
    %3184 = vmatpush1.msra.mxu0 %v1887
    %3185 = vmatprep.subr.mxu0 0.0
    %3186 = vmatpush1.msra.mxu0 0.0
    %3187 = vmatprep.subr.mxu0 0.0
    %3188 = vmatpush1.msra.mxu0 0.0
    %3189 = vmatprep.subr.mxu0 0.0
    %3190 = vmatpush1.msra.mxu0 0.0
    %3191 = vmatprep.subr.mxu0 0.0
    %3192 = vmatpush1.msra.mxu0 0.0
    %3193 = vmatprep.subr.mxu0 0.0
    %3194 = vmatpush1.msra.mxu0 0.0
    %3195 = vmatprep.subr.mxu0 0.0
    %3196 = vmatpush1.msra.mxu0 0.0
    %3197 = vmatprep.subr.mxu0 0.0
    %3198 = vmatpush1.msra.mxu0 0.0
    %3199 = vmatprep.subr.mxu0 0.0
    %3200 = vmatpush1.msra.mxu0 0.0
    %3201 = vmatprep.subr.mxu0 0.0
    %3202 = vmatpush1.msra.mxu0 0.0
    %3203 = vmatprep.subr.mxu0 0.0
    %3204 = vmatpush1.msra.mxu0 0.0
    %3205 = vmatprep.subr.mxu0 0.0
    %3206 = vmatpush1.msra.mxu0 0.0
    %3207 = vmatprep.subr.mxu0 0.0
    %3208 = vmatpush1.msra.mxu0 0.0
    %3209 = vmatprep.subr.mxu0 0.0
    %3210 = vmatpush1.msra.mxu0 0.0
    %3211 = vmatprep.subr.mxu0 0.0
    %3212 = vmatpush1.msra.mxu0 0.0
    %3213 = vmatprep.subr.mxu0 0.0
    %3214 = vmatpush1.msra.mxu0 0.0
    %3215 = vmatprep.subr.mxu0 0.0
    %3216 = vmatpush1.msra.mxu0 0.0
    %3217 = vmatprep.subr.mxu0 0.0
    %3218 = vmatpush1.msra.mxu0 0.0
    %3219 = vmatprep.subr.mxu0 0.0
    %3220 = vmatpush1.msra.mxu0 0.0
    %3221 = vmatprep.subr.mxu0 0.0
    %3222 = vmatpush1.msra.mxu0 0.0
    %3223 = vmatprep.subr.mxu0 0.0
    %3224 = vmatpush1.msra.mxu0 0.0
    %3225 = vmatprep.subr.mxu0 0.0
    %3226 = vmatpush1.msra.mxu0 0.0
    %3227 = vmatprep.subr.mxu0 0.0
    %3228 = vmatpush1.msra.mxu0 0.0
    %3229 = vmatprep.subr.mxu0 0.0
    %3230 = vmatpush1.msra.mxu0 0.0
    %3231 = vmatprep.subr.mxu0 0.0
    %3232 = vmatpush1.msra.mxu0 0.0
    %3233 = vmatprep.subr.mxu0 0.0
    %3234 = vmatpush1.msra.mxu0 0.0
    %3235 = vmatprep.subr.mxu0 0.0
    %3236 = vmatpush1.msra.mxu0 0.0
    %3237 = vmatprep.subr.mxu0 0.0
    %3238 = vmatpush1.msra.mxu0 0.0
    %3239 = vmatprep.subr.mxu0 0.0
    %3240 = vmatpush1.msra.mxu0 0.0
    %3241 = vmatprep.mubr.f32.mxu0 0.0
    %3242 = vmatmul.mubr.f32.gmra.mrb[0].mxu0 %v3175
    %v3243 = vpop.f32.mrb[0].mxu0
    %v3244 = vadd.f32 %v1888, %v3243
    %v3245 = vpop.f32.mrb[0].mxu0
    %3246 = vdwg.mxu0
    %v3247 = vsel %vm379, %v3244, -inf
    %3248 = vmax.xlane.f32.xlu0 %v3247
    %v3249 = vpop.xlane.xlu0 %3248
    %v3250 = vsub.f32 %v3244, %v3249
    %v3251 = vmul.f32 %v3250, 1.442695
    %v3252 = vpow.pop %v3251
    %v3253 = vsel %vm379, %v3252, 0.0
    %3254 = vadd.xlane.f32.xlu0 %v3253
    %v3255 = vpop.xlane.xlu0 %3254
    %v3256 = vrcp.pop %v3255
    %v3257 = vmul.f32 1.0, %v3256
    %vm3258 = vcmp.ge.f32.partialorder %v3244, %v3249
    %v3259 = vsel %vm3258, %v1974, 32.0
    %v3260 = vsel %vm379, %v3259, inf
    %3261 = vmin.xlane.f32.xlu0 %v3260
    %v3262 = vpop.xlane.xlu0 %3261
    %v3263 = vcvt.f32.s32.to.zero.pseudo %v3262
    %vm3264 = vcmp.eq.s32.totalorder %v1303, %v3263
    %v3265 = vsel %vm3264, 1, 0
    %v3266 = vcvt.s32.f32 %v3265
    %vm3267 = vcmp.eq.s32.totalorder %v1303, 2
    %v3268 = vsel %vm3267, %v3263, %v2626
    %v3269 = vsel %vm3267, %v3257, %v2627
    %v3271 = vsel %vm195, %v3266, 0
    %3273 = vmatprep.subr.mxu0 0.0
    %3274 = vmatpush1.msra.mxu0 %v1305
    %3275 = vmatprep.subr.mxu0 0.0
    %3276 = vmatpush1.msra.mxu0 %v1306
    %3277 = vmatprep.subr.mxu0 0.0
    %3278 = vmatpush1.msra.mxu0 %v1307
    %3279 = vmatprep.subr.mxu0 0.0
    %3280 = vmatpush1.msra.mxu0 %v1308
    %3281 = vmatprep.subr.mxu0 0.0
    %3282 = vmatpush1.msra.mxu0 0.0
    %3283 = vmatprep.subr.mxu0 0.0
    %3284 = vmatpush1.msra.mxu0 0.0
    %3285 = vmatprep.subr.mxu0 0.0
    %3286 = vmatpush1.msra.mxu0 0.0
    %3287 = vmatprep.subr.mxu0 0.0
    %3288 = vmatpush1.msra.mxu0 0.0
    %3289 = vmatprep.subr.mxu0 0.0
    %3290 = vmatpush1.msra.mxu0 0.0
    %3291 = vmatprep.subr.mxu0 0.0
    %3292 = vmatpush1.msra.mxu0 0.0
    %3293 = vmatprep.subr.mxu0 0.0
    %3294 = vmatpush1.msra.mxu0 0.0
    %3295 = vmatprep.subr.mxu0 0.0
    %3296 = vmatpush1.msra.mxu0 0.0
    %3297 = vmatprep.subr.mxu0 0.0
    %3298 = vmatpush1.msra.mxu0 0.0
    %3299 = vmatprep.subr.mxu0 0.0
    %3300 = vmatpush1.msra.mxu0 0.0
    %3301 = vmatprep.subr.mxu0 0.0
    %3302 = vmatpush1.msra.mxu0 0.0
    %3303 = vmatprep.subr.mxu0 0.0
    %3304 = vmatpush1.msra.mxu0 0.0
    %3305 = vmatprep.subr.mxu0 0.0
    %3306 = vmatpush1.msra.mxu0 0.0
    %3307 = vmatprep.subr.mxu0 0.0
    %3308 = vmatpush1.msra.mxu0 0.0
    %3309 = vmatprep.subr.mxu0 0.0
    %3310 = vmatpush1.msra.mxu0 0.0
    %3311 = vmatprep.subr.mxu0 0.0
    %3312 = vmatpush1.msra.mxu0 0.0
    %3313 = vmatprep.subr.mxu0 0.0
    %3314 = vmatpush1.msra.mxu0 0.0
    %3315 = vmatprep.subr.mxu0 0.0
    %3316 = vmatpush1.msra.mxu0 0.0
    %3317 = vmatprep.subr.mxu0 0.0
    %3318 = vmatpush1.msra.mxu0 0.0
    %3319 = vmatprep.subr.mxu0 0.0
    %3320 = vmatpush1.msra.mxu0 0.0
    %3321 = vmatprep.subr.mxu0 0.0
    %3322 = vmatpush1.msra.mxu0 0.0
    %3323 = vmatprep.subr.mxu0 0.0
    %3324 = vmatpush1.msra.mxu0 0.0
    %3325 = vmatprep.subr.mxu0 0.0
    %3326 = vmatpush1.msra.mxu0 0.0
    %3327 = vmatprep.subr.mxu0 0.0
    %3328 = vmatpush1.msra.mxu0 0.0
    %3329 = vmatprep.subr.mxu0 0.0
    %3330 = vmatpush1.msra.mxu0 0.0
    %3331 = vmatprep.subr.mxu0 0.0
    %3332 = vmatpush1.msra.mxu0 0.0
    %3333 = vmatprep.subr.mxu0 0.0
    %3334 = vmatpush1.msra.mxu0 0.0
    %3335 = vmatprep.subr.mxu0 0.0
    %3336 = vmatpush1.msra.mxu0 0.0
    %3337 = vmatprep.mubr.f32.mxu0 0.0
    %3338 = vmatmul.mubr.f32.gmra.mrb[0].mxu0 %v3271
    %v3339 = vpop.f32.mrb[0].mxu0
    %v3340 = vadd.f32 0.0, %v3339
    %v3341 = vpop.f32.mrb[0].mxu0
    %3342 = vdwg.mxu0
    %v3344 = vsel %vm195, %v3340, 0
    %3346 = vmatprep.subr.mxu0 0.0
    %3347 = vmatpush1.msra.mxu0 %v1382
    %3348 = vmatprep.subr.mxu0 0.0
    %3349 = vmatpush1.msra.mxu0 %v1383
    %3350 = vmatprep.subr.mxu0 0.0
    %3351 = vmatpush1.msra.mxu0 %v1384
    %3352 = vmatprep.subr.mxu0 0.0
    %3353 = vmatpush1.msra.mxu0 %v1385
    %3354 = vmatprep.subr.mxu0 0.0
    %3355 = vmatpush1.msra.mxu0 0.0
    %3356 = vmatprep.subr.mxu0 0.0
    %3357 = vmatpush1.msra.mxu0 0.0
    %3358 = vmatprep.subr.mxu0 0.0
    %3359 = vmatpush1.msra.mxu0 0.0
    %3360 = vmatprep.subr.mxu0 0.0
    %3361 = vmatpush1.msra.mxu0 0.0
    %3362 = vmatprep.subr.mxu0 0.0
    %3363 = vmatpush1.msra.mxu0 0.0
    %3364 = vmatprep.subr.mxu0 0.0
    %3365 = vmatpush1.msra.mxu0 0.0
    %3366 = vmatprep.subr.mxu0 0.0
    %3367 = vmatpush1.msra.mxu0 0.0
    %3368 = vmatprep.subr.mxu0 0.0
    %3369 = vmatpush1.msra.mxu0 0.0
    %3370 = vmatprep.subr.mxu0 0.0
    %3371 = vmatpush1.msra.mxu0 0.0
    %3372 = vmatprep.subr.mxu0 0.0
    %3373 = vmatpush1.msra.mxu0 0.0
    %3374 = vmatprep.subr.mxu0 0.0
    %3375 = vmatpush1.msra.mxu0 0.0
    %3376 = vmatprep.subr.mxu0 0.0
    %3377 = vmatpush1.msra.mxu0 0.0
    %3378 = vmatprep.subr.mxu0 0.0
    %3379 = vmatpush1.msra.mxu0 0.0
    %3380 = vmatprep.subr.mxu0 0.0
    %3381 = vmatpush1.msra.mxu0 0.0
    %3382 = vmatprep.subr.mxu0 0.0
    %3383 = vmatpush1.msra.mxu0 0.0
    %3384 = vmatprep.subr.mxu0 0.0
    %3385 = vmatpush1.msra.mxu0 0.0
    %3386 = vmatprep.subr.mxu0 0.0
    %3387 = vmatpush1.msra.mxu0 0.0
    %3388 = vmatprep.subr.mxu0 0.0
    %3389 = vmatpush1.msra.mxu0 0.0
    %3390 = vmatprep.subr.mxu0 0.0
    %3391 = vmatpush1.msra.mxu0 0.0
    %3392 = vmatprep.subr.mxu0 0.0
    %3393 = vmatpush1.msra.mxu0 0.0
    %3394 = vmatprep.subr.mxu0 0.0
    %3395 = vmatpush1.msra.mxu0 0.0
    %3396 = vmatprep.subr.mxu0 0.0
    %3397 = vmatpush1.msra.mxu0 0.0
    %3398 = vmatprep.subr.mxu0 0.0
    %3399 = vmatpush1.msra.mxu0 0.0
    %3400 = vmatprep.subr.mxu0 0.0
    %3401 = vmatpush1.msra.mxu0 0.0
    %3402 = vmatprep.subr.mxu0 0.0
    %3403 = vmatpush1.msra.mxu0 0.0
    %3404 = vmatprep.subr.mxu0 0.0
    %3405 = vmatpush1.msra.mxu0 0.0
    %3406 = vmatprep.subr.mxu0 0.0
    %3407 = vmatpush1.msra.mxu0 0.0
    %3408 = vmatprep.subr.mxu0 0.0
    %3409 = vmatpush1.msra.mxu0 0.0
    %3410 = vmatprep.mubr.f32.mxu0 0.0
    %3411 = vmatmul.mubr.f32.gmra.mrb[0].mxu0 %v3344
    %v3412 = vpop.f32.mrb[0].mxu0
    %v3413 = vadd.f32 %v1299, %v3412
    %v3414 = vpop.f32.mrb[0].mxu0
    %3415 = vdwg.mxu0
    %3416 = vmatprep.subr.mxu0 0.0
    %3417 = vmatpush1.msra.mxu0 %v1459
    %3418 = vmatprep.subr.mxu0 0.0
    %3419 = vmatpush1.msra.mxu0 %v1460
    %3420 = vmatprep.subr.mxu0 0.0
    %3421 = vmatpush1.msra.mxu0 %v1461
    %3422 = vmatprep.subr.mxu0 0.0
    %3423 = vmatpush1.msra.mxu0 %v1462
    %3424 = vmatprep.subr.mxu0 0.0
    %3425 = vmatpush1.msra.mxu0 0.0
    %3426 = vmatprep.subr.mxu0 0.0
    %3427 = vmatpush1.msra.mxu0 0.0
    %3428 = vmatprep.subr.mxu0 0.0
    %3429 = vmatpush1.msra.mxu0 0.0
    %3430 = vmatprep.subr.mxu0 0.0
    %3431 = vmatpush1.msra.mxu0 0.0
    %3432 = vmatprep.subr.mxu0 0.0
    %3433 = vmatpush1.msra.mxu0 0.0
    %3434 = vmatprep.subr.mxu0 0.0
    %3435 = vmatpush1.msra.mxu0 0.0
    %3436 = vmatprep.subr.mxu0 0.0
    %3437 = vmatpush1.msra.mxu0 0.0
    %3438 = vmatprep.subr.mxu0 0.0
    %3439 = vmatpush1.msra.mxu0 0.0
    %3440 = vmatprep.subr.mxu0 0.0
    %3441 = vmatpush1.msra.mxu0 0.0
    %3442 = vmatprep.subr.mxu0 0.0
    %3443 = vmatpush1.msra.mxu0 0.0
    %3444 = vmatprep.subr.mxu0 0.0
    %3445 = vmatpush1.msra.mxu0 0.0
    %3446 = vmatprep.subr.mxu0 0.0
    %3447 = vmatpush1.msra.mxu0 0.0
    %3448 = vmatprep.subr.mxu0 0.0
    %3449 = vmatpush1.msra.mxu0 0.0
    %3450 = vmatprep.subr.mxu0 0.0
    %3451 = vmatpush1.msra.mxu0 0.0
    %3452 = vmatprep.subr.mxu0 0.0
    %3453 = vmatpush1.msra.mxu0 0.0
    %3454 = vmatprep.subr.mxu0 0.0
    %3455 = vmatpush1.msra.mxu0 0.0
    %3456 = vmatprep.subr.mxu0 0.0
    %3457 = vmatpush1.msra.mxu0 0.0
    %3458 = vmatprep.subr.mxu0 0.0
    %3459 = vmatpush1.msra.mxu0 0.0
    %3460 = vmatprep.subr.mxu0 0.0
    %3461 = vmatpush1.msra.mxu0 0.0
    %3462 = vmatprep.subr.mxu0 0.0
    %3463 = vmatpush1.msra.mxu0 0.0
    %3464 = vmatprep.subr.mxu0 0.0
    %3465 = vmatpush1.msra.mxu0 0.0
    %3466 = vmatprep.subr.mxu0 0.0
    %3467 = vmatpush1.msra.mxu0 0.0
    %3468 = vmatprep.subr.mxu0 0.0
    %3469 = vmatpush1.msra.mxu0 0.0
    %3470 = vmatprep.subr.mxu0 0.0
    %3471 = vmatpush1.msra.mxu0 0.0
    %3472 = vmatprep.subr.mxu0 0.0
    %3473 = vmatpush1.msra.mxu0 0.0
    %3474 = vmatprep.subr.mxu0 0.0
    %3475 = vmatpush1.msra.mxu0 0.0
    %3476 = vmatprep.subr.mxu0 0.0
    %3477 = vmatpush1.msra.mxu0 0.0
    %3478 = vmatprep.subr.mxu0 0.0
    %3479 = vmatpush1.msra.mxu0 0.0
    %3480 = vmatprep.mubr.f32.mxu0 0.0
    %3481 = vmatmul.mubr.f32.gmra.mrb[0].mxu0 %v2873
    %v3482 = vpop.f32.mrb[0].mxu0
    %v3483 = vadd.f32 %v1463, %v3482
    %v3484 = vpop.f32.mrb[0].mxu0
    %3485 = vdwg.mxu0
    %v3486 = vadd.f32 %v3413, %v3483
    %v3487 = vsub.f32 0.0, %v3486
    %v3488 = vmul.f32 %v3487, 1.442695
    %v3489 = vpow.pop %v3488
    %v3490 = vadd.f32 %v3489, 1.0
    %v3491 = vrcp.pop %v3490
    %v3492 = vmul.f32 1.0, %v3491
    %3494 = vrot.lane.b32.xlu0 %v3483, 64
    %v3495 = vpop.permute.xlu0 %3494
    %v3497 = vmul.f32 %v3492, %v3495
    %3499 = vrot.lane.b32.xlu0 %v3497, 64
    %v3500 = vpop.permute.xlu0 %3499
    %v3502 = vadd.f32 %v3413, %v3500
    %v3503 = vtanh.pop %v3502
    %v3504 = vsub.f32 1.0, %v3492
    %3506 = vrot.lane.b32.xlu0 %v3503, 96
    %v3507 = vpop.permute.xlu0 %3506
    %v3509 = vmul.f32 %v3504, %v3507
    %v3510 = vmul.f32 %v3492, %v2869
    %v3511 = vadd.f32 %v3509, %v3510
    %3513 = vrot.lane.b32.xlu0 %v3511, 96
    %v3514 = vpop.permute.xlu0 %3513
    %v3515 = vsel %vm195, %v3514, 0
    %3517 = vmatprep.subr.mxu0 0.0
    %3518 = vmatpush1.xpose.msra.mxu0 %v1572
    %3519 = vmatprep.subr.mxu0 0.0
    %3520 = vmatpush1.xpose.msra.mxu0 0.0
    %3521 = vmatprep.subr.mxu0 0.0
    %3522 = vmatpush1.xpose.msra.mxu0 0.0
    %3523 = vmatprep.subr.mxu0 0.0
    %3524 = vmatpush1.xpose.msra.mxu0 0.0
    %3525 = vmatprep.subr.mxu0 0.0
    %3526 = vmatpush1.xpose.msra.mxu0 0.0
    %3527 = vmatprep.subr.mxu0 0.0
    %3528 = vmatpush1.xpose.msra.mxu0 0.0
    %3529 = vmatprep.subr.mxu0 0.0
    %3530 = vmatpush1.xpose.msra.mxu0 0.0
    %3531 = vmatprep.subr.mxu0 0.0
    %3532 = vmatpush1.xpose.msra.mxu0 0.0
    %3533 = vmatprep.subr.mxu0 0.0
    %3534 = vmatpush1.xpose.msra.mxu0 0.0
    %3535 = vmatprep.subr.mxu0 0.0
    %3536 = vmatpush1.xpose.msra.mxu0 0.0
    %3537 = vmatprep.subr.mxu0 0.0
    %3538 = vmatpush1.xpose.msra.mxu0 0.0
    %3539 = vmatprep.subr.mxu0 0.0
    %3540 = vmatpush1.xpose.msra.mxu0 0.0
    %3541 = vmatprep.subr.mxu0 0.0
    %3542 = vmatpush1.xpose.msra.mxu0 0.0
    %3543 = vmatprep.subr.mxu0 0.0
    %3544 = vmatpush1.xpose.msra.mxu0 0.0
    %3545 = vmatprep.subr.mxu0 0.0
    %3546 = vmatpush1.xpose.msra.mxu0 0.0
    %3547 = vmatprep.subr.mxu0 0.0
    %3548 = vmatpush1.xpose.msra.mxu0 0.0
    %3549 = vmatprep.subr.mxu0 0.0
    %3550 = vmatpush1.xpose.msra.mxu0 0.0
    %3551 = vmatprep.subr.mxu0 0.0
    %3552 = vmatpush1.xpose.msra.mxu0 0.0
    %3553 = vmatprep.subr.mxu0 0.0
    %3554 = vmatpush1.xpose.msra.mxu0 0.0
    %3555 = vmatprep.subr.mxu0 0.0
    %3556 = vmatpush1.xpose.msra.mxu0 0.0
    %3557 = vmatprep.subr.mxu0 0.0
    %3558 = vmatpush1.xpose.msra.mxu0 0.0
    %3559 = vmatprep.subr.mxu0 0.0
    %3560 = vmatpush1.xpose.msra.mxu0 0.0
    %3561 = vmatprep.subr.mxu0 0.0
    %3562 = vmatpush1.xpose.msra.mxu0 0.0
    %3563 = vmatprep.subr.mxu0 0.0
    %3564 = vmatpush1.xpose.msra.mxu0 0.0
    %3565 = vmatprep.subr.mxu0 0.0
    %3566 = vmatpush1.xpose.msra.mxu0 0.0
    %3567 = vmatprep.subr.mxu0 0.0
    %3568 = vmatpush1.xpose.msra.mxu0 0.0
    %3569 = vmatprep.subr.mxu0 0.0
    %3570 = vmatpush1.xpose.msra.mxu0 0.0
    %3571 = vmatprep.subr.mxu0 0.0
    %3572 = vmatpush1.xpose.msra.mxu0 0.0
    %3573 = vmatprep.subr.mxu0 0.0
    %3574 = vmatpush1.xpose.msra.mxu0 0.0
    %3575 = vmatprep.subr.mxu0 0.0
    %3576 = vmatpush1.xpose.msra.mxu0 0.0
    %3577 = vmatprep.subr.mxu0 0.0
    %3578 = vmatpush1.xpose.msra.mxu0 0.0
    %3579 = vmatprep.subr.mxu0 0.0
    %3580 = vmatpush1.xpose.msra.mxu0 0.0
    %3581 = vmatprep.mubr.f32.mxu0 0.0
    %3582 = vmatmul.mubr.f32.gmra.mrb[0].mxu0 %v3515
    %v3583 = vpop.f32.mrb[0].mxu0
    %v3584 = vadd.f32 0.0, %v3583
    %v3585 = vpop.f32.mrb[0].mxu0
    %3586 = vdwg.mxu0
    %v3587 = vsel %vm1644, %v3584, -inf
    %3588 = vmax.xlane.f32.xlu0 %v3587
    %v3589 = vpop.xlane.xlu0 %3588
    %v3590 = vsub.f32 %v3584, %v3589
    %v3591 = vmul.f32 %v3590, 1.442695
    %v3592 = vpow.pop %v3591
    %v3593 = vsel %vm1644, %v3592, 0.0
    %3594 = vadd.xlane.f32.xlu0 %v3593
    %v3595 = vpop.xlane.xlu0 %3594
    %v3596 = vrcp.pop %v3595
    %v3597 = vmul.f32 %v3592, %v3596
    %v3599 = vsel %vm1656, %v3597, 0
    %3601 = vmatprep.subr.mxu0 0.0
    %3602 = vmatpush1.msra.mxu0 %v1222
    %3603 = vmatprep.subr.mxu0 0.0
    %3604 = vmatpush1.msra.mxu0 0.0
    %3605 = vmatprep.subr.mxu0 0.0
    %3606 = vmatpush1.msra.mxu0 0.0
    %3607 = vmatprep.subr.mxu0 0.0
    %3608 = vmatpush1.msra.mxu0 0.0
    %3609 = vmatprep.subr.mxu0 0.0
    %3610 = vmatpush1.msra.mxu0 0.0
    %3611 = vmatprep.subr.mxu0 0.0
    %3612 = vmatpush1.msra.mxu0 0.0
    %3613 = vmatprep.subr.mxu0 0.0
    %3614 = vmatpush1.msra.mxu0 0.0
    %3615 = vmatprep.subr.mxu0 0.0
    %3616 = vmatpush1.msra.mxu0 0.0
    %3617 = vmatprep.subr.mxu0 0.0
    %3618 = vmatpush1.msra.mxu0 0.0
    %3619 = vmatprep.subr.mxu0 0.0
    %3620 = vmatpush1.msra.mxu0 0.0
    %3621 = vmatprep.subr.mxu0 0.0
    %3622 = vmatpush1.msra.mxu0 0.0
    %3623 = vmatprep.subr.mxu0 0.0
    %3624 = vmatpush1.msra.mxu0 0.0
    %3625 = vmatprep.subr.mxu0 0.0
    %3626 = vmatpush1.msra.mxu0 0.0
    %3627 = vmatprep.subr.mxu0 0.0
    %3628 = vmatpush1.msra.mxu0 0.0
    %3629 = vmatprep.subr.mxu0 0.0
    %3630 = vmatpush1.msra.mxu0 0.0
    %3631 = vmatprep.subr.mxu0 0.0
    %3632 = vmatpush1.msra.mxu0 0.0
    %3633 = vmatprep.subr.mxu0 0.0
    %3634 = vmatpush1.msra.mxu0 0.0
    %3635 = vmatprep.subr.mxu0 0.0
    %3636 = vmatpush1.msra.mxu0 0.0
    %3637 = vmatprep.subr.mxu0 0.0
    %3638 = vmatpush1.msra.mxu0 0.0
    %3639 = vmatprep.subr.mxu0 0.0
    %3640 = vmatpush1.msra.mxu0 0.0
    %3641 = vmatprep.subr.mxu0 0.0
    %3642 = vmatpush1.msra.mxu0 0.0
    %3643 = vmatprep.subr.mxu0 0.0
    %3644 = vmatpush1.msra.mxu0 0.0
    %3645 = vmatprep.subr.mxu0 0.0
    %3646 = vmatpush1.msra.mxu0 0.0
    %3647 = vmatprep.subr.mxu0 0.0
    %3648 = vmatpush1.msra.mxu0 0.0
    %3649 = vmatprep.subr.mxu0 0.0
    %3650 = vmatpush1.msra.mxu0 0.0
    %3651 = vmatprep.subr.mxu0 0.0
    %3652 = vmatpush1.msra.mxu0 0.0
    %3653 = vmatprep.subr.mxu0 0.0
    %3654 = vmatpush1.msra.mxu0 0.0
    %3655 = vmatprep.subr.mxu0 0.0
    %3656 = vmatpush1.msra.mxu0 0.0
    %3657 = vmatprep.subr.mxu0 0.0
    %3658 = vmatpush1.msra.mxu0 0.0
    %3659 = vmatprep.subr.mxu0 0.0
    %3660 = vmatpush1.msra.mxu0 0.0
    %3661 = vmatprep.subr.mxu0 0.0
    %3662 = vmatpush1.msra.mxu0 0.0
    %3663 = vmatprep.subr.mxu0 0.0
    %3664 = vmatpush1.msra.mxu0 0.0
    %3665 = vmatprep.mubr.f32.mxu0 0.0
    %3666 = vmatmul.mubr.f32.gmra.mrb[0].mxu0 %v3599
    %v3667 = vpop.f32.mrb[0].mxu0
    %v3668 = vadd.f32 0.0, %v3667
    %v3669 = vpop.f32.mrb[0].mxu0
    %3670 = vdwg.mxu0
    %v3672 = vsel %vm195, %v3668, 0
    %3674 = vmatprep.subr.mxu0 0.0
    %3675 = vmatpush1.msra.mxu0 %v1734
    %3676 = vmatprep.subr.mxu0 0.0
    %3677 = vmatpush1.msra.mxu0 %v1735
    %3678 = vmatprep.subr.mxu0 0.0
    %3679 = vmatpush1.msra.mxu0 %v1736
    %3680 = vmatprep.subr.mxu0 0.0
    %3681 = vmatpush1.msra.mxu0 %v1737
    %3682 = vmatprep.subr.mxu0 0.0
    %3683 = vmatpush1.msra.mxu0 0.0
    %3684 = vmatprep.subr.mxu0 0.0
    %3685 = vmatpush1.msra.mxu0 0.0
    %3686 = vmatprep.subr.mxu0 0.0
    %3687 = vmatpush1.msra.mxu0 0.0
    %3688 = vmatprep.subr.mxu0 0.0
    %3689 = vmatpush1.msra.mxu0 0.0
    %3690 = vmatprep.subr.mxu0 0.0
    %3691 = vmatpush1.msra.mxu0 0.0
    %3692 = vmatprep.subr.mxu0 0.0
    %3693 = vmatpush1.msra.mxu0 0.0
    %3694 = vmatprep.subr.mxu0 0.0
    %3695 = vmatpush1.msra.mxu0 0.0
    %3696 = vmatprep.subr.mxu0 0.0
    %3697 = vmatpush1.msra.mxu0 0.0
    %3698 = vmatprep.subr.mxu0 0.0
    %3699 = vmatpush1.msra.mxu0 0.0
    %3700 = vmatprep.subr.mxu0 0.0
    %3701 = vmatpush1.msra.mxu0 0.0
    %3702 = vmatprep.subr.mxu0 0.0
    %3703 = vmatpush1.msra.mxu0 0.0
    %3704 = vmatprep.subr.mxu0 0.0
    %3705 = vmatpush1.msra.mxu0 0.0
    %3706 = vmatprep.subr.mxu0 0.0
    %3707 = vmatpush1.msra.mxu0 0.0
    %3708 = vmatprep.subr.mxu0 0.0
    %3709 = vmatpush1.msra.mxu0 0.0
    %3710 = vmatprep.subr.mxu0 0.0
    %3711 = vmatpush1.msra.mxu0 0.0
    %3712 = vmatprep.subr.mxu0 0.0
    %3713 = vmatpush1.msra.mxu0 0.0
    %3714 = vmatprep.subr.mxu0 0.0
    %3715 = vmatpush1.msra.mxu0 0.0
    %3716 = vmatprep.subr.mxu0 0.0
    %3717 = vmatpush1.msra.mxu0 0.0
    %3718 = vmatprep.subr.mxu0 0.0
    %3719 = vmatpush1.msra.mxu0 0.0
    %3720 = vmatprep.subr.mxu0 0.0
    %3721 = vmatpush1.msra.mxu0 0.0
    %3722 = vmatprep.subr.mxu0 0.0
    %3723 = vmatpush1.msra.mxu0 0.0
    %3724 = vmatprep.subr.mxu0 0.0
    %3725 = vmatpush1.msra.mxu0 0.0
    %3726 = vmatprep.subr.mxu0 0.0
    %3727 = vmatpush1.msra.mxu0 0.0
    %3728 = vmatprep.subr.mxu0 0.0
    %3729 = vmatpush1.msra.mxu0 0.0
    %3730 = vmatprep.subr.mxu0 0.0
    %3731 = vmatpush1.msra.mxu0 0.0
    %3732 = vmatprep.subr.mxu0 0.0
    %3733 = vmatpush1.msra.mxu0 0.0
    %3734 = vmatprep.subr.mxu0 0.0
    %3735 = vmatpush1.msra.mxu0 0.0
    %3736 = vmatprep.subr.mxu0 0.0
    %3737 = vmatpush1.msra.mxu0 0.0
    %3738 = vmatprep.mubr.f32.mxu0 0.0
    %3739 = vmatmul.mubr.f32.gmra.mrb[0].mxu0 %v3672
    %v3740 = vpop.f32.mrb[0].mxu0
    %v3741 = vadd.f32 0.0, %v3740
    %v3742 = vpop.f32.mrb[0].mxu0
    %3743 = vdwg.mxu0
    %3744 = vmatprep.subr.mxu0 0.0
    %3745 = vmatpush1.msra.mxu0 %v1730
    %3746 = vmatprep.subr.mxu0 0.0
    %3747 = vmatpush1.msra.mxu0 %v1731
    %3748 = vmatprep.subr.mxu0 0.0
    %3749 = vmatpush1.msra.mxu0 %v1732
    %3750 = vmatprep.subr.mxu0 0.0
    %3751 = vmatpush1.msra.mxu0 %v1733
    %3752 = vmatprep.subr.mxu0 0.0
    %3753 = vmatpush1.msra.mxu0 0.0
    %3754 = vmatprep.subr.mxu0 0.0
    %3755 = vmatpush1.msra.mxu0 0.0
    %3756 = vmatprep.subr.mxu0 0.0
    %3757 = vmatpush1.msra.mxu0 0.0
    %3758 = vmatprep.subr.mxu0 0.0
    %3759 = vmatpush1.msra.mxu0 0.0
    %3760 = vmatprep.subr.mxu0 0.0
    %3761 = vmatpush1.msra.mxu0 0.0
    %3762 = vmatprep.subr.mxu0 0.0
    %3763 = vmatpush1.msra.mxu0 0.0
    %3764 = vmatprep.subr.mxu0 0.0
    %3765 = vmatpush1.msra.mxu0 0.0
    %3766 = vmatprep.subr.mxu0 0.0
    %3767 = vmatpush1.msra.mxu0 0.0
    %3768 = vmatprep.subr.mxu0 0.0
    %3769 = vmatpush1.msra.mxu0 0.0
    %3770 = vmatprep.subr.mxu0 0.0
    %3771 = vmatpush1.msra.mxu0 0.0
    %3772 = vmatprep.subr.mxu0 0.0
    %3773 = vmatpush1.msra.mxu0 0.0
    %3774 = vmatprep.subr.mxu0 0.0
    %3775 = vmatpush1.msra.mxu0 0.0
    %3776 = vmatprep.subr.mxu0 0.0
    %3777 = vmatpush1.msra.mxu0 0.0
    %3778 = vmatprep.subr.mxu0 0.0
    %3779 = vmatpush1.msra.mxu0 0.0
    %3780 = vmatprep.subr.mxu0 0.0
    %3781 = vmatpush1.msra.mxu0 0.0
    %3782 = vmatprep.subr.mxu0 0.0
    %3783 = vmatpush1.msra.mxu0 0.0
    %3784 = vmatprep.subr.mxu0 0.0
    %3785 = vmatpush1.msra.mxu0 0.0
    %3786 = vmatprep.subr.mxu0 0.0
    %3787 = vmatpush1.msra.mxu0 0.0
    %3788 = vmatprep.subr.mxu0 0.0
    %3789 = vmatpush1.msra.mxu0 0.0
    %3790 = vmatprep.subr.mxu0 0.0
    %3791 = vmatpush1.msra.mxu0 0.0
    %3792 = vmatprep.subr.mxu0 0.0
    %3793 = vmatpush1.msra.mxu0 0.0
    %3794 = vmatprep.subr.mxu0 0.0
    %3795 = vmatpush1.msra.mxu0 0.0
    %3796 = vmatprep.subr.mxu0 0.0
    %3797 = vmatpush1.msra.mxu0 0.0
    %3798 = vmatprep.subr.mxu0 0.0
    %3799 = vmatpush1.msra.mxu0 0.0
    %3800 = vmatprep.subr.mxu0 0.0
    %3801 = vmatpush1.msra.mxu0 0.0
    %3802 = vmatprep.subr.mxu0 0.0
    %3803 = vmatpush1.msra.mxu0 0.0
    %3804 = vmatprep.subr.mxu0 0.0
    %3805 = vmatpush1.msra.mxu0 0.0
    %3806 = vmatprep.subr.mxu0 0.0
    %3807 = vmatpush1.msra.mxu0 0.0
    %3808 = vmatprep.mubr.f32.mxu0 0.0
    %3809 = vmatmul.mubr.f32.gmra.mrb[0].mxu0 %v3515
    %v3810 = vpop.f32.mrb[0].mxu0
    %v3811 = vadd.f32 %v3741, %v3810
    %v3812 = vpop.f32.mrb[0].mxu0
    %3813 = vdwg.mxu0
    %v3814 = vadd.f32 %v3811, %v1881
    %v3815 = vtanh.pop %v3814
    %v3817 = vsel %vm195, %v3815, 0
    %3819 = vmatprep.subr.mxu0 0.0
    %3820 = vmatpush1.msra.mxu0 %v1884
    %3821 = vmatprep.subr.mxu0 0.0
    %3822 = vmatpush1.msra.mxu0 %v1885
    %3823 = vmatprep.subr.mxu0 0.0
    %3824 = vmatpush1.msra.mxu0 %v1886
    %3825 = vmatprep.subr.mxu0 0.0
    %3826 = vmatpush1.msra.mxu0 %v1887
    %3827 = vmatprep.subr.mxu0 0.0
    %3828 = vmatpush1.msra.mxu0 0.0
    %3829 = vmatprep.subr.mxu0 0.0
    %3830 = vmatpush1.msra.mxu0 0.0
    %3831 = vmatprep.subr.mxu0 0.0
    %3832 = vmatpush1.msra.mxu0 0.0
    %3833 = vmatprep.subr.mxu0 0.0
    %3834 = vmatpush1.msra.mxu0 0.0
    %3835 = vmatprep.subr.mxu0 0.0
    %3836 = vmatpush1.msra.mxu0 0.0
    %3837 = vmatprep.subr.mxu0 0.0
    %3838 = vmatpush1.msra.mxu0 0.0
    %3839 = vmatprep.subr.mxu0 0.0
    %3840 = vmatpush1.msra.mxu0 0.0
    %3841 = vmatprep.subr.mxu0 0.0
    %3842 = vmatpush1.msra.mxu0 0.0
    %3843 = vmatprep.subr.mxu0 0.0
    %3844 = vmatpush1.msra.mxu0 0.0
    %3845 = vmatprep.subr.mxu0 0.0
    %3846 = vmatpush1.msra.mxu0 0.0
    %3847 = vmatprep.subr.mxu0 0.0
    %3848 = vmatpush1.msra.mxu0 0.0
    %3849 = vmatprep.subr.mxu0 0.0
    %3850 = vmatpush1.msra.mxu0 0.0
    %3851 = vmatprep.subr.mxu0 0.0
    %3852 = vmatpush1.msra.mxu0 0.0
    %3853 = vmatprep.subr.mxu0 0.0
    %3854 = vmatpush1.msra.mxu0 0.0
    %3855 = vmatprep.subr.mxu0 0.0
    %3856 = vmatpush1.msra.mxu0 0.0
    %3857 = vmatprep.subr.mxu0 0.0
    %3858 = vmatpush1.msra.mxu0 0.0
    %3859 = vmatprep.subr.mxu0 0.0
    %3860 = vmatpush1.msra.mxu0 0.0
    %3861 = vmatprep.subr.mxu0 0.0
    %3862 = vmatpush1.msra.mxu0 0.0
    %3863 = vmatprep.subr.mxu0 0.0
    %3864 = vmatpush1.msra.mxu0 0.0
    %3865 = vmatprep.subr.mxu0 0.0
    %3866 = vmatpush1.msra.mxu0 0.0
    %3867 = vmatprep.subr.mxu0 0.0
    %3868 = vmatpush1.msra.mxu0 0.0
    %3869 = vmatprep.subr.mxu0 0.0
    %3870 = vmatpush1.msra.mxu0 0.0
    %3871 = vmatprep.subr.mxu0 0.0
    %3872 = vmatpush1.msra.mxu0 0.0
    %3873 = vmatprep.subr.mxu0 0.0
    %3874 = vmatpush1.msra.mxu0 0.0
    %3875 = vmatprep.subr.mxu0 0.0
    %3876 = vmatpush1.msra.mxu0 0.0
    %3877 = vmatprep.subr.mxu0 0.0
    %3878 = vmatpush1.msra.mxu0 0.0
    %3879 = vmatprep.subr.mxu0 0.0
    %3880 = vmatpush1.msra.mxu0 0.0
    %3881 = vmatprep.subr.mxu0 0.0
    %3882 = vmatpush1.msra.mxu0 0.0
    %3883 = vmatprep.mubr.f32.mxu0 0.0
    %3884 = vmatmul.mubr.f32.gmra.mrb[0].mxu0 %v3817
    %v3885 = vpop.f32.mrb[0].mxu0
    %v3886 = vadd.f32 %v1888, %v3885
    %v3887 = vpop.f32.mrb[0].mxu0
    %3888 = vdwg.mxu0
    %v3889 = vsel %vm379, %v3886, -inf
    %3890 = vmax.xlane.f32.xlu0 %v3889
    %v3891 = vpop.xlane.xlu0 %3890
    %v3892 = vsub.f32 %v3886, %v3891
    %v3893 = vmul.f32 %v3892, 1.442695
    %v3894 = vpow.pop %v3893
    %v3895 = vsel %vm379, %v3894, 0.0
    %3896 = vadd.xlane.f32.xlu0 %v3895
    %v3897 = vpop.xlane.xlu0 %3896
    %v3898 = vrcp.pop %v3897
    %v3899 = vmul.f32 1.0, %v3898
    %vm3900 = vcmp.ge.f32.partialorder %v3886, %v3891
    %v3901 = vsel %vm3900, %v1974, 32.0
    %v3902 = vsel %vm379, %v3901, inf
    %3903 = vmin.xlane.f32.xlu0 %v3902
    %v3904 = vpop.xlane.xlu0 %3903
    %v3905 = vcvt.f32.s32.to.zero.pseudo %v3904
    %vm3906 = vcmp.eq.s32.totalorder %v1303, %v3905
    %v3907 = vsel %vm3906, 1, 0
    %v3908 = vcvt.s32.f32 %v3907
    %vm3909 = vcmp.eq.s32.totalorder %v1303, 3
    %v3910 = vsel %vm3909, %v3905, %v3268
    %v3911 = vsel %vm3909, %v3899, %v3269
    %v3913 = vsel %vm195, %v3908, 0
    %3915 = vmatprep.subr.mxu0 0.0
    %3916 = vmatpush1.msra.mxu0 %v1305
    %3917 = vmatprep.subr.mxu0 0.0
    %3918 = vmatpush1.msra.mxu0 %v1306
    %3919 = vmatprep.subr.mxu0 0.0
    %3920 = vmatpush1.msra.mxu0 %v1307
    %3921 = vmatprep.subr.mxu0 0.0
    %3922 = vmatpush1.msra.mxu0 %v1308
    %3923 = vmatprep.subr.mxu0 0.0
    %3924 = vmatpush1.msra.mxu0 0.0
    %3925 = vmatprep.subr.mxu0 0.0
    %3926 = vmatpush1.msra.mxu0 0.0
    %3927 = vmatprep.subr.mxu0 0.0
    %3928 = vmatpush1.msra.mxu0 0.0
    %3929 = vmatprep.subr.mxu0 0.0
    %3930 = vmatpush1.msra.mxu0 0.0
    %3931 = vmatprep.subr.mxu0 0.0
    %3932 = vmatpush1.msra.mxu0 0.0
    %3933 = vmatprep.subr.mxu0 0.0
    %3934 = vmatpush1.msra.mxu0 0.0
    %3935 = vmatprep.subr.mxu0 0.0
    %3936 = vmatpush1.msra.mxu0 0.0
    %3937 = vmatprep.subr.mxu0 0.0
    %3938 = vmatpush1.msra.mxu0 0.0
    %3939 = vmatprep.subr.mxu0 0.0
    %3940 = vmatpush1.msra.mxu0 0.0
    %3941 = vmatprep.subr.mxu0 0.0
    %3942 = vmatpush1.msra.mxu0 0.0
    %3943 = vmatprep.subr.mxu0 0.0
    %3944 = vmatpush1.msra.mxu0 0.0
    %3945 = vmatprep.subr.mxu0 0.0
    %3946 = vmatpush1.msra.mxu0 0.0
    %3947 = vmatprep.subr.mxu0 0.0
    %3948 = vmatpush1.msra.mxu0 0.0
    %3949 = vmatprep.subr.mxu0 0.0
    %3950 = vmatpush1.msra.mxu0 0.0
    %3951 = vmatprep.subr.mxu0 0.0
    %3952 = vmatpush1.msra.mxu0 0.0
    %3953 = vmatprep.subr.mxu0 0.0
    %3954 = vmatpush1.msra.mxu0 0.0
    %3955 = vmatprep.subr.mxu0 0.0
    %3956 = vmatpush1.msra.mxu0 0.0
    %3957 = vmatprep.subr.mxu0 0.0
    %3958 = vmatpush1.msra.mxu0 0.0
    %3959 = vmatprep.subr.mxu0 0.0
    %3960 = vmatpush1.msra.mxu0 0.0
    %3961 = vmatprep.subr.mxu0 0.0
    %3962 = vmatpush1.msra.mxu0 0.0
    %3963 = vmatprep.subr.mxu0 0.0
    %3964 = vmatpush1.msra.mxu0 0.0
    %3965 = vmatprep.subr.mxu0 0.0
    %3966 = vmatpush1.msra.mxu0 0.0
    %3967 = vmatprep.subr.mxu0 0.0
    %3968 = vmatpush1.msra.mxu0 0.0
    %3969 = vmatprep.subr.mxu0 0.0
    %3970 = vmatpush1.msra.mxu0 0.0
    %3971 = vmatprep.subr.mxu0 0.0
    %3972 = vmatpush1.msra.mxu0 0.0
    %3973 = vmatprep.subr.mxu0 0.0
    %3974 = vmatpush1.msra.mxu0 0.0
    %3975 = vmatprep.subr.mxu0 0.0
    %3976 = vmatpush1.msra.mxu0 0.0
    %3977 = vmatprep.subr.mxu0 0.0
    %3978 = vmatpush1.msra.mxu0 0.0
    %3979 = vmatprep.mubr.f32.mxu0 0.0
    %3980 = vmatmul.mubr.f32.gmra.mrb[0].mxu0 %v3913
    %v3981 = vpop.f32.mrb[0].mxu0
    %v3982 = vadd.f32 0.0, %v3981
    %v3983 = vpop.f32.mrb[0].mxu0
    %3984 = vdwg.mxu0
    %v3986 = vsel %vm195, %v3982, 0
    %3988 = vmatprep.subr.mxu0 0.0
    %3989 = vmatpush1.msra.mxu0 %v1382
    %3990 = vmatprep.subr.mxu0 0.0
    %3991 = vmatpush1.msra.mxu0 %v1383
    %3992 = vmatprep.subr.mxu0 0.0
    %3993 = vmatpush1.msra.mxu0 %v1384
    %3994 = vmatprep.subr.mxu0 0.0
    %3995 = vmatpush1.msra.mxu0 %v1385
    %3996 = vmatprep.subr.mxu0 0.0
    %3997 = vmatpush1.msra.mxu0 0.0
    %3998 = vmatprep.subr.mxu0 0.0
    %3999 = vmatpush1.msra.mxu0 0.0
    %4000 = vmatprep.subr.mxu0 0.0
    %4001 = vmatpush1.msra.mxu0 0.0
    %4002 = vmatprep.subr.mxu0 0.0
    %4003 = vmatpush1.msra.mxu0 0.0
    %4004 = vmatprep.subr.mxu0 0.0
    %4005 = vmatpush1.msra.mxu0 0.0
    %4006 = vmatprep.subr.mxu0 0.0
    %4007 = vmatpush1.msra.mxu0 0.0
    %4008 = vmatprep.subr.mxu0 0.0
    %4009 = vmatpush1.msra.mxu0 0.0
    %4010 = vmatprep.subr.mxu0 0.0
    %4011 = vmatpush1.msra.mxu0 0.0
    %4012 = vmatprep.subr.mxu0 0.0
    %4013 = vmatpush1.msra.mxu0 0.0
    %4014 = vmatprep.subr.mxu0 0.0
    %4015 = vmatpush1.msra.mxu0 0.0
    %4016 = vmatprep.subr.mxu0 0.0
    %4017 = vmatpush1.msra.mxu0 0.0
    %4018 = vmatprep.subr.mxu0 0.0
    %4019 = vmatpush1.msra.mxu0 0.0
    %4020 = vmatprep.subr.mxu0 0.0
    %4021 = vmatpush1.msra.mxu0 0.0
    %4022 = vmatprep.subr.mxu0 0.0
    %4023 = vmatpush1.msra.mxu0 0.0
    %4024 = vmatprep.subr.mxu0 0.0
    %4025 = vmatpush1.msra.mxu0 0.0
    %4026 = vmatprep.subr.mxu0 0.0
    %4027 = vmatpush1.msra.mxu0 0.0
    %4028 = vmatprep.subr.mxu0 0.0
    %4029 = vmatpush1.msra.mxu0 0.0
    %4030 = vmatprep.subr.mxu0 0.0
    %4031 = vmatpush1.msra.mxu0 0.0
    %4032 = vmatprep.subr.mxu0 0.0
    %4033 = vmatpush1.msra.mxu0 0.0
    %4034 = vmatprep.subr.mxu0 0.0
    %4035 = vmatpush1.msra.mxu0 0.0
    %4036 = vmatprep.subr.mxu0 0.0
    %4037 = vmatpush1.msra.mxu0 0.0
    %4038 = vmatprep.subr.mxu0 0.0
    %4039 = vmatpush1.msra.mxu0 0.0
    %4040 = vmatprep.subr.mxu0 0.0
    %4041 = vmatpush1.msra.mxu0 0.0
    %4042 = vmatprep.subr.mxu0 0.0
    %4043 = vmatpush1.msra.mxu0 0.0
    %4044 = vmatprep.subr.mxu0 0.0
    %4045 = vmatpush1.msra.mxu0 0.0
    %4046 = vmatprep.subr.mxu0 0.0
    %4047 = vmatpush1.msra.mxu0 0.0
    %4048 = vmatprep.subr.mxu0 0.0
    %4049 = vmatpush1.msra.mxu0 0.0
    %4050 = vmatprep.subr.mxu0 0.0
    %4051 = vmatpush1.msra.mxu0 0.0
    %4052 = vmatprep.mubr.f32.mxu0 0.0
    %4053 = vmatmul.mubr.f32.gmra.mrb[0].mxu0 %v3986
    %v4054 = vpop.f32.mrb[0].mxu0
    %v4055 = vadd.f32 %v1299, %v4054
    %v4056 = vpop.f32.mrb[0].mxu0
    %4057 = vdwg.mxu0
    %4058 = vmatprep.subr.mxu0 0.0
    %4059 = vmatpush1.msra.mxu0 %v1459
    %4060 = vmatprep.subr.mxu0 0.0
    %4061 = vmatpush1.msra.mxu0 %v1460
    %4062 = vmatprep.subr.mxu0 0.0
    %4063 = vmatpush1.msra.mxu0 %v1461
    %4064 = vmatprep.subr.mxu0 0.0
    %4065 = vmatpush1.msra.mxu0 %v1462
    %4066 = vmatprep.subr.mxu0 0.0
    %4067 = vmatpush1.msra.mxu0 0.0
    %4068 = vmatprep.subr.mxu0 0.0
    %4069 = vmatpush1.msra.mxu0 0.0
    %4070 = vmatprep.subr.mxu0 0.0
    %4071 = vmatpush1.msra.mxu0 0.0
    %4072 = vmatprep.subr.mxu0 0.0
    %4073 = vmatpush1.msra.mxu0 0.0
    %4074 = vmatprep.subr.mxu0 0.0
    %4075 = vmatpush1.msra.mxu0 0.0
    %4076 = vmatprep.subr.mxu0 0.0
    %4077 = vmatpush1.msra.mxu0 0.0
    %4078 = vmatprep.subr.mxu0 0.0
    %4079 = vmatpush1.msra.mxu0 0.0
    %4080 = vmatprep.subr.mxu0 0.0
    %4081 = vmatpush1.msra.mxu0 0.0
    %4082 = vmatprep.subr.mxu0 0.0
    %4083 = vmatpush1.msra.mxu0 0.0
    %4084 = vmatprep.subr.mxu0 0.0
    %4085 = vmatpush1.msra.mxu0 0.0
    %4086 = vmatprep.subr.mxu0 0.0
    %4087 = vmatpush1.msra.mxu0 0.0
    %4088 = vmatprep.subr.mxu0 0.0
    %4089 = vmatpush1.msra.mxu0 0.0
    %4090 = vmatprep.subr.mxu0 0.0
    %4091 = vmatpush1.msra.mxu0 0.0
    %4092 = vmatprep.subr.mxu0 0.0
    %4093 = vmatpush1.msra.mxu0 0.0
    %4094 = vmatprep.subr.mxu0 0.0
    %4095 = vmatpush1.msra.mxu0 0.0
    %4096 = vmatprep.subr.mxu0 0.0
    %4097 = vmatpush1.msra.mxu0 0.0
    %4098 = vmatprep.subr.mxu0 0.0
    %4099 = vmatpush1.msra.mxu0 0.0
    %4100 = vmatprep.subr.mxu0 0.0
    %4101 = vmatpush1.msra.mxu0 0.0
    %4102 = vmatprep.subr.mxu0 0.0
    %4103 = vmatpush1.msra.mxu0 0.0
    %4104 = vmatprep.subr.mxu0 0.0
    %4105 = vmatpush1.msra.mxu0 0.0
    %4106 = vmatprep.subr.mxu0 0.0
    %4107 = vmatpush1.msra.mxu0 0.0
    %4108 = vmatprep.subr.mxu0 0.0
    %4109 = vmatpush1.msra.mxu0 0.0
    %4110 = vmatprep.subr.mxu0 0.0
    %4111 = vmatpush1.msra.mxu0 0.0
    %4112 = vmatprep.subr.mxu0 0.0
    %4113 = vmatpush1.msra.mxu0 0.0
    %4114 = vmatprep.subr.mxu0 0.0
    %4115 = vmatpush1.msra.mxu0 0.0
    %4116 = vmatprep.subr.mxu0 0.0
    %4117 = vmatpush1.msra.mxu0 0.0
    %4118 = vmatprep.subr.mxu0 0.0
    %4119 = vmatpush1.msra.mxu0 0.0
    %4120 = vmatprep.subr.mxu0 0.0
    %4121 = vmatpush1.msra.mxu0 0.0
    %4122 = vmatprep.mubr.f32.mxu0 0.0
    %4123 = vmatmul.mubr.f32.gmra.mrb[0].mxu0 %v3515
    %v4124 = vpop.f32.mrb[0].mxu0
    %v4125 = vadd.f32 %v1463, %v4124
    %v4126 = vpop.f32.mrb[0].mxu0
    %4127 = vdwg.mxu0
    %v4128 = vadd.f32 %v4055, %v4125
    %v4129 = vsub.f32 0.0, %v4128
    %v4130 = vmul.f32 %v4129, 1.442695
    %v4131 = vpow.pop %v4130
    %v4132 = vadd.f32 %v4131, 1.0
    %v4133 = vrcp.pop %v4132
    %v4134 = vmul.f32 1.0, %v4133
    %4136 = vrot.lane.b32.xlu0 %v4125, 64
    %v4137 = vpop.permute.xlu0 %4136
    %v4139 = vmul.f32 %v4134, %v4137
    %4141 = vrot.lane.b32.xlu0 %v4139, 64
    %v4142 = vpop.permute.xlu0 %4141
    %v4144 = vadd.f32 %v4055, %v4142
    %v4145 = vtanh.pop %v4144
    %v4146 = vsub.f32 1.0, %v4134
    %4148 = vrot.lane.b32.xlu0 %v4145, 96
    %v4149 = vpop.permute.xlu0 %4148
    %v4151 = vmul.f32 %v4146, %v4149
    %v4152 = vmul.f32 %v4134, %v3511
    %v4153 = vadd.f32 %v4151, %v4152
    %4155 = vrot.lane.b32.xlu0 %v4153, 96
    %v4156 = vpop.permute.xlu0 %4155
    %v4157 = vsel %vm195, %v4156, 0
    %4159 = vmatprep.subr.mxu0 0.0
    %4160 = vmatpush1.xpose.msra.mxu0 %v1572
    %4161 = vmatprep.subr.mxu0 0.0
    %4162 = vmatpush1.xpose.msra.mxu0 0.0
    %4163 = vmatprep.subr.mxu0 0.0
    %4164 = vmatpush1.xpose.msra.mxu0 0.0
    %4165 = vmatprep.subr.mxu0 0.0
    %4166 = vmatpush1.xpose.msra.mxu0 0.0
    %4167 = vmatprep.subr.mxu0 0.0
    %4168 = vmatpush1.xpose.msra.mxu0 0.0
    %4169 = vmatprep.subr.mxu0 0.0
    %4170 = vmatpush1.xpose.msra.mxu0 0.0
    %4171 = vmatprep.subr.mxu0 0.0
    %4172 = vmatpush1.xpose.msra.mxu0 0.0
    %4173 = vmatprep.subr.mxu0 0.0
    %4174 = vmatpush1.xpose.msra.mxu0 0.0
    %4175 = vmatprep.subr.mxu0 0.0
    %4176 = vmatpush1.xpose.msra.mxu0 0.0
    %4177 = vmatprep.subr.mxu0 0.0
    %4178 = vmatpush1.xpose.msra.mxu0 0.0
    %4179 = vmatprep.subr.mxu0 0.0
    %4180 = vmatpush1.xpose.msra.mxu0 0.0
    %4181 = vmatprep.subr.mxu0 0.0
    %4182 = vmatpush1.xpose.msra.mxu0 0.0
    %4183 = vmatprep.subr.mxu0 0.0
    %4184 = vmatpush1.xpose.msra.mxu0 0.0
    %4185 = vmatprep.subr.mxu0 0.0
    %4186 = vmatpush1.xpose.msra.mxu0 0.0
    %4187 = vmatprep.subr.mxu0 0.0
    %4188 = vmatpush1.xpose.msra.mxu0 0.0
    %4189 = vmatprep.subr.mxu0 0.0
    %4190 = vmatpush1.xpose.msra.mxu0 0.0
    %4191 = vmatprep.subr.mxu0 0.0
    %4192 = vmatpush1.xpose.msra.mxu0 0.0
    %4193 = vmatprep.subr.mxu0 0.0
    %4194 = vmatpush1.xpose.msra.mxu0 0.0
    %4195 = vmatprep.subr.mxu0 0.0
    %4196 = vmatpush1.xpose.msra.mxu0 0.0
    %4197 = vmatprep.subr.mxu0 0.0
    %4198 = vmatpush1.xpose.msra.mxu0 0.0
    %4199 = vmatprep.subr.mxu0 0.0
    %4200 = vmatpush1.xpose.msra.mxu0 0.0
    %4201 = vmatprep.subr.mxu0 0.0
    %4202 = vmatpush1.xpose.msra.mxu0 0.0
    %4203 = vmatprep.subr.mxu0 0.0
    %4204 = vmatpush1.xpose.msra.mxu0 0.0
    %4205 = vmatprep.subr.mxu0 0.0
    %4206 = vmatpush1.xpose.msra.mxu0 0.0
    %4207 = vmatprep.subr.mxu0 0.0
    %4208 = vmatpush1.xpose.msra.mxu0 0.0
    %4209 = vmatprep.subr.mxu0 0.0
    %4210 = vmatpush1.xpose.msra.mxu0 0.0
    %4211 = vmatprep.subr.mxu0 0.0
    %4212 = vmatpush1.xpose.msra.mxu0 0.0
    %4213 = vmatprep.subr.mxu0 0.0
    %4214 = vmatpush1.xpose.msra.mxu0 0.0
    %4215 = vmatprep.subr.mxu0 0.0
    %4216 = vmatpush1.xpose.msra.mxu0 0.0
    %4217 = vmatprep.subr.mxu0 0.0
    %4218 = vmatpush1.xpose.msra.mxu0 0.0
    %4219 = vmatprep.subr.mxu0 0.0
    %4220 = vmatpush1.xpose.msra.mxu0 0.0
    %4221 = vmatprep.subr.mxu0 0.0
    %4222 = vmatpush1.xpose.msra.mxu0 0.0
    %4223 = vmatprep.mubr.f32.mxu0 0.0
    %4224 = vmatmul.mubr.f32.gmra.mrb[0].mxu0 %v4157
    %v4225 = vpop.f32.mrb[0].mxu0
    %v4226 = vadd.f32 0.0, %v4225
    %v4227 = vpop.f32.mrb[0].mxu0
    %4228 = vdwg.mxu0
    %v4229 = vsel %vm1644, %v4226, -inf
    %4230 = vmax.xlane.f32.xlu0 %v4229
    %v4231 = vpop.xlane.xlu0 %4230
    %v4232 = vsub.f32 %v4226, %v4231
    %v4233 = vmul.f32 %v4232, 1.442695
    %v4234 = vpow.pop %v4233
    %v4235 = vsel %vm1644, %v4234, 0.0
    %4236 = vadd.xlane.f32.xlu0 %v4235
    %v4237 = vpop.xlane.xlu0 %4236
    %v4238 = vrcp.pop %v4237
    %v4239 = vmul.f32 %v4234, %v4238
    %v4241 = vsel %vm1656, %v4239, 0
    %4243 = vmatprep.subr.mxu0 0.0
    %4244 = vmatpush1.msra.mxu0 %v1222
    %4245 = vmatprep.subr.mxu0 0.0
    %4246 = vmatpush1.msra.mxu0 0.0
    %4247 = vmatprep.subr.mxu0 0.0
    %4248 = vmatpush1.msra.mxu0 0.0
    %4249 = vmatprep.subr.mxu0 0.0
    %4250 = vmatpush1.msra.mxu0 0.0
    %4251 = vmatprep.subr.mxu0 0.0
    %4252 = vmatpush1.msra.mxu0 0.0
    %4253 = vmatprep.subr.mxu0 0.0
    %4254 = vmatpush1.msra.mxu0 0.0
    %4255 = vmatprep.subr.mxu0 0.0
    %4256 = vmatpush1.msra.mxu0 0.0
    %4257 = vmatprep.subr.mxu0 0.0
    %4258 = vmatpush1.msra.mxu0 0.0
    %4259 = vmatprep.subr.mxu0 0.0
    %4260 = vmatpush1.msra.mxu0 0.0
    %4261 = vmatprep.subr.mxu0 0.0
    %4262 = vmatpush1.msra.mxu0 0.0
    %4263 = vmatprep.subr.mxu0 0.0
    %4264 = vmatpush1.msra.mxu0 0.0
    %4265 = vmatprep.subr.mxu0 0.0
    %4266 = vmatpush1.msra.mxu0 0.0
    %4267 = vmatprep.subr.mxu0 0.0
    %4268 = vmatpush1.msra.mxu0 0.0
    %4269 = vmatprep.subr.mxu0 0.0
    %4270 = vmatpush1.msra.mxu0 0.0
    %4271 = vmatprep.subr.mxu0 0.0
    %4272 = vmatpush1.msra.mxu0 0.0
    %4273 = vmatprep.subr.mxu0 0.0
    %4274 = vmatpush1.msra.mxu0 0.0
    %4275 = vmatprep.subr.mxu0 0.0
    %4276 = vmatpush1.msra.mxu0 0.0
    %4277 = vmatprep.subr.mxu0 0.0
    %4278 = vmatpush1.msra.mxu0 0.0
    %4279 = vmatprep.subr.mxu0 0.0
    %4280 = vmatpush1.msra.mxu0 0.0
    %4281 = vmatprep.subr.mxu0 0.0
    %4282 = vmatpush1.msra.mxu0 0.0
    %4283 = vmatprep.subr.mxu0 0.0
    %4284 = vmatpush1.msra.mxu0 0.0
    %4285 = vmatprep.subr.mxu0 0.0
    %4286 = vmatpush1.msra.mxu0 0.0
    %4287 = vmatprep.subr.mxu0 0.0
    %4288 = vmatpush1.msra.mxu0 0.0
    %4289 = vmatprep.subr.mxu0 0.0
    %4290 = vmatpush1.msra.mxu0 0.0
    %4291 = vmatprep.subr.mxu0 0.0
    %4292 = vmatpush1.msra.mxu0 0.0
    %4293 = vmatprep.subr.mxu0 0.0
    %4294 = vmatpush1.msra.mxu0 0.0
    %4295 = vmatprep.subr.mxu0 0.0
    %4296 = vmatpush1.msra.mxu0 0.0
    %4297 = vmatprep.subr.mxu0 0.0
    %4298 = vmatpush1.msra.mxu0 0.0
    %4299 = vmatprep.subr.mxu0 0.0
    %4300 = vmatpush1.msra.mxu0 0.0
    %4301 = vmatprep.subr.mxu0 0.0
    %4302 = vmatpush1.msra.mxu0 0.0
    %4303 = vmatprep.subr.mxu0 0.0
    %4304 = vmatpush1.msra.mxu0 0.0
    %4305 = vmatprep.subr.mxu0 0.0
    %4306 = vmatpush1.msra.mxu0 0.0
    %4307 = vmatprep.mubr.f32.mxu0 0.0
    %4308 = vmatmul.mubr.f32.gmra.mrb[0].mxu0 %v4241
    %v4309 = vpop.f32.mrb[0].mxu0
    %v4310 = vadd.f32 0.0, %v4309
    %v4311 = vpop.f32.mrb[0].mxu0
    %4312 = vdwg.mxu0
    %v4314 = vsel %vm195, %v4310, 0
    %4316 = vmatprep.subr.mxu0 0.0
    %4317 = vmatpush1.msra.mxu0 %v1734
    %4318 = vmatprep.subr.mxu0 0.0
    %4319 = vmatpush1.msra.mxu0 %v1735
    %4320 = vmatprep.subr.mxu0 0.0
    %4321 = vmatpush1.msra.mxu0 %v1736
    %4322 = vmatprep.subr.mxu0 0.0
    %4323 = vmatpush1.msra.mxu0 %v1737
    %4324 = vmatprep.subr.mxu0 0.0
    %4325 = vmatpush1.msra.mxu0 0.0
    %4326 = vmatprep.subr.mxu0 0.0
    %4327 = vmatpush1.msra.mxu0 0.0
    %4328 = vmatprep.subr.mxu0 0.0
    %4329 = vmatpush1.msra.mxu0 0.0
    %4330 = vmatprep.subr.mxu0 0.0
    %4331 = vmatpush1.msra.mxu0 0.0
    %4332 = vmatprep.subr.mxu0 0.0
    %4333 = vmatpush1.msra.mxu0 0.0
    %4334 = vmatprep.subr.mxu0 0.0
    %4335 = vmatpush1.msra.mxu0 0.0
    %4336 = vmatprep.subr.mxu0 0.0
    %4337 = vmatpush1.msra.mxu0 0.0
    %4338 = vmatprep.subr.mxu0 0.0
    %4339 = vmatpush1.msra.mxu0 0.0
    %4340 = vmatprep.subr.mxu0 0.0
    %4341 = vmatpush1.msra.mxu0 0.0
    %4342 = vmatprep.subr.mxu0 0.0
    %4343 = vmatpush1.msra.mxu0 0.0
    %4344 = vmatprep.subr.mxu0 0.0
    %4345 = vmatpush1.msra.mxu0 0.0
    %4346 = vmatprep.subr.mxu0 0.0
    %4347 = vmatpush1.msra.mxu0 0.0
    %4348 = vmatprep.subr.mxu0 0.0
    %4349 = vmatpush1.msra.mxu0 0.0
    %4350 = vmatprep.subr.mxu0 0.0
    %4351 = vmatpush1.msra.mxu0 0.0
    %4352 = vmatprep.subr.mxu0 0.0
    %4353 = vmatpush1.msra.mxu0 0.0
    %4354 = vmatprep.subr.mxu0 0.0
    %4355 = vmatpush1.msra.mxu0 0.0
    %4356 = vmatprep.subr.mxu0 0.0
    %4357 = vmatpush1.msra.mxu0 0.0
    %4358 = vmatprep.subr.mxu0 0.0
    %4359 = vmatpush1.msra.mxu0 0.0
    %4360 = vmatprep.subr.mxu0 0.0
    %4361 = vmatpush1.msra.mxu0 0.0
    %4362 = vmatprep.subr.mxu0 0.0
    %4363 = vmatpush1.msra.mxu0 0.0
    %4364 = vmatprep.subr.mxu0 0.0
    %4365 = vmatpush1.msra.mxu0 0.0
    %4366 = vmatprep.subr.mxu0 0.0
    %4367 = vmatpush1.msra.mxu0 0.0
    %4368 = vmatprep.subr.mxu0 0.0
    %4369 = vmatpush1.msra.mxu0 0.0
    %4370 = vmatprep.subr.mxu0 0.0
    %4371 = vmatpush1.msra.mxu0 0.0
    %4372 = vmatprep.subr.mxu0 0.0
    %4373 = vmatpush1.msra.mxu0 0.0
    %4374 = vmatprep.subr.mxu0 0.0
    %4375 = vmatpush1.msra.mxu0 0.0
    %4376 = vmatprep.subr.mxu0 0.0
    %4377 = vmatpush1.msra.mxu0 0.0
    %4378 = vmatprep.subr.mxu0 0.0
    %4379 = vmatpush1.msra.mxu0 0.0
    %4380 = vmatprep.mubr.f32.mxu0 0.0
    %4381 = vmatmul.mubr.f32.gmra.mrb[0].mxu0 %v4314
    %v4382 = vpop.f32.mrb[0].mxu0
    %v4383 = vadd.f32 0.0, %v4382
    %v4384 = vpop.f32.mrb[0].mxu0
    %4385 = vdwg.mxu0
    %4386 = vmatprep.subr.mxu0 0.0
    %4387 = vmatpush1.msra.mxu0 %v1730
    %4388 = vmatprep.subr.mxu0 0.0
    %4389 = vmatpush1.msra.mxu0 %v1731
    %4390 = vmatprep.subr.mxu0 0.0
    %4391 = vmatpush1.msra.mxu0 %v1732
    %4392 = vmatprep.subr.mxu0 0.0
    %4393 = vmatpush1.msra.mxu0 %v1733
    %4394 = vmatprep.subr.mxu0 0.0
    %4395 = vmatpush1.msra.mxu0 0.0
    %4396 = vmatprep.subr.mxu0 0.0
    %4397 = vmatpush1.msra.mxu0 0.0
    %4398 = vmatprep.subr.mxu0 0.0
    %4399 = vmatpush1.msra.mxu0 0.0
    %4400 = vmatprep.subr.mxu0 0.0
    %4401 = vmatpush1.msra.mxu0 0.0
    %4402 = vmatprep.subr.mxu0 0.0
    %4403 = vmatpush1.msra.mxu0 0.0
    %4404 = vmatprep.subr.mxu0 0.0
    %4405 = vmatpush1.msra.mxu0 0.0
    %4406 = vmatprep.subr.mxu0 0.0
    %4407 = vmatpush1.msra.mxu0 0.0
    %4408 = vmatprep.subr.mxu0 0.0
    %4409 = vmatpush1.msra.mxu0 0.0
    %4410 = vmatprep.subr.mxu0 0.0
    %4411 = vmatpush1.msra.mxu0 0.0
    %4412 = vmatprep.subr.mxu0 0.0
    %4413 = vmatpush1.msra.mxu0 0.0
    %4414 = vmatprep.subr.mxu0 0.0
    %4415 = vmatpush1.msra.mxu0 0.0
    %4416 = vmatprep.subr.mxu0 0.0
    %4417 = vmatpush1.msra.mxu0 0.0
    %4418 = vmatprep.subr.mxu0 0.0
    %4419 = vmatpush1.msra.mxu0 0.0
    %4420 = vmatprep.subr.mxu0 0.0
    %4421 = vmatpush1.msra.mxu0 0.0
    %4422 = vmatprep.subr.mxu0 0.0
    %4423 = vmatpush1.msra.mxu0 0.0
    %4424 = vmatprep.subr.mxu0 0.0
    %4425 = vmatpush1.msra.mxu0 0.0
    %4426 = vmatprep.subr.mxu0 0.0
    %4427 = vmatpush1.msra.mxu0 0.0
    %4428 = vmatprep.subr.mxu0 0.0
    %4429 = vmatpush1.msra.mxu0 0.0
    %4430 = vmatprep.subr.mxu0 0.0
    %4431 = vmatpush1.msra.mxu0 0.0
    %4432 = vmatprep.subr.mxu0 0.0
    %4433 = vmatpush1.msra.mxu0 0.0
    %4434 = vmatprep.subr.mxu0 0.0
    %4435 = vmatpush1.msra.mxu0 0.0
    %4436 = vmatprep.subr.mxu0 0.0
    %4437 = vmatpush1.msra.mxu0 0.0
    %4438 = vmatprep.subr.mxu0 0.0
    %4439 = vmatpush1.msra.mxu0 0.0
    %4440 = vmatprep.subr.mxu0 0.0
    %4441 = vmatpush1.msra.mxu0 0.0
    %4442 = vmatprep.subr.mxu0 0.0
    %4443 = vmatpush1.msra.mxu0 0.0
    %4444 = vmatprep.subr.mxu0 0.0
    %4445 = vmatpush1.msra.mxu0 0.0
    %4446 = vmatprep.subr.mxu0 0.0
    %4447 = vmatpush1.msra.mxu0 0.0
    %4448 = vmatprep.subr.mxu0 0.0
    %4449 = vmatpush1.msra.mxu0 0.0
    %4450 = vmatprep.mubr.f32.mxu0 0.0
    %4451 = vmatmul.mubr.f32.gmra.mrb[0].mxu0 %v4157
    %v4452 = vpop.f32.mrb[0].mxu0
    %v4453 = vadd.f32 %v4383, %v4452
    %v4454 = vpop.f32.mrb[0].mxu0
    %4455 = vdwg.mxu0
    %v4456 = vadd.f32 %v4453, %v1881
    %v4457 = vtanh.pop %v4456
    %v4459 = vsel %vm195, %v4457, 0
    %4461 = vmatprep.subr.mxu0 0.0
    %4462 = vmatpush1.msra.mxu0 %v1884
    %4463 = vmatprep.subr.mxu0 0.0
    %4464 = vmatpush1.msra.mxu0 %v1885
    %4465 = vmatprep.subr.mxu0 0.0
    %4466 = vmatpush1.msra.mxu0 %v1886
    %4467 = vmatprep.subr.mxu0 0.0
    %4468 = vmatpush1.msra.mxu0 %v1887
    %4469 = vmatprep.subr.mxu0 0.0
    %4470 = vmatpush1.msra.mxu0 0.0
    %4471 = vmatprep.subr.mxu0 0.0
    %4472 = vmatpush1.msra.mxu0 0.0
    %4473 = vmatprep.subr.mxu0 0.0
    %4474 = vmatpush1.msra.mxu0 0.0
    %4475 = vmatprep.subr.mxu0 0.0
    %4476 = vmatpush1.msra.mxu0 0.0
    %4477 = vmatprep.subr.mxu0 0.0
    %4478 = vmatpush1.msra.mxu0 0.0
    %4479 = vmatprep.subr.mxu0 0.0
    %4480 = vmatpush1.msra.mxu0 0.0
    %4481 = vmatprep.subr.mxu0 0.0
    %4482 = vmatpush1.msra.mxu0 0.0
    %4483 = vmatprep.subr.mxu0 0.0
    %4484 = vmatpush1.msra.mxu0 0.0
    %4485 = vmatprep.subr.mxu0 0.0
    %4486 = vmatpush1.msra.mxu0 0.0
    %4487 = vmatprep.subr.mxu0 0.0
    %4488 = vmatpush1.msra.mxu0 0.0
    %4489 = vmatprep.subr.mxu0 0.0
    %4490 = vmatpush1.msra.mxu0 0.0
    %4491 = vmatprep.subr.mxu0 0.0
    %4492 = vmatpush1.msra.mxu0 0.0
    %4493 = vmatprep.subr.mxu0 0.0
    %4494 = vmatpush1.msra.mxu0 0.0
    %4495 = vmatprep.subr.mxu0 0.0
    %4496 = vmatpush1.msra.mxu0 0.0
    %4497 = vmatprep.subr.mxu0 0.0
    %4498 = vmatpush1.msra.mxu0 0.0
    %4499 = vmatprep.subr.mxu0 0.0
    %4500 = vmatpush1.msra.mxu0 0.0
    %4501 = vmatprep.subr.mxu0 0.0
    %4502 = vmatpush1.msra.mxu0 0.0
    %4503 = vmatprep.subr.mxu0 0.0
    %4504 = vmatpush1.msra.mxu0 0.0
    %4505 = vmatprep.subr.mxu0 0.0
    %4506 = vmatpush1.msra.mxu0 0.0
    %4507 = vmatprep.subr.mxu0 0.0
    %4508 = vmatpush1.msra.mxu0 0.0
    %4509 = vmatprep.subr.mxu0 0.0
    %4510 = vmatpush1.msra.mxu0 0.0
    %4511 = vmatprep.subr.mxu0 0.0
    %4512 = vmatpush1.msra.mxu0 0.0
    %4513 = vmatprep.subr.mxu0 0.0
    %4514 = vmatpush1.msra.mxu0 0.0
    %4515 = vmatprep.subr.mxu0 0.0
    %4516 = vmatpush1.msra.mxu0 0.0
    %4517 = vmatprep.subr.mxu0 0.0
    %4518 = vmatpush1.msra.mxu0 0.0
    %4519 = vmatprep.subr.mxu0 0.0
    %4520 = vmatpush1.msra.mxu0 0.0
    %4521 = vmatprep.subr.mxu0 0.0
    %4522 = vmatpush1.msra.mxu0 0.0
    %4523 = vmatprep.subr.mxu0 0.0
    %4524 = vmatpush1.msra.mxu0 0.0
    %4525 = vmatprep.mubr.f32.mxu0 0.0
    %4526 = vmatmul.mubr.f32.gmra.mrb[0].mxu0 %v4459
    %v4527 = vpop.f32.mrb[0].mxu0
    %v4528 = vadd.f32 %v1888, %v4527
    %v4529 = vpop.f32.mrb[0].mxu0
    %4530 = vdwg.mxu0
    %v4531 = vsel %vm379, %v4528, -inf
    %4532 = vmax.xlane.f32.xlu0 %v4531
    %v4533 = vpop.xlane.xlu0 %4532
    %v4534 = vsub.f32 %v4528, %v4533
    %v4535 = vmul.f32 %v4534, 1.442695
    %v4536 = vpow.pop %v4535
    %v4537 = vsel %vm379, %v4536, 0.0
    %4538 = vadd.xlane.f32.xlu0 %v4537
    %v4539 = vpop.xlane.xlu0 %4538
    %v4540 = vrcp.pop %v4539
    %v4541 = vmul.f32 1.0, %v4540
    %vm4542 = vcmp.ge.f32.partialorder %v4528, %v4533
    %v4543 = vsel %vm4542, %v1974, 32.0
    %v4544 = vsel %vm379, %v4543, inf
    %4545 = vmin.xlane.f32.xlu0 %v4544
    %v4546 = vpop.xlane.xlu0 %4545
    %v4547 = vcvt.f32.s32.to.zero.pseudo %v4546
    %vm4548 = vcmp.eq.s32.totalorder %v1303, %v4547
    %v4549 = vsel %vm4548, 1, 0
    %v4550 = vcvt.s32.f32 %v4549
    %vm4551 = vcmp.eq.s32.totalorder %v1303, 4
    %v4552 = vsel %vm4551, %v4547, %v3910
    %v4553 = vsel %vm4551, %v4541, %v3911
    %v4555 = vsel %vm195, %v4550, 0
    %4557 = vmatprep.subr.mxu0 0.0
    %4558 = vmatpush1.msra.mxu0 %v1305
    %4559 = vmatprep.subr.mxu0 0.0
    %4560 = vmatpush1.msra.mxu0 %v1306
    %4561 = vmatprep.subr.mxu0 0.0
    %4562 = vmatpush1.msra.mxu0 %v1307
    %4563 = vmatprep.subr.mxu0 0.0
    %4564 = vmatpush1.msra.mxu0 %v1308
    %4565 = vmatprep.subr.mxu0 0.0
    %4566 = vmatpush1.msra.mxu0 0.0
    %4567 = vmatprep.subr.mxu0 0.0
    %4568 = vmatpush1.msra.mxu0 0.0
    %4569 = vmatprep.subr.mxu0 0.0
    %4570 = vmatpush1.msra.mxu0 0.0
    %4571 = vmatprep.subr.mxu0 0.0
    %4572 = vmatpush1.msra.mxu0 0.0
    %4573 = vmatprep.subr.mxu0 0.0
    %4574 = vmatpush1.msra.mxu0 0.0
    %4575 = vmatprep.subr.mxu0 0.0
    %4576 = vmatpush1.msra.mxu0 0.0
    %4577 = vmatprep.subr.mxu0 0.0
    %4578 = vmatpush1.msra.mxu0 0.0
    %4579 = vmatprep.subr.mxu0 0.0
    %4580 = vmatpush1.msra.mxu0 0.0
    %4581 = vmatprep.subr.mxu0 0.0
    %4582 = vmatpush1.msra.mxu0 0.0
    %4583 = vmatprep.subr.mxu0 0.0
    %4584 = vmatpush1.msra.mxu0 0.0
    %4585 = vmatprep.subr.mxu0 0.0
    %4586 = vmatpush1.msra.mxu0 0.0
    %4587 = vmatprep.subr.mxu0 0.0
    %4588 = vmatpush1.msra.mxu0 0.0
    %4589 = vmatprep.subr.mxu0 0.0
    %4590 = vmatpush1.msra.mxu0 0.0
    %4591 = vmatprep.subr.mxu0 0.0
    %4592 = vmatpush1.msra.mxu0 0.0
    %4593 = vmatprep.subr.mxu0 0.0
    %4594 = vmatpush1.msra.mxu0 0.0
    %4595 = vmatprep.subr.mxu0 0.0
    %4596 = vmatpush1.msra.mxu0 0.0
    %4597 = vmatprep.subr.mxu0 0.0
    %4598 = vmatpush1.msra.mxu0 0.0
    %4599 = vmatprep.subr.mxu0 0.0
    %4600 = vmatpush1.msra.mxu0 0.0
    %4601 = vmatprep.subr.mxu0 0.0
    %4602 = vmatpush1.msra.mxu0 0.0
    %4603 = vmatprep.subr.mxu0 0.0
    %4604 = vmatpush1.msra.mxu0 0.0
    %4605 = vmatprep.subr.mxu0 0.0
    %4606 = vmatpush1.msra.mxu0 0.0
    %4607 = vmatprep.subr.mxu0 0.0
    %4608 = vmatpush1.msra.mxu0 0.0
    %4609 = vmatprep.subr.mxu0 0.0
    %4610 = vmatpush1.msra.mxu0 0.0
    %4611 = vmatprep.subr.mxu0 0.0
    %4612 = vmatpush1.msra.mxu0 0.0
    %4613 = vmatprep.subr.mxu0 0.0
    %4614 = vmatpush1.msra.mxu0 0.0
    %4615 = vmatprep.subr.mxu0 0.0
    %4616 = vmatpush1.msra.mxu0 0.0
    %4617 = vmatprep.subr.mxu0 0.0
    %4618 = vmatpush1.msra.mxu0 0.0
    %4619 = vmatprep.subr.mxu0 0.0
    %4620 = vmatpush1.msra.mxu0 0.0
    %4621 = vmatprep.mubr.f32.mxu0 0.0
    %4622 = vmatmul.mubr.f32.gmra.mrb[0].mxu0 %v4555
    %v4623 = vpop.f32.mrb[0].mxu0
    %v4624 = vadd.f32 0.0, %v4623
    %v4625 = vpop.f32.mrb[0].mxu0
    %4626 = vdwg.mxu0
    %v4628 = vsel %vm195, %v4624, 0
    %4630 = vmatprep.subr.mxu0 0.0
    %4631 = vmatpush1.msra.mxu0 %v1382
    %4632 = vmatprep.subr.mxu0 0.0
    %4633 = vmatpush1.msra.mxu0 %v1383
    %4634 = vmatprep.subr.mxu0 0.0
    %4635 = vmatpush1.msra.mxu0 %v1384
    %4636 = vmatprep.subr.mxu0 0.0
    %4637 = vmatpush1.msra.mxu0 %v1385
    %4638 = vmatprep.subr.mxu0 0.0
    %4639 = vmatpush1.msra.mxu0 0.0
    %4640 = vmatprep.subr.mxu0 0.0
    %4641 = vmatpush1.msra.mxu0 0.0
    %4642 = vmatprep.subr.mxu0 0.0
    %4643 = vmatpush1.msra.mxu0 0.0
    %4644 = vmatprep.subr.mxu0 0.0
    %4645 = vmatpush1.msra.mxu0 0.0
    %4646 = vmatprep.subr.mxu0 0.0
    %4647 = vmatpush1.msra.mxu0 0.0
    %4648 = vmatprep.subr.mxu0 0.0
    %4649 = vmatpush1.msra.mxu0 0.0
    %4650 = vmatprep.subr.mxu0 0.0
    %4651 = vmatpush1.msra.mxu0 0.0
    %4652 = vmatprep.subr.mxu0 0.0
    %4653 = vmatpush1.msra.mxu0 0.0
    %4654 = vmatprep.subr.mxu0 0.0
    %4655 = vmatpush1.msra.mxu0 0.0
    %4656 = vmatprep.subr.mxu0 0.0
    %4657 = vmatpush1.msra.mxu0 0.0
    %4658 = vmatprep.subr.mxu0 0.0
    %4659 = vmatpush1.msra.mxu0 0.0
    %4660 = vmatprep.subr.mxu0 0.0
    %4661 = vmatpush1.msra.mxu0 0.0
    %4662 = vmatprep.subr.mxu0 0.0
    %4663 = vmatpush1.msra.mxu0 0.0
    %4664 = vmatprep.subr.mxu0 0.0
    %4665 = vmatpush1.msra.mxu0 0.0
    %4666 = vmatprep.subr.mxu0 0.0
    %4667 = vmatpush1.msra.mxu0 0.0
    %4668 = vmatprep.subr.mxu0 0.0
    %4669 = vmatpush1.msra.mxu0 0.0
    %4670 = vmatprep.subr.mxu0 0.0
    %4671 = vmatpush1.msra.mxu0 0.0
    %4672 = vmatprep.subr.mxu0 0.0
    %4673 = vmatpush1.msra.mxu0 0.0
    %4674 = vmatprep.subr.mxu0 0.0
    %4675 = vmatpush1.msra.mxu0 0.0
    %4676 = vmatprep.subr.mxu0 0.0
    %4677 = vmatpush1.msra.mxu0 0.0
    %4678 = vmatprep.subr.mxu0 0.0
    %4679 = vmatpush1.msra.mxu0 0.0
    %4680 = vmatprep.subr.mxu0 0.0
    %4681 = vmatpush1.msra.mxu0 0.0
    %4682 = vmatprep.subr.mxu0 0.0
    %4683 = vmatpush1.msra.mxu0 0.0
    %4684 = vmatprep.subr.mxu0 0.0
    %4685 = vmatpush1.msra.mxu0 0.0
    %4686 = vmatprep.subr.mxu0 0.0
    %4687 = vmatpush1.msra.mxu0 0.0
    %4688 = vmatprep.subr.mxu0 0.0
    %4689 = vmatpush1.msra.mxu0 0.0
    %4690 = vmatprep.subr.mxu0 0.0
    %4691 = vmatpush1.msra.mxu0 0.0
    %4692 = vmatprep.subr.mxu0 0.0
    %4693 = vmatpush1.msra.mxu0 0.0
    %4694 = vmatprep.mubr.f32.mxu0 0.0
    %4695 = vmatmul.mubr.f32.gmra.mrb[0].mxu0 %v4628
    %v4696 = vpop.f32.mrb[0].mxu0
    %v4697 = vadd.f32 %v1299, %v4696
    %v4698 = vpop.f32.mrb[0].mxu0
    %4699 = vdwg.mxu0
    %4700 = vmatprep.subr.mxu0 0.0
    %4701 = vmatpush1.msra.mxu0 %v1459
    %4702 = vmatprep.subr.mxu0 0.0
    %4703 = vmatpush1.msra.mxu0 %v1460
    %4704 = vmatprep.subr.mxu0 0.0
    %4705 = vmatpush1.msra.mxu0 %v1461
    %4706 = vmatprep.subr.mxu0 0.0
    %4707 = vmatpush1.msra.mxu0 %v1462
    %4708 = vmatprep.subr.mxu0 0.0
    %4709 = vmatpush1.msra.mxu0 0.0
    %4710 = vmatprep.subr.mxu0 0.0
    %4711 = vmatpush1.msra.mxu0 0.0
    %4712 = vmatprep.subr.mxu0 0.0
    %4713 = vmatpush1.msra.mxu0 0.0
    %4714 = vmatprep.subr.mxu0 0.0
    %4715 = vmatpush1.msra.mxu0 0.0
    %4716 = vmatprep.subr.mxu0 0.0
    %4717 = vmatpush1.msra.mxu0 0.0
    %4718 = vmatprep.subr.mxu0 0.0
    %4719 = vmatpush1.msra.mxu0 0.0
    %4720 = vmatprep.subr.mxu0 0.0
    %4721 = vmatpush1.msra.mxu0 0.0
    %4722 = vmatprep.subr.mxu0 0.0
    %4723 = vmatpush1.msra.mxu0 0.0
    %4724 = vmatprep.subr.mxu0 0.0
    %4725 = vmatpush1.msra.mxu0 0.0
    %4726 = vmatprep.subr.mxu0 0.0
    %4727 = vmatpush1.msra.mxu0 0.0
    %4728 = vmatprep.subr.mxu0 0.0
    %4729 = vmatpush1.msra.mxu0 0.0
    %4730 = vmatprep.subr.mxu0 0.0
    %4731 = vmatpush1.msra.mxu0 0.0
    %4732 = vmatprep.subr.mxu0 0.0
    %4733 = vmatpush1.msra.mxu0 0.0
    %4734 = vmatprep.subr.mxu0 0.0
    %4735 = vmatpush1.msra.mxu0 0.0
    %4736 = vmatprep.subr.mxu0 0.0
    %4737 = vmatpush1.msra.mxu0 0.0
    %4738 = vmatprep.subr.mxu0 0.0
    %4739 = vmatpush1.msra.mxu0 0.0
    %4740 = vmatprep.subr.mxu0 0.0
    %4741 = vmatpush1.msra.mxu0 0.0
    %4742 = vmatprep.subr.mxu0 0.0
    %4743 = vmatpush1.msra.mxu0 0.0
    %4744 = vmatprep.subr.mxu0 0.0
    %4745 = vmatpush1.msra.mxu0 0.0
    %4746 = vmatprep.subr.mxu0 0.0
    %4747 = vmatpush1.msra.mxu0 0.0
    %4748 = vmatprep.subr.mxu0 0.0
    %4749 = vmatpush1.msra.mxu0 0.0
    %4750 = vmatprep.subr.mxu0 0.0
    %4751 = vmatpush1.msra.mxu0 0.0
    %4752 = vmatprep.subr.mxu0 0.0
    %4753 = vmatpush1.msra.mxu0 0.0
    %4754 = vmatprep.subr.mxu0 0.0
    %4755 = vmatpush1.msra.mxu0 0.0
    %4756 = vmatprep.subr.mxu0 0.0
    %4757 = vmatpush1.msra.mxu0 0.0
    %4758 = vmatprep.subr.mxu0 0.0
    %4759 = vmatpush1.msra.mxu0 0.0
    %4760 = vmatprep.subr.mxu0 0.0
    %4761 = vmatpush1.msra.mxu0 0.0
    %4762 = vmatprep.subr.mxu0 0.0
    %4763 = vmatpush1.msra.mxu0 0.0
    %4764 = vmatprep.mubr.f32.mxu0 0.0
    %4765 = vmatmul.mubr.f32.gmra.mrb[0].mxu0 %v4157
    %v4766 = vpop.f32.mrb[0].mxu0
    %v4767 = vadd.f32 %v1463, %v4766
    %v4768 = vpop.f32.mrb[0].mxu0
    %4769 = vdwg.mxu0
    %v4770 = vadd.f32 %v4697, %v4767
    %v4771 = vsub.f32 0.0, %v4770
    %v4772 = vmul.f32 %v4771, 1.442695
    %v4773 = vpow.pop %v4772
    %v4774 = vadd.f32 %v4773, 1.0
    %v4775 = vrcp.pop %v4774
    %v4776 = vmul.f32 1.0, %v4775
    %4778 = vrot.lane.b32.xlu0 %v4767, 64
    %v4779 = vpop.permute.xlu0 %4778
    %v4781 = vmul.f32 %v4776, %v4779
    %4783 = vrot.lane.b32.xlu0 %v4781, 64
    %v4784 = vpop.permute.xlu0 %4783
    %v4786 = vadd.f32 %v4697, %v4784
    %v4787 = vtanh.pop %v4786
    %v4788 = vsub.f32 1.0, %v4776
    %4790 = vrot.lane.b32.xlu0 %v4787, 96
    %v4791 = vpop.permute.xlu0 %4790
    %v4793 = vmul.f32 %v4788, %v4791
    %v4794 = vmul.f32 %v4776, %v4153
    %v4795 = vadd.f32 %v4793, %v4794
    %4797 = vrot.lane.b32.xlu0 %v4795, 96
    %v4798 = vpop.permute.xlu0 %4797
    %v4799 = vsel %vm195, %v4798, 0
    %4801 = vmatprep.subr.mxu0 0.0
    %4802 = vmatpush1.xpose.msra.mxu0 %v1572
    %4803 = vmatprep.subr.mxu0 0.0
    %4804 = vmatpush1.xpose.msra.mxu0 0.0
    %4805 = vmatprep.subr.mxu0 0.0
    %4806 = vmatpush1.xpose.msra.mxu0 0.0
    %4807 = vmatprep.subr.mxu0 0.0
    %4808 = vmatpush1.xpose.msra.mxu0 0.0
    %4809 = vmatprep.subr.mxu0 0.0
    %4810 = vmatpush1.xpose.msra.mxu0 0.0
    %4811 = vmatprep.subr.mxu0 0.0
    %4812 = vmatpush1.xpose.msra.mxu0 0.0
    %4813 = vmatprep.subr.mxu0 0.0
    %4814 = vmatpush1.xpose.msra.mxu0 0.0
    %4815 = vmatprep.subr.mxu0 0.0
    %4816 = vmatpush1.xpose.msra.mxu0 0.0
    %4817 = vmatprep.subr.mxu0 0.0
    %4818 = vmatpush1.xpose.msra.mxu0 0.0
    %4819 = vmatprep.subr.mxu0 0.0
    %4820 = vmatpush1.xpose.msra.mxu0 0.0
    %4821 = vmatprep.subr.mxu0 0.0
    %4822 = vmatpush1.xpose.msra.mxu0 0.0
    %4823 = vmatprep.subr.mxu0 0.0
    %4824 = vmatpush1.xpose.msra.mxu0 0.0
    %4825 = vmatprep.subr.mxu0 0.0
    %4826 = vmatpush1.xpose.msra.mxu0 0.0
    %4827 = vmatprep.subr.mxu0 0.0
    %4828 = vmatpush1.xpose.msra.mxu0 0.0
    %4829 = vmatprep.subr.mxu0 0.0
    %4830 = vmatpush1.xpose.msra.mxu0 0.0
    %4831 = vmatprep.subr.mxu0 0.0
    %4832 = vmatpush1.xpose.msra.mxu0 0.0
    %4833 = vmatprep.subr.mxu0 0.0
    %4834 = vmatpush1.xpose.msra.mxu0 0.0
    %4835 = vmatprep.subr.mxu0 0.0
    %4836 = vmatpush1.xpose.msra.mxu0 0.0
    %4837 = vmatprep.subr.mxu0 0.0
    %4838 = vmatpush1.xpose.msra.mxu0 0.0
    %4839 = vmatprep.subr.mxu0 0.0
    %4840 = vmatpush1.xpose.msra.mxu0 0.0
    %4841 = vmatprep.subr.mxu0 0.0
    %4842 = vmatpush1.xpose.msra.mxu0 0.0
    %4843 = vmatprep.subr.mxu0 0.0
    %4844 = vmatpush1.xpose.msra.mxu0 0.0
    %4845 = vmatprep.subr.mxu0 0.0
    %4846 = vmatpush1.xpose.msra.mxu0 0.0
    %4847 = vmatprep.subr.mxu0 0.0
    %4848 = vmatpush1.xpose.msra.mxu0 0.0
    %4849 = vmatprep.subr.mxu0 0.0
    %4850 = vmatpush1.xpose.msra.mxu0 0.0
    %4851 = vmatprep.subr.mxu0 0.0
    %4852 = vmatpush1.xpose.msra.mxu0 0.0
    %4853 = vmatprep.subr.mxu0 0.0
    %4854 = vmatpush1.xpose.msra.mxu0 0.0
    %4855 = vmatprep.subr.mxu0 0.0
    %4856 = vmatpush1.xpose.msra.mxu0 0.0
    %4857 = vmatprep.subr.mxu0 0.0
    %4858 = vmatpush1.xpose.msra.mxu0 0.0
    %4859 = vmatprep.subr.mxu0 0.0
    %4860 = vmatpush1.xpose.msra.mxu0 0.0
    %4861 = vmatprep.subr.mxu0 0.0
    %4862 = vmatpush1.xpose.msra.mxu0 0.0
    %4863 = vmatprep.subr.mxu0 0.0
    %4864 = vmatpush1.xpose.msra.mxu0 0.0
    %4865 = vmatprep.mubr.f32.mxu0 0.0
    %4866 = vmatmul.mubr.f32.gmra.mrb[0].mxu0 %v4799
    %v4867 = vpop.f32.mrb[0].mxu0
    %v4868 = vadd.f32 0.0, %v4867
    %v4869 = vpop.f32.mrb[0].mxu0
    %4870 = vdwg.mxu0
    %v4871 = vsel %vm1644, %v4868, -inf
    %4872 = vmax.xlane.f32.xlu0 %v4871
    %v4873 = vpop.xlane.xlu0 %4872
    %v4874 = vsub.f32 %v4868, %v4873
    %v4875 = vmul.f32 %v4874, 1.442695
    %v4876 = vpow.pop %v4875
    %v4877 = vsel %vm1644, %v4876, 0.0
    %4878 = vadd.xlane.f32.xlu0 %v4877
    %v4879 = vpop.xlane.xlu0 %4878
    %v4880 = vrcp.pop %v4879
    %v4881 = vmul.f32 %v4876, %v4880
    %v4883 = vsel %vm1656, %v4881, 0
    %4885 = vmatprep.subr.mxu0 0.0
    %4886 = vmatpush1.msra.mxu0 %v1222
    %4887 = vmatprep.subr.mxu0 0.0
    %4888 = vmatpush1.msra.mxu0 0.0
    %4889 = vmatprep.subr.mxu0 0.0
    %4890 = vmatpush1.msra.mxu0 0.0
    %4891 = vmatprep.subr.mxu0 0.0
    %4892 = vmatpush1.msra.mxu0 0.0
    %4893 = vmatprep.subr.mxu0 0.0
    %4894 = vmatpush1.msra.mxu0 0.0
    %4895 = vmatprep.subr.mxu0 0.0
    %4896 = vmatpush1.msra.mxu0 0.0
    %4897 = vmatprep.subr.mxu0 0.0
    %4898 = vmatpush1.msra.mxu0 0.0
    %4899 = vmatprep.subr.mxu0 0.0
    %4900 = vmatpush1.msra.mxu0 0.0
    %4901 = vmatprep.subr.mxu0 0.0
    %4902 = vmatpush1.msra.mxu0 0.0
    %4903 = vmatprep.subr.mxu0 0.0
    %4904 = vmatpush1.msra.mxu0 0.0
    %4905 = vmatprep.subr.mxu0 0.0
    %4906 = vmatpush1.msra.mxu0 0.0
    %4907 = vmatprep.subr.mxu0 0.0
    %4908 = vmatpush1.msra.mxu0 0.0
    %4909 = vmatprep.subr.mxu0 0.0
    %4910 = vmatpush1.msra.mxu0 0.0
    %4911 = vmatprep.subr.mxu0 0.0
    %4912 = vmatpush1.msra.mxu0 0.0
    %4913 = vmatprep.subr.mxu0 0.0
    %4914 = vmatpush1.msra.mxu0 0.0
    %4915 = vmatprep.subr.mxu0 0.0
    %4916 = vmatpush1.msra.mxu0 0.0
    %4917 = vmatprep.subr.mxu0 0.0
    %4918 = vmatpush1.msra.mxu0 0.0
    %4919 = vmatprep.subr.mxu0 0.0
    %4920 = vmatpush1.msra.mxu0 0.0
    %4921 = vmatprep.subr.mxu0 0.0
    %4922 = vmatpush1.msra.mxu0 0.0
    %4923 = vmatprep.subr.mxu0 0.0
    %4924 = vmatpush1.msra.mxu0 0.0
    %4925 = vmatprep.subr.mxu0 0.0
    %4926 = vmatpush1.msra.mxu0 0.0
    %4927 = vmatprep.subr.mxu0 0.0
    %4928 = vmatpush1.msra.mxu0 0.0
    %4929 = vmatprep.subr.mxu0 0.0
    %4930 = vmatpush1.msra.mxu0 0.0
    %4931 = vmatprep.subr.mxu0 0.0
    %4932 = vmatpush1.msra.mxu0 0.0
    %4933 = vmatprep.subr.mxu0 0.0
    %4934 = vmatpush1.msra.mxu0 0.0
    %4935 = vmatprep.subr.mxu0 0.0
    %4936 = vmatpush1.msra.mxu0 0.0
    %4937 = vmatprep.subr.mxu0 0.0
    %4938 = vmatpush1.msra.mxu0 0.0
    %4939 = vmatprep.subr.mxu0 0.0
    %4940 = vmatpush1.msra.mxu0 0.0
    %4941 = vmatprep.subr.mxu0 0.0
    %4942 = vmatpush1.msra.mxu0 0.0
    %4943 = vmatprep.subr.mxu0 0.0
    %4944 = vmatpush1.msra.mxu0 0.0
    %4945 = vmatprep.subr.mxu0 0.0
    %4946 = vmatpush1.msra.mxu0 0.0
    %4947 = vmatprep.subr.mxu0 0.0
    %4948 = vmatpush1.msra.mxu0 0.0
    %4949 = vmatprep.mubr.f32.mxu0 0.0
    %4950 = vmatmul.mubr.f32.gmra.mrb[0].mxu0 %v4883
    %v4951 = vpop.f32.mrb[0].mxu0
    %v4952 = vadd.f32 0.0, %v4951
    %v4953 = vpop.f32.mrb[0].mxu0
    %4954 = vdwg.mxu0
    %v4956 = vsel %vm195, %v4952, 0
    %4958 = vmatprep.subr.mxu0 0.0
    %4959 = vmatpush1.msra.mxu0 %v1734
    %4960 = vmatprep.subr.mxu0 0.0
    %4961 = vmatpush1.msra.mxu0 %v1735
    %4962 = vmatprep.subr.mxu0 0.0
    %4963 = vmatpush1.msra.mxu0 %v1736
    %4964 = vmatprep.subr.mxu0 0.0
    %4965 = vmatpush1.msra.mxu0 %v1737
    %4966 = vmatprep.subr.mxu0 0.0
    %4967 = vmatpush1.msra.mxu0 0.0
    %4968 = vmatprep.subr.mxu0 0.0
    %4969 = vmatpush1.msra.mxu0 0.0
    %4970 = vmatprep.subr.mxu0 0.0
    %4971 = vmatpush1.msra.mxu0 0.0
    %4972 = vmatprep.subr.mxu0 0.0
    %4973 = vmatpush1.msra.mxu0 0.0
    %4974 = vmatprep.subr.mxu0 0.0
    %4975 = vmatpush1.msra.mxu0 0.0
    %4976 = vmatprep.subr.mxu0 0.0
    %4977 = vmatpush1.msra.mxu0 0.0
    %4978 = vmatprep.subr.mxu0 0.0
    %4979 = vmatpush1.msra.mxu0 0.0
    %4980 = vmatprep.subr.mxu0 0.0
    %4981 = vmatpush1.msra.mxu0 0.0
    %4982 = vmatprep.subr.mxu0 0.0
    %4983 = vmatpush1.msra.mxu0 0.0
    %4984 = vmatprep.subr.mxu0 0.0
    %4985 = vmatpush1.msra.mxu0 0.0
    %4986 = vmatprep.subr.mxu0 0.0
    %4987 = vmatpush1.msra.mxu0 0.0
    %4988 = vmatprep.subr.mxu0 0.0
    %4989 = vmatpush1.msra.mxu0 0.0
    %4990 = vmatprep.subr.mxu0 0.0
    %4991 = vmatpush1.msra.mxu0 0.0
    %4992 = vmatprep.subr.mxu0 0.0
    %4993 = vmatpush1.msra.mxu0 0.0
    %4994 = vmatprep.subr.mxu0 0.0
    %4995 = vmatpush1.msra.mxu0 0.0
    %4996 = vmatprep.subr.mxu0 0.0
    %4997 = vmatpush1.msra.mxu0 0.0
    %4998 = vmatprep.subr.mxu0 0.0
    %4999 = vmatpush1.msra.mxu0 0.0
    %5000 = vmatprep.subr.mxu0 0.0
    %5001 = vmatpush1.msra.mxu0 0.0
    %5002 = vmatprep.subr.mxu0 0.0
    %5003 = vmatpush1.msra.mxu0 0.0
    %5004 = vmatprep.subr.mxu0 0.0
    %5005 = vmatpush1.msra.mxu0 0.0
    %5006 = vmatprep.subr.mxu0 0.0
    %5007 = vmatpush1.msra.mxu0 0.0
    %5008 = vmatprep.subr.mxu0 0.0
    %5009 = vmatpush1.msra.mxu0 0.0
    %5010 = vmatprep.subr.mxu0 0.0
    %5011 = vmatpush1.msra.mxu0 0.0
    %5012 = vmatprep.subr.mxu0 0.0
    %5013 = vmatpush1.msra.mxu0 0.0
    %5014 = vmatprep.subr.mxu0 0.0
    %5015 = vmatpush1.msra.mxu0 0.0
    %5016 = vmatprep.subr.mxu0 0.0
    %5017 = vmatpush1.msra.mxu0 0.0
    %5018 = vmatprep.subr.mxu0 0.0
    %5019 = vmatpush1.msra.mxu0 0.0
    %5020 = vmatprep.subr.mxu0 0.0
    %5021 = vmatpush1.msra.mxu0 0.0
    %5022 = vmatprep.mubr.f32.mxu0 0.0
    %5023 = vmatmul.mubr.f32.gmra.mrb[0].mxu0 %v4956
    %v5024 = vpop.f32.mrb[0].mxu0
    %v5025 = vadd.f32 0.0, %v5024
    %v5026 = vpop.f32.mrb[0].mxu0
    %5027 = vdwg.mxu0
    %5028 = vmatprep.subr.mxu0 0.0
    %5029 = vmatpush1.msra.mxu0 %v1730
    %5030 = vmatprep.subr.mxu0 0.0
    %5031 = vmatpush1.msra.mxu0 %v1731
    %5032 = vmatprep.subr.mxu0 0.0
    %5033 = vmatpush1.msra.mxu0 %v1732
    %5034 = vmatprep.subr.mxu0 0.0
    %5035 = vmatpush1.msra.mxu0 %v1733
    %5036 = vmatprep.subr.mxu0 0.0
    %5037 = vmatpush1.msra.mxu0 0.0
    %5038 = vmatprep.subr.mxu0 0.0
    %5039 = vmatpush1.msra.mxu0 0.0
    %5040 = vmatprep.subr.mxu0 0.0
    %5041 = vmatpush1.msra.mxu0 0.0
    %5042 = vmatprep.subr.mxu0 0.0
    %5043 = vmatpush1.msra.mxu0 0.0
    %5044 = vmatprep.subr.mxu0 0.0
    %5045 = vmatpush1.msra.mxu0 0.0
    %5046 = vmatprep.subr.mxu0 0.0
    %5047 = vmatpush1.msra.mxu0 0.0
    %5048 = vmatprep.subr.mxu0 0.0
    %5049 = vmatpush1.msra.mxu0 0.0
    %5050 = vmatprep.subr.mxu0 0.0
    %5051 = vmatpush1.msra.mxu0 0.0
    %5052 = vmatprep.subr.mxu0 0.0
    %5053 = vmatpush1.msra.mxu0 0.0
    %5054 = vmatprep.subr.mxu0 0.0
    %5055 = vmatpush1.msra.mxu0 0.0
    %5056 = vmatprep.subr.mxu0 0.0
    %5057 = vmatpush1.msra.mxu0 0.0
    %5058 = vmatprep.subr.mxu0 0.0
    %5059 = vmatpush1.msra.mxu0 0.0
    %5060 = vmatprep.subr.mxu0 0.0
    %5061 = vmatpush1.msra.mxu0 0.0
    %5062 = vmatprep.subr.mxu0 0.0
    %5063 = vmatpush1.msra.mxu0 0.0
    %5064 = vmatprep.subr.mxu0 0.0
    %5065 = vmatpush1.msra.mxu0 0.0
    %5066 = vmatprep.subr.mxu0 0.0
    %5067 = vmatpush1.msra.mxu0 0.0
    %5068 = vmatprep.subr.mxu0 0.0
    %5069 = vmatpush1.msra.mxu0 0.0
    %5070 = vmatprep.subr.mxu0 0.0
    %5071 = vmatpush1.msra.mxu0 0.0
    %5072 = vmatprep.subr.mxu0 0.0
    %5073 = vmatpush1.msra.mxu0 0.0
    %5074 = vmatprep.subr.mxu0 0.0
    %5075 = vmatpush1.msra.mxu0 0.0
    %5076 = vmatprep.subr.mxu0 0.0
    %5077 = vmatpush1.msra.mxu0 0.0
    %5078 = vmatprep.subr.mxu0 0.0
    %5079 = vmatpush1.msra.mxu0 0.0
    %5080 = vmatprep.subr.mxu0 0.0
    %5081 = vmatpush1.msra.mxu0 0.0
    %5082 = vmatprep.subr.mxu0 0.0
    %5083 = vmatpush1.msra.mxu0 0.0
    %5084 = vmatprep.subr.mxu0 0.0
    %5085 = vmatpush1.msra.mxu0 0.0
    %5086 = vmatprep.subr.mxu0 0.0
    %5087 = vmatpush1.msra.mxu0 0.0
    %5088 = vmatprep.subr.mxu0 0.0
    %5089 = vmatpush1.msra.mxu0 0.0
    %5090 = vmatprep.subr.mxu0 0.0
    %5091 = vmatpush1.msra.mxu0 0.0
    %5092 = vmatprep.mubr.f32.mxu0 0.0
    %5093 = vmatmul.mubr.f32.gmra.mrb[0].mxu0 %v4799
    %v5094 = vpop.f32.mrb[0].mxu0
    %v5095 = vadd.f32 %v5025, %v5094
    %v5096 = vpop.f32.mrb[0].mxu0
    %5097 = vdwg.mxu0
    %v5098 = vadd.f32 %v5095, %v1881
    %v5099 = vtanh.pop %v5098
    %v5101 = vsel %vm195, %v5099, 0
    %5103 = vmatprep.subr.mxu0 0.0
    %5104 = vmatpush1.msra.mxu0 %v1884
    %5105 = vmatprep.subr.mxu0 0.0
    %5106 = vmatpush1.msra.mxu0 %v1885
    %5107 = vmatprep.subr.mxu0 0.0
    %5108 = vmatpush1.msra.mxu0 %v1886
    %5109 = vmatprep.subr.mxu0 0.0
    %5110 = vmatpush1.msra.mxu0 %v1887
    %5111 = vmatprep.subr.mxu0 0.0
    %5112 = vmatpush1.msra.mxu0 0.0
    %5113 = vmatprep.subr.mxu0 0.0
    %5114 = vmatpush1.msra.mxu0 0.0
    %5115 = vmatprep.subr.mxu0 0.0
    %5116 = vmatpush1.msra.mxu0 0.0
    %5117 = vmatprep.subr.mxu0 0.0
    %5118 = vmatpush1.msra.mxu0 0.0
    %5119 = vmatprep.subr.mxu0 0.0
    %5120 = vmatpush1.msra.mxu0 0.0
    %5121 = vmatprep.subr.mxu0 0.0
    %5122 = vmatpush1.msra.mxu0 0.0
    %5123 = vmatprep.subr.mxu0 0.0
    %5124 = vmatpush1.msra.mxu0 0.0
    %5125 = vmatprep.subr.mxu0 0.0
    %5126 = vmatpush1.msra.mxu0 0.0
    %5127 = vmatprep.subr.mxu0 0.0
    %5128 = vmatpush1.msra.mxu0 0.0
    %5129 = vmatprep.subr.mxu0 0.0
    %5130 = vmatpush1.msra.mxu0 0.0
    %5131 = vmatprep.subr.mxu0 0.0
    %5132 = vmatpush1.msra.mxu0 0.0
    %5133 = vmatprep.subr.mxu0 0.0
    %5134 = vmatpush1.msra.mxu0 0.0
    %5135 = vmatprep.subr.mxu0 0.0
    %5136 = vmatpush1.msra.mxu0 0.0
    %5137 = vmatprep.subr.mxu0 0.0
    %5138 = vmatpush1.msra.mxu0 0.0
    %5139 = vmatprep.subr.mxu0 0.0
    %5140 = vmatpush1.msra.mxu0 0.0
    %5141 = vmatprep.subr.mxu0 0.0
    %5142 = vmatpush1.msra.mxu0 0.0
    %5143 = vmatprep.subr.mxu0 0.0
    %5144 = vmatpush1.msra.mxu0 0.0
    %5145 = vmatprep.subr.mxu0 0.0
    %5146 = vmatpush1.msra.mxu0 0.0
    %5147 = vmatprep.subr.mxu0 0.0
    %5148 = vmatpush1.msra.mxu0 0.0
    %5149 = vmatprep.subr.mxu0 0.0
    %5150 = vmatpush1.msra.mxu0 0.0
    %5151 = vmatprep.subr.mxu0 0.0
    %5152 = vmatpush1.msra.mxu0 0.0
    %5153 = vmatprep.subr.mxu0 0.0
    %5154 = vmatpush1.msra.mxu0 0.0
    %5155 = vmatprep.subr.mxu0 0.0
    %5156 = vmatpush1.msra.mxu0 0.0
    %5157 = vmatprep.subr.mxu0 0.0
    %5158 = vmatpush1.msra.mxu0 0.0
    %5159 = vmatprep.subr.mxu0 0.0
    %5160 = vmatpush1.msra.mxu0 0.0
    %5161 = vmatprep.subr.mxu0 0.0
    %5162 = vmatpush1.msra.mxu0 0.0
    %5163 = vmatprep.subr.mxu0 0.0
    %5164 = vmatpush1.msra.mxu0 0.0
    %5165 = vmatprep.subr.mxu0 0.0
    %5166 = vmatpush1.msra.mxu0 0.0
    %5167 = vmatprep.mubr.f32.mxu0 0.0
    %5168 = vmatmul.mubr.f32.gmra.mrb[0].mxu0 %v5101
    %v5169 = vpop.f32.mrb[0].mxu0
    %v5170 = vadd.f32 %v1888, %v5169
    %v5171 = vpop.f32.mrb[0].mxu0
    %5172 = vdwg.mxu0
    %v5173 = vsel %vm379, %v5170, -inf
    %5174 = vmax.xlane.f32.xlu0 %v5173
    %v5175 = vpop.xlane.xlu0 %5174
    %v5176 = vsub.f32 %v5170, %v5175
    %v5177 = vmul.f32 %v5176, 1.442695
    %v5178 = vpow.pop %v5177
    %v5179 = vsel %vm379, %v5178, 0.0
    %5180 = vadd.xlane.f32.xlu0 %v5179
    %v5181 = vpop.xlane.xlu0 %5180
    %v5182 = vrcp.pop %v5181
    %v5183 = vmul.f32 1.0, %v5182
    %vm5184 = vcmp.ge.f32.partialorder %v5170, %v5175
    %v5185 = vsel %vm5184, %v1974, 32.0
    %v5186 = vsel %vm379, %v5185, inf
    %5187 = vmin.xlane.f32.xlu0 %v5186
    %v5188 = vpop.xlane.xlu0 %5187
    %v5189 = vcvt.f32.s32.to.zero.pseudo %v5188
    %vm5190 = vcmp.eq.s32.totalorder %v1303, 5
    %v5191 = vsel %vm5190, %v5189, %v4552
    %v5192 = vsel %vm5190, %v5183, %v4553
    %5193 = vst [vmem:[%s20] sm:$0x1] %v5191
    %5194 = vst [vmem:[%s21] sm:$0x1] %v5192
    // Predicated region
    $region118: #{_greedy_forward.1} parent=1 // pred_check
      _
    $region119: #{_greedy_forward.1} parent=1 // pred_check_branch
      %5196 = sbr.rel (0) target = $region121
    $region120: #{_greedy_forward.1} parent=1 // pred_region
      _
    $region121: #{_greedy_forward.1} parent=1 // pred_fallthru
      _
    // Predicated region
    $region122: #{_greedy_forward.1} parent=1 // pred_check
      _
    $region123: #{_greedy_forward.1} parent=1 // pred_check_branch
      %5198 = sbr.rel (0) target = $region125
    $region124: #{_greedy_forward.1} parent=1 // pred_region
      _
    $region125: #{_greedy_forward.1} parent=1 // pred_fallthru
      _
    // Predicated region
    $region126: #{_greedy_forward.1} parent=1 // pred_check
      _
    $region127: #{_greedy_forward.1} parent=1 // pred_check_branch
      %5200 = sbr.rel (0) target = $region129
    $region128: #{_greedy_forward.1} parent=1 // pred_region
      _
    $region129: #{_greedy_forward.1} parent=1 // pred_fallthru
      _
    // Predicated region
    $region130: #{_greedy_forward.1} parent=1 // pred_check
      _
    $region131: #{_greedy_forward.1} parent=1 // pred_check_branch
      %5202 = sbr.rel (0) target = $region133
    $region132: #{_greedy_forward.1} parent=1 // pred_region
      _
    $region133: #{_greedy_forward.1} parent=1 // pred_fallthru
      _
    %5203 = vsyncpa [#allocation5], 1
    %5204 = vsyncpa [#allocation7], 1
    %5205 = vsyncpa [#allocation10], 1
    %5206 = vsyncpa [#allocation13], 1
    %5207 = vsyncpa [#allocation16], 1

</llo_original>
